<compile_context>
chip_gen: v7x
topology: tpu7x:2x2x1
jax: 0.10.0
libtpu: 0.0.40
codegen_flags: <defaults>
</compile_context>

<pallas_src>
import math
from functools import partial

import jax
import jax.numpy as jnp
from jax.experimental import pallas as pl
from jax.experimental.pallas import tpu as pltpu


# ----------------------------------------------------------------------------
# In-kernel helpers (traced inside the Pallas kernel body).
# ----------------------------------------------------------------------------
def _gelu(x):
    # exact (erf-based) GELU, matching torch.nn.GELU(approximate='none')
    return 0.5 * x * (1.0 + jax.lax.erf(x * (1.0 / math.sqrt(2.0))))


def _layernorm(x, gamma, beta, eps=1e-5):
    mean = jnp.mean(x, axis=-1, keepdims=True)
    var = jnp.mean((x - mean) ** 2, axis=-1, keepdims=True)
    return (x - mean) * jax.lax.rsqrt(var + eps) * gamma + beta


def _mhsa(x_seq, wqkv, bqkv, wo, bo, num_heads):
    """Batched multi-head self-attention.

    x_seq : (n_seq, seq_len, E) float32
    wqkv  : (E, 3E) fused Q/K/V projection, bqkv: (1, 3E)
    wo    : (E, E)  output projection,      bo  : (1, E)
    Returns (n_seq, seq_len, E) float32.
    """
    n_seq, seq_len, E = x_seq.shape
    dh = E // num_heads
    scale = 1.0 / math.sqrt(dh)
    m = n_seq * seq_len

    # single fused QKV matmul for every token of every sequence
    qkv = jnp.dot(x_seq.reshape(m, E), wqkv,
                  preferred_element_type=jnp.float32) + bqkv           # (m, 3E)

    # TODO(synk): heads stay a tiny static loop; folding heads into the einsum
    # batch dim needs a leading<->sublane transpose (or lane-crossing reshape)
    # that Mosaic does not lower reliably, and batched dot_general unrolls per
    # batch element on TPU anyway (no MXU-push saving at H=2, dh=2).
    head_outs = []
    for h in range(num_heads):
        qh = qkv[:, h * dh:(h + 1) * dh].reshape(n_seq, seq_len, dh) * scale
        kh = qkv[:, E + h * dh:E + (h + 1) * dh].reshape(n_seq, seq_len, dh)
        vh = qkv[:, 2 * E + h * dh:2 * E + (h + 1) * dh].reshape(n_seq, seq_len, dh)
        s = jnp.einsum('bqd,bkd->bqk', qh, kh,
                       preferred_element_type=jnp.float32)             # (n, S, S)
        s = s - jnp.max(s, axis=-1, keepdims=True)
        p = jnp.exp(s)
        p = p * pl.reciprocal(jnp.sum(p, axis=-1, keepdims=True), approx=True)
        head_outs.append(jnp.einsum('bqk,bkd->bqd', p, vh,
                                    preferred_element_type=jnp.float32))
    ctx = head_outs[0] if num_heads == 1 else jnp.concatenate(head_outs, axis=-1)
    proj = jnp.dot(ctx.reshape(m, E), wo,
                   preferred_element_type=jnp.float32) + bo            # (m, E)
    return proj.reshape(n_seq, seq_len, E)


# ----------------------------------------------------------------------------
# Fused per-layer kernel: one grid step processes a block of BB batch elements;
# both attentions, both Linear/GELU/residual/LayerNorm stages and the
# (t,f)<->(f,t) re-layouts stay resident in VMEM for the whole layer.
#
#   x4_ref     : (BB, T, F, C)   input in 'b t f c' layout
#   attn_w_ref : (2, C, 4C)      [Wqkv | Wo] for [spectral, temporal]
#   attn_b_ref : (2, 1, 4C)      [bqkv | bo]
#   lin_w_ref  : (2, D, D)       Linear(D,D) weights (applied as x @ W)
#   dvec_ref   : (2, 3, D)       rows: [lin_bias, ln_gamma, ln_beta]
# ----------------------------------------------------------------------------
def _cst_layer_kernel(x4_ref, attn_w_ref, attn_b_ref, lin_w_ref, dvec_ref,
                      o_ref, *, num_heads, F, C):
    BB, T = x4_ref.shape[0], x4_ref.shape[1]
    D = F * C
    M = BB * T
    E3 = 3 * C

    aw = attn_w_ref[...]       # (2, C, 4C)
    ab = attn_b_ref[...]       # (2, 1, 4C)
    lw = lin_w_ref[...]        # (2, D, D)
    dv = dvec_ref[...]         # (2, 3, D)

    # spectral-attention input: '(b t) f c' (row-only reshape, no relayout)
    x_sp = x4_ref[...].astype(jnp.float32).reshape(M, F, C)            # (M, F, C)
    # D-space residual view of the same bytes: 'b t (f c)' via one lane concat
    xd = jnp.concatenate([x_sp[:, f, :] for f in range(F)], axis=-1)   # (M, D)

    # ---------------- spectral stage: MHSA over F (embed C) ------------------
    attn_sp = _mhsa(x_sp, aw[0][:, :E3], ab[0][:, :E3],
                    aw[0][:, E3:], ab[0][:, E3:], num_heads)            # (M, F, C)
    # '(b t) f c -> b t (f c)' merge folded straight into ONE K=D matmul
    attn_sp_flat = jnp.concatenate([attn_sp[:, f, :] for f in range(F)],
                                   axis=-1)                            # (M, D)
    y = jnp.dot(attn_sp_flat, lw[0],
                preferred_element_type=jnp.float32) + dv[0, 0:1]        # (M, D)
    xs = _layernorm(_gelu(y) + xd, dv[0, 1:2], dv[0, 2:3])              # (M, D)

    # ---------------- temporal stage: MHSA over T (embed C) ------------------
    # 'b t (f c) -> (b f) t c' : F lane slices stacked on a (leading) F axis
    xs3 = xs.reshape(BB, T, D)
    x_tp = jnp.stack([xs3[:, :, f * C:(f + 1) * C] for f in range(F)],
                     axis=1)                                            # (BB, F, T, C)
    attn_tp = _mhsa(x_tp.reshape(BB * F, T, C),
                    aw[1][:, :E3], ab[1][:, :E3],
                    aw[1][:, E3:], ab[1][:, E3:], num_heads)            # (BB*F, T, C)
    # '(b f) t c -> b t (f c)' merge folded into ONE K=D matmul
    a4 = attn_tp.reshape(BB, F, T, C)
    attn_tp_flat = jnp.concatenate([a4[:, f].reshape(M, C) for f in range(F)],
                                   axis=-1)                             # (M, D)
    y2 = jnp.dot(attn_tp_flat, lw[1],
                 preferred_element_type=jnp.float32) + dv[1, 0:1]       # (M, D)
    out = _layernorm(_gelu(y2) + xs, dv[1, 1:2], dv[1, 2:3])            # (M, D)

    o_ref[...] = out.reshape(BB, T, D).astype(o_ref.dtype)


def _full_spec(a):
    n = a.ndim
    return pl.BlockSpec(a.shape, lambda i, _n=n: (0,) * _n)


def _default_batch_blocks(B):
    """Grid length: 1 (fold whole batch) on single-TC chips; num cores on v7x."""
    cores = 1
    try:
        dev = jax.devices()[0]
        for attr in ("num_cores", "core_count", "num_cores_per_chip"):
            v = getattr(dev, attr, None)
            if isinstance(v, int) and v > 0:
                cores = v
                break
    except Exception:
        cores = 1
    nb = min(B, max(cores, 1))
    while nb > 1 and B % nb != 0:
        nb -= 1
    return max(nb, 1)


def cst_attention_layer(x, lp, F, C, num_batch_blocks=None):
    """One CST_attention layer as a single fused Pallas call.  x: (B, T, D)."""
    B, T, D = x.shape
    H = lp["num_heads"]
    x4 = x.reshape(B, T, F, C)           # free re-view done by XLA outside the kernel

    NB = _default_batch_blocks(B) if num_batch_blocks is None else num_batch_blocks
    BB = B // NB

    weights = (lp["attn_w"], lp["attn_b"], lp["lin_w"], lp["dvec"])
    in_specs = ([pl.BlockSpec((BB, T, F, C), lambda i: (i, 0, 0, 0))]
                + [_full_spec(w) for w in weights])

    return pl.pallas_call(
        partial(_cst_layer_kernel, num_heads=H, F=F, C=C),
        out_shape=jax.ShapeDtypeStruct((B, T, D), x.dtype),
        grid=(NB,),
        in_specs=in_specs,
        out_specs=pl.BlockSpec((BB, T, D), lambda i: (i, 0, 0)),
        compiler_params=pltpu.CompilerParams(
            dimension_semantics=("parallel",)),
    )(x4, *weights)


# ----------------------------------------------------------------------------
# Parameter construction (deterministic, synthetic), pre-packed per layer.
# ----------------------------------------------------------------------------
def _xavier(key, shape):
    fan_in, fan_out = shape[0], shape[1]
    bound = math.sqrt(6.0 / (fan_in + fan_out))
    return jax.random.uniform(key, shape, jnp.float32, -bound, bound)


def _init_mha(key, E):
    ks = jax.random.split(key, 8)
    wq = _xavier(ks[0], (E, E))
    wk = _xavier(ks[1], (E, E))
    wv = _xavier(ks[2], (E, E))
    wo = _xavier(ks[3], (E, E))
    bq = 0.02 * jax.random.normal(ks[4], (E,), jnp.float32)
    bk = 0.02 * jax.random.normal(ks[5], (E,), jnp.float32)
    bv = 0.02 * jax.random.normal(ks[6], (E,), jnp.float32)
    bo = 0.02 * jax.random.normal(ks[7], (E,), jnp.float32)
    wqkv = jnp.concatenate([wq, wk, wv], axis=1)          # (E, 3E)
    bqkv = jnp.concatenate([bq, bk, bv])                   # (3E,)
    return wqkv, bqkv, wo, bo


def init_layer_params(key, C, F, H):
    D = F * C
    ks = jax.random.split(key, 4)
    sp_wqkv, sp_bqkv, sp_wo, sp_bo = _init_mha(ks[0], C)
    tp_wqkv, tp_bqkv, tp_wo, tp_bo = _init_mha(ks[1], C)
    sp_lin_w = _xavier(ks[2], (D, D))
    tp_lin_w = _xavier(ks[3], (D, D))

    zeros_d = jnp.zeros((D,), jnp.float32)
    ones_d = jnp.ones((D,), jnp.float32)

    # pack per-stage parameters (stage 0 = spectral, stage 1 = temporal)
    attn_w = jnp.stack([jnp.concatenate([sp_wqkv, sp_wo], axis=1),
                        jnp.concatenate([tp_wqkv, tp_wo], axis=1)], axis=0)  # (2,C,4C)
    attn_b = jnp.stack([jnp.concatenate([sp_bqkv, sp_bo])[None, :],
                        jnp.concatenate([tp_bqkv, tp_bo])[None, :]], axis=0)  # (2,1,4C)
    lin_w = jnp.stack([sp_lin_w, tp_lin_w], axis=0)                           # (2,D,D)
    # rows: [Linear bias (=0), LayerNorm gamma (=1), LayerNorm beta (=0)]
    dvec = jnp.stack([jnp.stack([zeros_d, ones_d, zeros_d], axis=0),
                      jnp.stack([zeros_d, ones_d, zeros_d], axis=0)], axis=0)  # (2,3,D)

    return {"num_heads": H, "attn_w": attn_w, "attn_b": attn_b,
            "lin_w": lin_w, "dvec": dvec}


# ----------------------------------------------------------------------------
# CST_encoder forward (FreqAtten branch): one fused Pallas call per layer.
# ----------------------------------------------------------------------------
def cst_encoder_forward(x, layers):
    B, C, T, F = x.shape
    D = F * C
    # rearrange 'b c t f -> b t (f c)'  (layout plumbing done by XLA, outside kernels)
    x = jnp.transpose(x, (0, 2, 3, 1)).reshape(B, T, D)
    nb = _default_batch_blocks(B)
    for lp in layers:
        x = cst_attention_layer(x, lp, F=F, C=C, num_batch_blocks=nb)
    return x


if __name__ == "__main__":
    # CST_encoder configuration (FreqAtten branch)
    params = {
        "nb_mel_bins": 64, "ChAtten_DCA": False, "ChAtten_ULE": False,
        "FreqAtten": True, "LinearLayer": True, "dropout_rate": 0.0,
        "nb_cnn2d_filt": 4, "nb_heads": 2, "nb_self_attn_layers": 2,
        "t_pooling_loc": "front", "f_pool_size": [4, 4, 2],
    }
    # TODO(synk): dropout is identity here (dropout_rate=0 / eval mode), so no RNG mask kernel.

    B, C, T, F = 2, 4, 8, 4              # x: (B, C, T, F) NCHW-style
    H = params["nb_heads"]
    D = F * C                            # temp_embed_dim
    n_layers = params["nb_self_attn_layers"]

    key = jax.random.PRNGKey(0)
    kx, kp = jax.random.split(key)
    x = jax.random.normal(kx, (B, C, T, F), jnp.float32)

    layer_keys = jax.random.split(kp, n_layers)
    layers = [init_layer_params(layer_keys[i], C, F, H) for i in range(n_layers)]

    out = cst_encoder_forward(x, layers)
    out = jax.block_until_ready(out)
    assert out.shape == (B, T, D)
    assert bool(jnp.all(jnp.isfinite(out)))
    print("KERNEL_OK")
</pallas_src>

<mosaic_0001>
module attributes {stable_mosaic.version = 11 : i64} {
  func.func @_cst_layer_kernel(%arg0: i32, %arg1: memref<2x8x4x4xf32, #tpu.memory_space<vmem>>, %arg2: memref<2x4x16xf32, #tpu.memory_space<vmem>>, %arg3: memref<2x1x16xf32, #tpu.memory_space<vmem>>, %arg4: memref<2x16x16xf32, #tpu.memory_space<vmem>>, %arg5: memref<2x3x16xf32, #tpu.memory_space<vmem>>, %arg6: memref<2x8x16xf32, #tpu.memory_space<vmem>>) attributes {dimension_semantics = [#tpu.dimension_semantics<parallel>], iteration_bounds = array<i64: 1>, scalar_prefetch = 0 : i64, scratch_operands = 0 : i64, tpu.core_type = #tpu.core_type<tc>, window_params = [{transform_indices = @transform_0, window_bounds = array<i64: 2, 8, 4, 4>}, {pipeline_mode = #tpu.pipeline_mode<synchronous>, transform_indices = @transform_1, window_bounds = array<i64: 2, 4, 16>}, {pipeline_mode = #tpu.pipeline_mode<synchronous>, transform_indices = @transform_2, window_bounds = array<i64: 2, 1, 16>}, {pipeline_mode = #tpu.pipeline_mode<synchronous>, transform_indices = @transform_3, window_bounds = array<i64: 2, 16, 16>}, {pipeline_mode = #tpu.pipeline_mode<synchronous>, transform_indices = @transform_4, window_bounds = array<i64: 2, 3, 16>}, {transform_indices = @transform_5, window_bounds = array<i64: 2, 8, 16>}]} {
    %c0 = arith.constant 0 : index
    %c0_0 = arith.constant 0 : index
    %c0_1 = arith.constant 0 : index
    %0 = vector.load %arg2[%c0, %c0_0, %c0_1] : memref<2x4x16xf32, #tpu.memory_space<vmem>>, vector<2x4x16xf32>
    %c0_2 = arith.constant 0 : index
    %c0_3 = arith.constant 0 : index
    %c0_4 = arith.constant 0 : index
    %1 = vector.load %arg3[%c0_2, %c0_3, %c0_4] : memref<2x1x16xf32, #tpu.memory_space<vmem>>, vector<2x1x16xf32>
    %c0_5 = arith.constant 0 : index
    %c0_6 = arith.constant 0 : index
    %c0_7 = arith.constant 0 : index
    %2 = vector.load %arg4[%c0_5, %c0_6, %c0_7] : memref<2x16x16xf32, #tpu.memory_space<vmem>>, vector<2x16x16xf32>
    %c0_8 = arith.constant 0 : index
    %c0_9 = arith.constant 0 : index
    %c0_10 = arith.constant 0 : index
    %3 = vector.load %arg5[%c0_8, %c0_9, %c0_10] : memref<2x3x16xf32, #tpu.memory_space<vmem>>, vector<2x3x16xf32>
    %c0_11 = arith.constant 0 : index
    %c0_12 = arith.constant 0 : index
    %c0_13 = arith.constant 0 : index
    %c0_14 = arith.constant 0 : index
    %4 = vector.load %arg1[%c0_11, %c0_12, %c0_13, %c0_14] : memref<2x8x4x4xf32, #tpu.memory_space<vmem>>, vector<2x8x4x4xf32>
    %5 = vector.shape_cast %4 : vector<2x8x4x4xf32> to vector<16x4x4xf32>
    %6 = vector.extract_strided_slice %5 {offsets = [0, 0, 0], sizes = [16, 1, 4], strides = [1, 1, 1]} : vector<16x4x4xf32> to vector<16x1x4xf32>
    %7 = vector.shape_cast %6 : vector<16x1x4xf32> to vector<16x4xf32>
    %8 = vector.extract_strided_slice %5 {offsets = [0, 1, 0], sizes = [16, 1, 4], strides = [1, 1, 1]} : vector<16x4x4xf32> to vector<16x1x4xf32>
    %9 = vector.shape_cast %8 : vector<16x1x4xf32> to vector<16x4xf32>
    %10 = vector.extract_strided_slice %5 {offsets = [0, 2, 0], sizes = [16, 1, 4], strides = [1, 1, 1]} : vector<16x4x4xf32> to vector<16x1x4xf32>
    %11 = vector.shape_cast %10 : vector<16x1x4xf32> to vector<16x4xf32>
    %12 = vector.extract_strided_slice %5 {offsets = [0, 3, 0], sizes = [16, 1, 4], strides = [1, 1, 1]} : vector<16x4x4xf32> to vector<16x1x4xf32>
    %13 = vector.shape_cast %12 : vector<16x1x4xf32> to vector<16x4xf32>
    %14 = tpu.concatenate %7, %9, %11, %13 in 1 : vector<16x4xf32>, vector<16x4xf32>, vector<16x4xf32>, vector<16x4xf32> -> vector<16x16xf32>
    %15 = vector.extract_strided_slice %0 {offsets = [0, 0, 0], sizes = [1, 4, 16], strides = [1, 1, 1]} : vector<2x4x16xf32> to vector<1x4x16xf32>
    %16 = vector.shape_cast %15 : vector<1x4x16xf32> to vector<4x16xf32>
    %17 = vector.extract_strided_slice %16 {offsets = [0, 0], sizes = [4, 12], strides = [1, 1]} : vector<4x16xf32> to vector<4x12xf32>
    %18 = vector.extract_strided_slice %1 {offsets = [0, 0, 0], sizes = [1, 1, 16], strides = [1, 1, 1]} : vector<2x1x16xf32> to vector<1x1x16xf32>
    %19 = vector.shape_cast %18 : vector<1x1x16xf32> to vector<1x16xf32>
    %20 = vector.extract_strided_slice %19 {offsets = [0, 0], sizes = [1, 12], strides = [1, 1]} : vector<1x16xf32> to vector<1x12xf32>
    %21 = vector.extract_strided_slice %0 {offsets = [0, 0, 0], sizes = [1, 4, 16], strides = [1, 1, 1]} : vector<2x4x16xf32> to vector<1x4x16xf32>
    %22 = vector.shape_cast %21 : vector<1x4x16xf32> to vector<4x16xf32>
    %23 = vector.extract_strided_slice %22 {offsets = [0, 12], sizes = [4, 4], strides = [1, 1]} : vector<4x16xf32> to vector<4x4xf32>
    %24 = vector.extract_strided_slice %1 {offsets = [0, 0, 0], sizes = [1, 1, 16], strides = [1, 1, 1]} : vector<2x1x16xf32> to vector<1x1x16xf32>
    %25 = vector.shape_cast %24 : vector<1x1x16xf32> to vector<1x16xf32>
    %26 = vector.extract_strided_slice %25 {offsets = [0, 12], sizes = [1, 4], strides = [1, 1]} : vector<1x16xf32> to vector<1x4xf32>
    %27 = vector.shape_cast %5 : vector<16x4x4xf32> to vector<64x4xf32>
    %cst = arith.constant dense<0.000000e+00> : vector<64x12xf32>
    %28 = tpu.matmul %27, %17, %cst {dimension_numbers = #tpu.dot_dimension_numbers<[1], [0], [0], [1], [0, 0, 1, 1], [], []>} : vector<64x4xf32>, vector<4x12xf32>, vector<64x12xf32> -> vector<64x12xf32>
    %29 = vector.broadcast %20 : vector<1x12xf32> to vector<64x12xf32>
    %30 = arith.addf %28, %29 : vector<64x12xf32>
    %31 = vector.extract_strided_slice %30 {offsets = [0, 0], sizes = [64, 2], strides = [1, 1]} : vector<64x12xf32> to vector<64x2xf32>
    %32 = vector.shape_cast %31 : vector<64x2xf32> to vector<16x4x2xf32>
    %cst_15 = arith.constant 0.707106769 : f32
    %33 = vector.broadcast %cst_15 : f32 to vector<16x4x2xf32>
    %34 = arith.mulf %32, %33 : vector<16x4x2xf32>
    %35 = vector.extract_strided_slice %30 {offsets = [0, 4], sizes = [64, 2], strides = [1, 1]} : vector<64x12xf32> to vector<64x2xf32>
    %36 = vector.shape_cast %35 : vector<64x2xf32> to vector<16x4x2xf32>
    %37 = vector.extract_strided_slice %30 {offsets = [0, 8], sizes = [64, 2], strides = [1, 1]} : vector<64x12xf32> to vector<64x2xf32>
    %38 = vector.shape_cast %37 : vector<64x2xf32> to vector<16x4x2xf32>
    "tpu.trace_start"() <{level = 10 : i32, message = "bqd,bkd->bqk"}> : () -> ()
    %cst_16 = arith.constant dense<0.000000e+00> : vector<16x4x4xf32>
    %39 = tpu.matmul %34, %36, %cst_16 {dimension_numbers = #tpu.dot_dimension_numbers<[2], [2], [1], [1], [0, 0, 0, 1, 1, 1], [0], [0]>} : vector<16x4x2xf32>, vector<16x4x2xf32>, vector<16x4x4xf32> -> vector<16x4x4xf32>
    "tpu.trace_stop"() : () -> ()
    %cst_17 = arith.constant dense<0xFF800000> : vector<16x4xf32>
    %40 = vector.multi_reduction <maximumf>, %39, %cst_17 [2] : vector<16x4x4xf32> to vector<16x4xf32>
    %41 = vector.shape_cast %40 : vector<16x4xf32> to vector<16x4x1xf32>
    %42 = vector.broadcast %41 : vector<16x4x1xf32> to vector<16x4x4xf32>
    %43 = arith.subf %39, %42 : vector<16x4x4xf32>
    %44 = math.exp %43 : vector<16x4x4xf32>
    %cst_18 = arith.constant dense<0.000000e+00> : vector<16x4xf32>
    %45 = vector.multi_reduction <add>, %44, %cst_18 [2] : vector<16x4x4xf32> to vector<16x4xf32>
    %46 = vector.shape_cast %45 : vector<16x4xf32> to vector<16x4x1xf32>
    %47 = tpu.reciprocal %46 {approx = true} : vector<16x4x1xf32> -> vector<16x4x1xf32>
    %48 = vector.broadcast %47 : vector<16x4x1xf32> to vector<16x4x4xf32>
    %49 = arith.mulf %44, %48 : vector<16x4x4xf32>
    "tpu.trace_start"() <{level = 10 : i32, message = "bqk,bkd->bqd"}> : () -> ()
    %cst_19 = arith.constant dense<0.000000e+00> : vector<16x4x2xf32>
    %50 = tpu.matmul %49, %38, %cst_19 {dimension_numbers = #tpu.dot_dimension_numbers<[2], [1], [1], [2], [0, 0, 0, 1, 1, 2], [0], [0]>} : vector<16x4x4xf32>, vector<16x4x2xf32>, vector<16x4x2xf32> -> vector<16x4x2xf32>
    "tpu.trace_stop"() : () -> ()
    %51 = vector.extract_strided_slice %30 {offsets = [0, 2], sizes = [64, 2], strides = [1, 1]} : vector<64x12xf32> to vector<64x2xf32>
    %52 = vector.shape_cast %51 : vector<64x2xf32> to vector<16x4x2xf32>
    %cst_20 = arith.constant 0.707106769 : f32
    %53 = vector.broadcast %cst_20 : f32 to vector<16x4x2xf32>
    %54 = arith.mulf %52, %53 : vector<16x4x2xf32>
    %55 = vector.extract_strided_slice %30 {offsets = [0, 6], sizes = [64, 2], strides = [1, 1]} : vector<64x12xf32> to vector<64x2xf32>
    %56 = vector.shape_cast %55 : vector<64x2xf32> to vector<16x4x2xf32>
    %57 = vector.extract_strided_slice %30 {offsets = [0, 10], sizes = [64, 2], strides = [1, 1]} : vector<64x12xf32> to vector<64x2xf32>
    %58 = vector.shape_cast %57 : vector<64x2xf32> to vector<16x4x2xf32>
    "tpu.trace_start"() <{level = 10 : i32, message = "bqd,bkd->bqk"}> : () -> ()
    %cst_21 = arith.constant dense<0.000000e+00> : vector<16x4x4xf32>
    %59 = tpu.matmul %54, %56, %cst_21 {dimension_numbers = #tpu.dot_dimension_numbers<[2], [2], [1], [1], [0, 0, 0, 1, 1, 1], [0], [0]>} : vector<16x4x2xf32>, vector<16x4x2xf32>, vector<16x4x4xf32> -> vector<16x4x4xf32>
    "tpu.trace_stop"() : () -> ()
    %cst_22 = arith.constant dense<0xFF800000> : vector<16x4xf32>
    %60 = vector.multi_reduction <maximumf>, %59, %cst_22 [2] : vector<16x4x4xf32> to vector<16x4xf32>
    %61 = vector.shape_cast %60 : vector<16x4xf32> to vector<16x4x1xf32>
    %62 = vector.broadcast %61 : vector<16x4x1xf32> to vector<16x4x4xf32>
    %63 = arith.subf %59, %62 : vector<16x4x4xf32>
    %64 = math.exp %63 : vector<16x4x4xf32>
    %cst_23 = arith.constant dense<0.000000e+00> : vector<16x4xf32>
    %65 = vector.multi_reduction <add>, %64, %cst_23 [2] : vector<16x4x4xf32> to vector<16x4xf32>
    %66 = vector.shape_cast %65 : vector<16x4xf32> to vector<16x4x1xf32>
    %67 = tpu.reciprocal %66 {approx = true} : vector<16x4x1xf32> -> vector<16x4x1xf32>
    %68 = vector.broadcast %67 : vector<16x4x1xf32> to vector<16x4x4xf32>
    %69 = arith.mulf %64, %68 : vector<16x4x4xf32>
    "tpu.trace_start"() <{level = 10 : i32, message = "bqk,bkd->bqd"}> : () -> ()
    %cst_24 = arith.constant dense<0.000000e+00> : vector<16x4x2xf32>
    %70 = tpu.matmul %69, %58, %cst_24 {dimension_numbers = #tpu.dot_dimension_numbers<[2], [1], [1], [2], [0, 0, 0, 1, 1, 2], [0], [0]>} : vector<16x4x4xf32>, vector<16x4x2xf32>, vector<16x4x2xf32> -> vector<16x4x2xf32>
    "tpu.trace_stop"() : () -> ()
    %71 = tpu.concatenate %50, %70 in 2 : vector<16x4x2xf32>, vector<16x4x2xf32> -> vector<16x4x4xf32>
    %72 = vector.shape_cast %71 : vector<16x4x4xf32> to vector<64x4xf32>
    %cst_25 = arith.constant dense<0.000000e+00> : vector<64x4xf32>
    %73 = tpu.matmul %72, %23, %cst_25 {dimension_numbers = #tpu.dot_dimension_numbers<[1], [0], [0], [1], [0, 0, 1, 1], [], []>} : vector<64x4xf32>, vector<4x4xf32>, vector<64x4xf32> -> vector<64x4xf32>
    %74 = vector.broadcast %26 : vector<1x4xf32> to vector<64x4xf32>
    %75 = arith.addf %73, %74 : vector<64x4xf32>
    %76 = vector.shape_cast %75 : vector<64x4xf32> to vector<16x4x4xf32>
    %77 = vector.extract_strided_slice %76 {offsets = [0, 0, 0], sizes = [16, 1, 4], strides = [1, 1, 1]} : vector<16x4x4xf32> to vector<16x1x4xf32>
    %78 = vector.shape_cast %77 : vector<16x1x4xf32> to vector<16x4xf32>
    %79 = vector.extract_strided_slice %76 {offsets = [0, 1, 0], sizes = [16, 1, 4], strides = [1, 1, 1]} : vector<16x4x4xf32> to vector<16x1x4xf32>
    %80 = vector.shape_cast %79 : vector<16x1x4xf32> to vector<16x4xf32>
    %81 = vector.extract_strided_slice %76 {offsets = [0, 2, 0], sizes = [16, 1, 4], strides = [1, 1, 1]} : vector<16x4x4xf32> to vector<16x1x4xf32>
    %82 = vector.shape_cast %81 : vector<16x1x4xf32> to vector<16x4xf32>
    %83 = vector.extract_strided_slice %76 {offsets = [0, 3, 0], sizes = [16, 1, 4], strides = [1, 1, 1]} : vector<16x4x4xf32> to vector<16x1x4xf32>
    %84 = vector.shape_cast %83 : vector<16x1x4xf32> to vector<16x4xf32>
    %85 = tpu.concatenate %78, %80, %82, %84 in 1 : vector<16x4xf32>, vector<16x4xf32>, vector<16x4xf32>, vector<16x4xf32> -> vector<16x16xf32>
    %86 = vector.extract_strided_slice %2 {offsets = [0, 0, 0], sizes = [1, 16, 16], strides = [1, 1, 1]} : vector<2x16x16xf32> to vector<1x16x16xf32>
    %87 = vector.shape_cast %86 : vector<1x16x16xf32> to vector<16x16xf32>
    %cst_26 = arith.constant dense<0.000000e+00> : vector<16x16xf32>
    %88 = tpu.matmul %85, %87, %cst_26 {dimension_numbers = #tpu.dot_dimension_numbers<[1], [0], [0], [1], [0, 0, 1, 1], [], []>} : vector<16x16xf32>, vector<16x16xf32>, vector<16x16xf32> -> vector<16x16xf32>
    %89 = vector.extract_strided_slice %3 {offsets = [0, 0, 0], sizes = [1, 1, 16], strides = [1, 1, 1]} : vector<2x3x16xf32> to vector<1x1x16xf32>
    %90 = vector.shape_cast %89 : vector<1x1x16xf32> to vector<1x16xf32>
    %91 = vector.broadcast %90 : vector<1x16xf32> to vector<16x16xf32>
    %92 = arith.addf %88, %91 : vector<16x16xf32>
    %cst_27 = arith.constant 5.000000e-01 : f32
    %93 = vector.broadcast %cst_27 : f32 to vector<16x16xf32>
    %94 = arith.mulf %93, %92 : vector<16x16xf32>
    %cst_28 = arith.constant 0.707106769 : f32
    %95 = vector.broadcast %cst_28 : f32 to vector<16x16xf32>
    %96 = arith.mulf %92, %95 : vector<16x16xf32>
    %97 = math.erf %96 : vector<16x16xf32>
    %cst_29 = arith.constant 1.000000e+00 : f32
    %98 = vector.broadcast %cst_29 : f32 to vector<16x16xf32>
    %99 = arith.addf %98, %97 : vector<16x16xf32>
    %100 = arith.mulf %94, %99 : vector<16x16xf32>
    %101 = arith.addf %100, %14 : vector<16x16xf32>
    %102 = vector.extract_strided_slice %3 {offsets = [0, 1, 0], sizes = [1, 1, 16], strides = [1, 1, 1]} : vector<2x3x16xf32> to vector<1x1x16xf32>
    %103 = vector.shape_cast %102 : vector<1x1x16xf32> to vector<1x16xf32>
    %104 = vector.extract_strided_slice %3 {offsets = [0, 2, 0], sizes = [1, 1, 16], strides = [1, 1, 1]} : vector<2x3x16xf32> to vector<1x1x16xf32>
    %105 = vector.shape_cast %104 : vector<1x1x16xf32> to vector<1x16xf32>
    %cst_30 = arith.constant dense<0.000000e+00> : vector<16xf32>
    %106 = vector.multi_reduction <add>, %101, %cst_30 [1] : vector<16x16xf32> to vector<16xf32>
    %107 = vector.shape_cast %106 : vector<16xf32> to vector<16x1xf32>
    %cst_31 = arith.constant 1.600000e+01 : f32
    %108 = vector.broadcast %cst_31 : f32 to vector<16x1xf32>
    %109 = arith.divf %107, %108 : vector<16x1xf32>
    %110 = vector.broadcast %109 : vector<16x1xf32> to vector<16x16xf32>
    %111 = arith.subf %101, %110 : vector<16x16xf32>
    %112 = arith.mulf %111, %111 : vector<16x16xf32>
    %cst_32 = arith.constant dense<0.000000e+00> : vector<16xf32>
    %113 = vector.multi_reduction <add>, %112, %cst_32 [1] : vector<16x16xf32> to vector<16xf32>
    %114 = vector.shape_cast %113 : vector<16xf32> to vector<16x1xf32>
    %cst_33 = arith.constant 1.600000e+01 : f32
    %115 = vector.broadcast %cst_33 : f32 to vector<16x1xf32>
    %116 = arith.divf %114, %115 : vector<16x1xf32>
    %117 = vector.broadcast %109 : vector<16x1xf32> to vector<16x16xf32>
    %118 = arith.subf %101, %117 : vector<16x16xf32>
    %cst_34 = arith.constant 9.99999974E-6 : f32
    %119 = vector.broadcast %cst_34 : f32 to vector<16x1xf32>
    %120 = arith.addf %116, %119 : vector<16x1xf32>
    %121 = math.rsqrt %120 : vector<16x1xf32>
    %122 = vector.broadcast %121 : vector<16x1xf32> to vector<16x16xf32>
    %123 = arith.mulf %118, %122 : vector<16x16xf32>
    %124 = vector.broadcast %103 : vector<1x16xf32> to vector<16x16xf32>
    %125 = arith.mulf %123, %124 : vector<16x16xf32>
    %126 = vector.broadcast %105 : vector<1x16xf32> to vector<16x16xf32>
    %127 = arith.addf %125, %126 : vector<16x16xf32>
    %128 = vector.shape_cast %127 : vector<16x16xf32> to vector<2x8x16xf32>
    %129 = vector.extract_strided_slice %128 {offsets = [0, 0, 0], sizes = [2, 8, 4], strides = [1, 1, 1]} : vector<2x8x16xf32> to vector<2x8x4xf32>
    %130 = vector.extract_strided_slice %128 {offsets = [0, 0, 4], sizes = [2, 8, 4], strides = [1, 1, 1]} : vector<2x8x16xf32> to vector<2x8x4xf32>
    %131 = vector.extract_strided_slice %128 {offsets = [0, 0, 8], sizes = [2, 8, 4], strides = [1, 1, 1]} : vector<2x8x16xf32> to vector<2x8x4xf32>
    %132 = vector.extract_strided_slice %128 {offsets = [0, 0, 12], sizes = [2, 8, 4], strides = [1, 1, 1]} : vector<2x8x16xf32> to vector<2x8x4xf32>
    %133 = vector.shape_cast %129 : vector<2x8x4xf32> to vector<2x1x8x4xf32>
    %134 = vector.shape_cast %130 : vector<2x8x4xf32> to vector<2x1x8x4xf32>
    %135 = vector.shape_cast %131 : vector<2x8x4xf32> to vector<2x1x8x4xf32>
    %136 = vector.shape_cast %132 : vector<2x8x4xf32> to vector<2x1x8x4xf32>
    %137 = tpu.concatenate %133, %134, %135, %136 in 1 : vector<2x1x8x4xf32>, vector<2x1x8x4xf32>, vector<2x1x8x4xf32>, vector<2x1x8x4xf32> -> vector<2x4x8x4xf32>
    %138 = vector.shape_cast %137 : vector<2x4x8x4xf32> to vector<8x8x4xf32>
    %139 = vector.extract_strided_slice %0 {offsets = [1, 0, 0], sizes = [1, 4, 16], strides = [1, 1, 1]} : vector<2x4x16xf32> to vector<1x4x16xf32>
    %140 = vector.shape_cast %139 : vector<1x4x16xf32> to vector<4x16xf32>
    %141 = vector.extract_strided_slice %140 {offsets = [0, 0], sizes = [4, 12], strides = [1, 1]} : vector<4x16xf32> to vector<4x12xf32>
    %142 = vector.extract_strided_slice %1 {offsets = [1, 0, 0], sizes = [1, 1, 16], strides = [1, 1, 1]} : vector<2x1x16xf32> to vector<1x1x16xf32>
    %143 = vector.shape_cast %142 : vector<1x1x16xf32> to vector<1x16xf32>
    %144 = vector.extract_strided_slice %143 {offsets = [0, 0], sizes = [1, 12], strides = [1, 1]} : vector<1x16xf32> to vector<1x12xf32>
    %145 = vector.extract_strided_slice %0 {offsets = [1, 0, 0], sizes = [1, 4, 16], strides = [1, 1, 1]} : vector<2x4x16xf32> to vector<1x4x16xf32>
    %146 = vector.shape_cast %145 : vector<1x4x16xf32> to vector<4x16xf32>
    %147 = vector.extract_strided_slice %146 {offsets = [0, 12], sizes = [4, 4], strides = [1, 1]} : vector<4x16xf32> to vector<4x4xf32>
    %148 = vector.extract_strided_slice %1 {offsets = [1, 0, 0], sizes = [1, 1, 16], strides = [1, 1, 1]} : vector<2x1x16xf32> to vector<1x1x16xf32>
    %149 = vector.shape_cast %148 : vector<1x1x16xf32> to vector<1x16xf32>
    %150 = vector.extract_strided_slice %149 {offsets = [0, 12], sizes = [1, 4], strides = [1, 1]} : vector<1x16xf32> to vector<1x4xf32>
    %151 = vector.shape_cast %138 : vector<8x8x4xf32> to vector<64x4xf32>
    %cst_35 = arith.constant dense<0.000000e+00> : vector<64x12xf32>
    %152 = tpu.matmul %151, %141, %cst_35 {dimension_numbers = #tpu.dot_dimension_numbers<[1], [0], [0], [1], [0, 0, 1, 1], [], []>} : vector<64x4xf32>, vector<4x12xf32>, vector<64x12xf32> -> vector<64x12xf32>
    %153 = vector.broadcast %144 : vector<1x12xf32> to vector<64x12xf32>
    %154 = arith.addf %152, %153 : vector<64x12xf32>
    %155 = vector.extract_strided_slice %154 {offsets = [0, 0], sizes = [64, 2], strides = [1, 1]} : vector<64x12xf32> to vector<64x2xf32>
    %156 = vector.shape_cast %155 : vector<64x2xf32> to vector<8x8x2xf32>
    %cst_36 = arith.constant 0.707106769 : f32
    %157 = vector.broadcast %cst_36 : f32 to vector<8x8x2xf32>
    %158 = arith.mulf %156, %157 : vector<8x8x2xf32>
    %159 = vector.extract_strided_slice %154 {offsets = [0, 4], sizes = [64, 2], strides = [1, 1]} : vector<64x12xf32> to vector<64x2xf32>
    %160 = vector.shape_cast %159 : vector<64x2xf32> to vector<8x8x2xf32>
    %161 = vector.extract_strided_slice %154 {offsets = [0, 8], sizes = [64, 2], strides = [1, 1]} : vector<64x12xf32> to vector<64x2xf32>
    %162 = vector.shape_cast %161 : vector<64x2xf32> to vector<8x8x2xf32>
    "tpu.trace_start"() <{level = 10 : i32, message = "bqd,bkd->bqk"}> : () -> ()
    %cst_37 = arith.constant dense<0.000000e+00> : vector<8x8x8xf32>
    %163 = tpu.matmul %158, %160, %cst_37 {dimension_numbers = #tpu.dot_dimension_numbers<[2], [2], [1], [1], [0, 0, 0, 1, 1, 1], [0], [0]>} : vector<8x8x2xf32>, vector<8x8x2xf32>, vector<8x8x8xf32> -> vector<8x8x8xf32>
    "tpu.trace_stop"() : () -> ()
    %cst_38 = arith.constant dense<0xFF800000> : vector<8x8xf32>
    %164 = vector.multi_reduction <maximumf>, %163, %cst_38 [2] : vector<8x8x8xf32> to vector<8x8xf32>
    %165 = vector.shape_cast %164 : vector<8x8xf32> to vector<8x8x1xf32>
    %166 = vector.broadcast %165 : vector<8x8x1xf32> to vector<8x8x8xf32>
    %167 = arith.subf %163, %166 : vector<8x8x8xf32>
    %168 = math.exp %167 : vector<8x8x8xf32>
    %cst_39 = arith.constant dense<0.000000e+00> : vector<8x8xf32>
    %169 = vector.multi_reduction <add>, %168, %cst_39 [2] : vector<8x8x8xf32> to vector<8x8xf32>
    %170 = vector.shape_cast %169 : vector<8x8xf32> to vector<8x8x1xf32>
    %171 = tpu.reciprocal %170 {approx = true} : vector<8x8x1xf32> -> vector<8x8x1xf32>
    %172 = vector.broadcast %171 : vector<8x8x1xf32> to vector<8x8x8xf32>
    %173 = arith.mulf %168, %172 : vector<8x8x8xf32>
    "tpu.trace_start"() <{level = 10 : i32, message = "bqk,bkd->bqd"}> : () -> ()
    %cst_40 = arith.constant dense<0.000000e+00> : vector<8x8x2xf32>
    %174 = tpu.matmul %173, %162, %cst_40 {dimension_numbers = #tpu.dot_dimension_numbers<[2], [1], [1], [2], [0, 0, 0, 1, 1, 2], [0], [0]>} : vector<8x8x8xf32>, vector<8x8x2xf32>, vector<8x8x2xf32> -> vector<8x8x2xf32>
    "tpu.trace_stop"() : () -> ()
    %175 = vector.extract_strided_slice %154 {offsets = [0, 2], sizes = [64, 2], strides = [1, 1]} : vector<64x12xf32> to vector<64x2xf32>
    %176 = vector.shape_cast %175 : vector<64x2xf32> to vector<8x8x2xf32>
    %cst_41 = arith.constant 0.707106769 : f32
    %177 = vector.broadcast %cst_41 : f32 to vector<8x8x2xf32>
    %178 = arith.mulf %176, %177 : vector<8x8x2xf32>
    %179 = vector.extract_strided_slice %154 {offsets = [0, 6], sizes = [64, 2], strides = [1, 1]} : vector<64x12xf32> to vector<64x2xf32>
    %180 = vector.shape_cast %179 : vector<64x2xf32> to vector<8x8x2xf32>
    %181 = vector.extract_strided_slice %154 {offsets = [0, 10], sizes = [64, 2], strides = [1, 1]} : vector<64x12xf32> to vector<64x2xf32>
    %182 = vector.shape_cast %181 : vector<64x2xf32> to vector<8x8x2xf32>
    "tpu.trace_start"() <{level = 10 : i32, message = "bqd,bkd->bqk"}> : () -> ()
    %cst_42 = arith.constant dense<0.000000e+00> : vector<8x8x8xf32>
    %183 = tpu.matmul %178, %180, %cst_42 {dimension_numbers = #tpu.dot_dimension_numbers<[2], [2], [1], [1], [0, 0, 0, 1, 1, 1], [0], [0]>} : vector<8x8x2xf32>, vector<8x8x2xf32>, vector<8x8x8xf32> -> vector<8x8x8xf32>
    "tpu.trace_stop"() : () -> ()
    %cst_43 = arith.constant dense<0xFF800000> : vector<8x8xf32>
    %184 = vector.multi_reduction <maximumf>, %183, %cst_43 [2] : vector<8x8x8xf32> to vector<8x8xf32>
    %185 = vector.shape_cast %184 : vector<8x8xf32> to vector<8x8x1xf32>
    %186 = vector.broadcast %185 : vector<8x8x1xf32> to vector<8x8x8xf32>
    %187 = arith.subf %183, %186 : vector<8x8x8xf32>
    %188 = math.exp %187 : vector<8x8x8xf32>
    %cst_44 = arith.constant dense<0.000000e+00> : vector<8x8xf32>
    %189 = vector.multi_reduction <add>, %188, %cst_44 [2] : vector<8x8x8xf32> to vector<8x8xf32>
    %190 = vector.shape_cast %189 : vector<8x8xf32> to vector<8x8x1xf32>
    %191 = tpu.reciprocal %190 {approx = true} : vector<8x8x1xf32> -> vector<8x8x1xf32>
    %192 = vector.broadcast %191 : vector<8x8x1xf32> to vector<8x8x8xf32>
    %193 = arith.mulf %188, %192 : vector<8x8x8xf32>
    "tpu.trace_start"() <{level = 10 : i32, message = "bqk,bkd->bqd"}> : () -> ()
    %cst_45 = arith.constant dense<0.000000e+00> : vector<8x8x2xf32>
    %194 = tpu.matmul %193, %182, %cst_45 {dimension_numbers = #tpu.dot_dimension_numbers<[2], [1], [1], [2], [0, 0, 0, 1, 1, 2], [0], [0]>} : vector<8x8x8xf32>, vector<8x8x2xf32>, vector<8x8x2xf32> -> vector<8x8x2xf32>
    "tpu.trace_stop"() : () -> ()
    %195 = tpu.concatenate %174, %194 in 2 : vector<8x8x2xf32>, vector<8x8x2xf32> -> vector<8x8x4xf32>
    %196 = vector.shape_cast %195 : vector<8x8x4xf32> to vector<64x4xf32>
    %cst_46 = arith.constant dense<0.000000e+00> : vector<64x4xf32>
    %197 = tpu.matmul %196, %147, %cst_46 {dimension_numbers = #tpu.dot_dimension_numbers<[1], [0], [0], [1], [0, 0, 1, 1], [], []>} : vector<64x4xf32>, vector<4x4xf32>, vector<64x4xf32> -> vector<64x4xf32>
    %198 = vector.broadcast %150 : vector<1x4xf32> to vector<64x4xf32>
    %199 = arith.addf %197, %198 : vector<64x4xf32>
    %200 = vector.shape_cast %199 : vector<64x4xf32> to vector<8x8x4xf32>
    %201 = vector.shape_cast %200 : vector<8x8x4xf32> to vector<2x4x8x4xf32>
    %202 = vector.extract_strided_slice %201 {offsets = [0, 0, 0, 0], sizes = [2, 1, 8, 4], strides = [1, 1, 1, 1]} : vector<2x4x8x4xf32> to vector<2x1x8x4xf32>
    %203 = vector.shape_cast %202 : vector<2x1x8x4xf32> to vector<2x8x4xf32>
    %204 = vector.shape_cast %203 : vector<2x8x4xf32> to vector<16x4xf32>
    %205 = vector.extract_strided_slice %201 {offsets = [0, 1, 0, 0], sizes = [2, 1, 8, 4], strides = [1, 1, 1, 1]} : vector<2x4x8x4xf32> to vector<2x1x8x4xf32>
    %206 = vector.shape_cast %205 : vector<2x1x8x4xf32> to vector<2x8x4xf32>
    %207 = vector.shape_cast %206 : vector<2x8x4xf32> to vector<16x4xf32>
    %208 = vector.extract_strided_slice %201 {offsets = [0, 2, 0, 0], sizes = [2, 1, 8, 4], strides = [1, 1, 1, 1]} : vector<2x4x8x4xf32> to vector<2x1x8x4xf32>
    %209 = vector.shape_cast %208 : vector<2x1x8x4xf32> to vector<2x8x4xf32>
    %210 = vector.shape_cast %209 : vector<2x8x4xf32> to vector<16x4xf32>
    %211 = vector.extract_strided_slice %201 {offsets = [0, 3, 0, 0], sizes = [2, 1, 8, 4], strides = [1, 1, 1, 1]} : vector<2x4x8x4xf32> to vector<2x1x8x4xf32>
    %212 = vector.shape_cast %211 : vector<2x1x8x4xf32> to vector<2x8x4xf32>
    %213 = vector.shape_cast %212 : vector<2x8x4xf32> to vector<16x4xf32>
    %214 = tpu.concatenate %204, %207, %210, %213 in 1 : vector<16x4xf32>, vector<16x4xf32>, vector<16x4xf32>, vector<16x4xf32> -> vector<16x16xf32>
    %215 = vector.extract_strided_slice %2 {offsets = [1, 0, 0], sizes = [1, 16, 16], strides = [1, 1, 1]} : vector<2x16x16xf32> to vector<1x16x16xf32>
    %216 = vector.shape_cast %215 : vector<1x16x16xf32> to vector<16x16xf32>
    %cst_47 = arith.constant dense<0.000000e+00> : vector<16x16xf32>
    %217 = tpu.matmul %214, %216, %cst_47 {dimension_numbers = #tpu.dot_dimension_numbers<[1], [0], [0], [1], [0, 0, 1, 1], [], []>} : vector<16x16xf32>, vector<16x16xf32>, vector<16x16xf32> -> vector<16x16xf32>
    %218 = vector.extract_strided_slice %3 {offsets = [1, 0, 0], sizes = [1, 1, 16], strides = [1, 1, 1]} : vector<2x3x16xf32> to vector<1x1x16xf32>
    %219 = vector.shape_cast %218 : vector<1x1x16xf32> to vector<1x16xf32>
    %220 = vector.broadcast %219 : vector<1x16xf32> to vector<16x16xf32>
    %221 = arith.addf %217, %220 : vector<16x16xf32>
    %cst_48 = arith.constant 5.000000e-01 : f32
    %222 = vector.broadcast %cst_48 : f32 to vector<16x16xf32>
    %223 = arith.mulf %222, %221 : vector<16x16xf32>
    %cst_49 = arith.constant 0.707106769 : f32
    %224 = vector.broadcast %cst_49 : f32 to vector<16x16xf32>
    %225 = arith.mulf %221, %224 : vector<16x16xf32>
    %226 = math.erf %225 : vector<16x16xf32>
    %cst_50 = arith.constant 1.000000e+00 : f32
    %227 = vector.broadcast %cst_50 : f32 to vector<16x16xf32>
    %228 = arith.addf %227, %226 : vector<16x16xf32>
    %229 = arith.mulf %223, %228 : vector<16x16xf32>
    %230 = arith.addf %229, %127 : vector<16x16xf32>
    %231 = vector.extract_strided_slice %3 {offsets = [1, 1, 0], sizes = [1, 1, 16], strides = [1, 1, 1]} : vector<2x3x16xf32> to vector<1x1x16xf32>
    %232 = vector.shape_cast %231 : vector<1x1x16xf32> to vector<1x16xf32>
    %233 = vector.extract_strided_slice %3 {offsets = [1, 2, 0], sizes = [1, 1, 16], strides = [1, 1, 1]} : vector<2x3x16xf32> to vector<1x1x16xf32>
    %234 = vector.shape_cast %233 : vector<1x1x16xf32> to vector<1x16xf32>
    %cst_51 = arith.constant dense<0.000000e+00> : vector<16xf32>
    %235 = vector.multi_reduction <add>, %230, %cst_51 [1] : vector<16x16xf32> to vector<16xf32>
    %236 = vector.shape_cast %235 : vector<16xf32> to vector<16x1xf32>
    %cst_52 = arith.constant 1.600000e+01 : f32
    %237 = vector.broadcast %cst_52 : f32 to vector<16x1xf32>
    %238 = arith.divf %236, %237 : vector<16x1xf32>
    %239 = vector.broadcast %238 : vector<16x1xf32> to vector<16x16xf32>
    %240 = arith.subf %230, %239 : vector<16x16xf32>
    %241 = arith.mulf %240, %240 : vector<16x16xf32>
    %cst_53 = arith.constant dense<0.000000e+00> : vector<16xf32>
    %242 = vector.multi_reduction <add>, %241, %cst_53 [1] : vector<16x16xf32> to vector<16xf32>
    %243 = vector.shape_cast %242 : vector<16xf32> to vector<16x1xf32>
    %cst_54 = arith.constant 1.600000e+01 : f32
    %244 = vector.broadcast %cst_54 : f32 to vector<16x1xf32>
    %245 = arith.divf %243, %244 : vector<16x1xf32>
    %246 = vector.broadcast %238 : vector<16x1xf32> to vector<16x16xf32>
    %247 = arith.subf %230, %246 : vector<16x16xf32>
    %cst_55 = arith.constant 9.99999974E-6 : f32
    %248 = vector.broadcast %cst_55 : f32 to vector<16x1xf32>
    %249 = arith.addf %245, %248 : vector<16x1xf32>
    %250 = math.rsqrt %249 : vector<16x1xf32>
    %251 = vector.broadcast %250 : vector<16x1xf32> to vector<16x16xf32>
    %252 = arith.mulf %247, %251 : vector<16x16xf32>
    %253 = vector.broadcast %232 : vector<1x16xf32> to vector<16x16xf32>
    %254 = arith.mulf %252, %253 : vector<16x16xf32>
    %255 = vector.broadcast %234 : vector<1x16xf32> to vector<16x16xf32>
    %256 = arith.addf %254, %255 : vector<16x16xf32>
    %257 = vector.shape_cast %256 : vector<16x16xf32> to vector<2x8x16xf32>
    %c0_56 = arith.constant 0 : index
    %c0_57 = arith.constant 0 : index
    %c0_58 = arith.constant 0 : index
    %258 = vector.load %arg6[%c0_56, %c0_57, %c0_58] : memref<2x8x16xf32, #tpu.memory_space<vmem>>, vector<2x8x16xf32>
    tpu.vector_store %arg6[%c0_56, %c0_57, %c0_58], %257 {strides = array<i32>} : memref<2x8x16xf32, #tpu.memory_space<vmem>>, vector<2x8x16xf32>,
    return
  }
  func.func @transform_0(%arg0: i32) -> (i32, i32, i32, i32) {
    %c0_i32 = arith.constant 0 : i32
    %c0_i32_0 = arith.constant 0 : i32
    %c0_i32_1 = arith.constant 0 : i32
    %c0_i32_2 = arith.constant 0 : i32
    return %arg0, %c0_i32, %c0_i32_0, %c0_i32_1 : i32, i32, i32, i32
  }
  func.func @transform_1(%arg0: i32) -> (i32, i32, i32) {
    %c0_i32 = arith.constant 0 : i32
    %c0_i32_0 = arith.constant 0 : i32
    %c0_i32_1 = arith.constant 0 : i32
    %c0_i32_2 = arith.constant 0 : i32
    return %c0_i32, %c0_i32_0, %c0_i32_1 : i32, i32, i32
  }
  func.func @transform_2(%arg0: i32) -> (i32, i32, i32) {
    %c0_i32 = arith.constant 0 : i32
    %c0_i32_0 = arith.constant 0 : i32
    %c0_i32_1 = arith.constant 0 : i32
    %c0_i32_2 = arith.constant 0 : i32
    return %c0_i32, %c0_i32_0, %c0_i32_1 : i32, i32, i32
  }
  func.func @transform_3(%arg0: i32) -> (i32, i32, i32) {
    %c0_i32 = arith.constant 0 : i32
    %c0_i32_0 = arith.constant 0 : i32
    %c0_i32_1 = arith.constant 0 : i32
    %c0_i32_2 = arith.constant 0 : i32
    return %c0_i32, %c0_i32_0, %c0_i32_1 : i32, i32, i32
  }
  func.func @transform_4(%arg0: i32) -> (i32, i32, i32) {
    %c0_i32 = arith.constant 0 : i32
    %c0_i32_0 = arith.constant 0 : i32
    %c0_i32_1 = arith.constant 0 : i32
    %c0_i32_2 = arith.constant 0 : i32
    return %c0_i32, %c0_i32_0, %c0_i32_1 : i32, i32, i32
  }
  func.func @transform_5(%arg0: i32) -> (i32, i32, i32) {
    %c0_i32 = arith.constant 0 : i32
    %c0_i32_0 = arith.constant 0 : i32
    %c0_i32_1 = arith.constant 0 : i32
    return %arg0, %c0_i32, %c0_i32_0 : i32, i32, i32
  }
}

</mosaic_0001>

<llo_original>
// kernel: tpu_custom_call.1
$region0: #{tpu_custom_call.1}
  #allocation0 [shape = 'u32[]', space=smem, size = 0x4, offset = 0x4, fixed_abs, tag = 'smem constant byte address 0x4 - core index']
  #allocation1 [shape = 'u32[144,128]{1,0:T(1,128)}', space=vmem, size = 0x12000, scoped, tag = 'internal scratch']
  %s0 = inlined_call_operand.vmem [shape: f32[2,8,4,4], index: 0, kind: input, shape index: {}]
  %s1 = inlined_call_operand.vmem [shape: f32[2,4,16], index: 1, kind: input, shape index: {}]
  %s2 = inlined_call_operand.vmem [shape: f32[2,1,16], index: 2, kind: input, shape index: {}]
  %s3 = inlined_call_operand.vmem [shape: f32[2,16,16], index: 3, kind: input, shape index: {}]
  %s4 = inlined_call_operand.vmem [shape: f32[2,3,16], index: 4, kind: input, shape index: {}]
  %s5 = inlined_call_operand.hbm [shape: f32[2,8,16], index: 5, kind: output, shape index: {}]
  %s6 = sld [smem:[#allocation0]]
  $region30: #{tpu_custom_call.1} parent=0
    _
  %s8 = ssub.s32 1, %s6
  %s9 = scalar_select 0, %s8, %s6
  $region1: #{tpu_custom_call.1} parent=0
    #allocation2 [shape = 'u8[8192]{0}', space=vmem, size = 0x2000, scoped, tag = 'output window, operand 0, single buffered']
    #allocation3 [shape = 's32[1]{0}', space=sflag, size = 0x4, scoped, tag = 'scoped memory for tpu_custom_call.1']
    %10 = vsyncpa [#allocation3], 0
    // Predicated region
    $region2: #{tpu_custom_call.1} parent=1 // pred_check
      _
    $region3: #{tpu_custom_call.1} parent=1 // pred_check_branch
      %12 = sbr.rel (0) target = $region5
    $region4: #{tpu_custom_call.1} parent=1 // pred_region
      _
    $region5: #{tpu_custom_call.1} parent=1 // pred_fallthru
      _
    // Predicated region
    $region6: #{tpu_custom_call.1} parent=1 // pred_check
      _
    $region7: #{tpu_custom_call.1} parent=1 // pred_check_branch
      %14 = sbr.rel (0) target = $region9
    $region8: #{tpu_custom_call.1} parent=1 // pred_region
      _
    $region9: #{tpu_custom_call.1} parent=1 // pred_fallthru
      _
    // Predicated region
    $region10: #{tpu_custom_call.1} parent=1 // pred_check
      _
    $region11: #{tpu_custom_call.1} parent=1 // pred_check_branch
      %16 = sbr.rel (0) target = $region13
    $region12: #{tpu_custom_call.1} parent=1 // pred_region
      _
    $region13: #{tpu_custom_call.1} parent=1 // pred_fallthru
      _
    // Predicated region
    $region14: #{tpu_custom_call.1} parent=1 // pred_check
      _
    $region15: #{tpu_custom_call.1} parent=1 // pred_check_branch
      %18 = sbr.rel (0) target = $region17
    $region16: #{tpu_custom_call.1} parent=1 // pred_region
      _
    $region17: #{tpu_custom_call.1} parent=1 // pred_fallthru
      _
    // Predicated region
    $region18: #{tpu_custom_call.1} parent=1 // pred_check
      _
    $region19: #{tpu_custom_call.1} parent=1 // pred_check_branch
      %20 = sbr.rel (0) target = $region21
    $region20: #{tpu_custom_call.1} parent=1 // pred_region
      _
    $region21: #{tpu_custom_call.1} parent=1 // pred_fallthru
      _
    %v21 = vld [vmem:[%s1] sm:$0xf]
    %v22 = vld [vmem:[%s1 + $0x4] sm:$0xf]
    %v23 = vld [vmem:[%s2] sm:$0x1]
    %v24 = vld [vmem:[%s2 + $0x1] sm:$0x1]
    %v25 = vld [vmem:[%s3] sm:$0xff]
    %v26 = vld [vmem:[%s3 + $0x8] sm:$0xff]
    %v27 = vld [vmem:[%s3 + $0x10] sm:$0xff]
    %v28 = vld [vmem:[%s3 + $0x18] sm:$0xff]
    %v29 = vld [vmem:[%s4] sm:$0x7]
    %v30 = vld [vmem:[%s4 + $0x4] sm:$0x7]
    %v31 = vld [vmem:[%s0] sm:$0xf]
    %v32 = vld [vmem:[%s0 + $0x4] sm:$0xf]
    %v33 = vld [vmem:[%s0 + $0x8] sm:$0xf]
    %v34 = vld [vmem:[%s0 + $0xc] sm:$0xf]
    %v35 = vld [vmem:[%s0 + $0x10] sm:$0xf]
    %v36 = vld [vmem:[%s0 + $0x14] sm:$0xf]
    %v37 = vld [vmem:[%s0 + $0x18] sm:$0xf]
    %v38 = vld [vmem:[%s0 + $0x1c] sm:$0xf]
    %v39 = vld [vmem:[%s0 + $0x20] sm:$0xf]
    %v40 = vld [vmem:[%s0 + $0x24] sm:$0xf]
    %v41 = vld [vmem:[%s0 + $0x28] sm:$0xf]
    %v42 = vld [vmem:[%s0 + $0x2c] sm:$0xf]
    %v43 = vld [vmem:[%s0 + $0x30] sm:$0xf]
    %v44 = vld [vmem:[%s0 + $0x34] sm:$0xf]
    %v45 = vld [vmem:[%s0 + $0x38] sm:$0xf]
    %v46 = vld [vmem:[%s0 + $0x3c] sm:$0xf]
    %v63 = vrot.slane %v32, 7
    %vm64 = vcmask 1041409
    %v65 = vsel %vm64, %v63, %v31
    %v66 = vrot.slane %v33, 6
    %vm67 = vcmask 1042434
    %v68 = vsel %vm67, %v66, %v65
    %v69 = vrot.slane %v34, 5
    %vm70 = vcmask 1043459
    %v71 = vsel %vm70, %v69, %v68
    %v72 = vrot.slane %v35, 4
    %vm73 = vcmask 1044484
    %v74 = vsel %vm73, %v72, %v71
    %v75 = vrot.slane %v36, 3
    %vm76 = vcmask 1045509
    %v77 = vsel %vm76, %v75, %v74
    %v78 = vrot.slane %v37, 2
    %vm79 = vcmask 1046534
    %v80 = vsel %vm79, %v78, %v77
    %v81 = vrot.slane %v38, 1
    %vm82 = vcmask 1047559
    %v83 = vsel %vm82, %v81, %v80
    %v84 = vrot.slane %v40, 7
    %v85 = vsel %vm64, %v84, %v39
    %v86 = vrot.slane %v41, 6
    %v87 = vsel %vm67, %v86, %v85
    %v88 = vrot.slane %v42, 5
    %v89 = vsel %vm70, %v88, %v87
    %v90 = vrot.slane %v43, 4
    %v91 = vsel %vm73, %v90, %v89
    %v92 = vrot.slane %v44, 3
    %v93 = vsel %vm76, %v92, %v91
    %v94 = vrot.slane %v45, 2
    %v95 = vsel %vm79, %v94, %v93
    %v96 = vrot.slane %v46, 1
    %v97 = vsel %vm82, %v96, %v95
    %v100 = vrot.slane %v31, 1
    %v101 = vsel %vm64, %v32, %v100
    %v102 = vrot.slane %v33, 7
    %v103 = vsel %vm67, %v102, %v101
    %v104 = vrot.slane %v34, 6
    %v105 = vsel %vm70, %v104, %v103
    %v106 = vrot.slane %v35, 5
    %v107 = vsel %vm73, %v106, %v105
    %v108 = vrot.slane %v36, 4
    %v109 = vsel %vm76, %v108, %v107
    %v110 = vrot.slane %v37, 3
    %v111 = vsel %vm79, %v110, %v109
    %v112 = vrot.slane %v38, 2
    %v113 = vsel %vm82, %v112, %v111
    %v114 = vrot.slane %v39, 1
    %v115 = vsel %vm64, %v40, %v114
    %v116 = vrot.slane %v41, 7
    %v117 = vsel %vm67, %v116, %v115
    %v118 = vrot.slane %v42, 6
    %v119 = vsel %vm70, %v118, %v117
    %v120 = vrot.slane %v43, 5
    %v121 = vsel %vm73, %v120, %v119
    %v122 = vrot.slane %v44, 4
    %v123 = vsel %vm76, %v122, %v121
    %v124 = vrot.slane %v45, 3
    %v125 = vsel %vm79, %v124, %v123
    %v126 = vrot.slane %v46, 2
    %v127 = vsel %vm82, %v126, %v125
    %128 = vrot.lane.b32.xlu0 %v113, 4
    %v129 = vpop.permute.xlu0 %128
    %130 = vrot.lane.b32.xlu0 %v127, 4
    %v131 = vpop.permute.xlu0 %130
    %v134 = vrot.slane %v31, 2
    %v135 = vrot.slane %v32, 1
    %v136 = vsel %vm64, %v135, %v134
    %v137 = vsel %vm67, %v33, %v136
    %v138 = vrot.slane %v34, 7
    %v139 = vsel %vm70, %v138, %v137
    %v140 = vrot.slane %v35, 6
    %v141 = vsel %vm73, %v140, %v139
    %v142 = vrot.slane %v36, 5
    %v143 = vsel %vm76, %v142, %v141
    %v144 = vrot.slane %v37, 4
    %v145 = vsel %vm79, %v144, %v143
    %v146 = vrot.slane %v38, 3
    %v147 = vsel %vm82, %v146, %v145
    %v148 = vrot.slane %v39, 2
    %v149 = vrot.slane %v40, 1
    %v150 = vsel %vm64, %v149, %v148
    %v151 = vsel %vm67, %v41, %v150
    %v152 = vrot.slane %v42, 7
    %v153 = vsel %vm70, %v152, %v151
    %v154 = vrot.slane %v43, 6
    %v155 = vsel %vm73, %v154, %v153
    %v156 = vrot.slane %v44, 5
    %v157 = vsel %vm76, %v156, %v155
    %v158 = vrot.slane %v45, 4
    %v159 = vsel %vm79, %v158, %v157
    %v160 = vrot.slane %v46, 3
    %v161 = vsel %vm82, %v160, %v159
    %162 = vrot.lane.b32.xlu0 %v147, 8
    %v163 = vpop.permute.xlu0 %162
    %164 = vrot.lane.b32.xlu0 %v161, 8
    %v165 = vpop.permute.xlu0 %164
    %v168 = vrot.slane %v31, 3
    %v169 = vrot.slane %v32, 2
    %v170 = vsel %vm64, %v169, %v168
    %v171 = vrot.slane %v33, 1
    %v172 = vsel %vm67, %v171, %v170
    %v173 = vsel %vm70, %v34, %v172
    %v174 = vrot.slane %v35, 7
    %v175 = vsel %vm73, %v174, %v173
    %v176 = vrot.slane %v36, 6
    %v177 = vsel %vm76, %v176, %v175
    %v178 = vrot.slane %v37, 5
    %v179 = vsel %vm79, %v178, %v177
    %v180 = vrot.slane %v38, 4
    %v181 = vsel %vm82, %v180, %v179
    %v182 = vrot.slane %v39, 3
    %v183 = vrot.slane %v40, 2
    %v184 = vsel %vm64, %v183, %v182
    %v185 = vrot.slane %v41, 1
    %v186 = vsel %vm67, %v185, %v184
    %v187 = vsel %vm70, %v42, %v186
    %v188 = vrot.slane %v43, 7
    %v189 = vsel %vm73, %v188, %v187
    %v190 = vrot.slane %v44, 6
    %v191 = vsel %vm76, %v190, %v189
    %v192 = vrot.slane %v45, 5
    %v193 = vsel %vm79, %v192, %v191
    %v194 = vrot.slane %v46, 4
    %v195 = vsel %vm82, %v194, %v193
    %196 = vrot.lane.b32.xlu0 %v181, 12
    %v197 = vpop.permute.xlu0 %196
    %198 = vrot.lane.b32.xlu0 %v195, 12
    %v199 = vpop.permute.xlu0 %198
    %vm202 = vcmask 31744
    %v203 = vsel %vm202, %v83, %v129
    %v204 = vsel %vm202, %v97, %v131
    %vm205 = vcmask 64512
    %v206 = vsel %vm205, %v203, %v163
    %v207 = vsel %vm205, %v204, %v165
    %vm208 = vcmask 97280
    %v209 = vsel %vm208, %v206, %v197
    %v210 = vsel %vm208, %v207, %v199
    %v212 = vlaneseq
    %v213 = vshrl.u32 %v212, 7
    %v214 = vsub.s32 0, %v213
    %v215 = vrot.slane %v23, %v214
    %v217 = vcombine.low %v31, %v32
    %v218 = vcombine.low %v33, %v34
    %v219 = vcombine.low %v35, %v36
    %v220 = vcombine.low %v37, %v38
    %v221 = vcombine.low %v39, %v40
    %v222 = vcombine.low %v41, %v42
    %v223 = vcombine.low %v43, %v44
    %v224 = vcombine.low %v45, %v46
    %v225 = vsel %vm202, %v217, 0
    %v227 = vsel %vm202, %v218, 0
    %v229 = vsel %vm202, %v219, 0
    %v231 = vsel %vm202, %v220, 0
    %v233 = vsel %vm202, %v221, 0
    %v235 = vsel %vm202, %v222, 0
    %v237 = vsel %vm202, %v223, 0
    %v239 = vsel %vm202, %v224, 0
    %vm241 = vcmask 1043456
    %v243 = vsel %vm241, %v21, 0
    %245 = vmatprep.subr.mxu0 0.0
    %246 = vmatpush1.msra.mxu0 %v243
    %247 = vmatprep.subr.mxu0 0.0
    %248 = vmatpush1.msra.mxu0 0.0
    %249 = vmatprep.subr.mxu0 0.0
    %250 = vmatpush1.msra.mxu0 0.0
    %251 = vmatprep.subr.mxu0 0.0
    %252 = vmatpush1.msra.mxu0 0.0
    %253 = vmatprep.subr.mxu0 0.0
    %254 = vmatpush1.msra.mxu0 0.0
    %255 = vmatprep.subr.mxu0 0.0
    %256 = vmatpush1.msra.mxu0 0.0
    %257 = vmatprep.subr.mxu0 0.0
    %258 = vmatpush1.msra.mxu0 0.0
    %259 = vmatprep.subr.mxu0 0.0
    %260 = vmatpush1.msra.mxu0 0.0
    %261 = vmatprep.subr.mxu0 0.0
    %262 = vmatpush1.msra.mxu0 0.0
    %263 = vmatprep.subr.mxu0 0.0
    %264 = vmatpush1.msra.mxu0 0.0
    %265 = vmatprep.subr.mxu0 0.0
    %266 = vmatpush1.msra.mxu0 0.0
    %267 = vmatprep.subr.mxu0 0.0
    %268 = vmatpush1.msra.mxu0 0.0
    %269 = vmatprep.subr.mxu0 0.0
    %270 = vmatpush1.msra.mxu0 0.0
    %271 = vmatprep.subr.mxu0 0.0
    %272 = vmatpush1.msra.mxu0 0.0
    %273 = vmatprep.subr.mxu0 0.0
    %274 = vmatpush1.msra.mxu0 0.0
    %275 = vmatprep.subr.mxu0 0.0
    %276 = vmatpush1.msra.mxu0 0.0
    %277 = vmatprep.subr.mxu0 0.0
    %278 = vmatpush1.msra.mxu0 0.0
    %279 = vmatprep.subr.mxu0 0.0
    %280 = vmatpush1.msra.mxu0 0.0
    %281 = vmatprep.subr.mxu0 0.0
    %282 = vmatpush1.msra.mxu0 0.0
    %283 = vmatprep.subr.mxu0 0.0
    %284 = vmatpush1.msra.mxu0 0.0
    %285 = vmatprep.subr.mxu0 0.0
    %286 = vmatpush1.msra.mxu0 0.0
    %287 = vmatprep.subr.mxu0 0.0
    %288 = vmatpush1.msra.mxu0 0.0
    %289 = vmatprep.subr.mxu0 0.0
    %290 = vmatpush1.msra.mxu0 0.0
    %291 = vmatprep.subr.mxu0 0.0
    %292 = vmatpush1.msra.mxu0 0.0
    %293 = vmatprep.subr.mxu0 0.0
    %294 = vmatpush1.msra.mxu0 0.0
    %295 = vmatprep.subr.mxu0 0.0
    %296 = vmatpush1.msra.mxu0 0.0
    %297 = vmatprep.subr.mxu0 0.0
    %298 = vmatpush1.msra.mxu0 0.0
    %299 = vmatprep.subr.mxu0 0.0
    %300 = vmatpush1.msra.mxu0 0.0
    %301 = vmatprep.subr.mxu0 0.0
    %302 = vmatpush1.msra.mxu0 0.0
    %303 = vmatprep.subr.mxu0 0.0
    %304 = vmatpush1.msra.mxu0 0.0
    %305 = vmatprep.subr.mxu0 0.0
    %306 = vmatpush1.msra.mxu0 0.0
    %307 = vmatprep.subr.mxu0 0.0
    %308 = vmatpush1.msra.mxu0 0.0
    %309 = vmatprep.mubr.f32.mxu0 0.0
    %310 = vmatmul.mubr.f32.gmra.mrb[0].mxu0 %v225
    %v311 = vpop.f32.mrb[0].mxu0
    %v312 = vadd.f32 %v215, %v311
    %v313 = vpop.f32.mrb[0].mxu0
    %314 = vmatprep.mubr.f32.mxu0 0.0
    %315 = vmatmul.mubr.f32.gmra.mrb[0].mxu0 %v227
    %v316 = vpop.f32.mrb[0].mxu0
    %v317 = vadd.f32 %v215, %v316
    %v318 = vpop.f32.mrb[0].mxu0
    %319 = vmatprep.mubr.f32.mxu0 0.0
    %320 = vmatmul.mubr.f32.gmra.mrb[0].mxu0 %v229
    %v321 = vpop.f32.mrb[0].mxu0
    %v322 = vadd.f32 %v215, %v321
    %v323 = vpop.f32.mrb[0].mxu0
    %324 = vmatprep.mubr.f32.mxu0 0.0
    %325 = vmatmul.mubr.f32.gmra.mrb[0].mxu0 %v231
    %v326 = vpop.f32.mrb[0].mxu0
    %v327 = vadd.f32 %v215, %v326
    %v328 = vpop.f32.mrb[0].mxu0
    %329 = vmatprep.mubr.f32.mxu0 0.0
    %330 = vmatmul.mubr.f32.gmra.mrb[0].mxu0 %v233
    %v331 = vpop.f32.mrb[0].mxu0
    %v332 = vadd.f32 %v215, %v331
    %v333 = vpop.f32.mrb[0].mxu0
    %334 = vmatprep.mubr.f32.mxu0 0.0
    %335 = vmatmul.mubr.f32.gmra.mrb[0].mxu0 %v235
    %v336 = vpop.f32.mrb[0].mxu0
    %v337 = vadd.f32 %v215, %v336
    %v338 = vpop.f32.mrb[0].mxu0
    %339 = vmatprep.mubr.f32.mxu0 0.0
    %340 = vmatmul.mubr.f32.gmra.mrb[0].mxu0 %v237
    %v341 = vpop.f32.mrb[0].mxu0
    %v342 = vadd.f32 %v215, %v341
    %v343 = vpop.f32.mrb[0].mxu0
    %344 = vmatprep.mubr.f32.mxu0 0.0
    %345 = vmatmul.mubr.f32.gmra.mrb[0].mxu0 %v239
    %v346 = vpop.f32.mrb[0].mxu0
    %v347 = vadd.f32 %v215, %v346
    %v348 = vpop.f32.mrb[0].mxu0
    %349 = vdwg.mxu0
    %v358 = vcombine.high %v312, %v312
    %v359 = vcombine.high %v317, %v317
    %v360 = vcombine.high %v322, %v322
    %v361 = vcombine.high %v327, %v327
    %v362 = vcombine.high %v332, %v332
    %v363 = vcombine.high %v337, %v337
    %v364 = vcombine.high %v342, %v342
    %v365 = vcombine.high %v347, %v347
    %v374 = vmul.f32 %v312, 0.70710677
    %v375 = vmul.f32 %v358, 0.70710677
    %v376 = vmul.f32 %v317, 0.70710677
    %v377 = vmul.f32 %v359, 0.70710677
    %v378 = vmul.f32 %v322, 0.70710677
    %v379 = vmul.f32 %v360, 0.70710677
    %v380 = vmul.f32 %v327, 0.70710677
    %v381 = vmul.f32 %v361, 0.70710677
    %v382 = vmul.f32 %v332, 0.70710677
    %v383 = vmul.f32 %v362, 0.70710677
    %v384 = vmul.f32 %v337, 0.70710677
    %v385 = vmul.f32 %v363, 0.70710677
    %v386 = vmul.f32 %v342, 0.70710677
    %v387 = vmul.f32 %v364, 0.70710677
    %v388 = vmul.f32 %v347, 0.70710677
    %v389 = vmul.f32 %v365, 0.70710677
    %390 = vrot.lane.b32.xlu0 %v312, 124
    %v391 = vpop.permute.xlu0 %390
    %vm392 = vcmask 15360
    %v394 = vsel %vm392, %v374, 0
    %v396 = vsel %vm392, %v391, 0
    %398 = vmatprep.subr.mxu0 0.0
    %399 = vmatpush1.xpose.msra.mxu0 %v396
    %400 = vmatprep.subr.mxu0 0.0
    %401 = vmatpush1.xpose.msra.mxu0 0.0
    %402 = vmatprep.subr.mxu0 0.0
    %403 = vmatpush1.xpose.msra.mxu0 0.0
    %404 = vmatprep.subr.mxu0 0.0
    %405 = vmatpush1.xpose.msra.mxu0 0.0
    %406 = vmatprep.subr.mxu0 0.0
    %407 = vmatpush1.xpose.msra.mxu0 0.0
    %408 = vmatprep.subr.mxu0 0.0
    %409 = vmatpush1.xpose.msra.mxu0 0.0
    %410 = vmatprep.subr.mxu0 0.0
    %411 = vmatpush1.xpose.msra.mxu0 0.0
    %412 = vmatprep.subr.mxu0 0.0
    %413 = vmatpush1.xpose.msra.mxu0 0.0
    %414 = vmatprep.subr.mxu0 0.0
    %415 = vmatpush1.xpose.msra.mxu0 0.0
    %416 = vmatprep.subr.mxu0 0.0
    %417 = vmatpush1.xpose.msra.mxu0 0.0
    %418 = vmatprep.subr.mxu0 0.0
    %419 = vmatpush1.xpose.msra.mxu0 0.0
    %420 = vmatprep.subr.mxu0 0.0
    %421 = vmatpush1.xpose.msra.mxu0 0.0
    %422 = vmatprep.subr.mxu0 0.0
    %423 = vmatpush1.xpose.msra.mxu0 0.0
    %424 = vmatprep.subr.mxu0 0.0
    %425 = vmatpush1.xpose.msra.mxu0 0.0
    %426 = vmatprep.subr.mxu0 0.0
    %427 = vmatpush1.xpose.msra.mxu0 0.0
    %428 = vmatprep.subr.mxu0 0.0
    %429 = vmatpush1.xpose.msra.mxu0 0.0
    %430 = vmatprep.subr.mxu0 0.0
    %431 = vmatpush1.xpose.msra.mxu0 0.0
    %432 = vmatprep.subr.mxu0 0.0
    %433 = vmatpush1.xpose.msra.mxu0 0.0
    %434 = vmatprep.subr.mxu0 0.0
    %435 = vmatpush1.xpose.msra.mxu0 0.0
    %436 = vmatprep.subr.mxu0 0.0
    %437 = vmatpush1.xpose.msra.mxu0 0.0
    %438 = vmatprep.subr.mxu0 0.0
    %439 = vmatpush1.xpose.msra.mxu0 0.0
    %440 = vmatprep.subr.mxu0 0.0
    %441 = vmatpush1.xpose.msra.mxu0 0.0
    %442 = vmatprep.subr.mxu0 0.0
    %443 = vmatpush1.xpose.msra.mxu0 0.0
    %444 = vmatprep.subr.mxu0 0.0
    %445 = vmatpush1.xpose.msra.mxu0 0.0
    %446 = vmatprep.subr.mxu0 0.0
    %447 = vmatpush1.xpose.msra.mxu0 0.0
    %448 = vmatprep.subr.mxu0 0.0
    %449 = vmatpush1.xpose.msra.mxu0 0.0
    %450 = vmatprep.subr.mxu0 0.0
    %451 = vmatpush1.xpose.msra.mxu0 0.0
    %452 = vmatprep.subr.mxu0 0.0
    %453 = vmatpush1.xpose.msra.mxu0 0.0
    %454 = vmatprep.subr.mxu0 0.0
    %455 = vmatpush1.xpose.msra.mxu0 0.0
    %456 = vmatprep.subr.mxu0 0.0
    %457 = vmatpush1.xpose.msra.mxu0 0.0
    %458 = vmatprep.subr.mxu0 0.0
    %459 = vmatpush1.xpose.msra.mxu0 0.0
    %460 = vmatprep.subr.mxu0 0.0
    %461 = vmatpush1.xpose.msra.mxu0 0.0
    %462 = vmatprep.mubr.f32.mxu0 0.0
    %463 = vmatmul.mubr.f32.gmra.mrb[0].mxu0 %v394
    %v464 = vpop.f32.mrb[0].mxu0
    %v465 = vadd.f32 0.0, %v464
    %v466 = vpop.f32.mrb[0].mxu0
    %467 = vdwg.mxu0
    %468 = vrot.lane.b32.xlu0 %v358, 124
    %v469 = vpop.permute.xlu0 %468
    %v471 = vsel %vm392, %v375, 0
    %v473 = vsel %vm392, %v469, 0
    %475 = vmatprep.subr.mxu0 0.0
    %476 = vmatpush1.xpose.msra.mxu0 %v473
    %477 = vmatprep.subr.mxu0 0.0
    %478 = vmatpush1.xpose.msra.mxu0 0.0
    %479 = vmatprep.subr.mxu0 0.0
    %480 = vmatpush1.xpose.msra.mxu0 0.0
    %481 = vmatprep.subr.mxu0 0.0
    %482 = vmatpush1.xpose.msra.mxu0 0.0
    %483 = vmatprep.subr.mxu0 0.0
    %484 = vmatpush1.xpose.msra.mxu0 0.0
    %485 = vmatprep.subr.mxu0 0.0
    %486 = vmatpush1.xpose.msra.mxu0 0.0
    %487 = vmatprep.subr.mxu0 0.0
    %488 = vmatpush1.xpose.msra.mxu0 0.0
    %489 = vmatprep.subr.mxu0 0.0
    %490 = vmatpush1.xpose.msra.mxu0 0.0
    %491 = vmatprep.subr.mxu0 0.0
    %492 = vmatpush1.xpose.msra.mxu0 0.0
    %493 = vmatprep.subr.mxu0 0.0
    %494 = vmatpush1.xpose.msra.mxu0 0.0
    %495 = vmatprep.subr.mxu0 0.0
    %496 = vmatpush1.xpose.msra.mxu0 0.0
    %497 = vmatprep.subr.mxu0 0.0
    %498 = vmatpush1.xpose.msra.mxu0 0.0
    %499 = vmatprep.subr.mxu0 0.0
    %500 = vmatpush1.xpose.msra.mxu0 0.0
    %501 = vmatprep.subr.mxu0 0.0
    %502 = vmatpush1.xpose.msra.mxu0 0.0
    %503 = vmatprep.subr.mxu0 0.0
    %504 = vmatpush1.xpose.msra.mxu0 0.0
    %505 = vmatprep.subr.mxu0 0.0
    %506 = vmatpush1.xpose.msra.mxu0 0.0
    %507 = vmatprep.subr.mxu0 0.0
    %508 = vmatpush1.xpose.msra.mxu0 0.0
    %509 = vmatprep.subr.mxu0 0.0
    %510 = vmatpush1.xpose.msra.mxu0 0.0
    %511 = vmatprep.subr.mxu0 0.0
    %512 = vmatpush1.xpose.msra.mxu0 0.0
    %513 = vmatprep.subr.mxu0 0.0
    %514 = vmatpush1.xpose.msra.mxu0 0.0
    %515 = vmatprep.subr.mxu0 0.0
    %516 = vmatpush1.xpose.msra.mxu0 0.0
    %517 = vmatprep.subr.mxu0 0.0
    %518 = vmatpush1.xpose.msra.mxu0 0.0
    %519 = vmatprep.subr.mxu0 0.0
    %520 = vmatpush1.xpose.msra.mxu0 0.0
    %521 = vmatprep.subr.mxu0 0.0
    %522 = vmatpush1.xpose.msra.mxu0 0.0
    %523 = vmatprep.subr.mxu0 0.0
    %524 = vmatpush1.xpose.msra.mxu0 0.0
    %525 = vmatprep.subr.mxu0 0.0
    %526 = vmatpush1.xpose.msra.mxu0 0.0
    %527 = vmatprep.subr.mxu0 0.0
    %528 = vmatpush1.xpose.msra.mxu0 0.0
    %529 = vmatprep.subr.mxu0 0.0
    %530 = vmatpush1.xpose.msra.mxu0 0.0
    %531 = vmatprep.subr.mxu0 0.0
    %532 = vmatpush1.xpose.msra.mxu0 0.0
    %533 = vmatprep.subr.mxu0 0.0
    %534 = vmatpush1.xpose.msra.mxu0 0.0
    %535 = vmatprep.subr.mxu0 0.0
    %536 = vmatpush1.xpose.msra.mxu0 0.0
    %537 = vmatprep.subr.mxu0 0.0
    %538 = vmatpush1.xpose.msra.mxu0 0.0
    %539 = vmatprep.mubr.f32.mxu0 0.0
    %540 = vmatmul.mubr.f32.gmra.mrb[0].mxu0 %v471
    %v541 = vpop.f32.mrb[0].mxu0
    %v542 = vadd.f32 0.0, %v541
    %v543 = vpop.f32.mrb[0].mxu0
    %544 = vdwg.mxu0
    %545 = vrot.lane.b32.xlu0 %v317, 124
    %v546 = vpop.permute.xlu0 %545
    %v548 = vsel %vm392, %v376, 0
    %v550 = vsel %vm392, %v546, 0
    %552 = vmatprep.subr.mxu0 0.0
    %553 = vmatpush1.xpose.msra.mxu0 %v550
    %554 = vmatprep.subr.mxu0 0.0
    %555 = vmatpush1.xpose.msra.mxu0 0.0
    %556 = vmatprep.subr.mxu0 0.0
    %557 = vmatpush1.xpose.msra.mxu0 0.0
    %558 = vmatprep.subr.mxu0 0.0
    %559 = vmatpush1.xpose.msra.mxu0 0.0
    %560 = vmatprep.subr.mxu0 0.0
    %561 = vmatpush1.xpose.msra.mxu0 0.0
    %562 = vmatprep.subr.mxu0 0.0
    %563 = vmatpush1.xpose.msra.mxu0 0.0
    %564 = vmatprep.subr.mxu0 0.0
    %565 = vmatpush1.xpose.msra.mxu0 0.0
    %566 = vmatprep.subr.mxu0 0.0
    %567 = vmatpush1.xpose.msra.mxu0 0.0
    %568 = vmatprep.subr.mxu0 0.0
    %569 = vmatpush1.xpose.msra.mxu0 0.0
    %570 = vmatprep.subr.mxu0 0.0
    %571 = vmatpush1.xpose.msra.mxu0 0.0
    %572 = vmatprep.subr.mxu0 0.0
    %573 = vmatpush1.xpose.msra.mxu0 0.0
    %574 = vmatprep.subr.mxu0 0.0
    %575 = vmatpush1.xpose.msra.mxu0 0.0
    %576 = vmatprep.subr.mxu0 0.0
    %577 = vmatpush1.xpose.msra.mxu0 0.0
    %578 = vmatprep.subr.mxu0 0.0
    %579 = vmatpush1.xpose.msra.mxu0 0.0
    %580 = vmatprep.subr.mxu0 0.0
    %581 = vmatpush1.xpose.msra.mxu0 0.0
    %582 = vmatprep.subr.mxu0 0.0
    %583 = vmatpush1.xpose.msra.mxu0 0.0
    %584 = vmatprep.subr.mxu0 0.0
    %585 = vmatpush1.xpose.msra.mxu0 0.0
    %586 = vmatprep.subr.mxu0 0.0
    %587 = vmatpush1.xpose.msra.mxu0 0.0
    %588 = vmatprep.subr.mxu0 0.0
    %589 = vmatpush1.xpose.msra.mxu0 0.0
    %590 = vmatprep.subr.mxu0 0.0
    %591 = vmatpush1.xpose.msra.mxu0 0.0
    %592 = vmatprep.subr.mxu0 0.0
    %593 = vmatpush1.xpose.msra.mxu0 0.0
    %594 = vmatprep.subr.mxu0 0.0
    %595 = vmatpush1.xpose.msra.mxu0 0.0
    %596 = vmatprep.subr.mxu0 0.0
    %597 = vmatpush1.xpose.msra.mxu0 0.0
    %598 = vmatprep.subr.mxu0 0.0
    %599 = vmatpush1.xpose.msra.mxu0 0.0
    %600 = vmatprep.subr.mxu0 0.0
    %601 = vmatpush1.xpose.msra.mxu0 0.0
    %602 = vmatprep.subr.mxu0 0.0
    %603 = vmatpush1.xpose.msra.mxu0 0.0
    %604 = vmatprep.subr.mxu0 0.0
    %605 = vmatpush1.xpose.msra.mxu0 0.0
    %606 = vmatprep.subr.mxu0 0.0
    %607 = vmatpush1.xpose.msra.mxu0 0.0
    %608 = vmatprep.subr.mxu0 0.0
    %609 = vmatpush1.xpose.msra.mxu0 0.0
    %610 = vmatprep.subr.mxu0 0.0
    %611 = vmatpush1.xpose.msra.mxu0 0.0
    %612 = vmatprep.subr.mxu0 0.0
    %613 = vmatpush1.xpose.msra.mxu0 0.0
    %614 = vmatprep.subr.mxu0 0.0
    %615 = vmatpush1.xpose.msra.mxu0 0.0
    %616 = vmatprep.mubr.f32.mxu0 0.0
    %617 = vmatmul.mubr.f32.gmra.mrb[0].mxu0 %v548
    %v618 = vpop.f32.mrb[0].mxu0
    %v619 = vadd.f32 0.0, %v618
    %v620 = vpop.f32.mrb[0].mxu0
    %621 = vdwg.mxu0
    %622 = vrot.lane.b32.xlu0 %v359, 124
    %v623 = vpop.permute.xlu0 %622
    %v625 = vsel %vm392, %v377, 0
    %v627 = vsel %vm392, %v623, 0
    %629 = vmatprep.subr.mxu0 0.0
    %630 = vmatpush1.xpose.msra.mxu0 %v627
    %631 = vmatprep.subr.mxu0 0.0
    %632 = vmatpush1.xpose.msra.mxu0 0.0
    %633 = vmatprep.subr.mxu0 0.0
    %634 = vmatpush1.xpose.msra.mxu0 0.0
    %635 = vmatprep.subr.mxu0 0.0
    %636 = vmatpush1.xpose.msra.mxu0 0.0
    %637 = vmatprep.subr.mxu0 0.0
    %638 = vmatpush1.xpose.msra.mxu0 0.0
    %639 = vmatprep.subr.mxu0 0.0
    %640 = vmatpush1.xpose.msra.mxu0 0.0
    %641 = vmatprep.subr.mxu0 0.0
    %642 = vmatpush1.xpose.msra.mxu0 0.0
    %643 = vmatprep.subr.mxu0 0.0
    %644 = vmatpush1.xpose.msra.mxu0 0.0
    %645 = vmatprep.subr.mxu0 0.0
    %646 = vmatpush1.xpose.msra.mxu0 0.0
    %647 = vmatprep.subr.mxu0 0.0
    %648 = vmatpush1.xpose.msra.mxu0 0.0
    %649 = vmatprep.subr.mxu0 0.0
    %650 = vmatpush1.xpose.msra.mxu0 0.0
    %651 = vmatprep.subr.mxu0 0.0
    %652 = vmatpush1.xpose.msra.mxu0 0.0
    %653 = vmatprep.subr.mxu0 0.0
    %654 = vmatpush1.xpose.msra.mxu0 0.0
    %655 = vmatprep.subr.mxu0 0.0
    %656 = vmatpush1.xpose.msra.mxu0 0.0
    %657 = vmatprep.subr.mxu0 0.0
    %658 = vmatpush1.xpose.msra.mxu0 0.0
    %659 = vmatprep.subr.mxu0 0.0
    %660 = vmatpush1.xpose.msra.mxu0 0.0
    %661 = vmatprep.subr.mxu0 0.0
    %662 = vmatpush1.xpose.msra.mxu0 0.0
    %663 = vmatprep.subr.mxu0 0.0
    %664 = vmatpush1.xpose.msra.mxu0 0.0
    %665 = vmatprep.subr.mxu0 0.0
    %666 = vmatpush1.xpose.msra.mxu0 0.0
    %667 = vmatprep.subr.mxu0 0.0
    %668 = vmatpush1.xpose.msra.mxu0 0.0
    %669 = vmatprep.subr.mxu0 0.0
    %670 = vmatpush1.xpose.msra.mxu0 0.0
    %671 = vmatprep.subr.mxu0 0.0
    %672 = vmatpush1.xpose.msra.mxu0 0.0
    %673 = vmatprep.subr.mxu0 0.0
    %674 = vmatpush1.xpose.msra.mxu0 0.0
    %675 = vmatprep.subr.mxu0 0.0
    %676 = vmatpush1.xpose.msra.mxu0 0.0
    %677 = vmatprep.subr.mxu0 0.0
    %678 = vmatpush1.xpose.msra.mxu0 0.0
    %679 = vmatprep.subr.mxu0 0.0
    %680 = vmatpush1.xpose.msra.mxu0 0.0
    %681 = vmatprep.subr.mxu0 0.0
    %682 = vmatpush1.xpose.msra.mxu0 0.0
    %683 = vmatprep.subr.mxu0 0.0
    %684 = vmatpush1.xpose.msra.mxu0 0.0
    %685 = vmatprep.subr.mxu0 0.0
    %686 = vmatpush1.xpose.msra.mxu0 0.0
    %687 = vmatprep.subr.mxu0 0.0
    %688 = vmatpush1.xpose.msra.mxu0 0.0
    %689 = vmatprep.subr.mxu0 0.0
    %690 = vmatpush1.xpose.msra.mxu0 0.0
    %691 = vmatprep.subr.mxu0 0.0
    %692 = vmatpush1.xpose.msra.mxu0 0.0
    %693 = vmatprep.mubr.f32.mxu0 0.0
    %694 = vmatmul.mubr.f32.gmra.mrb[0].mxu0 %v625
    %v695 = vpop.f32.mrb[0].mxu0
    %v696 = vadd.f32 0.0, %v695
    %v697 = vpop.f32.mrb[0].mxu0
    %698 = vdwg.mxu0
    %699 = vrot.lane.b32.xlu0 %v322, 124
    %v700 = vpop.permute.xlu0 %699
    %v702 = vsel %vm392, %v378, 0
    %v704 = vsel %vm392, %v700, 0
    %706 = vmatprep.subr.mxu0 0.0
    %707 = vmatpush1.xpose.msra.mxu0 %v704
    %708 = vmatprep.subr.mxu0 0.0
    %709 = vmatpush1.xpose.msra.mxu0 0.0
    %710 = vmatprep.subr.mxu0 0.0
    %711 = vmatpush1.xpose.msra.mxu0 0.0
    %712 = vmatprep.subr.mxu0 0.0
    %713 = vmatpush1.xpose.msra.mxu0 0.0
    %714 = vmatprep.subr.mxu0 0.0
    %715 = vmatpush1.xpose.msra.mxu0 0.0
    %716 = vmatprep.subr.mxu0 0.0
    %717 = vmatpush1.xpose.msra.mxu0 0.0
    %718 = vmatprep.subr.mxu0 0.0
    %719 = vmatpush1.xpose.msra.mxu0 0.0
    %720 = vmatprep.subr.mxu0 0.0
    %721 = vmatpush1.xpose.msra.mxu0 0.0
    %722 = vmatprep.subr.mxu0 0.0
    %723 = vmatpush1.xpose.msra.mxu0 0.0
    %724 = vmatprep.subr.mxu0 0.0
    %725 = vmatpush1.xpose.msra.mxu0 0.0
    %726 = vmatprep.subr.mxu0 0.0
    %727 = vmatpush1.xpose.msra.mxu0 0.0
    %728 = vmatprep.subr.mxu0 0.0
    %729 = vmatpush1.xpose.msra.mxu0 0.0
    %730 = vmatprep.subr.mxu0 0.0
    %731 = vmatpush1.xpose.msra.mxu0 0.0
    %732 = vmatprep.subr.mxu0 0.0
    %733 = vmatpush1.xpose.msra.mxu0 0.0
    %734 = vmatprep.subr.mxu0 0.0
    %735 = vmatpush1.xpose.msra.mxu0 0.0
    %736 = vmatprep.subr.mxu0 0.0
    %737 = vmatpush1.xpose.msra.mxu0 0.0
    %738 = vmatprep.subr.mxu0 0.0
    %739 = vmatpush1.xpose.msra.mxu0 0.0
    %740 = vmatprep.subr.mxu0 0.0
    %741 = vmatpush1.xpose.msra.mxu0 0.0
    %742 = vmatprep.subr.mxu0 0.0
    %743 = vmatpush1.xpose.msra.mxu0 0.0
    %744 = vmatprep.subr.mxu0 0.0
    %745 = vmatpush1.xpose.msra.mxu0 0.0
    %746 = vmatprep.subr.mxu0 0.0
    %747 = vmatpush1.xpose.msra.mxu0 0.0
    %748 = vmatprep.subr.mxu0 0.0
    %749 = vmatpush1.xpose.msra.mxu0 0.0
    %750 = vmatprep.subr.mxu0 0.0
    %751 = vmatpush1.xpose.msra.mxu0 0.0
    %752 = vmatprep.subr.mxu0 0.0
    %753 = vmatpush1.xpose.msra.mxu0 0.0
    %754 = vmatprep.subr.mxu0 0.0
    %755 = vmatpush1.xpose.msra.mxu0 0.0
    %756 = vmatprep.subr.mxu0 0.0
    %757 = vmatpush1.xpose.msra.mxu0 0.0
    %758 = vmatprep.subr.mxu0 0.0
    %759 = vmatpush1.xpose.msra.mxu0 0.0
    %760 = vmatprep.subr.mxu0 0.0
    %761 = vmatpush1.xpose.msra.mxu0 0.0
    %762 = vmatprep.subr.mxu0 0.0
    %763 = vmatpush1.xpose.msra.mxu0 0.0
    %764 = vmatprep.subr.mxu0 0.0
    %765 = vmatpush1.xpose.msra.mxu0 0.0
    %766 = vmatprep.subr.mxu0 0.0
    %767 = vmatpush1.xpose.msra.mxu0 0.0
    %768 = vmatprep.subr.mxu0 0.0
    %769 = vmatpush1.xpose.msra.mxu0 0.0
    %770 = vmatprep.mubr.f32.mxu0 0.0
    %771 = vmatmul.mubr.f32.gmra.mrb[0].mxu0 %v702
    %v772 = vpop.f32.mrb[0].mxu0
    %v773 = vadd.f32 0.0, %v772
    %v774 = vpop.f32.mrb[0].mxu0
    %775 = vdwg.mxu0
    %776 = vrot.lane.b32.xlu0 %v360, 124
    %v777 = vpop.permute.xlu0 %776
    %v779 = vsel %vm392, %v379, 0
    %v781 = vsel %vm392, %v777, 0
    %783 = vmatprep.subr.mxu0 0.0
    %784 = vmatpush1.xpose.msra.mxu0 %v781
    %785 = vmatprep.subr.mxu0 0.0
    %786 = vmatpush1.xpose.msra.mxu0 0.0
    %787 = vmatprep.subr.mxu0 0.0
    %788 = vmatpush1.xpose.msra.mxu0 0.0
    %789 = vmatprep.subr.mxu0 0.0
    %790 = vmatpush1.xpose.msra.mxu0 0.0
    %791 = vmatprep.subr.mxu0 0.0
    %792 = vmatpush1.xpose.msra.mxu0 0.0
    %793 = vmatprep.subr.mxu0 0.0
    %794 = vmatpush1.xpose.msra.mxu0 0.0
    %795 = vmatprep.subr.mxu0 0.0
    %796 = vmatpush1.xpose.msra.mxu0 0.0
    %797 = vmatprep.subr.mxu0 0.0
    %798 = vmatpush1.xpose.msra.mxu0 0.0
    %799 = vmatprep.subr.mxu0 0.0
    %800 = vmatpush1.xpose.msra.mxu0 0.0
    %801 = vmatprep.subr.mxu0 0.0
    %802 = vmatpush1.xpose.msra.mxu0 0.0
    %803 = vmatprep.subr.mxu0 0.0
    %804 = vmatpush1.xpose.msra.mxu0 0.0
    %805 = vmatprep.subr.mxu0 0.0
    %806 = vmatpush1.xpose.msra.mxu0 0.0
    %807 = vmatprep.subr.mxu0 0.0
    %808 = vmatpush1.xpose.msra.mxu0 0.0
    %809 = vmatprep.subr.mxu0 0.0
    %810 = vmatpush1.xpose.msra.mxu0 0.0
    %811 = vmatprep.subr.mxu0 0.0
    %812 = vmatpush1.xpose.msra.mxu0 0.0
    %813 = vmatprep.subr.mxu0 0.0
    %814 = vmatpush1.xpose.msra.mxu0 0.0
    %815 = vmatprep.subr.mxu0 0.0
    %816 = vmatpush1.xpose.msra.mxu0 0.0
    %817 = vmatprep.subr.mxu0 0.0
    %818 = vmatpush1.xpose.msra.mxu0 0.0
    %819 = vmatprep.subr.mxu0 0.0
    %820 = vmatpush1.xpose.msra.mxu0 0.0
    %821 = vmatprep.subr.mxu0 0.0
    %822 = vmatpush1.xpose.msra.mxu0 0.0
    %823 = vmatprep.subr.mxu0 0.0
    %824 = vmatpush1.xpose.msra.mxu0 0.0
    %825 = vmatprep.subr.mxu0 0.0
    %826 = vmatpush1.xpose.msra.mxu0 0.0
    %827 = vmatprep.subr.mxu0 0.0
    %828 = vmatpush1.xpose.msra.mxu0 0.0
    %829 = vmatprep.subr.mxu0 0.0
    %830 = vmatpush1.xpose.msra.mxu0 0.0
    %831 = vmatprep.subr.mxu0 0.0
    %832 = vmatpush1.xpose.msra.mxu0 0.0
    %833 = vmatprep.subr.mxu0 0.0
    %834 = vmatpush1.xpose.msra.mxu0 0.0
    %835 = vmatprep.subr.mxu0 0.0
    %836 = vmatpush1.xpose.msra.mxu0 0.0
    %837 = vmatprep.subr.mxu0 0.0
    %838 = vmatpush1.xpose.msra.mxu0 0.0
    %839 = vmatprep.subr.mxu0 0.0
    %840 = vmatpush1.xpose.msra.mxu0 0.0
    %841 = vmatprep.subr.mxu0 0.0
    %842 = vmatpush1.xpose.msra.mxu0 0.0
    %843 = vmatprep.subr.mxu0 0.0
    %844 = vmatpush1.xpose.msra.mxu0 0.0
    %845 = vmatprep.subr.mxu0 0.0
    %846 = vmatpush1.xpose.msra.mxu0 0.0
    %847 = vmatprep.mubr.f32.mxu0 0.0
    %848 = vmatmul.mubr.f32.gmra.mrb[0].mxu0 %v779
    %v849 = vpop.f32.mrb[0].mxu0
    %v850 = vadd.f32 0.0, %v849
    %v851 = vpop.f32.mrb[0].mxu0
    %852 = vdwg.mxu0
    %853 = vrot.lane.b32.xlu0 %v327, 124
    %v854 = vpop.permute.xlu0 %853
    %v856 = vsel %vm392, %v380, 0
    %v858 = vsel %vm392, %v854, 0
    %860 = vmatprep.subr.mxu0 0.0
    %861 = vmatpush1.xpose.msra.mxu0 %v858
    %862 = vmatprep.subr.mxu0 0.0
    %863 = vmatpush1.xpose.msra.mxu0 0.0
    %864 = vmatprep.subr.mxu0 0.0
    %865 = vmatpush1.xpose.msra.mxu0 0.0
    %866 = vmatprep.subr.mxu0 0.0
    %867 = vmatpush1.xpose.msra.mxu0 0.0
    %868 = vmatprep.subr.mxu0 0.0
    %869 = vmatpush1.xpose.msra.mxu0 0.0
    %870 = vmatprep.subr.mxu0 0.0
    %871 = vmatpush1.xpose.msra.mxu0 0.0
    %872 = vmatprep.subr.mxu0 0.0
    %873 = vmatpush1.xpose.msra.mxu0 0.0
    %874 = vmatprep.subr.mxu0 0.0
    %875 = vmatpush1.xpose.msra.mxu0 0.0
    %876 = vmatprep.subr.mxu0 0.0
    %877 = vmatpush1.xpose.msra.mxu0 0.0
    %878 = vmatprep.subr.mxu0 0.0
    %879 = vmatpush1.xpose.msra.mxu0 0.0
    %880 = vmatprep.subr.mxu0 0.0
    %881 = vmatpush1.xpose.msra.mxu0 0.0
    %882 = vmatprep.subr.mxu0 0.0
    %883 = vmatpush1.xpose.msra.mxu0 0.0
    %884 = vmatprep.subr.mxu0 0.0
    %885 = vmatpush1.xpose.msra.mxu0 0.0
    %886 = vmatprep.subr.mxu0 0.0
    %887 = vmatpush1.xpose.msra.mxu0 0.0
    %888 = vmatprep.subr.mxu0 0.0
    %889 = vmatpush1.xpose.msra.mxu0 0.0
    %890 = vmatprep.subr.mxu0 0.0
    %891 = vmatpush1.xpose.msra.mxu0 0.0
    %892 = vmatprep.subr.mxu0 0.0
    %893 = vmatpush1.xpose.msra.mxu0 0.0
    %894 = vmatprep.subr.mxu0 0.0
    %895 = vmatpush1.xpose.msra.mxu0 0.0
    %896 = vmatprep.subr.mxu0 0.0
    %897 = vmatpush1.xpose.msra.mxu0 0.0
    %898 = vmatprep.subr.mxu0 0.0
    %899 = vmatpush1.xpose.msra.mxu0 0.0
    %900 = vmatprep.subr.mxu0 0.0
    %901 = vmatpush1.xpose.msra.mxu0 0.0
    %902 = vmatprep.subr.mxu0 0.0
    %903 = vmatpush1.xpose.msra.mxu0 0.0
    %904 = vmatprep.subr.mxu0 0.0
    %905 = vmatpush1.xpose.msra.mxu0 0.0
    %906 = vmatprep.subr.mxu0 0.0
    %907 = vmatpush1.xpose.msra.mxu0 0.0
    %908 = vmatprep.subr.mxu0 0.0
    %909 = vmatpush1.xpose.msra.mxu0 0.0
    %910 = vmatprep.subr.mxu0 0.0
    %911 = vmatpush1.xpose.msra.mxu0 0.0
    %912 = vmatprep.subr.mxu0 0.0
    %913 = vmatpush1.xpose.msra.mxu0 0.0
    %914 = vmatprep.subr.mxu0 0.0
    %915 = vmatpush1.xpose.msra.mxu0 0.0
    %916 = vmatprep.subr.mxu0 0.0
    %917 = vmatpush1.xpose.msra.mxu0 0.0
    %918 = vmatprep.subr.mxu0 0.0
    %919 = vmatpush1.xpose.msra.mxu0 0.0
    %920 = vmatprep.subr.mxu0 0.0
    %921 = vmatpush1.xpose.msra.mxu0 0.0
    %922 = vmatprep.subr.mxu0 0.0
    %923 = vmatpush1.xpose.msra.mxu0 0.0
    %924 = vmatprep.mubr.f32.mxu0 0.0
    %925 = vmatmul.mubr.f32.gmra.mrb[0].mxu0 %v856
    %v926 = vpop.f32.mrb[0].mxu0
    %v927 = vadd.f32 0.0, %v926
    %v928 = vpop.f32.mrb[0].mxu0
    %929 = vdwg.mxu0
    %930 = vrot.lane.b32.xlu0 %v361, 124
    %v931 = vpop.permute.xlu0 %930
    %v933 = vsel %vm392, %v381, 0
    %v935 = vsel %vm392, %v931, 0
    %937 = vmatprep.subr.mxu0 0.0
    %938 = vmatpush1.xpose.msra.mxu0 %v935
    %939 = vmatprep.subr.mxu0 0.0
    %940 = vmatpush1.xpose.msra.mxu0 0.0
    %941 = vmatprep.subr.mxu0 0.0
    %942 = vmatpush1.xpose.msra.mxu0 0.0
    %943 = vmatprep.subr.mxu0 0.0
    %944 = vmatpush1.xpose.msra.mxu0 0.0
    %945 = vmatprep.subr.mxu0 0.0
    %946 = vmatpush1.xpose.msra.mxu0 0.0
    %947 = vmatprep.subr.mxu0 0.0
    %948 = vmatpush1.xpose.msra.mxu0 0.0
    %949 = vmatprep.subr.mxu0 0.0
    %950 = vmatpush1.xpose.msra.mxu0 0.0
    %951 = vmatprep.subr.mxu0 0.0
    %952 = vmatpush1.xpose.msra.mxu0 0.0
    %953 = vmatprep.subr.mxu0 0.0
    %954 = vmatpush1.xpose.msra.mxu0 0.0
    %955 = vmatprep.subr.mxu0 0.0
    %956 = vmatpush1.xpose.msra.mxu0 0.0
    %957 = vmatprep.subr.mxu0 0.0
    %958 = vmatpush1.xpose.msra.mxu0 0.0
    %959 = vmatprep.subr.mxu0 0.0
    %960 = vmatpush1.xpose.msra.mxu0 0.0
    %961 = vmatprep.subr.mxu0 0.0
    %962 = vmatpush1.xpose.msra.mxu0 0.0
    %963 = vmatprep.subr.mxu0 0.0
    %964 = vmatpush1.xpose.msra.mxu0 0.0
    %965 = vmatprep.subr.mxu0 0.0
    %966 = vmatpush1.xpose.msra.mxu0 0.0
    %967 = vmatprep.subr.mxu0 0.0
    %968 = vmatpush1.xpose.msra.mxu0 0.0
    %969 = vmatprep.subr.mxu0 0.0
    %970 = vmatpush1.xpose.msra.mxu0 0.0
    %971 = vmatprep.subr.mxu0 0.0
    %972 = vmatpush1.xpose.msra.mxu0 0.0
    %973 = vmatprep.subr.mxu0 0.0
    %974 = vmatpush1.xpose.msra.mxu0 0.0
    %975 = vmatprep.subr.mxu0 0.0
    %976 = vmatpush1.xpose.msra.mxu0 0.0
    %977 = vmatprep.subr.mxu0 0.0
    %978 = vmatpush1.xpose.msra.mxu0 0.0
    %979 = vmatprep.subr.mxu0 0.0
    %980 = vmatpush1.xpose.msra.mxu0 0.0
    %981 = vmatprep.subr.mxu0 0.0
    %982 = vmatpush1.xpose.msra.mxu0 0.0
    %983 = vmatprep.subr.mxu0 0.0
    %984 = vmatpush1.xpose.msra.mxu0 0.0
    %985 = vmatprep.subr.mxu0 0.0
    %986 = vmatpush1.xpose.msra.mxu0 0.0
    %987 = vmatprep.subr.mxu0 0.0
    %988 = vmatpush1.xpose.msra.mxu0 0.0
    %989 = vmatprep.subr.mxu0 0.0
    %990 = vmatpush1.xpose.msra.mxu0 0.0
    %991 = vmatprep.subr.mxu0 0.0
    %992 = vmatpush1.xpose.msra.mxu0 0.0
    %993 = vmatprep.subr.mxu0 0.0
    %994 = vmatpush1.xpose.msra.mxu0 0.0
    %995 = vmatprep.subr.mxu0 0.0
    %996 = vmatpush1.xpose.msra.mxu0 0.0
    %997 = vmatprep.subr.mxu0 0.0
    %998 = vmatpush1.xpose.msra.mxu0 0.0
    %999 = vmatprep.subr.mxu0 0.0
    %1000 = vmatpush1.xpose.msra.mxu0 0.0
    %1001 = vmatprep.mubr.f32.mxu0 0.0
    %1002 = vmatmul.mubr.f32.gmra.mrb[0].mxu0 %v933
    %v1003 = vpop.f32.mrb[0].mxu0
    %v1004 = vadd.f32 0.0, %v1003
    %v1005 = vpop.f32.mrb[0].mxu0
    %1006 = vdwg.mxu0
    %1007 = vrot.lane.b32.xlu0 %v332, 124
    %v1008 = vpop.permute.xlu0 %1007
    %v1010 = vsel %vm392, %v382, 0
    %v1012 = vsel %vm392, %v1008, 0
    %1014 = vmatprep.subr.mxu0 0.0
    %1015 = vmatpush1.xpose.msra.mxu0 %v1012
    %1016 = vmatprep.subr.mxu0 0.0
    %1017 = vmatpush1.xpose.msra.mxu0 0.0
    %1018 = vmatprep.subr.mxu0 0.0
    %1019 = vmatpush1.xpose.msra.mxu0 0.0
    %1020 = vmatprep.subr.mxu0 0.0
    %1021 = vmatpush1.xpose.msra.mxu0 0.0
    %1022 = vmatprep.subr.mxu0 0.0
    %1023 = vmatpush1.xpose.msra.mxu0 0.0
    %1024 = vmatprep.subr.mxu0 0.0
    %1025 = vmatpush1.xpose.msra.mxu0 0.0
    %1026 = vmatprep.subr.mxu0 0.0
    %1027 = vmatpush1.xpose.msra.mxu0 0.0
    %1028 = vmatprep.subr.mxu0 0.0
    %1029 = vmatpush1.xpose.msra.mxu0 0.0
    %1030 = vmatprep.subr.mxu0 0.0
    %1031 = vmatpush1.xpose.msra.mxu0 0.0
    %1032 = vmatprep.subr.mxu0 0.0
    %1033 = vmatpush1.xpose.msra.mxu0 0.0
    %1034 = vmatprep.subr.mxu0 0.0
    %1035 = vmatpush1.xpose.msra.mxu0 0.0
    %1036 = vmatprep.subr.mxu0 0.0
    %1037 = vmatpush1.xpose.msra.mxu0 0.0
    %1038 = vmatprep.subr.mxu0 0.0
    %1039 = vmatpush1.xpose.msra.mxu0 0.0
    %1040 = vmatprep.subr.mxu0 0.0
    %1041 = vmatpush1.xpose.msra.mxu0 0.0
    %1042 = vmatprep.subr.mxu0 0.0
    %1043 = vmatpush1.xpose.msra.mxu0 0.0
    %1044 = vmatprep.subr.mxu0 0.0
    %1045 = vmatpush1.xpose.msra.mxu0 0.0
    %1046 = vmatprep.subr.mxu0 0.0
    %1047 = vmatpush1.xpose.msra.mxu0 0.0
    %1048 = vmatprep.subr.mxu0 0.0
    %1049 = vmatpush1.xpose.msra.mxu0 0.0
    %1050 = vmatprep.subr.mxu0 0.0
    %1051 = vmatpush1.xpose.msra.mxu0 0.0
    %1052 = vmatprep.subr.mxu0 0.0
    %1053 = vmatpush1.xpose.msra.mxu0 0.0
    %1054 = vmatprep.subr.mxu0 0.0
    %1055 = vmatpush1.xpose.msra.mxu0 0.0
    %1056 = vmatprep.subr.mxu0 0.0
    %1057 = vmatpush1.xpose.msra.mxu0 0.0
    %1058 = vmatprep.subr.mxu0 0.0
    %1059 = vmatpush1.xpose.msra.mxu0 0.0
    %1060 = vmatprep.subr.mxu0 0.0
    %1061 = vmatpush1.xpose.msra.mxu0 0.0
    %1062 = vmatprep.subr.mxu0 0.0
    %1063 = vmatpush1.xpose.msra.mxu0 0.0
    %1064 = vmatprep.subr.mxu0 0.0
    %1065 = vmatpush1.xpose.msra.mxu0 0.0
    %1066 = vmatprep.subr.mxu0 0.0
    %1067 = vmatpush1.xpose.msra.mxu0 0.0
    %1068 = vmatprep.subr.mxu0 0.0
    %1069 = vmatpush1.xpose.msra.mxu0 0.0
    %1070 = vmatprep.subr.mxu0 0.0
    %1071 = vmatpush1.xpose.msra.mxu0 0.0
    %1072 = vmatprep.subr.mxu0 0.0
    %1073 = vmatpush1.xpose.msra.mxu0 0.0
    %1074 = vmatprep.subr.mxu0 0.0
    %1075 = vmatpush1.xpose.msra.mxu0 0.0
    %1076 = vmatprep.subr.mxu0 0.0
    %1077 = vmatpush1.xpose.msra.mxu0 0.0
    %1078 = vmatprep.mubr.f32.mxu0 0.0
    %1079 = vmatmul.mubr.f32.gmra.mrb[0].mxu0 %v1010
    %v1080 = vpop.f32.mrb[0].mxu0
    %v1081 = vadd.f32 0.0, %v1080
    %v1082 = vpop.f32.mrb[0].mxu0
    %1083 = vdwg.mxu0
    %1084 = vrot.lane.b32.xlu0 %v362, 124
    %v1085 = vpop.permute.xlu0 %1084
    %v1087 = vsel %vm392, %v383, 0
    %v1089 = vsel %vm392, %v1085, 0
    %1091 = vmatprep.subr.mxu0 0.0
    %1092 = vmatpush1.xpose.msra.mxu0 %v1089
    %1093 = vmatprep.subr.mxu0 0.0
    %1094 = vmatpush1.xpose.msra.mxu0 0.0
    %1095 = vmatprep.subr.mxu0 0.0
    %1096 = vmatpush1.xpose.msra.mxu0 0.0
    %1097 = vmatprep.subr.mxu0 0.0
    %1098 = vmatpush1.xpose.msra.mxu0 0.0
    %1099 = vmatprep.subr.mxu0 0.0
    %1100 = vmatpush1.xpose.msra.mxu0 0.0
    %1101 = vmatprep.subr.mxu0 0.0
    %1102 = vmatpush1.xpose.msra.mxu0 0.0
    %1103 = vmatprep.subr.mxu0 0.0
    %1104 = vmatpush1.xpose.msra.mxu0 0.0
    %1105 = vmatprep.subr.mxu0 0.0
    %1106 = vmatpush1.xpose.msra.mxu0 0.0
    %1107 = vmatprep.subr.mxu0 0.0
    %1108 = vmatpush1.xpose.msra.mxu0 0.0
    %1109 = vmatprep.subr.mxu0 0.0
    %1110 = vmatpush1.xpose.msra.mxu0 0.0
    %1111 = vmatprep.subr.mxu0 0.0
    %1112 = vmatpush1.xpose.msra.mxu0 0.0
    %1113 = vmatprep.subr.mxu0 0.0
    %1114 = vmatpush1.xpose.msra.mxu0 0.0
    %1115 = vmatprep.subr.mxu0 0.0
    %1116 = vmatpush1.xpose.msra.mxu0 0.0
    %1117 = vmatprep.subr.mxu0 0.0
    %1118 = vmatpush1.xpose.msra.mxu0 0.0
    %1119 = vmatprep.subr.mxu0 0.0
    %1120 = vmatpush1.xpose.msra.mxu0 0.0
    %1121 = vmatprep.subr.mxu0 0.0
    %1122 = vmatpush1.xpose.msra.mxu0 0.0
    %1123 = vmatprep.subr.mxu0 0.0
    %1124 = vmatpush1.xpose.msra.mxu0 0.0
    %1125 = vmatprep.subr.mxu0 0.0
    %1126 = vmatpush1.xpose.msra.mxu0 0.0
    %1127 = vmatprep.subr.mxu0 0.0
    %1128 = vmatpush1.xpose.msra.mxu0 0.0
    %1129 = vmatprep.subr.mxu0 0.0
    %1130 = vmatpush1.xpose.msra.mxu0 0.0
    %1131 = vmatprep.subr.mxu0 0.0
    %1132 = vmatpush1.xpose.msra.mxu0 0.0
    %1133 = vmatprep.subr.mxu0 0.0
    %1134 = vmatpush1.xpose.msra.mxu0 0.0
    %1135 = vmatprep.subr.mxu0 0.0
    %1136 = vmatpush1.xpose.msra.mxu0 0.0
    %1137 = vmatprep.subr.mxu0 0.0
    %1138 = vmatpush1.xpose.msra.mxu0 0.0
    %1139 = vmatprep.subr.mxu0 0.0
    %1140 = vmatpush1.xpose.msra.mxu0 0.0
    %1141 = vmatprep.subr.mxu0 0.0
    %1142 = vmatpush1.xpose.msra.mxu0 0.0
    %1143 = vmatprep.subr.mxu0 0.0
    %1144 = vmatpush1.xpose.msra.mxu0 0.0
    %1145 = vmatprep.subr.mxu0 0.0
    %1146 = vmatpush1.xpose.msra.mxu0 0.0
    %1147 = vmatprep.subr.mxu0 0.0
    %1148 = vmatpush1.xpose.msra.mxu0 0.0
    %1149 = vmatprep.subr.mxu0 0.0
    %1150 = vmatpush1.xpose.msra.mxu0 0.0
    %1151 = vmatprep.subr.mxu0 0.0
    %1152 = vmatpush1.xpose.msra.mxu0 0.0
    %1153 = vmatprep.subr.mxu0 0.0
    %1154 = vmatpush1.xpose.msra.mxu0 0.0
    %1155 = vmatprep.mubr.f32.mxu0 0.0
    %1156 = vmatmul.mubr.f32.gmra.mrb[0].mxu0 %v1087
    %v1157 = vpop.f32.mrb[0].mxu0
    %v1158 = vadd.f32 0.0, %v1157
    %v1159 = vpop.f32.mrb[0].mxu0
    %1160 = vdwg.mxu0
    %1161 = vrot.lane.b32.xlu0 %v337, 124
    %v1162 = vpop.permute.xlu0 %1161
    %v1164 = vsel %vm392, %v384, 0
    %v1166 = vsel %vm392, %v1162, 0
    %1168 = vmatprep.subr.mxu0 0.0
    %1169 = vmatpush1.xpose.msra.mxu0 %v1166
    %1170 = vmatprep.subr.mxu0 0.0
    %1171 = vmatpush1.xpose.msra.mxu0 0.0
    %1172 = vmatprep.subr.mxu0 0.0
    %1173 = vmatpush1.xpose.msra.mxu0 0.0
    %1174 = vmatprep.subr.mxu0 0.0
    %1175 = vmatpush1.xpose.msra.mxu0 0.0
    %1176 = vmatprep.subr.mxu0 0.0
    %1177 = vmatpush1.xpose.msra.mxu0 0.0
    %1178 = vmatprep.subr.mxu0 0.0
    %1179 = vmatpush1.xpose.msra.mxu0 0.0
    %1180 = vmatprep.subr.mxu0 0.0
    %1181 = vmatpush1.xpose.msra.mxu0 0.0
    %1182 = vmatprep.subr.mxu0 0.0
    %1183 = vmatpush1.xpose.msra.mxu0 0.0
    %1184 = vmatprep.subr.mxu0 0.0
    %1185 = vmatpush1.xpose.msra.mxu0 0.0
    %1186 = vmatprep.subr.mxu0 0.0
    %1187 = vmatpush1.xpose.msra.mxu0 0.0
    %1188 = vmatprep.subr.mxu0 0.0
    %1189 = vmatpush1.xpose.msra.mxu0 0.0
    %1190 = vmatprep.subr.mxu0 0.0
    %1191 = vmatpush1.xpose.msra.mxu0 0.0
    %1192 = vmatprep.subr.mxu0 0.0
    %1193 = vmatpush1.xpose.msra.mxu0 0.0
    %1194 = vmatprep.subr.mxu0 0.0
    %1195 = vmatpush1.xpose.msra.mxu0 0.0
    %1196 = vmatprep.subr.mxu0 0.0
    %1197 = vmatpush1.xpose.msra.mxu0 0.0
    %1198 = vmatprep.subr.mxu0 0.0
    %1199 = vmatpush1.xpose.msra.mxu0 0.0
    %1200 = vmatprep.subr.mxu0 0.0
    %1201 = vmatpush1.xpose.msra.mxu0 0.0
    %1202 = vmatprep.subr.mxu0 0.0
    %1203 = vmatpush1.xpose.msra.mxu0 0.0
    %1204 = vmatprep.subr.mxu0 0.0
    %1205 = vmatpush1.xpose.msra.mxu0 0.0
    %1206 = vmatprep.subr.mxu0 0.0
    %1207 = vmatpush1.xpose.msra.mxu0 0.0
    %1208 = vmatprep.subr.mxu0 0.0
    %1209 = vmatpush1.xpose.msra.mxu0 0.0
    %1210 = vmatprep.subr.mxu0 0.0
    %1211 = vmatpush1.xpose.msra.mxu0 0.0
    %1212 = vmatprep.subr.mxu0 0.0
    %1213 = vmatpush1.xpose.msra.mxu0 0.0
    %1214 = vmatprep.subr.mxu0 0.0
    %1215 = vmatpush1.xpose.msra.mxu0 0.0
    %1216 = vmatprep.subr.mxu0 0.0
    %1217 = vmatpush1.xpose.msra.mxu0 0.0
    %1218 = vmatprep.subr.mxu0 0.0
    %1219 = vmatpush1.xpose.msra.mxu0 0.0
    %1220 = vmatprep.subr.mxu0 0.0
    %1221 = vmatpush1.xpose.msra.mxu0 0.0
    %1222 = vmatprep.subr.mxu0 0.0
    %1223 = vmatpush1.xpose.msra.mxu0 0.0
    %1224 = vmatprep.subr.mxu0 0.0
    %1225 = vmatpush1.xpose.msra.mxu0 0.0
    %1226 = vmatprep.subr.mxu0 0.0
    %1227 = vmatpush1.xpose.msra.mxu0 0.0
    %1228 = vmatprep.subr.mxu0 0.0
    %1229 = vmatpush1.xpose.msra.mxu0 0.0
    %1230 = vmatprep.subr.mxu0 0.0
    %1231 = vmatpush1.xpose.msra.mxu0 0.0
    %1232 = vmatprep.mubr.f32.mxu0 0.0
    %1233 = vmatmul.mubr.f32.gmra.mrb[0].mxu0 %v1164
    %v1234 = vpop.f32.mrb[0].mxu0
    %v1235 = vadd.f32 0.0, %v1234
    %v1236 = vpop.f32.mrb[0].mxu0
    %1237 = vdwg.mxu0
    %1238 = vrot.lane.b32.xlu0 %v363, 124
    %v1239 = vpop.permute.xlu0 %1238
    %v1241 = vsel %vm392, %v385, 0
    %v1243 = vsel %vm392, %v1239, 0
    %1245 = vmatprep.subr.mxu0 0.0
    %1246 = vmatpush1.xpose.msra.mxu0 %v1243
    %1247 = vmatprep.subr.mxu0 0.0
    %1248 = vmatpush1.xpose.msra.mxu0 0.0
    %1249 = vmatprep.subr.mxu0 0.0
    %1250 = vmatpush1.xpose.msra.mxu0 0.0
    %1251 = vmatprep.subr.mxu0 0.0
    %1252 = vmatpush1.xpose.msra.mxu0 0.0
    %1253 = vmatprep.subr.mxu0 0.0
    %1254 = vmatpush1.xpose.msra.mxu0 0.0
    %1255 = vmatprep.subr.mxu0 0.0
    %1256 = vmatpush1.xpose.msra.mxu0 0.0
    %1257 = vmatprep.subr.mxu0 0.0
    %1258 = vmatpush1.xpose.msra.mxu0 0.0
    %1259 = vmatprep.subr.mxu0 0.0
    %1260 = vmatpush1.xpose.msra.mxu0 0.0
    %1261 = vmatprep.subr.mxu0 0.0
    %1262 = vmatpush1.xpose.msra.mxu0 0.0
    %1263 = vmatprep.subr.mxu0 0.0
    %1264 = vmatpush1.xpose.msra.mxu0 0.0
    %1265 = vmatprep.subr.mxu0 0.0
    %1266 = vmatpush1.xpose.msra.mxu0 0.0
    %1267 = vmatprep.subr.mxu0 0.0
    %1268 = vmatpush1.xpose.msra.mxu0 0.0
    %1269 = vmatprep.subr.mxu0 0.0
    %1270 = vmatpush1.xpose.msra.mxu0 0.0
    %1271 = vmatprep.subr.mxu0 0.0
    %1272 = vmatpush1.xpose.msra.mxu0 0.0
    %1273 = vmatprep.subr.mxu0 0.0
    %1274 = vmatpush1.xpose.msra.mxu0 0.0
    %1275 = vmatprep.subr.mxu0 0.0
    %1276 = vmatpush1.xpose.msra.mxu0 0.0
    %1277 = vmatprep.subr.mxu0 0.0
    %1278 = vmatpush1.xpose.msra.mxu0 0.0
    %1279 = vmatprep.subr.mxu0 0.0
    %1280 = vmatpush1.xpose.msra.mxu0 0.0
    %1281 = vmatprep.subr.mxu0 0.0
    %1282 = vmatpush1.xpose.msra.mxu0 0.0
    %1283 = vmatprep.subr.mxu0 0.0
    %1284 = vmatpush1.xpose.msra.mxu0 0.0
    %1285 = vmatprep.subr.mxu0 0.0
    %1286 = vmatpush1.xpose.msra.mxu0 0.0
    %1287 = vmatprep.subr.mxu0 0.0
    %1288 = vmatpush1.xpose.msra.mxu0 0.0
    %1289 = vmatprep.subr.mxu0 0.0
    %1290 = vmatpush1.xpose.msra.mxu0 0.0
    %1291 = vmatprep.subr.mxu0 0.0
    %1292 = vmatpush1.xpose.msra.mxu0 0.0
    %1293 = vmatprep.subr.mxu0 0.0
    %1294 = vmatpush1.xpose.msra.mxu0 0.0
    %1295 = vmatprep.subr.mxu0 0.0
    %1296 = vmatpush1.xpose.msra.mxu0 0.0
    %1297 = vmatprep.subr.mxu0 0.0
    %1298 = vmatpush1.xpose.msra.mxu0 0.0
    %1299 = vmatprep.subr.mxu0 0.0
    %1300 = vmatpush1.xpose.msra.mxu0 0.0
    %1301 = vmatprep.subr.mxu0 0.0
    %1302 = vmatpush1.xpose.msra.mxu0 0.0
    %1303 = vmatprep.subr.mxu0 0.0
    %1304 = vmatpush1.xpose.msra.mxu0 0.0
    %1305 = vmatprep.subr.mxu0 0.0
    %1306 = vmatpush1.xpose.msra.mxu0 0.0
    %1307 = vmatprep.subr.mxu0 0.0
    %1308 = vmatpush1.xpose.msra.mxu0 0.0
    %1309 = vmatprep.mubr.f32.mxu0 0.0
    %1310 = vmatmul.mubr.f32.gmra.mrb[0].mxu0 %v1241
    %v1311 = vpop.f32.mrb[0].mxu0
    %v1312 = vadd.f32 0.0, %v1311
    %v1313 = vpop.f32.mrb[0].mxu0
    %1314 = vdwg.mxu0
    %1315 = vrot.lane.b32.xlu0 %v342, 124
    %v1316 = vpop.permute.xlu0 %1315
    %v1318 = vsel %vm392, %v386, 0
    %v1320 = vsel %vm392, %v1316, 0
    %1322 = vmatprep.subr.mxu0 0.0
    %1323 = vmatpush1.xpose.msra.mxu0 %v1320
    %1324 = vmatprep.subr.mxu0 0.0
    %1325 = vmatpush1.xpose.msra.mxu0 0.0
    %1326 = vmatprep.subr.mxu0 0.0
    %1327 = vmatpush1.xpose.msra.mxu0 0.0
    %1328 = vmatprep.subr.mxu0 0.0
    %1329 = vmatpush1.xpose.msra.mxu0 0.0
    %1330 = vmatprep.subr.mxu0 0.0
    %1331 = vmatpush1.xpose.msra.mxu0 0.0
    %1332 = vmatprep.subr.mxu0 0.0
    %1333 = vmatpush1.xpose.msra.mxu0 0.0
    %1334 = vmatprep.subr.mxu0 0.0
    %1335 = vmatpush1.xpose.msra.mxu0 0.0
    %1336 = vmatprep.subr.mxu0 0.0
    %1337 = vmatpush1.xpose.msra.mxu0 0.0
    %1338 = vmatprep.subr.mxu0 0.0
    %1339 = vmatpush1.xpose.msra.mxu0 0.0
    %1340 = vmatprep.subr.mxu0 0.0
    %1341 = vmatpush1.xpose.msra.mxu0 0.0
    %1342 = vmatprep.subr.mxu0 0.0
    %1343 = vmatpush1.xpose.msra.mxu0 0.0
    %1344 = vmatprep.subr.mxu0 0.0
    %1345 = vmatpush1.xpose.msra.mxu0 0.0
    %1346 = vmatprep.subr.mxu0 0.0
    %1347 = vmatpush1.xpose.msra.mxu0 0.0
    %1348 = vmatprep.subr.mxu0 0.0
    %1349 = vmatpush1.xpose.msra.mxu0 0.0
    %1350 = vmatprep.subr.mxu0 0.0
    %1351 = vmatpush1.xpose.msra.mxu0 0.0
    %1352 = vmatprep.subr.mxu0 0.0
    %1353 = vmatpush1.xpose.msra.mxu0 0.0
    %1354 = vmatprep.subr.mxu0 0.0
    %1355 = vmatpush1.xpose.msra.mxu0 0.0
    %1356 = vmatprep.subr.mxu0 0.0
    %1357 = vmatpush1.xpose.msra.mxu0 0.0
    %1358 = vmatprep.subr.mxu0 0.0
    %1359 = vmatpush1.xpose.msra.mxu0 0.0
    %1360 = vmatprep.subr.mxu0 0.0
    %1361 = vmatpush1.xpose.msra.mxu0 0.0
    %1362 = vmatprep.subr.mxu0 0.0
    %1363 = vmatpush1.xpose.msra.mxu0 0.0
    %1364 = vmatprep.subr.mxu0 0.0
    %1365 = vmatpush1.xpose.msra.mxu0 0.0
    %1366 = vmatprep.subr.mxu0 0.0
    %1367 = vmatpush1.xpose.msra.mxu0 0.0
    %1368 = vmatprep.subr.mxu0 0.0
    %1369 = vmatpush1.xpose.msra.mxu0 0.0
    %1370 = vmatprep.subr.mxu0 0.0
    %1371 = vmatpush1.xpose.msra.mxu0 0.0
    %1372 = vmatprep.subr.mxu0 0.0
    %1373 = vmatpush1.xpose.msra.mxu0 0.0
    %1374 = vmatprep.subr.mxu0 0.0
    %1375 = vmatpush1.xpose.msra.mxu0 0.0
    %1376 = vmatprep.subr.mxu0 0.0
    %1377 = vmatpush1.xpose.msra.mxu0 0.0
    %1378 = vmatprep.subr.mxu0 0.0
    %1379 = vmatpush1.xpose.msra.mxu0 0.0
    %1380 = vmatprep.subr.mxu0 0.0
    %1381 = vmatpush1.xpose.msra.mxu0 0.0
    %1382 = vmatprep.subr.mxu0 0.0
    %1383 = vmatpush1.xpose.msra.mxu0 0.0
    %1384 = vmatprep.subr.mxu0 0.0
    %1385 = vmatpush1.xpose.msra.mxu0 0.0
    %1386 = vmatprep.mubr.f32.mxu0 0.0
    %1387 = vmatmul.mubr.f32.gmra.mrb[0].mxu0 %v1318
    %v1388 = vpop.f32.mrb[0].mxu0
    %v1389 = vadd.f32 0.0, %v1388
    %v1390 = vpop.f32.mrb[0].mxu0
    %1391 = vdwg.mxu0
    %1392 = vrot.lane.b32.xlu0 %v364, 124
    %v1393 = vpop.permute.xlu0 %1392
    %v1395 = vsel %vm392, %v387, 0
    %v1397 = vsel %vm392, %v1393, 0
    %1399 = vmatprep.subr.mxu0 0.0
    %1400 = vmatpush1.xpose.msra.mxu0 %v1397
    %1401 = vmatprep.subr.mxu0 0.0
    %1402 = vmatpush1.xpose.msra.mxu0 0.0
    %1403 = vmatprep.subr.mxu0 0.0
    %1404 = vmatpush1.xpose.msra.mxu0 0.0
    %1405 = vmatprep.subr.mxu0 0.0
    %1406 = vmatpush1.xpose.msra.mxu0 0.0
    %1407 = vmatprep.subr.mxu0 0.0
    %1408 = vmatpush1.xpose.msra.mxu0 0.0
    %1409 = vmatprep.subr.mxu0 0.0
    %1410 = vmatpush1.xpose.msra.mxu0 0.0
    %1411 = vmatprep.subr.mxu0 0.0
    %1412 = vmatpush1.xpose.msra.mxu0 0.0
    %1413 = vmatprep.subr.mxu0 0.0
    %1414 = vmatpush1.xpose.msra.mxu0 0.0
    %1415 = vmatprep.subr.mxu0 0.0
    %1416 = vmatpush1.xpose.msra.mxu0 0.0
    %1417 = vmatprep.subr.mxu0 0.0
    %1418 = vmatpush1.xpose.msra.mxu0 0.0
    %1419 = vmatprep.subr.mxu0 0.0
    %1420 = vmatpush1.xpose.msra.mxu0 0.0
    %1421 = vmatprep.subr.mxu0 0.0
    %1422 = vmatpush1.xpose.msra.mxu0 0.0
    %1423 = vmatprep.subr.mxu0 0.0
    %1424 = vmatpush1.xpose.msra.mxu0 0.0
    %1425 = vmatprep.subr.mxu0 0.0
    %1426 = vmatpush1.xpose.msra.mxu0 0.0
    %1427 = vmatprep.subr.mxu0 0.0
    %1428 = vmatpush1.xpose.msra.mxu0 0.0
    %1429 = vmatprep.subr.mxu0 0.0
    %1430 = vmatpush1.xpose.msra.mxu0 0.0
    %1431 = vmatprep.subr.mxu0 0.0
    %1432 = vmatpush1.xpose.msra.mxu0 0.0
    %1433 = vmatprep.subr.mxu0 0.0
    %1434 = vmatpush1.xpose.msra.mxu0 0.0
    %1435 = vmatprep.subr.mxu0 0.0
    %1436 = vmatpush1.xpose.msra.mxu0 0.0
    %1437 = vmatprep.subr.mxu0 0.0
    %1438 = vmatpush1.xpose.msra.mxu0 0.0
    %1439 = vmatprep.subr.mxu0 0.0
    %1440 = vmatpush1.xpose.msra.mxu0 0.0
    %1441 = vmatprep.subr.mxu0 0.0
    %1442 = vmatpush1.xpose.msra.mxu0 0.0
    %1443 = vmatprep.subr.mxu0 0.0
    %1444 = vmatpush1.xpose.msra.mxu0 0.0
    %1445 = vmatprep.subr.mxu0 0.0
    %1446 = vmatpush1.xpose.msra.mxu0 0.0
    %1447 = vmatprep.subr.mxu0 0.0
    %1448 = vmatpush1.xpose.msra.mxu0 0.0
    %1449 = vmatprep.subr.mxu0 0.0
    %1450 = vmatpush1.xpose.msra.mxu0 0.0
    %1451 = vmatprep.subr.mxu0 0.0
    %1452 = vmatpush1.xpose.msra.mxu0 0.0
    %1453 = vmatprep.subr.mxu0 0.0
    %1454 = vmatpush1.xpose.msra.mxu0 0.0
    %1455 = vmatprep.subr.mxu0 0.0
    %1456 = vmatpush1.xpose.msra.mxu0 0.0
    %1457 = vmatprep.subr.mxu0 0.0
    %1458 = vmatpush1.xpose.msra.mxu0 0.0
    %1459 = vmatprep.subr.mxu0 0.0
    %1460 = vmatpush1.xpose.msra.mxu0 0.0
    %1461 = vmatprep.subr.mxu0 0.0
    %1462 = vmatpush1.xpose.msra.mxu0 0.0
    %1463 = vmatprep.mubr.f32.mxu0 0.0
    %1464 = vmatmul.mubr.f32.gmra.mrb[0].mxu0 %v1395
    %v1465 = vpop.f32.mrb[0].mxu0
    %v1466 = vadd.f32 0.0, %v1465
    %v1467 = vpop.f32.mrb[0].mxu0
    %1468 = vdwg.mxu0
    %1469 = vrot.lane.b32.xlu0 %v347, 124
    %v1470 = vpop.permute.xlu0 %1469
    %v1472 = vsel %vm392, %v388, 0
    %v1474 = vsel %vm392, %v1470, 0
    %1476 = vmatprep.subr.mxu0 0.0
    %1477 = vmatpush1.xpose.msra.mxu0 %v1474
    %1478 = vmatprep.subr.mxu0 0.0
    %1479 = vmatpush1.xpose.msra.mxu0 0.0
    %1480 = vmatprep.subr.mxu0 0.0
    %1481 = vmatpush1.xpose.msra.mxu0 0.0
    %1482 = vmatprep.subr.mxu0 0.0
    %1483 = vmatpush1.xpose.msra.mxu0 0.0
    %1484 = vmatprep.subr.mxu0 0.0
    %1485 = vmatpush1.xpose.msra.mxu0 0.0
    %1486 = vmatprep.subr.mxu0 0.0
    %1487 = vmatpush1.xpose.msra.mxu0 0.0
    %1488 = vmatprep.subr.mxu0 0.0
    %1489 = vmatpush1.xpose.msra.mxu0 0.0
    %1490 = vmatprep.subr.mxu0 0.0
    %1491 = vmatpush1.xpose.msra.mxu0 0.0
    %1492 = vmatprep.subr.mxu0 0.0
    %1493 = vmatpush1.xpose.msra.mxu0 0.0
    %1494 = vmatprep.subr.mxu0 0.0
    %1495 = vmatpush1.xpose.msra.mxu0 0.0
    %1496 = vmatprep.subr.mxu0 0.0
    %1497 = vmatpush1.xpose.msra.mxu0 0.0
    %1498 = vmatprep.subr.mxu0 0.0
    %1499 = vmatpush1.xpose.msra.mxu0 0.0
    %1500 = vmatprep.subr.mxu0 0.0
    %1501 = vmatpush1.xpose.msra.mxu0 0.0
    %1502 = vmatprep.subr.mxu0 0.0
    %1503 = vmatpush1.xpose.msra.mxu0 0.0
    %1504 = vmatprep.subr.mxu0 0.0
    %1505 = vmatpush1.xpose.msra.mxu0 0.0
    %1506 = vmatprep.subr.mxu0 0.0
    %1507 = vmatpush1.xpose.msra.mxu0 0.0
    %1508 = vmatprep.subr.mxu0 0.0
    %1509 = vmatpush1.xpose.msra.mxu0 0.0
    %1510 = vmatprep.subr.mxu0 0.0
    %1511 = vmatpush1.xpose.msra.mxu0 0.0
    %1512 = vmatprep.subr.mxu0 0.0
    %1513 = vmatpush1.xpose.msra.mxu0 0.0
    %1514 = vmatprep.subr.mxu0 0.0
    %1515 = vmatpush1.xpose.msra.mxu0 0.0
    %1516 = vmatprep.subr.mxu0 0.0
    %1517 = vmatpush1.xpose.msra.mxu0 0.0
    %1518 = vmatprep.subr.mxu0 0.0
    %1519 = vmatpush1.xpose.msra.mxu0 0.0
    %1520 = vmatprep.subr.mxu0 0.0
    %1521 = vmatpush1.xpose.msra.mxu0 0.0
    %1522 = vmatprep.subr.mxu0 0.0
    %1523 = vmatpush1.xpose.msra.mxu0 0.0
    %1524 = vmatprep.subr.mxu0 0.0
    %1525 = vmatpush1.xpose.msra.mxu0 0.0
    %1526 = vmatprep.subr.mxu0 0.0
    %1527 = vmatpush1.xpose.msra.mxu0 0.0
    %1528 = vmatprep.subr.mxu0 0.0
    %1529 = vmatpush1.xpose.msra.mxu0 0.0
    %1530 = vmatprep.subr.mxu0 0.0
    %1531 = vmatpush1.xpose.msra.mxu0 0.0
    %1532 = vmatprep.subr.mxu0 0.0
    %1533 = vmatpush1.xpose.msra.mxu0 0.0
    %1534 = vmatprep.subr.mxu0 0.0
    %1535 = vmatpush1.xpose.msra.mxu0 0.0
    %1536 = vmatprep.subr.mxu0 0.0
    %1537 = vmatpush1.xpose.msra.mxu0 0.0
    %1538 = vmatprep.subr.mxu0 0.0
    %1539 = vmatpush1.xpose.msra.mxu0 0.0
    %1540 = vmatprep.mubr.f32.mxu0 0.0
    %1541 = vmatmul.mubr.f32.gmra.mrb[0].mxu0 %v1472
    %v1542 = vpop.f32.mrb[0].mxu0
    %v1543 = vadd.f32 0.0, %v1542
    %v1544 = vpop.f32.mrb[0].mxu0
    %1545 = vdwg.mxu0
    %1546 = vrot.lane.b32.xlu0 %v365, 124
    %v1547 = vpop.permute.xlu0 %1546
    %v1549 = vsel %vm392, %v389, 0
    %v1551 = vsel %vm392, %v1547, 0
    %1553 = vmatprep.subr.mxu0 0.0
    %1554 = vmatpush1.xpose.msra.mxu0 %v1551
    %1555 = vmatprep.subr.mxu0 0.0
    %1556 = vmatpush1.xpose.msra.mxu0 0.0
    %1557 = vmatprep.subr.mxu0 0.0
    %1558 = vmatpush1.xpose.msra.mxu0 0.0
    %1559 = vmatprep.subr.mxu0 0.0
    %1560 = vmatpush1.xpose.msra.mxu0 0.0
    %1561 = vmatprep.subr.mxu0 0.0
    %1562 = vmatpush1.xpose.msra.mxu0 0.0
    %1563 = vmatprep.subr.mxu0 0.0
    %1564 = vmatpush1.xpose.msra.mxu0 0.0
    %1565 = vmatprep.subr.mxu0 0.0
    %1566 = vmatpush1.xpose.msra.mxu0 0.0
    %1567 = vmatprep.subr.mxu0 0.0
    %1568 = vmatpush1.xpose.msra.mxu0 0.0
    %1569 = vmatprep.subr.mxu0 0.0
    %1570 = vmatpush1.xpose.msra.mxu0 0.0
    %1571 = vmatprep.subr.mxu0 0.0
    %1572 = vmatpush1.xpose.msra.mxu0 0.0
    %1573 = vmatprep.subr.mxu0 0.0
    %1574 = vmatpush1.xpose.msra.mxu0 0.0
    %1575 = vmatprep.subr.mxu0 0.0
    %1576 = vmatpush1.xpose.msra.mxu0 0.0
    %1577 = vmatprep.subr.mxu0 0.0
    %1578 = vmatpush1.xpose.msra.mxu0 0.0
    %1579 = vmatprep.subr.mxu0 0.0
    %1580 = vmatpush1.xpose.msra.mxu0 0.0
    %1581 = vmatprep.subr.mxu0 0.0
    %1582 = vmatpush1.xpose.msra.mxu0 0.0
    %1583 = vmatprep.subr.mxu0 0.0
    %1584 = vmatpush1.xpose.msra.mxu0 0.0
    %1585 = vmatprep.subr.mxu0 0.0
    %1586 = vmatpush1.xpose.msra.mxu0 0.0
    %1587 = vmatprep.subr.mxu0 0.0
    %1588 = vmatpush1.xpose.msra.mxu0 0.0
    %1589 = vmatprep.subr.mxu0 0.0
    %1590 = vmatpush1.xpose.msra.mxu0 0.0
    %1591 = vmatprep.subr.mxu0 0.0
    %1592 = vmatpush1.xpose.msra.mxu0 0.0
    %1593 = vmatprep.subr.mxu0 0.0
    %1594 = vmatpush1.xpose.msra.mxu0 0.0
    %1595 = vmatprep.subr.mxu0 0.0
    %1596 = vmatpush1.xpose.msra.mxu0 0.0
    %1597 = vmatprep.subr.mxu0 0.0
    %1598 = vmatpush1.xpose.msra.mxu0 0.0
    %1599 = vmatprep.subr.mxu0 0.0
    %1600 = vmatpush1.xpose.msra.mxu0 0.0
    %1601 = vmatprep.subr.mxu0 0.0
    %1602 = vmatpush1.xpose.msra.mxu0 0.0
    %1603 = vmatprep.subr.mxu0 0.0
    %1604 = vmatpush1.xpose.msra.mxu0 0.0
    %1605 = vmatprep.subr.mxu0 0.0
    %1606 = vmatpush1.xpose.msra.mxu0 0.0
    %1607 = vmatprep.subr.mxu0 0.0
    %1608 = vmatpush1.xpose.msra.mxu0 0.0
    %1609 = vmatprep.subr.mxu0 0.0
    %1610 = vmatpush1.xpose.msra.mxu0 0.0
    %1611 = vmatprep.subr.mxu0 0.0
    %1612 = vmatpush1.xpose.msra.mxu0 0.0
    %1613 = vmatprep.subr.mxu0 0.0
    %1614 = vmatpush1.xpose.msra.mxu0 0.0
    %1615 = vmatprep.subr.mxu0 0.0
    %1616 = vmatpush1.xpose.msra.mxu0 0.0
    %1617 = vmatprep.mubr.f32.mxu0 0.0
    %1618 = vmatmul.mubr.f32.gmra.mrb[0].mxu0 %v1549
    %v1619 = vpop.f32.mrb[0].mxu0
    %v1620 = vadd.f32 0.0, %v1619
    %v1621 = vpop.f32.mrb[0].mxu0
    %1622 = vdwg.mxu0
    %vm1623 = vcmask 27648
    %v1624 = vsel %vm1623, %v465, -inf
    %1625 = vmax.xlane.f32.xlu0 %v1624
    %v1626 = vpop.xlane.xlu0 %1625
    %v1627 = vsel %vm1623, %v542, -inf
    %1628 = vmax.xlane.f32.xlu0 %v1627
    %v1629 = vpop.xlane.xlu0 %1628
    %v1630 = vsel %vm1623, %v619, -inf
    %1631 = vmax.xlane.f32.xlu0 %v1630
    %v1632 = vpop.xlane.xlu0 %1631
    %v1633 = vsel %vm1623, %v696, -inf
    %1634 = vmax.xlane.f32.xlu0 %v1633
    %v1635 = vpop.xlane.xlu0 %1634
    %v1636 = vsel %vm1623, %v773, -inf
    %1637 = vmax.xlane.f32.xlu0 %v1636
    %v1638 = vpop.xlane.xlu0 %1637
    %v1639 = vsel %vm1623, %v850, -inf
    %1640 = vmax.xlane.f32.xlu0 %v1639
    %v1641 = vpop.xlane.xlu0 %1640
    %v1642 = vsel %vm1623, %v927, -inf
    %1643 = vmax.xlane.f32.xlu0 %v1642
    %v1644 = vpop.xlane.xlu0 %1643
    %v1645 = vsel %vm1623, %v1004, -inf
    %1646 = vmax.xlane.f32.xlu0 %v1645
    %v1647 = vpop.xlane.xlu0 %1646
    %v1648 = vsel %vm1623, %v1081, -inf
    %1649 = vmax.xlane.f32.xlu0 %v1648
    %v1650 = vpop.xlane.xlu0 %1649
    %v1651 = vsel %vm1623, %v1158, -inf
    %1652 = vmax.xlane.f32.xlu0 %v1651
    %v1653 = vpop.xlane.xlu0 %1652
    %v1654 = vsel %vm1623, %v1235, -inf
    %1655 = vmax.xlane.f32.xlu0 %v1654
    %v1656 = vpop.xlane.xlu0 %1655
    %v1657 = vsel %vm1623, %v1312, -inf
    %1658 = vmax.xlane.f32.xlu0 %v1657
    %v1659 = vpop.xlane.xlu0 %1658
    %v1660 = vsel %vm1623, %v1389, -inf
    %1661 = vmax.xlane.f32.xlu0 %v1660
    %v1662 = vpop.xlane.xlu0 %1661
    %v1663 = vsel %vm1623, %v1466, -inf
    %1664 = vmax.xlane.f32.xlu0 %v1663
    %v1665 = vpop.xlane.xlu0 %1664
    %v1666 = vsel %vm1623, %v1543, -inf
    %1667 = vmax.xlane.f32.xlu0 %v1666
    %v1668 = vpop.xlane.xlu0 %1667
    %v1669 = vsel %vm1623, %v1620, -inf
    %1670 = vmax.xlane.f32.xlu0 %v1669
    %v1671 = vpop.xlane.xlu0 %1670
    %v1672 = vsub.f32 %v465, %v1626
    %v1673 = vsub.f32 %v542, %v1629
    %v1674 = vsub.f32 %v619, %v1632
    %v1675 = vsub.f32 %v696, %v1635
    %v1676 = vsub.f32 %v773, %v1638
    %v1677 = vsub.f32 %v850, %v1641
    %v1678 = vsub.f32 %v927, %v1644
    %v1679 = vsub.f32 %v1004, %v1647
    %v1680 = vsub.f32 %v1081, %v1650
    %v1681 = vsub.f32 %v1158, %v1653
    %v1682 = vsub.f32 %v1235, %v1656
    %v1683 = vsub.f32 %v1312, %v1659
    %v1684 = vsub.f32 %v1389, %v1662
    %v1685 = vsub.f32 %v1466, %v1665
    %v1686 = vsub.f32 %v1543, %v1668
    %v1687 = vsub.f32 %v1620, %v1671
    %v1688 = vmul.f32 %v1672, 1.442695
    %v1689 = vpow.pop %v1688
    %v1690 = vmul.f32 %v1673, 1.442695
    %v1691 = vpow.pop %v1690
    %v1692 = vmul.f32 %v1674, 1.442695
    %v1693 = vpow.pop %v1692
    %v1694 = vmul.f32 %v1675, 1.442695
    %v1695 = vpow.pop %v1694
    %v1696 = vmul.f32 %v1676, 1.442695
    %v1697 = vpow.pop %v1696
    %v1698 = vmul.f32 %v1677, 1.442695
    %v1699 = vpow.pop %v1698
    %v1700 = vmul.f32 %v1678, 1.442695
    %v1701 = vpow.pop %v1700
    %v1702 = vmul.f32 %v1679, 1.442695
    %v1703 = vpow.pop %v1702
    %v1704 = vmul.f32 %v1680, 1.442695
    %v1705 = vpow.pop %v1704
    %v1706 = vmul.f32 %v1681, 1.442695
    %v1707 = vpow.pop %v1706
    %v1708 = vmul.f32 %v1682, 1.442695
    %v1709 = vpow.pop %v1708
    %v1710 = vmul.f32 %v1683, 1.442695
    %v1711 = vpow.pop %v1710
    %v1712 = vmul.f32 %v1684, 1.442695
    %v1713 = vpow.pop %v1712
    %v1714 = vmul.f32 %v1685, 1.442695
    %v1715 = vpow.pop %v1714
    %v1716 = vmul.f32 %v1686, 1.442695
    %v1717 = vpow.pop %v1716
    %v1718 = vmul.f32 %v1687, 1.442695
    %v1719 = vpow.pop %v1718
    %v1720 = vsel %vm1623, %v1689, 0.0
    %1721 = vadd.xlane.f32.xlu0 %v1720
    %v1722 = vpop.xlane.xlu0 %1721
    %v1723 = vsel %vm1623, %v1691, 0.0
    %1724 = vadd.xlane.f32.xlu0 %v1723
    %v1725 = vpop.xlane.xlu0 %1724
    %v1726 = vsel %vm1623, %v1693, 0.0
    %1727 = vadd.xlane.f32.xlu0 %v1726
    %v1728 = vpop.xlane.xlu0 %1727
    %v1729 = vsel %vm1623, %v1695, 0.0
    %1730 = vadd.xlane.f32.xlu0 %v1729
    %v1731 = vpop.xlane.xlu0 %1730
    %v1732 = vsel %vm1623, %v1697, 0.0
    %1733 = vadd.xlane.f32.xlu0 %v1732
    %v1734 = vpop.xlane.xlu0 %1733
    %v1735 = vsel %vm1623, %v1699, 0.0
    %1736 = vadd.xlane.f32.xlu0 %v1735
    %v1737 = vpop.xlane.xlu0 %1736
    %v1738 = vsel %vm1623, %v1701, 0.0
    %1739 = vadd.xlane.f32.xlu0 %v1738
    %v1740 = vpop.xlane.xlu0 %1739
    %v1741 = vsel %vm1623, %v1703, 0.0
    %1742 = vadd.xlane.f32.xlu0 %v1741
    %v1743 = vpop.xlane.xlu0 %1742
    %v1744 = vsel %vm1623, %v1705, 0.0
    %1745 = vadd.xlane.f32.xlu0 %v1744
    %v1746 = vpop.xlane.xlu0 %1745
    %v1747 = vsel %vm1623, %v1707, 0.0
    %1748 = vadd.xlane.f32.xlu0 %v1747
    %v1749 = vpop.xlane.xlu0 %1748
    %v1750 = vsel %vm1623, %v1709, 0.0
    %1751 = vadd.xlane.f32.xlu0 %v1750
    %v1752 = vpop.xlane.xlu0 %1751
    %v1753 = vsel %vm1623, %v1711, 0.0
    %1754 = vadd.xlane.f32.xlu0 %v1753
    %v1755 = vpop.xlane.xlu0 %1754
    %v1756 = vsel %vm1623, %v1713, 0.0
    %1757 = vadd.xlane.f32.xlu0 %v1756
    %v1758 = vpop.xlane.xlu0 %1757
    %v1759 = vsel %vm1623, %v1715, 0.0
    %1760 = vadd.xlane.f32.xlu0 %v1759
    %v1761 = vpop.xlane.xlu0 %1760
    %v1762 = vsel %vm1623, %v1717, 0.0
    %1763 = vadd.xlane.f32.xlu0 %v1762
    %v1764 = vpop.xlane.xlu0 %1763
    %v1765 = vsel %vm1623, %v1719, 0.0
    %1766 = vadd.xlane.f32.xlu0 %v1765
    %v1767 = vpop.xlane.xlu0 %1766
    %v1768 = vrcp.pop %v1722
    %v1769 = vrcp.pop %v1725
    %v1770 = vrcp.pop %v1728
    %v1771 = vrcp.pop %v1731
    %v1772 = vrcp.pop %v1734
    %v1773 = vrcp.pop %v1737
    %v1774 = vrcp.pop %v1740
    %v1775 = vrcp.pop %v1743
    %v1776 = vrcp.pop %v1746
    %v1777 = vrcp.pop %v1749
    %v1778 = vrcp.pop %v1752
    %v1779 = vrcp.pop %v1755
    %v1780 = vrcp.pop %v1758
    %v1781 = vrcp.pop %v1761
    %v1782 = vrcp.pop %v1764
    %v1783 = vrcp.pop %v1767
    %v1784 = vmul.f32 %v1689, %v1768
    %v1785 = vmul.f32 %v1691, %v1769
    %v1786 = vmul.f32 %v1693, %v1770
    %v1787 = vmul.f32 %v1695, %v1771
    %v1788 = vmul.f32 %v1697, %v1772
    %v1789 = vmul.f32 %v1699, %v1773
    %v1790 = vmul.f32 %v1701, %v1774
    %v1791 = vmul.f32 %v1703, %v1775
    %v1792 = vmul.f32 %v1705, %v1776
    %v1793 = vmul.f32 %v1707, %v1777
    %v1794 = vmul.f32 %v1709, %v1778
    %v1795 = vmul.f32 %v1711, %v1779
    %v1796 = vmul.f32 %v1713, %v1780
    %v1797 = vmul.f32 %v1715, %v1781
    %v1798 = vmul.f32 %v1717, %v1782
    %v1799 = vmul.f32 %v1719, %v1783
    %1800 = vrot.lane.b32.xlu0 %v312, 120
    %v1801 = vpop.permute.xlu0 %1800
    %v1803 = vsel %vm202, %v1784, 0
    %v1805 = vsel %vm241, %v1801, 0
    %1807 = vmatprep.subr.mxu0 0.0
    %1808 = vmatpush1.msra.mxu0 %v1805
    %1809 = vmatprep.subr.mxu0 0.0
    %1810 = vmatpush1.msra.mxu0 0.0
    %1811 = vmatprep.subr.mxu0 0.0
    %1812 = vmatpush1.msra.mxu0 0.0
    %1813 = vmatprep.subr.mxu0 0.0
    %1814 = vmatpush1.msra.mxu0 0.0
    %1815 = vmatprep.subr.mxu0 0.0
    %1816 = vmatpush1.msra.mxu0 0.0
    %1817 = vmatprep.subr.mxu0 0.0
    %1818 = vmatpush1.msra.mxu0 0.0
    %1819 = vmatprep.subr.mxu0 0.0
    %1820 = vmatpush1.msra.mxu0 0.0
    %1821 = vmatprep.subr.mxu0 0.0
    %1822 = vmatpush1.msra.mxu0 0.0
    %1823 = vmatprep.subr.mxu0 0.0
    %1824 = vmatpush1.msra.mxu0 0.0
    %1825 = vmatprep.subr.mxu0 0.0
    %1826 = vmatpush1.msra.mxu0 0.0
    %1827 = vmatprep.subr.mxu0 0.0
    %1828 = vmatpush1.msra.mxu0 0.0
    %1829 = vmatprep.subr.mxu0 0.0
    %1830 = vmatpush1.msra.mxu0 0.0
    %1831 = vmatprep.subr.mxu0 0.0
    %1832 = vmatpush1.msra.mxu0 0.0
    %1833 = vmatprep.subr.mxu0 0.0
    %1834 = vmatpush1.msra.mxu0 0.0
    %1835 = vmatprep.subr.mxu0 0.0
    %1836 = vmatpush1.msra.mxu0 0.0
    %1837 = vmatprep.subr.mxu0 0.0
    %1838 = vmatpush1.msra.mxu0 0.0
    %1839 = vmatprep.subr.mxu0 0.0
    %1840 = vmatpush1.msra.mxu0 0.0
    %1841 = vmatprep.subr.mxu0 0.0
    %1842 = vmatpush1.msra.mxu0 0.0
    %1843 = vmatprep.subr.mxu0 0.0
    %1844 = vmatpush1.msra.mxu0 0.0
    %1845 = vmatprep.subr.mxu0 0.0
    %1846 = vmatpush1.msra.mxu0 0.0
    %1847 = vmatprep.subr.mxu0 0.0
    %1848 = vmatpush1.msra.mxu0 0.0
    %1849 = vmatprep.subr.mxu0 0.0
    %1850 = vmatpush1.msra.mxu0 0.0
    %1851 = vmatprep.subr.mxu0 0.0
    %1852 = vmatpush1.msra.mxu0 0.0
    %1853 = vmatprep.subr.mxu0 0.0
    %1854 = vmatpush1.msra.mxu0 0.0
    %1855 = vmatprep.subr.mxu0 0.0
    %1856 = vmatpush1.msra.mxu0 0.0
    %1857 = vmatprep.subr.mxu0 0.0
    %1858 = vmatpush1.msra.mxu0 0.0
    %1859 = vmatprep.subr.mxu0 0.0
    %1860 = vmatpush1.msra.mxu0 0.0
    %1861 = vmatprep.subr.mxu0 0.0
    %1862 = vmatpush1.msra.mxu0 0.0
    %1863 = vmatprep.subr.mxu0 0.0
    %1864 = vmatpush1.msra.mxu0 0.0
    %1865 = vmatprep.subr.mxu0 0.0
    %1866 = vmatpush1.msra.mxu0 0.0
    %1867 = vmatprep.subr.mxu0 0.0
    %1868 = vmatpush1.msra.mxu0 0.0
    %1869 = vmatprep.subr.mxu0 0.0
    %1870 = vmatpush1.msra.mxu0 0.0
    %1871 = vmatprep.mubr.f32.mxu0 0.0
    %1872 = vmatmul.mubr.f32.gmra.mrb[0].mxu0 %v1803
    %v1873 = vpop.f32.mrb[0].mxu0
    %v1874 = vadd.f32 0.0, %v1873
    %v1875 = vpop.f32.mrb[0].mxu0
    %1876 = vdwg.mxu0
    %1877 = vrot.lane.b32.xlu0 %v358, 120
    %v1878 = vpop.permute.xlu0 %1877
    %v1880 = vsel %vm202, %v1785, 0
    %v1882 = vsel %vm241, %v1878, 0
    %1884 = vmatprep.subr.mxu0 0.0
    %1885 = vmatpush1.msra.mxu0 %v1882
    %1886 = vmatprep.subr.mxu0 0.0
    %1887 = vmatpush1.msra.mxu0 0.0
    %1888 = vmatprep.subr.mxu0 0.0
    %1889 = vmatpush1.msra.mxu0 0.0
    %1890 = vmatprep.subr.mxu0 0.0
    %1891 = vmatpush1.msra.mxu0 0.0
    %1892 = vmatprep.subr.mxu0 0.0
    %1893 = vmatpush1.msra.mxu0 0.0
    %1894 = vmatprep.subr.mxu0 0.0
    %1895 = vmatpush1.msra.mxu0 0.0
    %1896 = vmatprep.subr.mxu0 0.0
    %1897 = vmatpush1.msra.mxu0 0.0
    %1898 = vmatprep.subr.mxu0 0.0
    %1899 = vmatpush1.msra.mxu0 0.0
    %1900 = vmatprep.subr.mxu0 0.0
    %1901 = vmatpush1.msra.mxu0 0.0
    %1902 = vmatprep.subr.mxu0 0.0
    %1903 = vmatpush1.msra.mxu0 0.0
    %1904 = vmatprep.subr.mxu0 0.0
    %1905 = vmatpush1.msra.mxu0 0.0
    %1906 = vmatprep.subr.mxu0 0.0
    %1907 = vmatpush1.msra.mxu0 0.0
    %1908 = vmatprep.subr.mxu0 0.0
    %1909 = vmatpush1.msra.mxu0 0.0
    %1910 = vmatprep.subr.mxu0 0.0
    %1911 = vmatpush1.msra.mxu0 0.0
    %1912 = vmatprep.subr.mxu0 0.0
    %1913 = vmatpush1.msra.mxu0 0.0
    %1914 = vmatprep.subr.mxu0 0.0
    %1915 = vmatpush1.msra.mxu0 0.0
    %1916 = vmatprep.subr.mxu0 0.0
    %1917 = vmatpush1.msra.mxu0 0.0
    %1918 = vmatprep.subr.mxu0 0.0
    %1919 = vmatpush1.msra.mxu0 0.0
    %1920 = vmatprep.subr.mxu0 0.0
    %1921 = vmatpush1.msra.mxu0 0.0
    %1922 = vmatprep.subr.mxu0 0.0
    %1923 = vmatpush1.msra.mxu0 0.0
    %1924 = vmatprep.subr.mxu0 0.0
    %1925 = vmatpush1.msra.mxu0 0.0
    %1926 = vmatprep.subr.mxu0 0.0
    %1927 = vmatpush1.msra.mxu0 0.0
    %1928 = vmatprep.subr.mxu0 0.0
    %1929 = vmatpush1.msra.mxu0 0.0
    %1930 = vmatprep.subr.mxu0 0.0
    %1931 = vmatpush1.msra.mxu0 0.0
    %1932 = vmatprep.subr.mxu0 0.0
    %1933 = vmatpush1.msra.mxu0 0.0
    %1934 = vmatprep.subr.mxu0 0.0
    %1935 = vmatpush1.msra.mxu0 0.0
    %1936 = vmatprep.subr.mxu0 0.0
    %1937 = vmatpush1.msra.mxu0 0.0
    %1938 = vmatprep.subr.mxu0 0.0
    %1939 = vmatpush1.msra.mxu0 0.0
    %1940 = vmatprep.subr.mxu0 0.0
    %1941 = vmatpush1.msra.mxu0 0.0
    %1942 = vmatprep.subr.mxu0 0.0
    %1943 = vmatpush1.msra.mxu0 0.0
    %1944 = vmatprep.subr.mxu0 0.0
    %1945 = vmatpush1.msra.mxu0 0.0
    %1946 = vmatprep.subr.mxu0 0.0
    %1947 = vmatpush1.msra.mxu0 0.0
    %1948 = vmatprep.mubr.f32.mxu0 0.0
    %1949 = vmatmul.mubr.f32.gmra.mrb[0].mxu0 %v1880
    %v1950 = vpop.f32.mrb[0].mxu0
    %v1951 = vadd.f32 0.0, %v1950
    %v1952 = vpop.f32.mrb[0].mxu0
    %1953 = vdwg.mxu0
    %1954 = vrot.lane.b32.xlu0 %v317, 120
    %v1955 = vpop.permute.xlu0 %1954
    %v1957 = vsel %vm202, %v1786, 0
    %v1959 = vsel %vm241, %v1955, 0
    %1961 = vmatprep.subr.mxu0 0.0
    %1962 = vmatpush1.msra.mxu0 %v1959
    %1963 = vmatprep.subr.mxu0 0.0
    %1964 = vmatpush1.msra.mxu0 0.0
    %1965 = vmatprep.subr.mxu0 0.0
    %1966 = vmatpush1.msra.mxu0 0.0
    %1967 = vmatprep.subr.mxu0 0.0
    %1968 = vmatpush1.msra.mxu0 0.0
    %1969 = vmatprep.subr.mxu0 0.0
    %1970 = vmatpush1.msra.mxu0 0.0
    %1971 = vmatprep.subr.mxu0 0.0
    %1972 = vmatpush1.msra.mxu0 0.0
    %1973 = vmatprep.subr.mxu0 0.0
    %1974 = vmatpush1.msra.mxu0 0.0
    %1975 = vmatprep.subr.mxu0 0.0
    %1976 = vmatpush1.msra.mxu0 0.0
    %1977 = vmatprep.subr.mxu0 0.0
    %1978 = vmatpush1.msra.mxu0 0.0
    %1979 = vmatprep.subr.mxu0 0.0
    %1980 = vmatpush1.msra.mxu0 0.0
    %1981 = vmatprep.subr.mxu0 0.0
    %1982 = vmatpush1.msra.mxu0 0.0
    %1983 = vmatprep.subr.mxu0 0.0
    %1984 = vmatpush1.msra.mxu0 0.0
    %1985 = vmatprep.subr.mxu0 0.0
    %1986 = vmatpush1.msra.mxu0 0.0
    %1987 = vmatprep.subr.mxu0 0.0
    %1988 = vmatpush1.msra.mxu0 0.0
    %1989 = vmatprep.subr.mxu0 0.0
    %1990 = vmatpush1.msra.mxu0 0.0
    %1991 = vmatprep.subr.mxu0 0.0
    %1992 = vmatpush1.msra.mxu0 0.0
    %1993 = vmatprep.subr.mxu0 0.0
    %1994 = vmatpush1.msra.mxu0 0.0
    %1995 = vmatprep.subr.mxu0 0.0
    %1996 = vmatpush1.msra.mxu0 0.0
    %1997 = vmatprep.subr.mxu0 0.0
    %1998 = vmatpush1.msra.mxu0 0.0
    %1999 = vmatprep.subr.mxu0 0.0
    %2000 = vmatpush1.msra.mxu0 0.0
    %2001 = vmatprep.subr.mxu0 0.0
    %2002 = vmatpush1.msra.mxu0 0.0
    %2003 = vmatprep.subr.mxu0 0.0
    %2004 = vmatpush1.msra.mxu0 0.0
    %2005 = vmatprep.subr.mxu0 0.0
    %2006 = vmatpush1.msra.mxu0 0.0
    %2007 = vmatprep.subr.mxu0 0.0
    %2008 = vmatpush1.msra.mxu0 0.0
    %2009 = vmatprep.subr.mxu0 0.0
    %2010 = vmatpush1.msra.mxu0 0.0
    %2011 = vmatprep.subr.mxu0 0.0
    %2012 = vmatpush1.msra.mxu0 0.0
    %2013 = vmatprep.subr.mxu0 0.0
    %2014 = vmatpush1.msra.mxu0 0.0
    %2015 = vmatprep.subr.mxu0 0.0
    %2016 = vmatpush1.msra.mxu0 0.0
    %2017 = vmatprep.subr.mxu0 0.0
    %2018 = vmatpush1.msra.mxu0 0.0
    %2019 = vmatprep.subr.mxu0 0.0
    %2020 = vmatpush1.msra.mxu0 0.0
    %2021 = vmatprep.subr.mxu0 0.0
    %2022 = vmatpush1.msra.mxu0 0.0
    %2023 = vmatprep.subr.mxu0 0.0
    %2024 = vmatpush1.msra.mxu0 0.0
    %2025 = vmatprep.mubr.f32.mxu0 0.0
    %2026 = vmatmul.mubr.f32.gmra.mrb[0].mxu0 %v1957
    %v2027 = vpop.f32.mrb[0].mxu0
    %v2028 = vadd.f32 0.0, %v2027
    %v2029 = vpop.f32.mrb[0].mxu0
    %2030 = vdwg.mxu0
    %2031 = vrot.lane.b32.xlu0 %v359, 120
    %v2032 = vpop.permute.xlu0 %2031
    %v2034 = vsel %vm202, %v1787, 0
    %v2036 = vsel %vm241, %v2032, 0
    %2038 = vmatprep.subr.mxu0 0.0
    %2039 = vmatpush1.msra.mxu0 %v2036
    %2040 = vmatprep.subr.mxu0 0.0
    %2041 = vmatpush1.msra.mxu0 0.0
    %2042 = vmatprep.subr.mxu0 0.0
    %2043 = vmatpush1.msra.mxu0 0.0
    %2044 = vmatprep.subr.mxu0 0.0
    %2045 = vmatpush1.msra.mxu0 0.0
    %2046 = vmatprep.subr.mxu0 0.0
    %2047 = vmatpush1.msra.mxu0 0.0
    %2048 = vmatprep.subr.mxu0 0.0
    %2049 = vmatpush1.msra.mxu0 0.0
    %2050 = vmatprep.subr.mxu0 0.0
    %2051 = vmatpush1.msra.mxu0 0.0
    %2052 = vmatprep.subr.mxu0 0.0
    %2053 = vmatpush1.msra.mxu0 0.0
    %2054 = vmatprep.subr.mxu0 0.0
    %2055 = vmatpush1.msra.mxu0 0.0
    %2056 = vmatprep.subr.mxu0 0.0
    %2057 = vmatpush1.msra.mxu0 0.0
    %2058 = vmatprep.subr.mxu0 0.0
    %2059 = vmatpush1.msra.mxu0 0.0
    %2060 = vmatprep.subr.mxu0 0.0
    %2061 = vmatpush1.msra.mxu0 0.0
    %2062 = vmatprep.subr.mxu0 0.0
    %2063 = vmatpush1.msra.mxu0 0.0
    %2064 = vmatprep.subr.mxu0 0.0
    %2065 = vmatpush1.msra.mxu0 0.0
    %2066 = vmatprep.subr.mxu0 0.0
    %2067 = vmatpush1.msra.mxu0 0.0
    %2068 = vmatprep.subr.mxu0 0.0
    %2069 = vmatpush1.msra.mxu0 0.0
    %2070 = vmatprep.subr.mxu0 0.0
    %2071 = vmatpush1.msra.mxu0 0.0
    %2072 = vmatprep.subr.mxu0 0.0
    %2073 = vmatpush1.msra.mxu0 0.0
    %2074 = vmatprep.subr.mxu0 0.0
    %2075 = vmatpush1.msra.mxu0 0.0
    %2076 = vmatprep.subr.mxu0 0.0
    %2077 = vmatpush1.msra.mxu0 0.0
    %2078 = vmatprep.subr.mxu0 0.0
    %2079 = vmatpush1.msra.mxu0 0.0
    %2080 = vmatprep.subr.mxu0 0.0
    %2081 = vmatpush1.msra.mxu0 0.0
    %2082 = vmatprep.subr.mxu0 0.0
    %2083 = vmatpush1.msra.mxu0 0.0
    %2084 = vmatprep.subr.mxu0 0.0
    %2085 = vmatpush1.msra.mxu0 0.0
    %2086 = vmatprep.subr.mxu0 0.0
    %2087 = vmatpush1.msra.mxu0 0.0
    %2088 = vmatprep.subr.mxu0 0.0
    %2089 = vmatpush1.msra.mxu0 0.0
    %2090 = vmatprep.subr.mxu0 0.0
    %2091 = vmatpush1.msra.mxu0 0.0
    %2092 = vmatprep.subr.mxu0 0.0
    %2093 = vmatpush1.msra.mxu0 0.0
    %2094 = vmatprep.subr.mxu0 0.0
    %2095 = vmatpush1.msra.mxu0 0.0
    %2096 = vmatprep.subr.mxu0 0.0
    %2097 = vmatpush1.msra.mxu0 0.0
    %2098 = vmatprep.subr.mxu0 0.0
    %2099 = vmatpush1.msra.mxu0 0.0
    %2100 = vmatprep.subr.mxu0 0.0
    %2101 = vmatpush1.msra.mxu0 0.0
    %2102 = vmatprep.mubr.f32.mxu0 0.0
    %2103 = vmatmul.mubr.f32.gmra.mrb[0].mxu0 %v2034
    %v2104 = vpop.f32.mrb[0].mxu0
    %v2105 = vadd.f32 0.0, %v2104
    %v2106 = vpop.f32.mrb[0].mxu0
    %2107 = vdwg.mxu0
    %2108 = vrot.lane.b32.xlu0 %v322, 120
    %v2109 = vpop.permute.xlu0 %2108
    %v2111 = vsel %vm202, %v1788, 0
    %v2113 = vsel %vm241, %v2109, 0
    %2115 = vmatprep.subr.mxu0 0.0
    %2116 = vmatpush1.msra.mxu0 %v2113
    %2117 = vmatprep.subr.mxu0 0.0
    %2118 = vmatpush1.msra.mxu0 0.0
    %2119 = vmatprep.subr.mxu0 0.0
    %2120 = vmatpush1.msra.mxu0 0.0
    %2121 = vmatprep.subr.mxu0 0.0
    %2122 = vmatpush1.msra.mxu0 0.0
    %2123 = vmatprep.subr.mxu0 0.0
    %2124 = vmatpush1.msra.mxu0 0.0
    %2125 = vmatprep.subr.mxu0 0.0
    %2126 = vmatpush1.msra.mxu0 0.0
    %2127 = vmatprep.subr.mxu0 0.0
    %2128 = vmatpush1.msra.mxu0 0.0
    %2129 = vmatprep.subr.mxu0 0.0
    %2130 = vmatpush1.msra.mxu0 0.0
    %2131 = vmatprep.subr.mxu0 0.0
    %2132 = vmatpush1.msra.mxu0 0.0
    %2133 = vmatprep.subr.mxu0 0.0
    %2134 = vmatpush1.msra.mxu0 0.0
    %2135 = vmatprep.subr.mxu0 0.0
    %2136 = vmatpush1.msra.mxu0 0.0
    %2137 = vmatprep.subr.mxu0 0.0
    %2138 = vmatpush1.msra.mxu0 0.0
    %2139 = vmatprep.subr.mxu0 0.0
    %2140 = vmatpush1.msra.mxu0 0.0
    %2141 = vmatprep.subr.mxu0 0.0
    %2142 = vmatpush1.msra.mxu0 0.0
    %2143 = vmatprep.subr.mxu0 0.0
    %2144 = vmatpush1.msra.mxu0 0.0
    %2145 = vmatprep.subr.mxu0 0.0
    %2146 = vmatpush1.msra.mxu0 0.0
    %2147 = vmatprep.subr.mxu0 0.0
    %2148 = vmatpush1.msra.mxu0 0.0
    %2149 = vmatprep.subr.mxu0 0.0
    %2150 = vmatpush1.msra.mxu0 0.0
    %2151 = vmatprep.subr.mxu0 0.0
    %2152 = vmatpush1.msra.mxu0 0.0
    %2153 = vmatprep.subr.mxu0 0.0
    %2154 = vmatpush1.msra.mxu0 0.0
    %2155 = vmatprep.subr.mxu0 0.0
    %2156 = vmatpush1.msra.mxu0 0.0
    %2157 = vmatprep.subr.mxu0 0.0
    %2158 = vmatpush1.msra.mxu0 0.0
    %2159 = vmatprep.subr.mxu0 0.0
    %2160 = vmatpush1.msra.mxu0 0.0
    %2161 = vmatprep.subr.mxu0 0.0
    %2162 = vmatpush1.msra.mxu0 0.0
    %2163 = vmatprep.subr.mxu0 0.0
    %2164 = vmatpush1.msra.mxu0 0.0
    %2165 = vmatprep.subr.mxu0 0.0
    %2166 = vmatpush1.msra.mxu0 0.0
    %2167 = vmatprep.subr.mxu0 0.0
    %2168 = vmatpush1.msra.mxu0 0.0
    %2169 = vmatprep.subr.mxu0 0.0
    %2170 = vmatpush1.msra.mxu0 0.0
    %2171 = vmatprep.subr.mxu0 0.0
    %2172 = vmatpush1.msra.mxu0 0.0
    %2173 = vmatprep.subr.mxu0 0.0
    %2174 = vmatpush1.msra.mxu0 0.0
    %2175 = vmatprep.subr.mxu0 0.0
    %2176 = vmatpush1.msra.mxu0 0.0
    %2177 = vmatprep.subr.mxu0 0.0
    %2178 = vmatpush1.msra.mxu0 0.0
    %2179 = vmatprep.mubr.f32.mxu0 0.0
    %2180 = vmatmul.mubr.f32.gmra.mrb[0].mxu0 %v2111
    %v2181 = vpop.f32.mrb[0].mxu0
    %v2182 = vadd.f32 0.0, %v2181
    %v2183 = vpop.f32.mrb[0].mxu0
    %2184 = vdwg.mxu0
    %2185 = vrot.lane.b32.xlu0 %v360, 120
    %v2186 = vpop.permute.xlu0 %2185
    %v2188 = vsel %vm202, %v1789, 0
    %v2190 = vsel %vm241, %v2186, 0
    %2192 = vmatprep.subr.mxu0 0.0
    %2193 = vmatpush1.msra.mxu0 %v2190
    %2194 = vmatprep.subr.mxu0 0.0
    %2195 = vmatpush1.msra.mxu0 0.0
    %2196 = vmatprep.subr.mxu0 0.0
    %2197 = vmatpush1.msra.mxu0 0.0
    %2198 = vmatprep.subr.mxu0 0.0
    %2199 = vmatpush1.msra.mxu0 0.0
    %2200 = vmatprep.subr.mxu0 0.0
    %2201 = vmatpush1.msra.mxu0 0.0
    %2202 = vmatprep.subr.mxu0 0.0
    %2203 = vmatpush1.msra.mxu0 0.0
    %2204 = vmatprep.subr.mxu0 0.0
    %2205 = vmatpush1.msra.mxu0 0.0
    %2206 = vmatprep.subr.mxu0 0.0
    %2207 = vmatpush1.msra.mxu0 0.0
    %2208 = vmatprep.subr.mxu0 0.0
    %2209 = vmatpush1.msra.mxu0 0.0
    %2210 = vmatprep.subr.mxu0 0.0
    %2211 = vmatpush1.msra.mxu0 0.0
    %2212 = vmatprep.subr.mxu0 0.0
    %2213 = vmatpush1.msra.mxu0 0.0
    %2214 = vmatprep.subr.mxu0 0.0
    %2215 = vmatpush1.msra.mxu0 0.0
    %2216 = vmatprep.subr.mxu0 0.0
    %2217 = vmatpush1.msra.mxu0 0.0
    %2218 = vmatprep.subr.mxu0 0.0
    %2219 = vmatpush1.msra.mxu0 0.0
    %2220 = vmatprep.subr.mxu0 0.0
    %2221 = vmatpush1.msra.mxu0 0.0
    %2222 = vmatprep.subr.mxu0 0.0
    %2223 = vmatpush1.msra.mxu0 0.0
    %2224 = vmatprep.subr.mxu0 0.0
    %2225 = vmatpush1.msra.mxu0 0.0
    %2226 = vmatprep.subr.mxu0 0.0
    %2227 = vmatpush1.msra.mxu0 0.0
    %2228 = vmatprep.subr.mxu0 0.0
    %2229 = vmatpush1.msra.mxu0 0.0
    %2230 = vmatprep.subr.mxu0 0.0
    %2231 = vmatpush1.msra.mxu0 0.0
    %2232 = vmatprep.subr.mxu0 0.0
    %2233 = vmatpush1.msra.mxu0 0.0
    %2234 = vmatprep.subr.mxu0 0.0
    %2235 = vmatpush1.msra.mxu0 0.0
    %2236 = vmatprep.subr.mxu0 0.0
    %2237 = vmatpush1.msra.mxu0 0.0
    %2238 = vmatprep.subr.mxu0 0.0
    %2239 = vmatpush1.msra.mxu0 0.0
    %2240 = vmatprep.subr.mxu0 0.0
    %2241 = vmatpush1.msra.mxu0 0.0
    %2242 = vmatprep.subr.mxu0 0.0
    %2243 = vmatpush1.msra.mxu0 0.0
    %2244 = vmatprep.subr.mxu0 0.0
    %2245 = vmatpush1.msra.mxu0 0.0
    %2246 = vmatprep.subr.mxu0 0.0
    %2247 = vmatpush1.msra.mxu0 0.0
    %2248 = vmatprep.subr.mxu0 0.0
    %2249 = vmatpush1.msra.mxu0 0.0
    %2250 = vmatprep.subr.mxu0 0.0
    %2251 = vmatpush1.msra.mxu0 0.0
    %2252 = vmatprep.subr.mxu0 0.0
    %2253 = vmatpush1.msra.mxu0 0.0
    %2254 = vmatprep.subr.mxu0 0.0
    %2255 = vmatpush1.msra.mxu0 0.0
    %2256 = vmatprep.mubr.f32.mxu0 0.0
    %2257 = vmatmul.mubr.f32.gmra.mrb[0].mxu0 %v2188
    %v2258 = vpop.f32.mrb[0].mxu0
    %v2259 = vadd.f32 0.0, %v2258
    %v2260 = vpop.f32.mrb[0].mxu0
    %2261 = vdwg.mxu0
    %2262 = vrot.lane.b32.xlu0 %v327, 120
    %v2263 = vpop.permute.xlu0 %2262
    %v2265 = vsel %vm202, %v1790, 0
    %v2267 = vsel %vm241, %v2263, 0
    %2269 = vmatprep.subr.mxu0 0.0
    %2270 = vmatpush1.msra.mxu0 %v2267
    %2271 = vmatprep.subr.mxu0 0.0
    %2272 = vmatpush1.msra.mxu0 0.0
    %2273 = vmatprep.subr.mxu0 0.0
    %2274 = vmatpush1.msra.mxu0 0.0
    %2275 = vmatprep.subr.mxu0 0.0
    %2276 = vmatpush1.msra.mxu0 0.0
    %2277 = vmatprep.subr.mxu0 0.0
    %2278 = vmatpush1.msra.mxu0 0.0
    %2279 = vmatprep.subr.mxu0 0.0
    %2280 = vmatpush1.msra.mxu0 0.0
    %2281 = vmatprep.subr.mxu0 0.0
    %2282 = vmatpush1.msra.mxu0 0.0
    %2283 = vmatprep.subr.mxu0 0.0
    %2284 = vmatpush1.msra.mxu0 0.0
    %2285 = vmatprep.subr.mxu0 0.0
    %2286 = vmatpush1.msra.mxu0 0.0
    %2287 = vmatprep.subr.mxu0 0.0
    %2288 = vmatpush1.msra.mxu0 0.0
    %2289 = vmatprep.subr.mxu0 0.0
    %2290 = vmatpush1.msra.mxu0 0.0
    %2291 = vmatprep.subr.mxu0 0.0
    %2292 = vmatpush1.msra.mxu0 0.0
    %2293 = vmatprep.subr.mxu0 0.0
    %2294 = vmatpush1.msra.mxu0 0.0
    %2295 = vmatprep.subr.mxu0 0.0
    %2296 = vmatpush1.msra.mxu0 0.0
    %2297 = vmatprep.subr.mxu0 0.0
    %2298 = vmatpush1.msra.mxu0 0.0
    %2299 = vmatprep.subr.mxu0 0.0
    %2300 = vmatpush1.msra.mxu0 0.0
    %2301 = vmatprep.subr.mxu0 0.0
    %2302 = vmatpush1.msra.mxu0 0.0
    %2303 = vmatprep.subr.mxu0 0.0
    %2304 = vmatpush1.msra.mxu0 0.0
    %2305 = vmatprep.subr.mxu0 0.0
    %2306 = vmatpush1.msra.mxu0 0.0
    %2307 = vmatprep.subr.mxu0 0.0
    %2308 = vmatpush1.msra.mxu0 0.0
    %2309 = vmatprep.subr.mxu0 0.0
    %2310 = vmatpush1.msra.mxu0 0.0
    %2311 = vmatprep.subr.mxu0 0.0
    %2312 = vmatpush1.msra.mxu0 0.0
    %2313 = vmatprep.subr.mxu0 0.0
    %2314 = vmatpush1.msra.mxu0 0.0
    %2315 = vmatprep.subr.mxu0 0.0
    %2316 = vmatpush1.msra.mxu0 0.0
    %2317 = vmatprep.subr.mxu0 0.0
    %2318 = vmatpush1.msra.mxu0 0.0
    %2319 = vmatprep.subr.mxu0 0.0
    %2320 = vmatpush1.msra.mxu0 0.0
    %2321 = vmatprep.subr.mxu0 0.0
    %2322 = vmatpush1.msra.mxu0 0.0
    %2323 = vmatprep.subr.mxu0 0.0
    %2324 = vmatpush1.msra.mxu0 0.0
    %2325 = vmatprep.subr.mxu0 0.0
    %2326 = vmatpush1.msra.mxu0 0.0
    %2327 = vmatprep.subr.mxu0 0.0
    %2328 = vmatpush1.msra.mxu0 0.0
    %2329 = vmatprep.subr.mxu0 0.0
    %2330 = vmatpush1.msra.mxu0 0.0
    %2331 = vmatprep.subr.mxu0 0.0
    %2332 = vmatpush1.msra.mxu0 0.0
    %2333 = vmatprep.mubr.f32.mxu0 0.0
    %2334 = vmatmul.mubr.f32.gmra.mrb[0].mxu0 %v2265
    %v2335 = vpop.f32.mrb[0].mxu0
    %v2336 = vadd.f32 0.0, %v2335
    %v2337 = vpop.f32.mrb[0].mxu0
    %2338 = vdwg.mxu0
    %2339 = vrot.lane.b32.xlu0 %v361, 120
    %v2340 = vpop.permute.xlu0 %2339
    %v2342 = vsel %vm202, %v1791, 0
    %v2344 = vsel %vm241, %v2340, 0
    %2346 = vmatprep.subr.mxu0 0.0
    %2347 = vmatpush1.msra.mxu0 %v2344
    %2348 = vmatprep.subr.mxu0 0.0
    %2349 = vmatpush1.msra.mxu0 0.0
    %2350 = vmatprep.subr.mxu0 0.0
    %2351 = vmatpush1.msra.mxu0 0.0
    %2352 = vmatprep.subr.mxu0 0.0
    %2353 = vmatpush1.msra.mxu0 0.0
    %2354 = vmatprep.subr.mxu0 0.0
    %2355 = vmatpush1.msra.mxu0 0.0
    %2356 = vmatprep.subr.mxu0 0.0
    %2357 = vmatpush1.msra.mxu0 0.0
    %2358 = vmatprep.subr.mxu0 0.0
    %2359 = vmatpush1.msra.mxu0 0.0
    %2360 = vmatprep.subr.mxu0 0.0
    %2361 = vmatpush1.msra.mxu0 0.0
    %2362 = vmatprep.subr.mxu0 0.0
    %2363 = vmatpush1.msra.mxu0 0.0
    %2364 = vmatprep.subr.mxu0 0.0
    %2365 = vmatpush1.msra.mxu0 0.0
    %2366 = vmatprep.subr.mxu0 0.0
    %2367 = vmatpush1.msra.mxu0 0.0
    %2368 = vmatprep.subr.mxu0 0.0
    %2369 = vmatpush1.msra.mxu0 0.0
    %2370 = vmatprep.subr.mxu0 0.0
    %2371 = vmatpush1.msra.mxu0 0.0
    %2372 = vmatprep.subr.mxu0 0.0
    %2373 = vmatpush1.msra.mxu0 0.0
    %2374 = vmatprep.subr.mxu0 0.0
    %2375 = vmatpush1.msra.mxu0 0.0
    %2376 = vmatprep.subr.mxu0 0.0
    %2377 = vmatpush1.msra.mxu0 0.0
    %2378 = vmatprep.subr.mxu0 0.0
    %2379 = vmatpush1.msra.mxu0 0.0
    %2380 = vmatprep.subr.mxu0 0.0
    %2381 = vmatpush1.msra.mxu0 0.0
    %2382 = vmatprep.subr.mxu0 0.0
    %2383 = vmatpush1.msra.mxu0 0.0
    %2384 = vmatprep.subr.mxu0 0.0
    %2385 = vmatpush1.msra.mxu0 0.0
    %2386 = vmatprep.subr.mxu0 0.0
    %2387 = vmatpush1.msra.mxu0 0.0
    %2388 = vmatprep.subr.mxu0 0.0
    %2389 = vmatpush1.msra.mxu0 0.0
    %2390 = vmatprep.subr.mxu0 0.0
    %2391 = vmatpush1.msra.mxu0 0.0
    %2392 = vmatprep.subr.mxu0 0.0
    %2393 = vmatpush1.msra.mxu0 0.0
    %2394 = vmatprep.subr.mxu0 0.0
    %2395 = vmatpush1.msra.mxu0 0.0
    %2396 = vmatprep.subr.mxu0 0.0
    %2397 = vmatpush1.msra.mxu0 0.0
    %2398 = vmatprep.subr.mxu0 0.0
    %2399 = vmatpush1.msra.mxu0 0.0
    %2400 = vmatprep.subr.mxu0 0.0
    %2401 = vmatpush1.msra.mxu0 0.0
    %2402 = vmatprep.subr.mxu0 0.0
    %2403 = vmatpush1.msra.mxu0 0.0
    %2404 = vmatprep.subr.mxu0 0.0
    %2405 = vmatpush1.msra.mxu0 0.0
    %2406 = vmatprep.subr.mxu0 0.0
    %2407 = vmatpush1.msra.mxu0 0.0
    %2408 = vmatprep.subr.mxu0 0.0
    %2409 = vmatpush1.msra.mxu0 0.0
    %2410 = vmatprep.mubr.f32.mxu0 0.0
    %2411 = vmatmul.mubr.f32.gmra.mrb[0].mxu0 %v2342
    %v2412 = vpop.f32.mrb[0].mxu0
    %v2413 = vadd.f32 0.0, %v2412
    %v2414 = vpop.f32.mrb[0].mxu0
    %2415 = vdwg.mxu0
    %2416 = vrot.lane.b32.xlu0 %v332, 120
    %v2417 = vpop.permute.xlu0 %2416
    %v2419 = vsel %vm202, %v1792, 0
    %v2421 = vsel %vm241, %v2417, 0
    %2423 = vmatprep.subr.mxu0 0.0
    %2424 = vmatpush1.msra.mxu0 %v2421
    %2425 = vmatprep.subr.mxu0 0.0
    %2426 = vmatpush1.msra.mxu0 0.0
    %2427 = vmatprep.subr.mxu0 0.0
    %2428 = vmatpush1.msra.mxu0 0.0
    %2429 = vmatprep.subr.mxu0 0.0
    %2430 = vmatpush1.msra.mxu0 0.0
    %2431 = vmatprep.subr.mxu0 0.0
    %2432 = vmatpush1.msra.mxu0 0.0
    %2433 = vmatprep.subr.mxu0 0.0
    %2434 = vmatpush1.msra.mxu0 0.0
    %2435 = vmatprep.subr.mxu0 0.0
    %2436 = vmatpush1.msra.mxu0 0.0
    %2437 = vmatprep.subr.mxu0 0.0
    %2438 = vmatpush1.msra.mxu0 0.0
    %2439 = vmatprep.subr.mxu0 0.0
    %2440 = vmatpush1.msra.mxu0 0.0
    %2441 = vmatprep.subr.mxu0 0.0
    %2442 = vmatpush1.msra.mxu0 0.0
    %2443 = vmatprep.subr.mxu0 0.0
    %2444 = vmatpush1.msra.mxu0 0.0
    %2445 = vmatprep.subr.mxu0 0.0
    %2446 = vmatpush1.msra.mxu0 0.0
    %2447 = vmatprep.subr.mxu0 0.0
    %2448 = vmatpush1.msra.mxu0 0.0
    %2449 = vmatprep.subr.mxu0 0.0
    %2450 = vmatpush1.msra.mxu0 0.0
    %2451 = vmatprep.subr.mxu0 0.0
    %2452 = vmatpush1.msra.mxu0 0.0
    %2453 = vmatprep.subr.mxu0 0.0
    %2454 = vmatpush1.msra.mxu0 0.0
    %2455 = vmatprep.subr.mxu0 0.0
    %2456 = vmatpush1.msra.mxu0 0.0
    %2457 = vmatprep.subr.mxu0 0.0
    %2458 = vmatpush1.msra.mxu0 0.0
    %2459 = vmatprep.subr.mxu0 0.0
    %2460 = vmatpush1.msra.mxu0 0.0
    %2461 = vmatprep.subr.mxu0 0.0
    %2462 = vmatpush1.msra.mxu0 0.0
    %2463 = vmatprep.subr.mxu0 0.0
    %2464 = vmatpush1.msra.mxu0 0.0
    %2465 = vmatprep.subr.mxu0 0.0
    %2466 = vmatpush1.msra.mxu0 0.0
    %2467 = vmatprep.subr.mxu0 0.0
    %2468 = vmatpush1.msra.mxu0 0.0
    %2469 = vmatprep.subr.mxu0 0.0
    %2470 = vmatpush1.msra.mxu0 0.0
    %2471 = vmatprep.subr.mxu0 0.0
    %2472 = vmatpush1.msra.mxu0 0.0
    %2473 = vmatprep.subr.mxu0 0.0
    %2474 = vmatpush1.msra.mxu0 0.0
    %2475 = vmatprep.subr.mxu0 0.0
    %2476 = vmatpush1.msra.mxu0 0.0
    %2477 = vmatprep.subr.mxu0 0.0
    %2478 = vmatpush1.msra.mxu0 0.0
    %2479 = vmatprep.subr.mxu0 0.0
    %2480 = vmatpush1.msra.mxu0 0.0
    %2481 = vmatprep.subr.mxu0 0.0
    %2482 = vmatpush1.msra.mxu0 0.0
    %2483 = vmatprep.subr.mxu0 0.0
    %2484 = vmatpush1.msra.mxu0 0.0
    %2485 = vmatprep.subr.mxu0 0.0
    %2486 = vmatpush1.msra.mxu0 0.0
    %2487 = vmatprep.mubr.f32.mxu0 0.0
    %2488 = vmatmul.mubr.f32.gmra.mrb[0].mxu0 %v2419
    %v2489 = vpop.f32.mrb[0].mxu0
    %v2490 = vadd.f32 0.0, %v2489
    %v2491 = vpop.f32.mrb[0].mxu0
    %2492 = vdwg.mxu0
    %2493 = vrot.lane.b32.xlu0 %v362, 120
    %v2494 = vpop.permute.xlu0 %2493
    %v2496 = vsel %vm202, %v1793, 0
    %v2498 = vsel %vm241, %v2494, 0
    %2500 = vmatprep.subr.mxu0 0.0
    %2501 = vmatpush1.msra.mxu0 %v2498
    %2502 = vmatprep.subr.mxu0 0.0
    %2503 = vmatpush1.msra.mxu0 0.0
    %2504 = vmatprep.subr.mxu0 0.0
    %2505 = vmatpush1.msra.mxu0 0.0
    %2506 = vmatprep.subr.mxu0 0.0
    %2507 = vmatpush1.msra.mxu0 0.0
    %2508 = vmatprep.subr.mxu0 0.0
    %2509 = vmatpush1.msra.mxu0 0.0
    %2510 = vmatprep.subr.mxu0 0.0
    %2511 = vmatpush1.msra.mxu0 0.0
    %2512 = vmatprep.subr.mxu0 0.0
    %2513 = vmatpush1.msra.mxu0 0.0
    %2514 = vmatprep.subr.mxu0 0.0
    %2515 = vmatpush1.msra.mxu0 0.0
    %2516 = vmatprep.subr.mxu0 0.0
    %2517 = vmatpush1.msra.mxu0 0.0
    %2518 = vmatprep.subr.mxu0 0.0
    %2519 = vmatpush1.msra.mxu0 0.0
    %2520 = vmatprep.subr.mxu0 0.0
    %2521 = vmatpush1.msra.mxu0 0.0
    %2522 = vmatprep.subr.mxu0 0.0
    %2523 = vmatpush1.msra.mxu0 0.0
    %2524 = vmatprep.subr.mxu0 0.0
    %2525 = vmatpush1.msra.mxu0 0.0
    %2526 = vmatprep.subr.mxu0 0.0
    %2527 = vmatpush1.msra.mxu0 0.0
    %2528 = vmatprep.subr.mxu0 0.0
    %2529 = vmatpush1.msra.mxu0 0.0
    %2530 = vmatprep.subr.mxu0 0.0
    %2531 = vmatpush1.msra.mxu0 0.0
    %2532 = vmatprep.subr.mxu0 0.0
    %2533 = vmatpush1.msra.mxu0 0.0
    %2534 = vmatprep.subr.mxu0 0.0
    %2535 = vmatpush1.msra.mxu0 0.0
    %2536 = vmatprep.subr.mxu0 0.0
    %2537 = vmatpush1.msra.mxu0 0.0
    %2538 = vmatprep.subr.mxu0 0.0
    %2539 = vmatpush1.msra.mxu0 0.0
    %2540 = vmatprep.subr.mxu0 0.0
    %2541 = vmatpush1.msra.mxu0 0.0
    %2542 = vmatprep.subr.mxu0 0.0
    %2543 = vmatpush1.msra.mxu0 0.0
    %2544 = vmatprep.subr.mxu0 0.0
    %2545 = vmatpush1.msra.mxu0 0.0
    %2546 = vmatprep.subr.mxu0 0.0
    %2547 = vmatpush1.msra.mxu0 0.0
    %2548 = vmatprep.subr.mxu0 0.0
    %2549 = vmatpush1.msra.mxu0 0.0
    %2550 = vmatprep.subr.mxu0 0.0
    %2551 = vmatpush1.msra.mxu0 0.0
    %2552 = vmatprep.subr.mxu0 0.0
    %2553 = vmatpush1.msra.mxu0 0.0
    %2554 = vmatprep.subr.mxu0 0.0
    %2555 = vmatpush1.msra.mxu0 0.0
    %2556 = vmatprep.subr.mxu0 0.0
    %2557 = vmatpush1.msra.mxu0 0.0
    %2558 = vmatprep.subr.mxu0 0.0
    %2559 = vmatpush1.msra.mxu0 0.0
    %2560 = vmatprep.subr.mxu0 0.0
    %2561 = vmatpush1.msra.mxu0 0.0
    %2562 = vmatprep.subr.mxu0 0.0
    %2563 = vmatpush1.msra.mxu0 0.0
    %2564 = vmatprep.mubr.f32.mxu0 0.0
    %2565 = vmatmul.mubr.f32.gmra.mrb[0].mxu0 %v2496
    %v2566 = vpop.f32.mrb[0].mxu0
    %v2567 = vadd.f32 0.0, %v2566
    %v2568 = vpop.f32.mrb[0].mxu0
    %2569 = vdwg.mxu0
    %2570 = vrot.lane.b32.xlu0 %v337, 120
    %v2571 = vpop.permute.xlu0 %2570
    %v2573 = vsel %vm202, %v1794, 0
    %v2575 = vsel %vm241, %v2571, 0
    %2577 = vmatprep.subr.mxu0 0.0
    %2578 = vmatpush1.msra.mxu0 %v2575
    %2579 = vmatprep.subr.mxu0 0.0
    %2580 = vmatpush1.msra.mxu0 0.0
    %2581 = vmatprep.subr.mxu0 0.0
    %2582 = vmatpush1.msra.mxu0 0.0
    %2583 = vmatprep.subr.mxu0 0.0
    %2584 = vmatpush1.msra.mxu0 0.0
    %2585 = vmatprep.subr.mxu0 0.0
    %2586 = vmatpush1.msra.mxu0 0.0
    %2587 = vmatprep.subr.mxu0 0.0
    %2588 = vmatpush1.msra.mxu0 0.0
    %2589 = vmatprep.subr.mxu0 0.0
    %2590 = vmatpush1.msra.mxu0 0.0
    %2591 = vmatprep.subr.mxu0 0.0
    %2592 = vmatpush1.msra.mxu0 0.0
    %2593 = vmatprep.subr.mxu0 0.0
    %2594 = vmatpush1.msra.mxu0 0.0
    %2595 = vmatprep.subr.mxu0 0.0
    %2596 = vmatpush1.msra.mxu0 0.0
    %2597 = vmatprep.subr.mxu0 0.0
    %2598 = vmatpush1.msra.mxu0 0.0
    %2599 = vmatprep.subr.mxu0 0.0
    %2600 = vmatpush1.msra.mxu0 0.0
    %2601 = vmatprep.subr.mxu0 0.0
    %2602 = vmatpush1.msra.mxu0 0.0
    %2603 = vmatprep.subr.mxu0 0.0
    %2604 = vmatpush1.msra.mxu0 0.0
    %2605 = vmatprep.subr.mxu0 0.0
    %2606 = vmatpush1.msra.mxu0 0.0
    %2607 = vmatprep.subr.mxu0 0.0
    %2608 = vmatpush1.msra.mxu0 0.0
    %2609 = vmatprep.subr.mxu0 0.0
    %2610 = vmatpush1.msra.mxu0 0.0
    %2611 = vmatprep.subr.mxu0 0.0
    %2612 = vmatpush1.msra.mxu0 0.0
    %2613 = vmatprep.subr.mxu0 0.0
    %2614 = vmatpush1.msra.mxu0 0.0
    %2615 = vmatprep.subr.mxu0 0.0
    %2616 = vmatpush1.msra.mxu0 0.0
    %2617 = vmatprep.subr.mxu0 0.0
    %2618 = vmatpush1.msra.mxu0 0.0
    %2619 = vmatprep.subr.mxu0 0.0
    %2620 = vmatpush1.msra.mxu0 0.0
    %2621 = vmatprep.subr.mxu0 0.0
    %2622 = vmatpush1.msra.mxu0 0.0
    %2623 = vmatprep.subr.mxu0 0.0
    %2624 = vmatpush1.msra.mxu0 0.0
    %2625 = vmatprep.subr.mxu0 0.0
    %2626 = vmatpush1.msra.mxu0 0.0
    %2627 = vmatprep.subr.mxu0 0.0
    %2628 = vmatpush1.msra.mxu0 0.0
    %2629 = vmatprep.subr.mxu0 0.0
    %2630 = vmatpush1.msra.mxu0 0.0
    %2631 = vmatprep.subr.mxu0 0.0
    %2632 = vmatpush1.msra.mxu0 0.0
    %2633 = vmatprep.subr.mxu0 0.0
    %2634 = vmatpush1.msra.mxu0 0.0
    %2635 = vmatprep.subr.mxu0 0.0
    %2636 = vmatpush1.msra.mxu0 0.0
    %2637 = vmatprep.subr.mxu0 0.0
    %2638 = vmatpush1.msra.mxu0 0.0
    %2639 = vmatprep.subr.mxu0 0.0
    %2640 = vmatpush1.msra.mxu0 0.0
    %2641 = vmatprep.mubr.f32.mxu0 0.0
    %2642 = vmatmul.mubr.f32.gmra.mrb[0].mxu0 %v2573
    %v2643 = vpop.f32.mrb[0].mxu0
    %v2644 = vadd.f32 0.0, %v2643
    %v2645 = vpop.f32.mrb[0].mxu0
    %2646 = vdwg.mxu0
    %2647 = vrot.lane.b32.xlu0 %v363, 120
    %v2648 = vpop.permute.xlu0 %2647
    %v2650 = vsel %vm202, %v1795, 0
    %v2652 = vsel %vm241, %v2648, 0
    %2654 = vmatprep.subr.mxu0 0.0
    %2655 = vmatpush1.msra.mxu0 %v2652
    %2656 = vmatprep.subr.mxu0 0.0
    %2657 = vmatpush1.msra.mxu0 0.0
    %2658 = vmatprep.subr.mxu0 0.0
    %2659 = vmatpush1.msra.mxu0 0.0
    %2660 = vmatprep.subr.mxu0 0.0
    %2661 = vmatpush1.msra.mxu0 0.0
    %2662 = vmatprep.subr.mxu0 0.0
    %2663 = vmatpush1.msra.mxu0 0.0
    %2664 = vmatprep.subr.mxu0 0.0
    %2665 = vmatpush1.msra.mxu0 0.0
    %2666 = vmatprep.subr.mxu0 0.0
    %2667 = vmatpush1.msra.mxu0 0.0
    %2668 = vmatprep.subr.mxu0 0.0
    %2669 = vmatpush1.msra.mxu0 0.0
    %2670 = vmatprep.subr.mxu0 0.0
    %2671 = vmatpush1.msra.mxu0 0.0
    %2672 = vmatprep.subr.mxu0 0.0
    %2673 = vmatpush1.msra.mxu0 0.0
    %2674 = vmatprep.subr.mxu0 0.0
    %2675 = vmatpush1.msra.mxu0 0.0
    %2676 = vmatprep.subr.mxu0 0.0
    %2677 = vmatpush1.msra.mxu0 0.0
    %2678 = vmatprep.subr.mxu0 0.0
    %2679 = vmatpush1.msra.mxu0 0.0
    %2680 = vmatprep.subr.mxu0 0.0
    %2681 = vmatpush1.msra.mxu0 0.0
    %2682 = vmatprep.subr.mxu0 0.0
    %2683 = vmatpush1.msra.mxu0 0.0
    %2684 = vmatprep.subr.mxu0 0.0
    %2685 = vmatpush1.msra.mxu0 0.0
    %2686 = vmatprep.subr.mxu0 0.0
    %2687 = vmatpush1.msra.mxu0 0.0
    %2688 = vmatprep.subr.mxu0 0.0
    %2689 = vmatpush1.msra.mxu0 0.0
    %2690 = vmatprep.subr.mxu0 0.0
    %2691 = vmatpush1.msra.mxu0 0.0
    %2692 = vmatprep.subr.mxu0 0.0
    %2693 = vmatpush1.msra.mxu0 0.0
    %2694 = vmatprep.subr.mxu0 0.0
    %2695 = vmatpush1.msra.mxu0 0.0
    %2696 = vmatprep.subr.mxu0 0.0
    %2697 = vmatpush1.msra.mxu0 0.0
    %2698 = vmatprep.subr.mxu0 0.0
    %2699 = vmatpush1.msra.mxu0 0.0
    %2700 = vmatprep.subr.mxu0 0.0
    %2701 = vmatpush1.msra.mxu0 0.0
    %2702 = vmatprep.subr.mxu0 0.0
    %2703 = vmatpush1.msra.mxu0 0.0
    %2704 = vmatprep.subr.mxu0 0.0
    %2705 = vmatpush1.msra.mxu0 0.0
    %2706 = vmatprep.subr.mxu0 0.0
    %2707 = vmatpush1.msra.mxu0 0.0
    %2708 = vmatprep.subr.mxu0 0.0
    %2709 = vmatpush1.msra.mxu0 0.0
    %2710 = vmatprep.subr.mxu0 0.0
    %2711 = vmatpush1.msra.mxu0 0.0
    %2712 = vmatprep.subr.mxu0 0.0
    %2713 = vmatpush1.msra.mxu0 0.0
    %2714 = vmatprep.subr.mxu0 0.0
    %2715 = vmatpush1.msra.mxu0 0.0
    %2716 = vmatprep.subr.mxu0 0.0
    %2717 = vmatpush1.msra.mxu0 0.0
    %2718 = vmatprep.mubr.f32.mxu0 0.0
    %2719 = vmatmul.mubr.f32.gmra.mrb[0].mxu0 %v2650
    %v2720 = vpop.f32.mrb[0].mxu0
    %v2721 = vadd.f32 0.0, %v2720
    %v2722 = vpop.f32.mrb[0].mxu0
    %2723 = vdwg.mxu0
    %2724 = vrot.lane.b32.xlu0 %v342, 120
    %v2725 = vpop.permute.xlu0 %2724
    %v2727 = vsel %vm202, %v1796, 0
    %v2729 = vsel %vm241, %v2725, 0
    %2731 = vmatprep.subr.mxu0 0.0
    %2732 = vmatpush1.msra.mxu0 %v2729
    %2733 = vmatprep.subr.mxu0 0.0
    %2734 = vmatpush1.msra.mxu0 0.0
    %2735 = vmatprep.subr.mxu0 0.0
    %2736 = vmatpush1.msra.mxu0 0.0
    %2737 = vmatprep.subr.mxu0 0.0
    %2738 = vmatpush1.msra.mxu0 0.0
    %2739 = vmatprep.subr.mxu0 0.0
    %2740 = vmatpush1.msra.mxu0 0.0
    %2741 = vmatprep.subr.mxu0 0.0
    %2742 = vmatpush1.msra.mxu0 0.0
    %2743 = vmatprep.subr.mxu0 0.0
    %2744 = vmatpush1.msra.mxu0 0.0
    %2745 = vmatprep.subr.mxu0 0.0
    %2746 = vmatpush1.msra.mxu0 0.0
    %2747 = vmatprep.subr.mxu0 0.0
    %2748 = vmatpush1.msra.mxu0 0.0
    %2749 = vmatprep.subr.mxu0 0.0
    %2750 = vmatpush1.msra.mxu0 0.0
    %2751 = vmatprep.subr.mxu0 0.0
    %2752 = vmatpush1.msra.mxu0 0.0
    %2753 = vmatprep.subr.mxu0 0.0
    %2754 = vmatpush1.msra.mxu0 0.0
    %2755 = vmatprep.subr.mxu0 0.0
    %2756 = vmatpush1.msra.mxu0 0.0
    %2757 = vmatprep.subr.mxu0 0.0
    %2758 = vmatpush1.msra.mxu0 0.0
    %2759 = vmatprep.subr.mxu0 0.0
    %2760 = vmatpush1.msra.mxu0 0.0
    %2761 = vmatprep.subr.mxu0 0.0
    %2762 = vmatpush1.msra.mxu0 0.0
    %2763 = vmatprep.subr.mxu0 0.0
    %2764 = vmatpush1.msra.mxu0 0.0
    %2765 = vmatprep.subr.mxu0 0.0
    %2766 = vmatpush1.msra.mxu0 0.0
    %2767 = vmatprep.subr.mxu0 0.0
    %2768 = vmatpush1.msra.mxu0 0.0
    %2769 = vmatprep.subr.mxu0 0.0
    %2770 = vmatpush1.msra.mxu0 0.0
    %2771 = vmatprep.subr.mxu0 0.0
    %2772 = vmatpush1.msra.mxu0 0.0
    %2773 = vmatprep.subr.mxu0 0.0
    %2774 = vmatpush1.msra.mxu0 0.0
    %2775 = vmatprep.subr.mxu0 0.0
    %2776 = vmatpush1.msra.mxu0 0.0
    %2777 = vmatprep.subr.mxu0 0.0
    %2778 = vmatpush1.msra.mxu0 0.0
    %2779 = vmatprep.subr.mxu0 0.0
    %2780 = vmatpush1.msra.mxu0 0.0
    %2781 = vmatprep.subr.mxu0 0.0
    %2782 = vmatpush1.msra.mxu0 0.0
    %2783 = vmatprep.subr.mxu0 0.0
    %2784 = vmatpush1.msra.mxu0 0.0
    %2785 = vmatprep.subr.mxu0 0.0
    %2786 = vmatpush1.msra.mxu0 0.0
    %2787 = vmatprep.subr.mxu0 0.0
    %2788 = vmatpush1.msra.mxu0 0.0
    %2789 = vmatprep.subr.mxu0 0.0
    %2790 = vmatpush1.msra.mxu0 0.0
    %2791 = vmatprep.subr.mxu0 0.0
    %2792 = vmatpush1.msra.mxu0 0.0
    %2793 = vmatprep.subr.mxu0 0.0
    %2794 = vmatpush1.msra.mxu0 0.0
    %2795 = vmatprep.mubr.f32.mxu0 0.0
    %2796 = vmatmul.mubr.f32.gmra.mrb[0].mxu0 %v2727
    %v2797 = vpop.f32.mrb[0].mxu0
    %v2798 = vadd.f32 0.0, %v2797
    %v2799 = vpop.f32.mrb[0].mxu0
    %2800 = vdwg.mxu0
    %2801 = vrot.lane.b32.xlu0 %v364, 120
    %v2802 = vpop.permute.xlu0 %2801
    %v2804 = vsel %vm202, %v1797, 0
    %v2806 = vsel %vm241, %v2802, 0
    %2808 = vmatprep.subr.mxu0 0.0
    %2809 = vmatpush1.msra.mxu0 %v2806
    %2810 = vmatprep.subr.mxu0 0.0
    %2811 = vmatpush1.msra.mxu0 0.0
    %2812 = vmatprep.subr.mxu0 0.0
    %2813 = vmatpush1.msra.mxu0 0.0
    %2814 = vmatprep.subr.mxu0 0.0
    %2815 = vmatpush1.msra.mxu0 0.0
    %2816 = vmatprep.subr.mxu0 0.0
    %2817 = vmatpush1.msra.mxu0 0.0
    %2818 = vmatprep.subr.mxu0 0.0
    %2819 = vmatpush1.msra.mxu0 0.0
    %2820 = vmatprep.subr.mxu0 0.0
    %2821 = vmatpush1.msra.mxu0 0.0
    %2822 = vmatprep.subr.mxu0 0.0
    %2823 = vmatpush1.msra.mxu0 0.0
    %2824 = vmatprep.subr.mxu0 0.0
    %2825 = vmatpush1.msra.mxu0 0.0
    %2826 = vmatprep.subr.mxu0 0.0
    %2827 = vmatpush1.msra.mxu0 0.0
    %2828 = vmatprep.subr.mxu0 0.0
    %2829 = vmatpush1.msra.mxu0 0.0
    %2830 = vmatprep.subr.mxu0 0.0
    %2831 = vmatpush1.msra.mxu0 0.0
    %2832 = vmatprep.subr.mxu0 0.0
    %2833 = vmatpush1.msra.mxu0 0.0
    %2834 = vmatprep.subr.mxu0 0.0
    %2835 = vmatpush1.msra.mxu0 0.0
    %2836 = vmatprep.subr.mxu0 0.0
    %2837 = vmatpush1.msra.mxu0 0.0
    %2838 = vmatprep.subr.mxu0 0.0
    %2839 = vmatpush1.msra.mxu0 0.0
    %2840 = vmatprep.subr.mxu0 0.0
    %2841 = vmatpush1.msra.mxu0 0.0
    %2842 = vmatprep.subr.mxu0 0.0
    %2843 = vmatpush1.msra.mxu0 0.0
    %2844 = vmatprep.subr.mxu0 0.0
    %2845 = vmatpush1.msra.mxu0 0.0
    %2846 = vmatprep.subr.mxu0 0.0
    %2847 = vmatpush1.msra.mxu0 0.0
    %2848 = vmatprep.subr.mxu0 0.0
    %2849 = vmatpush1.msra.mxu0 0.0
    %2850 = vmatprep.subr.mxu0 0.0
    %2851 = vmatpush1.msra.mxu0 0.0
    %2852 = vmatprep.subr.mxu0 0.0
    %2853 = vmatpush1.msra.mxu0 0.0
    %2854 = vmatprep.subr.mxu0 0.0
    %2855 = vmatpush1.msra.mxu0 0.0
    %2856 = vmatprep.subr.mxu0 0.0
    %2857 = vmatpush1.msra.mxu0 0.0
    %2858 = vmatprep.subr.mxu0 0.0
    %2859 = vmatpush1.msra.mxu0 0.0
    %2860 = vmatprep.subr.mxu0 0.0
    %2861 = vmatpush1.msra.mxu0 0.0
    %2862 = vmatprep.subr.mxu0 0.0
    %2863 = vmatpush1.msra.mxu0 0.0
    %2864 = vmatprep.subr.mxu0 0.0
    %2865 = vmatpush1.msra.mxu0 0.0
    %2866 = vmatprep.subr.mxu0 0.0
    %2867 = vmatpush1.msra.mxu0 0.0
    %2868 = vmatprep.subr.mxu0 0.0
    %2869 = vmatpush1.msra.mxu0 0.0
    %2870 = vmatprep.subr.mxu0 0.0
    %2871 = vmatpush1.msra.mxu0 0.0
    %2872 = vmatprep.mubr.f32.mxu0 0.0
    %2873 = vmatmul.mubr.f32.gmra.mrb[0].mxu0 %v2804
    %v2874 = vpop.f32.mrb[0].mxu0
    %v2875 = vadd.f32 0.0, %v2874
    %v2876 = vpop.f32.mrb[0].mxu0
    %2877 = vdwg.mxu0
    %2878 = vrot.lane.b32.xlu0 %v347, 120
    %v2879 = vpop.permute.xlu0 %2878
    %v2881 = vsel %vm202, %v1798, 0
    %v2883 = vsel %vm241, %v2879, 0
    %2885 = vmatprep.subr.mxu0 0.0
    %2886 = vmatpush1.msra.mxu0 %v2883
    %2887 = vmatprep.subr.mxu0 0.0
    %2888 = vmatpush1.msra.mxu0 0.0
    %2889 = vmatprep.subr.mxu0 0.0
    %2890 = vmatpush1.msra.mxu0 0.0
    %2891 = vmatprep.subr.mxu0 0.0
    %2892 = vmatpush1.msra.mxu0 0.0
    %2893 = vmatprep.subr.mxu0 0.0
    %2894 = vmatpush1.msra.mxu0 0.0
    %2895 = vmatprep.subr.mxu0 0.0
    %2896 = vmatpush1.msra.mxu0 0.0
    %2897 = vmatprep.subr.mxu0 0.0
    %2898 = vmatpush1.msra.mxu0 0.0
    %2899 = vmatprep.subr.mxu0 0.0
    %2900 = vmatpush1.msra.mxu0 0.0
    %2901 = vmatprep.subr.mxu0 0.0
    %2902 = vmatpush1.msra.mxu0 0.0
    %2903 = vmatprep.subr.mxu0 0.0
    %2904 = vmatpush1.msra.mxu0 0.0
    %2905 = vmatprep.subr.mxu0 0.0
    %2906 = vmatpush1.msra.mxu0 0.0
    %2907 = vmatprep.subr.mxu0 0.0
    %2908 = vmatpush1.msra.mxu0 0.0
    %2909 = vmatprep.subr.mxu0 0.0
    %2910 = vmatpush1.msra.mxu0 0.0
    %2911 = vmatprep.subr.mxu0 0.0
    %2912 = vmatpush1.msra.mxu0 0.0
    %2913 = vmatprep.subr.mxu0 0.0
    %2914 = vmatpush1.msra.mxu0 0.0
    %2915 = vmatprep.subr.mxu0 0.0
    %2916 = vmatpush1.msra.mxu0 0.0
    %2917 = vmatprep.subr.mxu0 0.0
    %2918 = vmatpush1.msra.mxu0 0.0
    %2919 = vmatprep.subr.mxu0 0.0
    %2920 = vmatpush1.msra.mxu0 0.0
    %2921 = vmatprep.subr.mxu0 0.0
    %2922 = vmatpush1.msra.mxu0 0.0
    %2923 = vmatprep.subr.mxu0 0.0
    %2924 = vmatpush1.msra.mxu0 0.0
    %2925 = vmatprep.subr.mxu0 0.0
    %2926 = vmatpush1.msra.mxu0 0.0
    %2927 = vmatprep.subr.mxu0 0.0
    %2928 = vmatpush1.msra.mxu0 0.0
    %2929 = vmatprep.subr.mxu0 0.0
    %2930 = vmatpush1.msra.mxu0 0.0
    %2931 = vmatprep.subr.mxu0 0.0
    %2932 = vmatpush1.msra.mxu0 0.0
    %2933 = vmatprep.subr.mxu0 0.0
    %2934 = vmatpush1.msra.mxu0 0.0
    %2935 = vmatprep.subr.mxu0 0.0
    %2936 = vmatpush1.msra.mxu0 0.0
    %2937 = vmatprep.subr.mxu0 0.0
    %2938 = vmatpush1.msra.mxu0 0.0
    %2939 = vmatprep.subr.mxu0 0.0
    %2940 = vmatpush1.msra.mxu0 0.0
    %2941 = vmatprep.subr.mxu0 0.0
    %2942 = vmatpush1.msra.mxu0 0.0
    %2943 = vmatprep.subr.mxu0 0.0
    %2944 = vmatpush1.msra.mxu0 0.0
    %2945 = vmatprep.subr.mxu0 0.0
    %2946 = vmatpush1.msra.mxu0 0.0
    %2947 = vmatprep.subr.mxu0 0.0
    %2948 = vmatpush1.msra.mxu0 0.0
    %2949 = vmatprep.mubr.f32.mxu0 0.0
    %2950 = vmatmul.mubr.f32.gmra.mrb[0].mxu0 %v2881
    %v2951 = vpop.f32.mrb[0].mxu0
    %v2952 = vadd.f32 0.0, %v2951
    %v2953 = vpop.f32.mrb[0].mxu0
    %2954 = vdwg.mxu0
    %2955 = vrot.lane.b32.xlu0 %v365, 120
    %v2956 = vpop.permute.xlu0 %2955
    %v2958 = vsel %vm202, %v1799, 0
    %v2960 = vsel %vm241, %v2956, 0
    %2962 = vmatprep.subr.mxu0 0.0
    %2963 = vmatpush1.msra.mxu0 %v2960
    %2964 = vmatprep.subr.mxu0 0.0
    %2965 = vmatpush1.msra.mxu0 0.0
    %2966 = vmatprep.subr.mxu0 0.0
    %2967 = vmatpush1.msra.mxu0 0.0
    %2968 = vmatprep.subr.mxu0 0.0
    %2969 = vmatpush1.msra.mxu0 0.0
    %2970 = vmatprep.subr.mxu0 0.0
    %2971 = vmatpush1.msra.mxu0 0.0
    %2972 = vmatprep.subr.mxu0 0.0
    %2973 = vmatpush1.msra.mxu0 0.0
    %2974 = vmatprep.subr.mxu0 0.0
    %2975 = vmatpush1.msra.mxu0 0.0
    %2976 = vmatprep.subr.mxu0 0.0
    %2977 = vmatpush1.msra.mxu0 0.0
    %2978 = vmatprep.subr.mxu0 0.0
    %2979 = vmatpush1.msra.mxu0 0.0
    %2980 = vmatprep.subr.mxu0 0.0
    %2981 = vmatpush1.msra.mxu0 0.0
    %2982 = vmatprep.subr.mxu0 0.0
    %2983 = vmatpush1.msra.mxu0 0.0
    %2984 = vmatprep.subr.mxu0 0.0
    %2985 = vmatpush1.msra.mxu0 0.0
    %2986 = vmatprep.subr.mxu0 0.0
    %2987 = vmatpush1.msra.mxu0 0.0
    %2988 = vmatprep.subr.mxu0 0.0
    %2989 = vmatpush1.msra.mxu0 0.0
    %2990 = vmatprep.subr.mxu0 0.0
    %2991 = vmatpush1.msra.mxu0 0.0
    %2992 = vmatprep.subr.mxu0 0.0
    %2993 = vmatpush1.msra.mxu0 0.0
    %2994 = vmatprep.subr.mxu0 0.0
    %2995 = vmatpush1.msra.mxu0 0.0
    %2996 = vmatprep.subr.mxu0 0.0
    %2997 = vmatpush1.msra.mxu0 0.0
    %2998 = vmatprep.subr.mxu0 0.0
    %2999 = vmatpush1.msra.mxu0 0.0
    %3000 = vmatprep.subr.mxu0 0.0
    %3001 = vmatpush1.msra.mxu0 0.0
    %3002 = vmatprep.subr.mxu0 0.0
    %3003 = vmatpush1.msra.mxu0 0.0
    %3004 = vmatprep.subr.mxu0 0.0
    %3005 = vmatpush1.msra.mxu0 0.0
    %3006 = vmatprep.subr.mxu0 0.0
    %3007 = vmatpush1.msra.mxu0 0.0
    %3008 = vmatprep.subr.mxu0 0.0
    %3009 = vmatpush1.msra.mxu0 0.0
    %3010 = vmatprep.subr.mxu0 0.0
    %3011 = vmatpush1.msra.mxu0 0.0
    %3012 = vmatprep.subr.mxu0 0.0
    %3013 = vmatpush1.msra.mxu0 0.0
    %3014 = vmatprep.subr.mxu0 0.0
    %3015 = vmatpush1.msra.mxu0 0.0
    %3016 = vmatprep.subr.mxu0 0.0
    %3017 = vmatpush1.msra.mxu0 0.0
    %3018 = vmatprep.subr.mxu0 0.0
    %3019 = vmatpush1.msra.mxu0 0.0
    %3020 = vmatprep.subr.mxu0 0.0
    %3021 = vmatpush1.msra.mxu0 0.0
    %3022 = vmatprep.subr.mxu0 0.0
    %3023 = vmatpush1.msra.mxu0 0.0
    %3024 = vmatprep.subr.mxu0 0.0
    %3025 = vmatpush1.msra.mxu0 0.0
    %3026 = vmatprep.mubr.f32.mxu0 0.0
    %3027 = vmatmul.mubr.f32.gmra.mrb[0].mxu0 %v2958
    %v3028 = vpop.f32.mrb[0].mxu0
    %v3029 = vadd.f32 0.0, %v3028
    %v3030 = vpop.f32.mrb[0].mxu0
    %3031 = vdwg.mxu0
    %3032 = vrot.lane.b32.xlu0 %v374, 126
    %v3033 = vpop.permute.xlu0 %3032
    %3034 = vrot.lane.b32.xlu0 %v312, 122
    %v3035 = vpop.permute.xlu0 %3034
    %v3036 = vsel %vm392, %v3033, 0
    %v3038 = vsel %vm392, %v3035, 0
    %3040 = vmatprep.subr.mxu0 0.0
    %3041 = vmatpush1.xpose.msra.mxu0 %v3038
    %3042 = vmatprep.subr.mxu0 0.0
    %3043 = vmatpush1.xpose.msra.mxu0 0.0
    %3044 = vmatprep.subr.mxu0 0.0
    %3045 = vmatpush1.xpose.msra.mxu0 0.0
    %3046 = vmatprep.subr.mxu0 0.0
    %3047 = vmatpush1.xpose.msra.mxu0 0.0
    %3048 = vmatprep.subr.mxu0 0.0
    %3049 = vmatpush1.xpose.msra.mxu0 0.0
    %3050 = vmatprep.subr.mxu0 0.0
    %3051 = vmatpush1.xpose.msra.mxu0 0.0
    %3052 = vmatprep.subr.mxu0 0.0
    %3053 = vmatpush1.xpose.msra.mxu0 0.0
    %3054 = vmatprep.subr.mxu0 0.0
    %3055 = vmatpush1.xpose.msra.mxu0 0.0
    %3056 = vmatprep.subr.mxu0 0.0
    %3057 = vmatpush1.xpose.msra.mxu0 0.0
    %3058 = vmatprep.subr.mxu0 0.0
    %3059 = vmatpush1.xpose.msra.mxu0 0.0
    %3060 = vmatprep.subr.mxu0 0.0
    %3061 = vmatpush1.xpose.msra.mxu0 0.0
    %3062 = vmatprep.subr.mxu0 0.0
    %3063 = vmatpush1.xpose.msra.mxu0 0.0
    %3064 = vmatprep.subr.mxu0 0.0
    %3065 = vmatpush1.xpose.msra.mxu0 0.0
    %3066 = vmatprep.subr.mxu0 0.0
    %3067 = vmatpush1.xpose.msra.mxu0 0.0
    %3068 = vmatprep.subr.mxu0 0.0
    %3069 = vmatpush1.xpose.msra.mxu0 0.0
    %3070 = vmatprep.subr.mxu0 0.0
    %3071 = vmatpush1.xpose.msra.mxu0 0.0
    %3072 = vmatprep.subr.mxu0 0.0
    %3073 = vmatpush1.xpose.msra.mxu0 0.0
    %3074 = vmatprep.subr.mxu0 0.0
    %3075 = vmatpush1.xpose.msra.mxu0 0.0
    %3076 = vmatprep.subr.mxu0 0.0
    %3077 = vmatpush1.xpose.msra.mxu0 0.0
    %3078 = vmatprep.subr.mxu0 0.0
    %3079 = vmatpush1.xpose.msra.mxu0 0.0
    %3080 = vmatprep.subr.mxu0 0.0
    %3081 = vmatpush1.xpose.msra.mxu0 0.0
    %3082 = vmatprep.subr.mxu0 0.0
    %3083 = vmatpush1.xpose.msra.mxu0 0.0
    %3084 = vmatprep.subr.mxu0 0.0
    %3085 = vmatpush1.xpose.msra.mxu0 0.0
    %3086 = vmatprep.subr.mxu0 0.0
    %3087 = vmatpush1.xpose.msra.mxu0 0.0
    %3088 = vmatprep.subr.mxu0 0.0
    %3089 = vmatpush1.xpose.msra.mxu0 0.0
    %3090 = vmatprep.subr.mxu0 0.0
    %3091 = vmatpush1.xpose.msra.mxu0 0.0
    %3092 = vmatprep.subr.mxu0 0.0
    %3093 = vmatpush1.xpose.msra.mxu0 0.0
    %3094 = vmatprep.subr.mxu0 0.0
    %3095 = vmatpush1.xpose.msra.mxu0 0.0
    %3096 = vmatprep.subr.mxu0 0.0
    %3097 = vmatpush1.xpose.msra.mxu0 0.0
    %3098 = vmatprep.subr.mxu0 0.0
    %3099 = vmatpush1.xpose.msra.mxu0 0.0
    %3100 = vmatprep.subr.mxu0 0.0
    %3101 = vmatpush1.xpose.msra.mxu0 0.0
    %3102 = vmatprep.subr.mxu0 0.0
    %3103 = vmatpush1.xpose.msra.mxu0 0.0
    %3104 = vmatprep.mubr.f32.mxu0 0.0
    %3105 = vmatmul.mubr.f32.gmra.mrb[0].mxu0 %v3036
    %v3106 = vpop.f32.mrb[0].mxu0
    %v3107 = vadd.f32 0.0, %v3106
    %v3108 = vpop.f32.mrb[0].mxu0
    %3109 = vdwg.mxu0
    %3110 = vrot.lane.b32.xlu0 %v375, 126
    %v3111 = vpop.permute.xlu0 %3110
    %3112 = vrot.lane.b32.xlu0 %v358, 122
    %v3113 = vpop.permute.xlu0 %3112
    %v3114 = vsel %vm392, %v3111, 0
    %v3116 = vsel %vm392, %v3113, 0
    %3118 = vmatprep.subr.mxu0 0.0
    %3119 = vmatpush1.xpose.msra.mxu0 %v3116
    %3120 = vmatprep.subr.mxu0 0.0
    %3121 = vmatpush1.xpose.msra.mxu0 0.0
    %3122 = vmatprep.subr.mxu0 0.0
    %3123 = vmatpush1.xpose.msra.mxu0 0.0
    %3124 = vmatprep.subr.mxu0 0.0
    %3125 = vmatpush1.xpose.msra.mxu0 0.0
    %3126 = vmatprep.subr.mxu0 0.0
    %3127 = vmatpush1.xpose.msra.mxu0 0.0
    %3128 = vmatprep.subr.mxu0 0.0
    %3129 = vmatpush1.xpose.msra.mxu0 0.0
    %3130 = vmatprep.subr.mxu0 0.0
    %3131 = vmatpush1.xpose.msra.mxu0 0.0
    %3132 = vmatprep.subr.mxu0 0.0
    %3133 = vmatpush1.xpose.msra.mxu0 0.0
    %3134 = vmatprep.subr.mxu0 0.0
    %3135 = vmatpush1.xpose.msra.mxu0 0.0
    %3136 = vmatprep.subr.mxu0 0.0
    %3137 = vmatpush1.xpose.msra.mxu0 0.0
    %3138 = vmatprep.subr.mxu0 0.0
    %3139 = vmatpush1.xpose.msra.mxu0 0.0
    %3140 = vmatprep.subr.mxu0 0.0
    %3141 = vmatpush1.xpose.msra.mxu0 0.0
    %3142 = vmatprep.subr.mxu0 0.0
    %3143 = vmatpush1.xpose.msra.mxu0 0.0
    %3144 = vmatprep.subr.mxu0 0.0
    %3145 = vmatpush1.xpose.msra.mxu0 0.0
    %3146 = vmatprep.subr.mxu0 0.0
    %3147 = vmatpush1.xpose.msra.mxu0 0.0
    %3148 = vmatprep.subr.mxu0 0.0
    %3149 = vmatpush1.xpose.msra.mxu0 0.0
    %3150 = vmatprep.subr.mxu0 0.0
    %3151 = vmatpush1.xpose.msra.mxu0 0.0
    %3152 = vmatprep.subr.mxu0 0.0
    %3153 = vmatpush1.xpose.msra.mxu0 0.0
    %3154 = vmatprep.subr.mxu0 0.0
    %3155 = vmatpush1.xpose.msra.mxu0 0.0
    %3156 = vmatprep.subr.mxu0 0.0
    %3157 = vmatpush1.xpose.msra.mxu0 0.0
    %3158 = vmatprep.subr.mxu0 0.0
    %3159 = vmatpush1.xpose.msra.mxu0 0.0
    %3160 = vmatprep.subr.mxu0 0.0
    %3161 = vmatpush1.xpose.msra.mxu0 0.0
    %3162 = vmatprep.subr.mxu0 0.0
    %3163 = vmatpush1.xpose.msra.mxu0 0.0
    %3164 = vmatprep.subr.mxu0 0.0
    %3165 = vmatpush1.xpose.msra.mxu0 0.0
    %3166 = vmatprep.subr.mxu0 0.0
    %3167 = vmatpush1.xpose.msra.mxu0 0.0
    %3168 = vmatprep.subr.mxu0 0.0
    %3169 = vmatpush1.xpose.msra.mxu0 0.0
    %3170 = vmatprep.subr.mxu0 0.0
    %3171 = vmatpush1.xpose.msra.mxu0 0.0
    %3172 = vmatprep.subr.mxu0 0.0
    %3173 = vmatpush1.xpose.msra.mxu0 0.0
    %3174 = vmatprep.subr.mxu0 0.0
    %3175 = vmatpush1.xpose.msra.mxu0 0.0
    %3176 = vmatprep.subr.mxu0 0.0
    %3177 = vmatpush1.xpose.msra.mxu0 0.0
    %3178 = vmatprep.subr.mxu0 0.0
    %3179 = vmatpush1.xpose.msra.mxu0 0.0
    %3180 = vmatprep.subr.mxu0 0.0
    %3181 = vmatpush1.xpose.msra.mxu0 0.0
    %3182 = vmatprep.mubr.f32.mxu0 0.0
    %3183 = vmatmul.mubr.f32.gmra.mrb[0].mxu0 %v3114
    %v3184 = vpop.f32.mrb[0].mxu0
    %v3185 = vadd.f32 0.0, %v3184
    %v3186 = vpop.f32.mrb[0].mxu0
    %3187 = vdwg.mxu0
    %3188 = vrot.lane.b32.xlu0 %v376, 126
    %v3189 = vpop.permute.xlu0 %3188
    %3190 = vrot.lane.b32.xlu0 %v317, 122
    %v3191 = vpop.permute.xlu0 %3190
    %v3192 = vsel %vm392, %v3189, 0
    %v3194 = vsel %vm392, %v3191, 0
    %3196 = vmatprep.subr.mxu0 0.0
    %3197 = vmatpush1.xpose.msra.mxu0 %v3194
    %3198 = vmatprep.subr.mxu0 0.0
    %3199 = vmatpush1.xpose.msra.mxu0 0.0
    %3200 = vmatprep.subr.mxu0 0.0
    %3201 = vmatpush1.xpose.msra.mxu0 0.0
    %3202 = vmatprep.subr.mxu0 0.0
    %3203 = vmatpush1.xpose.msra.mxu0 0.0
    %3204 = vmatprep.subr.mxu0 0.0
    %3205 = vmatpush1.xpose.msra.mxu0 0.0
    %3206 = vmatprep.subr.mxu0 0.0
    %3207 = vmatpush1.xpose.msra.mxu0 0.0
    %3208 = vmatprep.subr.mxu0 0.0
    %3209 = vmatpush1.xpose.msra.mxu0 0.0
    %3210 = vmatprep.subr.mxu0 0.0
    %3211 = vmatpush1.xpose.msra.mxu0 0.0
    %3212 = vmatprep.subr.mxu0 0.0
    %3213 = vmatpush1.xpose.msra.mxu0 0.0
    %3214 = vmatprep.subr.mxu0 0.0
    %3215 = vmatpush1.xpose.msra.mxu0 0.0
    %3216 = vmatprep.subr.mxu0 0.0
    %3217 = vmatpush1.xpose.msra.mxu0 0.0
    %3218 = vmatprep.subr.mxu0 0.0
    %3219 = vmatpush1.xpose.msra.mxu0 0.0
    %3220 = vmatprep.subr.mxu0 0.0
    %3221 = vmatpush1.xpose.msra.mxu0 0.0
    %3222 = vmatprep.subr.mxu0 0.0
    %3223 = vmatpush1.xpose.msra.mxu0 0.0
    %3224 = vmatprep.subr.mxu0 0.0
    %3225 = vmatpush1.xpose.msra.mxu0 0.0
    %3226 = vmatprep.subr.mxu0 0.0
    %3227 = vmatpush1.xpose.msra.mxu0 0.0
    %3228 = vmatprep.subr.mxu0 0.0
    %3229 = vmatpush1.xpose.msra.mxu0 0.0
    %3230 = vmatprep.subr.mxu0 0.0
    %3231 = vmatpush1.xpose.msra.mxu0 0.0
    %3232 = vmatprep.subr.mxu0 0.0
    %3233 = vmatpush1.xpose.msra.mxu0 0.0
    %3234 = vmatprep.subr.mxu0 0.0
    %3235 = vmatpush1.xpose.msra.mxu0 0.0
    %3236 = vmatprep.subr.mxu0 0.0
    %3237 = vmatpush1.xpose.msra.mxu0 0.0
    %3238 = vmatprep.subr.mxu0 0.0
    %3239 = vmatpush1.xpose.msra.mxu0 0.0
    %3240 = vmatprep.subr.mxu0 0.0
    %3241 = vmatpush1.xpose.msra.mxu0 0.0
    %3242 = vmatprep.subr.mxu0 0.0
    %3243 = vmatpush1.xpose.msra.mxu0 0.0
    %3244 = vmatprep.subr.mxu0 0.0
    %3245 = vmatpush1.xpose.msra.mxu0 0.0
    %3246 = vmatprep.subr.mxu0 0.0
    %3247 = vmatpush1.xpose.msra.mxu0 0.0
    %3248 = vmatprep.subr.mxu0 0.0
    %3249 = vmatpush1.xpose.msra.mxu0 0.0
    %3250 = vmatprep.subr.mxu0 0.0
    %3251 = vmatpush1.xpose.msra.mxu0 0.0
    %3252 = vmatprep.subr.mxu0 0.0
    %3253 = vmatpush1.xpose.msra.mxu0 0.0
    %3254 = vmatprep.subr.mxu0 0.0
    %3255 = vmatpush1.xpose.msra.mxu0 0.0
    %3256 = vmatprep.subr.mxu0 0.0
    %3257 = vmatpush1.xpose.msra.mxu0 0.0
    %3258 = vmatprep.subr.mxu0 0.0
    %3259 = vmatpush1.xpose.msra.mxu0 0.0
    %3260 = vmatprep.mubr.f32.mxu0 0.0
    %3261 = vmatmul.mubr.f32.gmra.mrb[0].mxu0 %v3192
    %v3262 = vpop.f32.mrb[0].mxu0
    %v3263 = vadd.f32 0.0, %v3262
    %v3264 = vpop.f32.mrb[0].mxu0
    %3265 = vdwg.mxu0
    %3266 = vrot.lane.b32.xlu0 %v377, 126
    %v3267 = vpop.permute.xlu0 %3266
    %3268 = vrot.lane.b32.xlu0 %v359, 122
    %v3269 = vpop.permute.xlu0 %3268
    %v3270 = vsel %vm392, %v3267, 0
    %v3272 = vsel %vm392, %v3269, 0
    %3274 = vmatprep.subr.mxu0 0.0
    %3275 = vmatpush1.xpose.msra.mxu0 %v3272
    %3276 = vmatprep.subr.mxu0 0.0
    %3277 = vmatpush1.xpose.msra.mxu0 0.0
    %3278 = vmatprep.subr.mxu0 0.0
    %3279 = vmatpush1.xpose.msra.mxu0 0.0
    %3280 = vmatprep.subr.mxu0 0.0
    %3281 = vmatpush1.xpose.msra.mxu0 0.0
    %3282 = vmatprep.subr.mxu0 0.0
    %3283 = vmatpush1.xpose.msra.mxu0 0.0
    %3284 = vmatprep.subr.mxu0 0.0
    %3285 = vmatpush1.xpose.msra.mxu0 0.0
    %3286 = vmatprep.subr.mxu0 0.0
    %3287 = vmatpush1.xpose.msra.mxu0 0.0
    %3288 = vmatprep.subr.mxu0 0.0
    %3289 = vmatpush1.xpose.msra.mxu0 0.0
    %3290 = vmatprep.subr.mxu0 0.0
    %3291 = vmatpush1.xpose.msra.mxu0 0.0
    %3292 = vmatprep.subr.mxu0 0.0
    %3293 = vmatpush1.xpose.msra.mxu0 0.0
    %3294 = vmatprep.subr.mxu0 0.0
    %3295 = vmatpush1.xpose.msra.mxu0 0.0
    %3296 = vmatprep.subr.mxu0 0.0
    %3297 = vmatpush1.xpose.msra.mxu0 0.0
    %3298 = vmatprep.subr.mxu0 0.0
    %3299 = vmatpush1.xpose.msra.mxu0 0.0
    %3300 = vmatprep.subr.mxu0 0.0
    %3301 = vmatpush1.xpose.msra.mxu0 0.0
    %3302 = vmatprep.subr.mxu0 0.0
    %3303 = vmatpush1.xpose.msra.mxu0 0.0
    %3304 = vmatprep.subr.mxu0 0.0
    %3305 = vmatpush1.xpose.msra.mxu0 0.0
    %3306 = vmatprep.subr.mxu0 0.0
    %3307 = vmatpush1.xpose.msra.mxu0 0.0
    %3308 = vmatprep.subr.mxu0 0.0
    %3309 = vmatpush1.xpose.msra.mxu0 0.0
    %3310 = vmatprep.subr.mxu0 0.0
    %3311 = vmatpush1.xpose.msra.mxu0 0.0
    %3312 = vmatprep.subr.mxu0 0.0
    %3313 = vmatpush1.xpose.msra.mxu0 0.0
    %3314 = vmatprep.subr.mxu0 0.0
    %3315 = vmatpush1.xpose.msra.mxu0 0.0
    %3316 = vmatprep.subr.mxu0 0.0
    %3317 = vmatpush1.xpose.msra.mxu0 0.0
    %3318 = vmatprep.subr.mxu0 0.0
    %3319 = vmatpush1.xpose.msra.mxu0 0.0
    %3320 = vmatprep.subr.mxu0 0.0
    %3321 = vmatpush1.xpose.msra.mxu0 0.0
    %3322 = vmatprep.subr.mxu0 0.0
    %3323 = vmatpush1.xpose.msra.mxu0 0.0
    %3324 = vmatprep.subr.mxu0 0.0
    %3325 = vmatpush1.xpose.msra.mxu0 0.0
    %3326 = vmatprep.subr.mxu0 0.0
    %3327 = vmatpush1.xpose.msra.mxu0 0.0
    %3328 = vmatprep.subr.mxu0 0.0
    %3329 = vmatpush1.xpose.msra.mxu0 0.0
    %3330 = vmatprep.subr.mxu0 0.0
    %3331 = vmatpush1.xpose.msra.mxu0 0.0
    %3332 = vmatprep.subr.mxu0 0.0
    %3333 = vmatpush1.xpose.msra.mxu0 0.0
    %3334 = vmatprep.subr.mxu0 0.0
    %3335 = vmatpush1.xpose.msra.mxu0 0.0
    %3336 = vmatprep.subr.mxu0 0.0
    %3337 = vmatpush1.xpose.msra.mxu0 0.0
    %3338 = vmatprep.mubr.f32.mxu0 0.0
    %3339 = vmatmul.mubr.f32.gmra.mrb[0].mxu0 %v3270
    %v3340 = vpop.f32.mrb[0].mxu0
    %v3341 = vadd.f32 0.0, %v3340
    %v3342 = vpop.f32.mrb[0].mxu0
    %3343 = vdwg.mxu0
    %3344 = vrot.lane.b32.xlu0 %v378, 126
    %v3345 = vpop.permute.xlu0 %3344
    %3346 = vrot.lane.b32.xlu0 %v322, 122
    %v3347 = vpop.permute.xlu0 %3346
    %v3348 = vsel %vm392, %v3345, 0
    %v3350 = vsel %vm392, %v3347, 0
    %3352 = vmatprep.subr.mxu0 0.0
    %3353 = vmatpush1.xpose.msra.mxu0 %v3350
    %3354 = vmatprep.subr.mxu0 0.0
    %3355 = vmatpush1.xpose.msra.mxu0 0.0
    %3356 = vmatprep.subr.mxu0 0.0
    %3357 = vmatpush1.xpose.msra.mxu0 0.0
    %3358 = vmatprep.subr.mxu0 0.0
    %3359 = vmatpush1.xpose.msra.mxu0 0.0
    %3360 = vmatprep.subr.mxu0 0.0
    %3361 = vmatpush1.xpose.msra.mxu0 0.0
    %3362 = vmatprep.subr.mxu0 0.0
    %3363 = vmatpush1.xpose.msra.mxu0 0.0
    %3364 = vmatprep.subr.mxu0 0.0
    %3365 = vmatpush1.xpose.msra.mxu0 0.0
    %3366 = vmatprep.subr.mxu0 0.0
    %3367 = vmatpush1.xpose.msra.mxu0 0.0
    %3368 = vmatprep.subr.mxu0 0.0
    %3369 = vmatpush1.xpose.msra.mxu0 0.0
    %3370 = vmatprep.subr.mxu0 0.0
    %3371 = vmatpush1.xpose.msra.mxu0 0.0
    %3372 = vmatprep.subr.mxu0 0.0
    %3373 = vmatpush1.xpose.msra.mxu0 0.0
    %3374 = vmatprep.subr.mxu0 0.0
    %3375 = vmatpush1.xpose.msra.mxu0 0.0
    %3376 = vmatprep.subr.mxu0 0.0
    %3377 = vmatpush1.xpose.msra.mxu0 0.0
    %3378 = vmatprep.subr.mxu0 0.0
    %3379 = vmatpush1.xpose.msra.mxu0 0.0
    %3380 = vmatprep.subr.mxu0 0.0
    %3381 = vmatpush1.xpose.msra.mxu0 0.0
    %3382 = vmatprep.subr.mxu0 0.0
    %3383 = vmatpush1.xpose.msra.mxu0 0.0
    %3384 = vmatprep.subr.mxu0 0.0
    %3385 = vmatpush1.xpose.msra.mxu0 0.0
    %3386 = vmatprep.subr.mxu0 0.0
    %3387 = vmatpush1.xpose.msra.mxu0 0.0
    %3388 = vmatprep.subr.mxu0 0.0
    %3389 = vmatpush1.xpose.msra.mxu0 0.0
    %3390 = vmatprep.subr.mxu0 0.0
    %3391 = vmatpush1.xpose.msra.mxu0 0.0
    %3392 = vmatprep.subr.mxu0 0.0
    %3393 = vmatpush1.xpose.msra.mxu0 0.0
    %3394 = vmatprep.subr.mxu0 0.0
    %3395 = vmatpush1.xpose.msra.mxu0 0.0
    %3396 = vmatprep.subr.mxu0 0.0
    %3397 = vmatpush1.xpose.msra.mxu0 0.0
    %3398 = vmatprep.subr.mxu0 0.0
    %3399 = vmatpush1.xpose.msra.mxu0 0.0
    %3400 = vmatprep.subr.mxu0 0.0
    %3401 = vmatpush1.xpose.msra.mxu0 0.0
    %3402 = vmatprep.subr.mxu0 0.0
    %3403 = vmatpush1.xpose.msra.mxu0 0.0
    %3404 = vmatprep.subr.mxu0 0.0
    %3405 = vmatpush1.xpose.msra.mxu0 0.0
    %3406 = vmatprep.subr.mxu0 0.0
    %3407 = vmatpush1.xpose.msra.mxu0 0.0
    %3408 = vmatprep.subr.mxu0 0.0
    %3409 = vmatpush1.xpose.msra.mxu0 0.0
    %3410 = vmatprep.subr.mxu0 0.0
    %3411 = vmatpush1.xpose.msra.mxu0 0.0
    %3412 = vmatprep.subr.mxu0 0.0
    %3413 = vmatpush1.xpose.msra.mxu0 0.0
    %3414 = vmatprep.subr.mxu0 0.0
    %3415 = vmatpush1.xpose.msra.mxu0 0.0
    %3416 = vmatprep.mubr.f32.mxu0 0.0
    %3417 = vmatmul.mubr.f32.gmra.mrb[0].mxu0 %v3348
    %v3418 = vpop.f32.mrb[0].mxu0
    %v3419 = vadd.f32 0.0, %v3418
    %v3420 = vpop.f32.mrb[0].mxu0
    %3421 = vdwg.mxu0
    %3422 = vrot.lane.b32.xlu0 %v379, 126
    %v3423 = vpop.permute.xlu0 %3422
    %3424 = vrot.lane.b32.xlu0 %v360, 122
    %v3425 = vpop.permute.xlu0 %3424
    %v3426 = vsel %vm392, %v3423, 0
    %v3428 = vsel %vm392, %v3425, 0
    %3430 = vmatprep.subr.mxu0 0.0
    %3431 = vmatpush1.xpose.msra.mxu0 %v3428
    %3432 = vmatprep.subr.mxu0 0.0
    %3433 = vmatpush1.xpose.msra.mxu0 0.0
    %3434 = vmatprep.subr.mxu0 0.0
    %3435 = vmatpush1.xpose.msra.mxu0 0.0
    %3436 = vmatprep.subr.mxu0 0.0
    %3437 = vmatpush1.xpose.msra.mxu0 0.0
    %3438 = vmatprep.subr.mxu0 0.0
    %3439 = vmatpush1.xpose.msra.mxu0 0.0
    %3440 = vmatprep.subr.mxu0 0.0
    %3441 = vmatpush1.xpose.msra.mxu0 0.0
    %3442 = vmatprep.subr.mxu0 0.0
    %3443 = vmatpush1.xpose.msra.mxu0 0.0
    %3444 = vmatprep.subr.mxu0 0.0
    %3445 = vmatpush1.xpose.msra.mxu0 0.0
    %3446 = vmatprep.subr.mxu0 0.0
    %3447 = vmatpush1.xpose.msra.mxu0 0.0
    %3448 = vmatprep.subr.mxu0 0.0
    %3449 = vmatpush1.xpose.msra.mxu0 0.0
    %3450 = vmatprep.subr.mxu0 0.0
    %3451 = vmatpush1.xpose.msra.mxu0 0.0
    %3452 = vmatprep.subr.mxu0 0.0
    %3453 = vmatpush1.xpose.msra.mxu0 0.0
    %3454 = vmatprep.subr.mxu0 0.0
    %3455 = vmatpush1.xpose.msra.mxu0 0.0
    %3456 = vmatprep.subr.mxu0 0.0
    %3457 = vmatpush1.xpose.msra.mxu0 0.0
    %3458 = vmatprep.subr.mxu0 0.0
    %3459 = vmatpush1.xpose.msra.mxu0 0.0
    %3460 = vmatprep.subr.mxu0 0.0
    %3461 = vmatpush1.xpose.msra.mxu0 0.0
    %3462 = vmatprep.subr.mxu0 0.0
    %3463 = vmatpush1.xpose.msra.mxu0 0.0
    %3464 = vmatprep.subr.mxu0 0.0
    %3465 = vmatpush1.xpose.msra.mxu0 0.0
    %3466 = vmatprep.subr.mxu0 0.0
    %3467 = vmatpush1.xpose.msra.mxu0 0.0
    %3468 = vmatprep.subr.mxu0 0.0
    %3469 = vmatpush1.xpose.msra.mxu0 0.0
    %3470 = vmatprep.subr.mxu0 0.0
    %3471 = vmatpush1.xpose.msra.mxu0 0.0
    %3472 = vmatprep.subr.mxu0 0.0
    %3473 = vmatpush1.xpose.msra.mxu0 0.0
    %3474 = vmatprep.subr.mxu0 0.0
    %3475 = vmatpush1.xpose.msra.mxu0 0.0
    %3476 = vmatprep.subr.mxu0 0.0
    %3477 = vmatpush1.xpose.msra.mxu0 0.0
    %3478 = vmatprep.subr.mxu0 0.0
    %3479 = vmatpush1.xpose.msra.mxu0 0.0
    %3480 = vmatprep.subr.mxu0 0.0
    %3481 = vmatpush1.xpose.msra.mxu0 0.0
    %3482 = vmatprep.subr.mxu0 0.0
    %3483 = vmatpush1.xpose.msra.mxu0 0.0
    %3484 = vmatprep.subr.mxu0 0.0
    %3485 = vmatpush1.xpose.msra.mxu0 0.0
    %3486 = vmatprep.subr.mxu0 0.0
    %3487 = vmatpush1.xpose.msra.mxu0 0.0
    %3488 = vmatprep.subr.mxu0 0.0
    %3489 = vmatpush1.xpose.msra.mxu0 0.0
    %3490 = vmatprep.subr.mxu0 0.0
    %3491 = vmatpush1.xpose.msra.mxu0 0.0
    %3492 = vmatprep.subr.mxu0 0.0
    %3493 = vmatpush1.xpose.msra.mxu0 0.0
    %3494 = vmatprep.mubr.f32.mxu0 0.0
    %3495 = vmatmul.mubr.f32.gmra.mrb[0].mxu0 %v3426
    %v3496 = vpop.f32.mrb[0].mxu0
    %v3497 = vadd.f32 0.0, %v3496
    %v3498 = vpop.f32.mrb[0].mxu0
    %3499 = vdwg.mxu0
    %3500 = vrot.lane.b32.xlu0 %v380, 126
    %v3501 = vpop.permute.xlu0 %3500
    %3502 = vrot.lane.b32.xlu0 %v327, 122
    %v3503 = vpop.permute.xlu0 %3502
    %v3504 = vsel %vm392, %v3501, 0
    %v3506 = vsel %vm392, %v3503, 0
    %3508 = vmatprep.subr.mxu0 0.0
    %3509 = vmatpush1.xpose.msra.mxu0 %v3506
    %3510 = vmatprep.subr.mxu0 0.0
    %3511 = vmatpush1.xpose.msra.mxu0 0.0
    %3512 = vmatprep.subr.mxu0 0.0
    %3513 = vmatpush1.xpose.msra.mxu0 0.0
    %3514 = vmatprep.subr.mxu0 0.0
    %3515 = vmatpush1.xpose.msra.mxu0 0.0
    %3516 = vmatprep.subr.mxu0 0.0
    %3517 = vmatpush1.xpose.msra.mxu0 0.0
    %3518 = vmatprep.subr.mxu0 0.0
    %3519 = vmatpush1.xpose.msra.mxu0 0.0
    %3520 = vmatprep.subr.mxu0 0.0
    %3521 = vmatpush1.xpose.msra.mxu0 0.0
    %3522 = vmatprep.subr.mxu0 0.0
    %3523 = vmatpush1.xpose.msra.mxu0 0.0
    %3524 = vmatprep.subr.mxu0 0.0
    %3525 = vmatpush1.xpose.msra.mxu0 0.0
    %3526 = vmatprep.subr.mxu0 0.0
    %3527 = vmatpush1.xpose.msra.mxu0 0.0
    %3528 = vmatprep.subr.mxu0 0.0
    %3529 = vmatpush1.xpose.msra.mxu0 0.0
    %3530 = vmatprep.subr.mxu0 0.0
    %3531 = vmatpush1.xpose.msra.mxu0 0.0
    %3532 = vmatprep.subr.mxu0 0.0
    %3533 = vmatpush1.xpose.msra.mxu0 0.0
    %3534 = vmatprep.subr.mxu0 0.0
    %3535 = vmatpush1.xpose.msra.mxu0 0.0
    %3536 = vmatprep.subr.mxu0 0.0
    %3537 = vmatpush1.xpose.msra.mxu0 0.0
    %3538 = vmatprep.subr.mxu0 0.0
    %3539 = vmatpush1.xpose.msra.mxu0 0.0
    %3540 = vmatprep.subr.mxu0 0.0
    %3541 = vmatpush1.xpose.msra.mxu0 0.0
    %3542 = vmatprep.subr.mxu0 0.0
    %3543 = vmatpush1.xpose.msra.mxu0 0.0
    %3544 = vmatprep.subr.mxu0 0.0
    %3545 = vmatpush1.xpose.msra.mxu0 0.0
    %3546 = vmatprep.subr.mxu0 0.0
    %3547 = vmatpush1.xpose.msra.mxu0 0.0
    %3548 = vmatprep.subr.mxu0 0.0
    %3549 = vmatpush1.xpose.msra.mxu0 0.0
    %3550 = vmatprep.subr.mxu0 0.0
    %3551 = vmatpush1.xpose.msra.mxu0 0.0
    %3552 = vmatprep.subr.mxu0 0.0
    %3553 = vmatpush1.xpose.msra.mxu0 0.0
    %3554 = vmatprep.subr.mxu0 0.0
    %3555 = vmatpush1.xpose.msra.mxu0 0.0
    %3556 = vmatprep.subr.mxu0 0.0
    %3557 = vmatpush1.xpose.msra.mxu0 0.0
    %3558 = vmatprep.subr.mxu0 0.0
    %3559 = vmatpush1.xpose.msra.mxu0 0.0
    %3560 = vmatprep.subr.mxu0 0.0
    %3561 = vmatpush1.xpose.msra.mxu0 0.0
    %3562 = vmatprep.subr.mxu0 0.0
    %3563 = vmatpush1.xpose.msra.mxu0 0.0
    %3564 = vmatprep.subr.mxu0 0.0
    %3565 = vmatpush1.xpose.msra.mxu0 0.0
    %3566 = vmatprep.subr.mxu0 0.0
    %3567 = vmatpush1.xpose.msra.mxu0 0.0
    %3568 = vmatprep.subr.mxu0 0.0
    %3569 = vmatpush1.xpose.msra.mxu0 0.0
    %3570 = vmatprep.subr.mxu0 0.0
    %3571 = vmatpush1.xpose.msra.mxu0 0.0
    %3572 = vmatprep.mubr.f32.mxu0 0.0
    %3573 = vmatmul.mubr.f32.gmra.mrb[0].mxu0 %v3504
    %v3574 = vpop.f32.mrb[0].mxu0
    %v3575 = vadd.f32 0.0, %v3574
    %v3576 = vpop.f32.mrb[0].mxu0
    %3577 = vdwg.mxu0
    %3578 = vrot.lane.b32.xlu0 %v381, 126
    %v3579 = vpop.permute.xlu0 %3578
    %3580 = vrot.lane.b32.xlu0 %v361, 122
    %v3581 = vpop.permute.xlu0 %3580
    %v3582 = vsel %vm392, %v3579, 0
    %v3584 = vsel %vm392, %v3581, 0
    %3586 = vmatprep.subr.mxu0 0.0
    %3587 = vmatpush1.xpose.msra.mxu0 %v3584
    %3588 = vmatprep.subr.mxu0 0.0
    %3589 = vmatpush1.xpose.msra.mxu0 0.0
    %3590 = vmatprep.subr.mxu0 0.0
    %3591 = vmatpush1.xpose.msra.mxu0 0.0
    %3592 = vmatprep.subr.mxu0 0.0
    %3593 = vmatpush1.xpose.msra.mxu0 0.0
    %3594 = vmatprep.subr.mxu0 0.0
    %3595 = vmatpush1.xpose.msra.mxu0 0.0
    %3596 = vmatprep.subr.mxu0 0.0
    %3597 = vmatpush1.xpose.msra.mxu0 0.0
    %3598 = vmatprep.subr.mxu0 0.0
    %3599 = vmatpush1.xpose.msra.mxu0 0.0
    %3600 = vmatprep.subr.mxu0 0.0
    %3601 = vmatpush1.xpose.msra.mxu0 0.0
    %3602 = vmatprep.subr.mxu0 0.0
    %3603 = vmatpush1.xpose.msra.mxu0 0.0
    %3604 = vmatprep.subr.mxu0 0.0
    %3605 = vmatpush1.xpose.msra.mxu0 0.0
    %3606 = vmatprep.subr.mxu0 0.0
    %3607 = vmatpush1.xpose.msra.mxu0 0.0
    %3608 = vmatprep.subr.mxu0 0.0
    %3609 = vmatpush1.xpose.msra.mxu0 0.0
    %3610 = vmatprep.subr.mxu0 0.0
    %3611 = vmatpush1.xpose.msra.mxu0 0.0
    %3612 = vmatprep.subr.mxu0 0.0
    %3613 = vmatpush1.xpose.msra.mxu0 0.0
    %3614 = vmatprep.subr.mxu0 0.0
    %3615 = vmatpush1.xpose.msra.mxu0 0.0
    %3616 = vmatprep.subr.mxu0 0.0
    %3617 = vmatpush1.xpose.msra.mxu0 0.0
    %3618 = vmatprep.subr.mxu0 0.0
    %3619 = vmatpush1.xpose.msra.mxu0 0.0
    %3620 = vmatprep.subr.mxu0 0.0
    %3621 = vmatpush1.xpose.msra.mxu0 0.0
    %3622 = vmatprep.subr.mxu0 0.0
    %3623 = vmatpush1.xpose.msra.mxu0 0.0
    %3624 = vmatprep.subr.mxu0 0.0
    %3625 = vmatpush1.xpose.msra.mxu0 0.0
    %3626 = vmatprep.subr.mxu0 0.0
    %3627 = vmatpush1.xpose.msra.mxu0 0.0
    %3628 = vmatprep.subr.mxu0 0.0
    %3629 = vmatpush1.xpose.msra.mxu0 0.0
    %3630 = vmatprep.subr.mxu0 0.0
    %3631 = vmatpush1.xpose.msra.mxu0 0.0
    %3632 = vmatprep.subr.mxu0 0.0
    %3633 = vmatpush1.xpose.msra.mxu0 0.0
    %3634 = vmatprep.subr.mxu0 0.0
    %3635 = vmatpush1.xpose.msra.mxu0 0.0
    %3636 = vmatprep.subr.mxu0 0.0
    %3637 = vmatpush1.xpose.msra.mxu0 0.0
    %3638 = vmatprep.subr.mxu0 0.0
    %3639 = vmatpush1.xpose.msra.mxu0 0.0
    %3640 = vmatprep.subr.mxu0 0.0
    %3641 = vmatpush1.xpose.msra.mxu0 0.0
    %3642 = vmatprep.subr.mxu0 0.0
    %3643 = vmatpush1.xpose.msra.mxu0 0.0
    %3644 = vmatprep.subr.mxu0 0.0
    %3645 = vmatpush1.xpose.msra.mxu0 0.0
    %3646 = vmatprep.subr.mxu0 0.0
    %3647 = vmatpush1.xpose.msra.mxu0 0.0
    %3648 = vmatprep.subr.mxu0 0.0
    %3649 = vmatpush1.xpose.msra.mxu0 0.0
    %3650 = vmatprep.mubr.f32.mxu0 0.0
    %3651 = vmatmul.mubr.f32.gmra.mrb[0].mxu0 %v3582
    %v3652 = vpop.f32.mrb[0].mxu0
    %v3653 = vadd.f32 0.0, %v3652
    %v3654 = vpop.f32.mrb[0].mxu0
    %3655 = vdwg.mxu0
    %3656 = vrot.lane.b32.xlu0 %v382, 126
    %v3657 = vpop.permute.xlu0 %3656
    %3658 = vrot.lane.b32.xlu0 %v332, 122
    %v3659 = vpop.permute.xlu0 %3658
    %v3660 = vsel %vm392, %v3657, 0
    %v3662 = vsel %vm392, %v3659, 0
    %3664 = vmatprep.subr.mxu0 0.0
    %3665 = vmatpush1.xpose.msra.mxu0 %v3662
    %3666 = vmatprep.subr.mxu0 0.0
    %3667 = vmatpush1.xpose.msra.mxu0 0.0
    %3668 = vmatprep.subr.mxu0 0.0
    %3669 = vmatpush1.xpose.msra.mxu0 0.0
    %3670 = vmatprep.subr.mxu0 0.0
    %3671 = vmatpush1.xpose.msra.mxu0 0.0
    %3672 = vmatprep.subr.mxu0 0.0
    %3673 = vmatpush1.xpose.msra.mxu0 0.0
    %3674 = vmatprep.subr.mxu0 0.0
    %3675 = vmatpush1.xpose.msra.mxu0 0.0
    %3676 = vmatprep.subr.mxu0 0.0
    %3677 = vmatpush1.xpose.msra.mxu0 0.0
    %3678 = vmatprep.subr.mxu0 0.0
    %3679 = vmatpush1.xpose.msra.mxu0 0.0
    %3680 = vmatprep.subr.mxu0 0.0
    %3681 = vmatpush1.xpose.msra.mxu0 0.0
    %3682 = vmatprep.subr.mxu0 0.0
    %3683 = vmatpush1.xpose.msra.mxu0 0.0
    %3684 = vmatprep.subr.mxu0 0.0
    %3685 = vmatpush1.xpose.msra.mxu0 0.0
    %3686 = vmatprep.subr.mxu0 0.0
    %3687 = vmatpush1.xpose.msra.mxu0 0.0
    %3688 = vmatprep.subr.mxu0 0.0
    %3689 = vmatpush1.xpose.msra.mxu0 0.0
    %3690 = vmatprep.subr.mxu0 0.0
    %3691 = vmatpush1.xpose.msra.mxu0 0.0
    %3692 = vmatprep.subr.mxu0 0.0
    %3693 = vmatpush1.xpose.msra.mxu0 0.0
    %3694 = vmatprep.subr.mxu0 0.0
    %3695 = vmatpush1.xpose.msra.mxu0 0.0
    %3696 = vmatprep.subr.mxu0 0.0
    %3697 = vmatpush1.xpose.msra.mxu0 0.0
    %3698 = vmatprep.subr.mxu0 0.0
    %3699 = vmatpush1.xpose.msra.mxu0 0.0
    %3700 = vmatprep.subr.mxu0 0.0
    %3701 = vmatpush1.xpose.msra.mxu0 0.0
    %3702 = vmatprep.subr.mxu0 0.0
    %3703 = vmatpush1.xpose.msra.mxu0 0.0
    %3704 = vmatprep.subr.mxu0 0.0
    %3705 = vmatpush1.xpose.msra.mxu0 0.0
    %3706 = vmatprep.subr.mxu0 0.0
    %3707 = vmatpush1.xpose.msra.mxu0 0.0
    %3708 = vmatprep.subr.mxu0 0.0
    %3709 = vmatpush1.xpose.msra.mxu0 0.0
    %3710 = vmatprep.subr.mxu0 0.0
    %3711 = vmatpush1.xpose.msra.mxu0 0.0
    %3712 = vmatprep.subr.mxu0 0.0
    %3713 = vmatpush1.xpose.msra.mxu0 0.0
    %3714 = vmatprep.subr.mxu0 0.0
    %3715 = vmatpush1.xpose.msra.mxu0 0.0
    %3716 = vmatprep.subr.mxu0 0.0
    %3717 = vmatpush1.xpose.msra.mxu0 0.0
    %3718 = vmatprep.subr.mxu0 0.0
    %3719 = vmatpush1.xpose.msra.mxu0 0.0
    %3720 = vmatprep.subr.mxu0 0.0
    %3721 = vmatpush1.xpose.msra.mxu0 0.0
    %3722 = vmatprep.subr.mxu0 0.0
    %3723 = vmatpush1.xpose.msra.mxu0 0.0
    %3724 = vmatprep.subr.mxu0 0.0
    %3725 = vmatpush1.xpose.msra.mxu0 0.0
    %3726 = vmatprep.subr.mxu0 0.0
    %3727 = vmatpush1.xpose.msra.mxu0 0.0
    %3728 = vmatprep.mubr.f32.mxu0 0.0
    %3729 = vmatmul.mubr.f32.gmra.mrb[0].mxu0 %v3660
    %v3730 = vpop.f32.mrb[0].mxu0
    %v3731 = vadd.f32 0.0, %v3730
    %v3732 = vpop.f32.mrb[0].mxu0
    %3733 = vdwg.mxu0
    %3734 = vrot.lane.b32.xlu0 %v383, 126
    %v3735 = vpop.permute.xlu0 %3734
    %3736 = vrot.lane.b32.xlu0 %v362, 122
    %v3737 = vpop.permute.xlu0 %3736
    %v3738 = vsel %vm392, %v3735, 0
    %v3740 = vsel %vm392, %v3737, 0
    %3742 = vmatprep.subr.mxu0 0.0
    %3743 = vmatpush1.xpose.msra.mxu0 %v3740
    %3744 = vmatprep.subr.mxu0 0.0
    %3745 = vmatpush1.xpose.msra.mxu0 0.0
    %3746 = vmatprep.subr.mxu0 0.0
    %3747 = vmatpush1.xpose.msra.mxu0 0.0
    %3748 = vmatprep.subr.mxu0 0.0
    %3749 = vmatpush1.xpose.msra.mxu0 0.0
    %3750 = vmatprep.subr.mxu0 0.0
    %3751 = vmatpush1.xpose.msra.mxu0 0.0
    %3752 = vmatprep.subr.mxu0 0.0
    %3753 = vmatpush1.xpose.msra.mxu0 0.0
    %3754 = vmatprep.subr.mxu0 0.0
    %3755 = vmatpush1.xpose.msra.mxu0 0.0
    %3756 = vmatprep.subr.mxu0 0.0
    %3757 = vmatpush1.xpose.msra.mxu0 0.0
    %3758 = vmatprep.subr.mxu0 0.0
    %3759 = vmatpush1.xpose.msra.mxu0 0.0
    %3760 = vmatprep.subr.mxu0 0.0
    %3761 = vmatpush1.xpose.msra.mxu0 0.0
    %3762 = vmatprep.subr.mxu0 0.0
    %3763 = vmatpush1.xpose.msra.mxu0 0.0
    %3764 = vmatprep.subr.mxu0 0.0
    %3765 = vmatpush1.xpose.msra.mxu0 0.0
    %3766 = vmatprep.subr.mxu0 0.0
    %3767 = vmatpush1.xpose.msra.mxu0 0.0
    %3768 = vmatprep.subr.mxu0 0.0
    %3769 = vmatpush1.xpose.msra.mxu0 0.0
    %3770 = vmatprep.subr.mxu0 0.0
    %3771 = vmatpush1.xpose.msra.mxu0 0.0
    %3772 = vmatprep.subr.mxu0 0.0
    %3773 = vmatpush1.xpose.msra.mxu0 0.0
    %3774 = vmatprep.subr.mxu0 0.0
    %3775 = vmatpush1.xpose.msra.mxu0 0.0
    %3776 = vmatprep.subr.mxu0 0.0
    %3777 = vmatpush1.xpose.msra.mxu0 0.0
    %3778 = vmatprep.subr.mxu0 0.0
    %3779 = vmatpush1.xpose.msra.mxu0 0.0
    %3780 = vmatprep.subr.mxu0 0.0
    %3781 = vmatpush1.xpose.msra.mxu0 0.0
    %3782 = vmatprep.subr.mxu0 0.0
    %3783 = vmatpush1.xpose.msra.mxu0 0.0
    %3784 = vmatprep.subr.mxu0 0.0
    %3785 = vmatpush1.xpose.msra.mxu0 0.0
    %3786 = vmatprep.subr.mxu0 0.0
    %3787 = vmatpush1.xpose.msra.mxu0 0.0
    %3788 = vmatprep.subr.mxu0 0.0
    %3789 = vmatpush1.xpose.msra.mxu0 0.0
    %3790 = vmatprep.subr.mxu0 0.0
    %3791 = vmatpush1.xpose.msra.mxu0 0.0
    %3792 = vmatprep.subr.mxu0 0.0
    %3793 = vmatpush1.xpose.msra.mxu0 0.0
    %3794 = vmatprep.subr.mxu0 0.0
    %3795 = vmatpush1.xpose.msra.mxu0 0.0
    %3796 = vmatprep.subr.mxu0 0.0
    %3797 = vmatpush1.xpose.msra.mxu0 0.0
    %3798 = vmatprep.subr.mxu0 0.0
    %3799 = vmatpush1.xpose.msra.mxu0 0.0
    %3800 = vmatprep.subr.mxu0 0.0
    %3801 = vmatpush1.xpose.msra.mxu0 0.0
    %3802 = vmatprep.subr.mxu0 0.0
    %3803 = vmatpush1.xpose.msra.mxu0 0.0
    %3804 = vmatprep.subr.mxu0 0.0
    %3805 = vmatpush1.xpose.msra.mxu0 0.0
    %3806 = vmatprep.mubr.f32.mxu0 0.0
    %3807 = vmatmul.mubr.f32.gmra.mrb[0].mxu0 %v3738
    %v3808 = vpop.f32.mrb[0].mxu0
    %v3809 = vadd.f32 0.0, %v3808
    %v3810 = vpop.f32.mrb[0].mxu0
    %3811 = vdwg.mxu0
    %3812 = vrot.lane.b32.xlu0 %v384, 126
    %v3813 = vpop.permute.xlu0 %3812
    %3814 = vrot.lane.b32.xlu0 %v337, 122
    %v3815 = vpop.permute.xlu0 %3814
    %v3816 = vsel %vm392, %v3813, 0
    %v3818 = vsel %vm392, %v3815, 0
    %3820 = vmatprep.subr.mxu0 0.0
    %3821 = vmatpush1.xpose.msra.mxu0 %v3818
    %3822 = vmatprep.subr.mxu0 0.0
    %3823 = vmatpush1.xpose.msra.mxu0 0.0
    %3824 = vmatprep.subr.mxu0 0.0
    %3825 = vmatpush1.xpose.msra.mxu0 0.0
    %3826 = vmatprep.subr.mxu0 0.0
    %3827 = vmatpush1.xpose.msra.mxu0 0.0
    %3828 = vmatprep.subr.mxu0 0.0
    %3829 = vmatpush1.xpose.msra.mxu0 0.0
    %3830 = vmatprep.subr.mxu0 0.0
    %3831 = vmatpush1.xpose.msra.mxu0 0.0
    %3832 = vmatprep.subr.mxu0 0.0
    %3833 = vmatpush1.xpose.msra.mxu0 0.0
    %3834 = vmatprep.subr.mxu0 0.0
    %3835 = vmatpush1.xpose.msra.mxu0 0.0
    %3836 = vmatprep.subr.mxu0 0.0
    %3837 = vmatpush1.xpose.msra.mxu0 0.0
    %3838 = vmatprep.subr.mxu0 0.0
    %3839 = vmatpush1.xpose.msra.mxu0 0.0
    %3840 = vmatprep.subr.mxu0 0.0
    %3841 = vmatpush1.xpose.msra.mxu0 0.0
    %3842 = vmatprep.subr.mxu0 0.0
    %3843 = vmatpush1.xpose.msra.mxu0 0.0
    %3844 = vmatprep.subr.mxu0 0.0
    %3845 = vmatpush1.xpose.msra.mxu0 0.0
    %3846 = vmatprep.subr.mxu0 0.0
    %3847 = vmatpush1.xpose.msra.mxu0 0.0
    %3848 = vmatprep.subr.mxu0 0.0
    %3849 = vmatpush1.xpose.msra.mxu0 0.0
    %3850 = vmatprep.subr.mxu0 0.0
    %3851 = vmatpush1.xpose.msra.mxu0 0.0
    %3852 = vmatprep.subr.mxu0 0.0
    %3853 = vmatpush1.xpose.msra.mxu0 0.0
    %3854 = vmatprep.subr.mxu0 0.0
    %3855 = vmatpush1.xpose.msra.mxu0 0.0
    %3856 = vmatprep.subr.mxu0 0.0
    %3857 = vmatpush1.xpose.msra.mxu0 0.0
    %3858 = vmatprep.subr.mxu0 0.0
    %3859 = vmatpush1.xpose.msra.mxu0 0.0
    %3860 = vmatprep.subr.mxu0 0.0
    %3861 = vmatpush1.xpose.msra.mxu0 0.0
    %3862 = vmatprep.subr.mxu0 0.0
    %3863 = vmatpush1.xpose.msra.mxu0 0.0
    %3864 = vmatprep.subr.mxu0 0.0
    %3865 = vmatpush1.xpose.msra.mxu0 0.0
    %3866 = vmatprep.subr.mxu0 0.0
    %3867 = vmatpush1.xpose.msra.mxu0 0.0
    %3868 = vmatprep.subr.mxu0 0.0
    %3869 = vmatpush1.xpose.msra.mxu0 0.0
    %3870 = vmatprep.subr.mxu0 0.0
    %3871 = vmatpush1.xpose.msra.mxu0 0.0
    %3872 = vmatprep.subr.mxu0 0.0
    %3873 = vmatpush1.xpose.msra.mxu0 0.0
    %3874 = vmatprep.subr.mxu0 0.0
    %3875 = vmatpush1.xpose.msra.mxu0 0.0
    %3876 = vmatprep.subr.mxu0 0.0
    %3877 = vmatpush1.xpose.msra.mxu0 0.0
    %3878 = vmatprep.subr.mxu0 0.0
    %3879 = vmatpush1.xpose.msra.mxu0 0.0
    %3880 = vmatprep.subr.mxu0 0.0
    %3881 = vmatpush1.xpose.msra.mxu0 0.0
    %3882 = vmatprep.subr.mxu0 0.0
    %3883 = vmatpush1.xpose.msra.mxu0 0.0
    %3884 = vmatprep.mubr.f32.mxu0 0.0
    %3885 = vmatmul.mubr.f32.gmra.mrb[0].mxu0 %v3816
    %v3886 = vpop.f32.mrb[0].mxu0
    %v3887 = vadd.f32 0.0, %v3886
    %v3888 = vpop.f32.mrb[0].mxu0
    %3889 = vdwg.mxu0
    %3890 = vrot.lane.b32.xlu0 %v385, 126
    %v3891 = vpop.permute.xlu0 %3890
    %3892 = vrot.lane.b32.xlu0 %v363, 122
    %v3893 = vpop.permute.xlu0 %3892
    %v3894 = vsel %vm392, %v3891, 0
    %v3896 = vsel %vm392, %v3893, 0
    %3898 = vmatprep.subr.mxu0 0.0
    %3899 = vmatpush1.xpose.msra.mxu0 %v3896
    %3900 = vmatprep.subr.mxu0 0.0
    %3901 = vmatpush1.xpose.msra.mxu0 0.0
    %3902 = vmatprep.subr.mxu0 0.0
    %3903 = vmatpush1.xpose.msra.mxu0 0.0
    %3904 = vmatprep.subr.mxu0 0.0
    %3905 = vmatpush1.xpose.msra.mxu0 0.0
    %3906 = vmatprep.subr.mxu0 0.0
    %3907 = vmatpush1.xpose.msra.mxu0 0.0
    %3908 = vmatprep.subr.mxu0 0.0
    %3909 = vmatpush1.xpose.msra.mxu0 0.0
    %3910 = vmatprep.subr.mxu0 0.0
    %3911 = vmatpush1.xpose.msra.mxu0 0.0
    %3912 = vmatprep.subr.mxu0 0.0
    %3913 = vmatpush1.xpose.msra.mxu0 0.0
    %3914 = vmatprep.subr.mxu0 0.0
    %3915 = vmatpush1.xpose.msra.mxu0 0.0
    %3916 = vmatprep.subr.mxu0 0.0
    %3917 = vmatpush1.xpose.msra.mxu0 0.0
    %3918 = vmatprep.subr.mxu0 0.0
    %3919 = vmatpush1.xpose.msra.mxu0 0.0
    %3920 = vmatprep.subr.mxu0 0.0
    %3921 = vmatpush1.xpose.msra.mxu0 0.0
    %3922 = vmatprep.subr.mxu0 0.0
    %3923 = vmatpush1.xpose.msra.mxu0 0.0
    %3924 = vmatprep.subr.mxu0 0.0
    %3925 = vmatpush1.xpose.msra.mxu0 0.0
    %3926 = vmatprep.subr.mxu0 0.0
    %3927 = vmatpush1.xpose.msra.mxu0 0.0
    %3928 = vmatprep.subr.mxu0 0.0
    %3929 = vmatpush1.xpose.msra.mxu0 0.0
    %3930 = vmatprep.subr.mxu0 0.0
    %3931 = vmatpush1.xpose.msra.mxu0 0.0
    %3932 = vmatprep.subr.mxu0 0.0
    %3933 = vmatpush1.xpose.msra.mxu0 0.0
    %3934 = vmatprep.subr.mxu0 0.0
    %3935 = vmatpush1.xpose.msra.mxu0 0.0
    %3936 = vmatprep.subr.mxu0 0.0
    %3937 = vmatpush1.xpose.msra.mxu0 0.0
    %3938 = vmatprep.subr.mxu0 0.0
    %3939 = vmatpush1.xpose.msra.mxu0 0.0
    %3940 = vmatprep.subr.mxu0 0.0
    %3941 = vmatpush1.xpose.msra.mxu0 0.0
    %3942 = vmatprep.subr.mxu0 0.0
    %3943 = vmatpush1.xpose.msra.mxu0 0.0
    %3944 = vmatprep.subr.mxu0 0.0
    %3945 = vmatpush1.xpose.msra.mxu0 0.0
    %3946 = vmatprep.subr.mxu0 0.0
    %3947 = vmatpush1.xpose.msra.mxu0 0.0
    %3948 = vmatprep.subr.mxu0 0.0
    %3949 = vmatpush1.xpose.msra.mxu0 0.0
    %3950 = vmatprep.subr.mxu0 0.0
    %3951 = vmatpush1.xpose.msra.mxu0 0.0
    %3952 = vmatprep.subr.mxu0 0.0
    %3953 = vmatpush1.xpose.msra.mxu0 0.0
    %3954 = vmatprep.subr.mxu0 0.0
    %3955 = vmatpush1.xpose.msra.mxu0 0.0
    %3956 = vmatprep.subr.mxu0 0.0
    %3957 = vmatpush1.xpose.msra.mxu0 0.0
    %3958 = vmatprep.subr.mxu0 0.0
    %3959 = vmatpush1.xpose.msra.mxu0 0.0
    %3960 = vmatprep.subr.mxu0 0.0
    %3961 = vmatpush1.xpose.msra.mxu0 0.0
    %3962 = vmatprep.mubr.f32.mxu0 0.0
    %3963 = vmatmul.mubr.f32.gmra.mrb[0].mxu0 %v3894
    %v3964 = vpop.f32.mrb[0].mxu0
    %v3965 = vadd.f32 0.0, %v3964
    %v3966 = vpop.f32.mrb[0].mxu0
    %3967 = vdwg.mxu0
    %3968 = vrot.lane.b32.xlu0 %v386, 126
    %v3969 = vpop.permute.xlu0 %3968
    %3970 = vrot.lane.b32.xlu0 %v342, 122
    %v3971 = vpop.permute.xlu0 %3970
    %v3972 = vsel %vm392, %v3969, 0
    %v3974 = vsel %vm392, %v3971, 0
    %3976 = vmatprep.subr.mxu0 0.0
    %3977 = vmatpush1.xpose.msra.mxu0 %v3974
    %3978 = vmatprep.subr.mxu0 0.0
    %3979 = vmatpush1.xpose.msra.mxu0 0.0
    %3980 = vmatprep.subr.mxu0 0.0
    %3981 = vmatpush1.xpose.msra.mxu0 0.0
    %3982 = vmatprep.subr.mxu0 0.0
    %3983 = vmatpush1.xpose.msra.mxu0 0.0
    %3984 = vmatprep.subr.mxu0 0.0
    %3985 = vmatpush1.xpose.msra.mxu0 0.0
    %3986 = vmatprep.subr.mxu0 0.0
    %3987 = vmatpush1.xpose.msra.mxu0 0.0
    %3988 = vmatprep.subr.mxu0 0.0
    %3989 = vmatpush1.xpose.msra.mxu0 0.0
    %3990 = vmatprep.subr.mxu0 0.0
    %3991 = vmatpush1.xpose.msra.mxu0 0.0
    %3992 = vmatprep.subr.mxu0 0.0
    %3993 = vmatpush1.xpose.msra.mxu0 0.0
    %3994 = vmatprep.subr.mxu0 0.0
    %3995 = vmatpush1.xpose.msra.mxu0 0.0
    %3996 = vmatprep.subr.mxu0 0.0
    %3997 = vmatpush1.xpose.msra.mxu0 0.0
    %3998 = vmatprep.subr.mxu0 0.0
    %3999 = vmatpush1.xpose.msra.mxu0 0.0
    %4000 = vmatprep.subr.mxu0 0.0
    %4001 = vmatpush1.xpose.msra.mxu0 0.0
    %4002 = vmatprep.subr.mxu0 0.0
    %4003 = vmatpush1.xpose.msra.mxu0 0.0
    %4004 = vmatprep.subr.mxu0 0.0
    %4005 = vmatpush1.xpose.msra.mxu0 0.0
    %4006 = vmatprep.subr.mxu0 0.0
    %4007 = vmatpush1.xpose.msra.mxu0 0.0
    %4008 = vmatprep.subr.mxu0 0.0
    %4009 = vmatpush1.xpose.msra.mxu0 0.0
    %4010 = vmatprep.subr.mxu0 0.0
    %4011 = vmatpush1.xpose.msra.mxu0 0.0
    %4012 = vmatprep.subr.mxu0 0.0
    %4013 = vmatpush1.xpose.msra.mxu0 0.0
    %4014 = vmatprep.subr.mxu0 0.0
    %4015 = vmatpush1.xpose.msra.mxu0 0.0
    %4016 = vmatprep.subr.mxu0 0.0
    %4017 = vmatpush1.xpose.msra.mxu0 0.0
    %4018 = vmatprep.subr.mxu0 0.0
    %4019 = vmatpush1.xpose.msra.mxu0 0.0
    %4020 = vmatprep.subr.mxu0 0.0
    %4021 = vmatpush1.xpose.msra.mxu0 0.0
    %4022 = vmatprep.subr.mxu0 0.0
    %4023 = vmatpush1.xpose.msra.mxu0 0.0
    %4024 = vmatprep.subr.mxu0 0.0
    %4025 = vmatpush1.xpose.msra.mxu0 0.0
    %4026 = vmatprep.subr.mxu0 0.0
    %4027 = vmatpush1.xpose.msra.mxu0 0.0
    %4028 = vmatprep.subr.mxu0 0.0
    %4029 = vmatpush1.xpose.msra.mxu0 0.0
    %4030 = vmatprep.subr.mxu0 0.0
    %4031 = vmatpush1.xpose.msra.mxu0 0.0
    %4032 = vmatprep.subr.mxu0 0.0
    %4033 = vmatpush1.xpose.msra.mxu0 0.0
    %4034 = vmatprep.subr.mxu0 0.0
    %4035 = vmatpush1.xpose.msra.mxu0 0.0
    %4036 = vmatprep.subr.mxu0 0.0
    %4037 = vmatpush1.xpose.msra.mxu0 0.0
    %4038 = vmatprep.subr.mxu0 0.0
    %4039 = vmatpush1.xpose.msra.mxu0 0.0
    %4040 = vmatprep.mubr.f32.mxu0 0.0
    %4041 = vmatmul.mubr.f32.gmra.mrb[0].mxu0 %v3972
    %v4042 = vpop.f32.mrb[0].mxu0
    %v4043 = vadd.f32 0.0, %v4042
    %v4044 = vpop.f32.mrb[0].mxu0
    %4045 = vdwg.mxu0
    %4046 = vrot.lane.b32.xlu0 %v387, 126
    %v4047 = vpop.permute.xlu0 %4046
    %4048 = vrot.lane.b32.xlu0 %v364, 122
    %v4049 = vpop.permute.xlu0 %4048
    %v4050 = vsel %vm392, %v4047, 0
    %v4052 = vsel %vm392, %v4049, 0
    %4054 = vmatprep.subr.mxu0 0.0
    %4055 = vmatpush1.xpose.msra.mxu0 %v4052
    %4056 = vmatprep.subr.mxu0 0.0
    %4057 = vmatpush1.xpose.msra.mxu0 0.0
    %4058 = vmatprep.subr.mxu0 0.0
    %4059 = vmatpush1.xpose.msra.mxu0 0.0
    %4060 = vmatprep.subr.mxu0 0.0
    %4061 = vmatpush1.xpose.msra.mxu0 0.0
    %4062 = vmatprep.subr.mxu0 0.0
    %4063 = vmatpush1.xpose.msra.mxu0 0.0
    %4064 = vmatprep.subr.mxu0 0.0
    %4065 = vmatpush1.xpose.msra.mxu0 0.0
    %4066 = vmatprep.subr.mxu0 0.0
    %4067 = vmatpush1.xpose.msra.mxu0 0.0
    %4068 = vmatprep.subr.mxu0 0.0
    %4069 = vmatpush1.xpose.msra.mxu0 0.0
    %4070 = vmatprep.subr.mxu0 0.0
    %4071 = vmatpush1.xpose.msra.mxu0 0.0
    %4072 = vmatprep.subr.mxu0 0.0
    %4073 = vmatpush1.xpose.msra.mxu0 0.0
    %4074 = vmatprep.subr.mxu0 0.0
    %4075 = vmatpush1.xpose.msra.mxu0 0.0
    %4076 = vmatprep.subr.mxu0 0.0
    %4077 = vmatpush1.xpose.msra.mxu0 0.0
    %4078 = vmatprep.subr.mxu0 0.0
    %4079 = vmatpush1.xpose.msra.mxu0 0.0
    %4080 = vmatprep.subr.mxu0 0.0
    %4081 = vmatpush1.xpose.msra.mxu0 0.0
    %4082 = vmatprep.subr.mxu0 0.0
    %4083 = vmatpush1.xpose.msra.mxu0 0.0
    %4084 = vmatprep.subr.mxu0 0.0
    %4085 = vmatpush1.xpose.msra.mxu0 0.0
    %4086 = vmatprep.subr.mxu0 0.0
    %4087 = vmatpush1.xpose.msra.mxu0 0.0
    %4088 = vmatprep.subr.mxu0 0.0
    %4089 = vmatpush1.xpose.msra.mxu0 0.0
    %4090 = vmatprep.subr.mxu0 0.0
    %4091 = vmatpush1.xpose.msra.mxu0 0.0
    %4092 = vmatprep.subr.mxu0 0.0
    %4093 = vmatpush1.xpose.msra.mxu0 0.0
    %4094 = vmatprep.subr.mxu0 0.0
    %4095 = vmatpush1.xpose.msra.mxu0 0.0
    %4096 = vmatprep.subr.mxu0 0.0
    %4097 = vmatpush1.xpose.msra.mxu0 0.0
    %4098 = vmatprep.subr.mxu0 0.0
    %4099 = vmatpush1.xpose.msra.mxu0 0.0
    %4100 = vmatprep.subr.mxu0 0.0
    %4101 = vmatpush1.xpose.msra.mxu0 0.0
    %4102 = vmatprep.subr.mxu0 0.0
    %4103 = vmatpush1.xpose.msra.mxu0 0.0
    %4104 = vmatprep.subr.mxu0 0.0
    %4105 = vmatpush1.xpose.msra.mxu0 0.0
    %4106 = vmatprep.subr.mxu0 0.0
    %4107 = vmatpush1.xpose.msra.mxu0 0.0
    %4108 = vmatprep.subr.mxu0 0.0
    %4109 = vmatpush1.xpose.msra.mxu0 0.0
    %4110 = vmatprep.subr.mxu0 0.0
    %4111 = vmatpush1.xpose.msra.mxu0 0.0
    %4112 = vmatprep.subr.mxu0 0.0
    %4113 = vmatpush1.xpose.msra.mxu0 0.0
    %4114 = vmatprep.subr.mxu0 0.0
    %4115 = vmatpush1.xpose.msra.mxu0 0.0
    %4116 = vmatprep.subr.mxu0 0.0
    %4117 = vmatpush1.xpose.msra.mxu0 0.0
    %4118 = vmatprep.mubr.f32.mxu0 0.0
    %4119 = vmatmul.mubr.f32.gmra.mrb[0].mxu0 %v4050
    %v4120 = vpop.f32.mrb[0].mxu0
    %v4121 = vadd.f32 0.0, %v4120
    %v4122 = vpop.f32.mrb[0].mxu0
    %4123 = vdwg.mxu0
    %4124 = vrot.lane.b32.xlu0 %v388, 126
    %v4125 = vpop.permute.xlu0 %4124
    %4126 = vrot.lane.b32.xlu0 %v347, 122
    %v4127 = vpop.permute.xlu0 %4126
    %v4128 = vsel %vm392, %v4125, 0
    %v4130 = vsel %vm392, %v4127, 0
    %4132 = vmatprep.subr.mxu0 0.0
    %4133 = vmatpush1.xpose.msra.mxu0 %v4130
    %4134 = vmatprep.subr.mxu0 0.0
    %4135 = vmatpush1.xpose.msra.mxu0 0.0
    %4136 = vmatprep.subr.mxu0 0.0
    %4137 = vmatpush1.xpose.msra.mxu0 0.0
    %4138 = vmatprep.subr.mxu0 0.0
    %4139 = vmatpush1.xpose.msra.mxu0 0.0
    %4140 = vmatprep.subr.mxu0 0.0
    %4141 = vmatpush1.xpose.msra.mxu0 0.0
    %4142 = vmatprep.subr.mxu0 0.0
    %4143 = vmatpush1.xpose.msra.mxu0 0.0
    %4144 = vmatprep.subr.mxu0 0.0
    %4145 = vmatpush1.xpose.msra.mxu0 0.0
    %4146 = vmatprep.subr.mxu0 0.0
    %4147 = vmatpush1.xpose.msra.mxu0 0.0
    %4148 = vmatprep.subr.mxu0 0.0
    %4149 = vmatpush1.xpose.msra.mxu0 0.0
    %4150 = vmatprep.subr.mxu0 0.0
    %4151 = vmatpush1.xpose.msra.mxu0 0.0
    %4152 = vmatprep.subr.mxu0 0.0
    %4153 = vmatpush1.xpose.msra.mxu0 0.0
    %4154 = vmatprep.subr.mxu0 0.0
    %4155 = vmatpush1.xpose.msra.mxu0 0.0
    %4156 = vmatprep.subr.mxu0 0.0
    %4157 = vmatpush1.xpose.msra.mxu0 0.0
    %4158 = vmatprep.subr.mxu0 0.0
    %4159 = vmatpush1.xpose.msra.mxu0 0.0
    %4160 = vmatprep.subr.mxu0 0.0
    %4161 = vmatpush1.xpose.msra.mxu0 0.0
    %4162 = vmatprep.subr.mxu0 0.0
    %4163 = vmatpush1.xpose.msra.mxu0 0.0
    %4164 = vmatprep.subr.mxu0 0.0
    %4165 = vmatpush1.xpose.msra.mxu0 0.0
    %4166 = vmatprep.subr.mxu0 0.0
    %4167 = vmatpush1.xpose.msra.mxu0 0.0
    %4168 = vmatprep.subr.mxu0 0.0
    %4169 = vmatpush1.xpose.msra.mxu0 0.0
    %4170 = vmatprep.subr.mxu0 0.0
    %4171 = vmatpush1.xpose.msra.mxu0 0.0
    %4172 = vmatprep.subr.mxu0 0.0
    %4173 = vmatpush1.xpose.msra.mxu0 0.0
    %4174 = vmatprep.subr.mxu0 0.0
    %4175 = vmatpush1.xpose.msra.mxu0 0.0
    %4176 = vmatprep.subr.mxu0 0.0
    %4177 = vmatpush1.xpose.msra.mxu0 0.0
    %4178 = vmatprep.subr.mxu0 0.0
    %4179 = vmatpush1.xpose.msra.mxu0 0.0
    %4180 = vmatprep.subr.mxu0 0.0
    %4181 = vmatpush1.xpose.msra.mxu0 0.0
    %4182 = vmatprep.subr.mxu0 0.0
    %4183 = vmatpush1.xpose.msra.mxu0 0.0
    %4184 = vmatprep.subr.mxu0 0.0
    %4185 = vmatpush1.xpose.msra.mxu0 0.0
    %4186 = vmatprep.subr.mxu0 0.0
    %4187 = vmatpush1.xpose.msra.mxu0 0.0
    %4188 = vmatprep.subr.mxu0 0.0
    %4189 = vmatpush1.xpose.msra.mxu0 0.0
    %4190 = vmatprep.subr.mxu0 0.0
    %4191 = vmatpush1.xpose.msra.mxu0 0.0
    %4192 = vmatprep.subr.mxu0 0.0
    %4193 = vmatpush1.xpose.msra.mxu0 0.0
    %4194 = vmatprep.subr.mxu0 0.0
    %4195 = vmatpush1.xpose.msra.mxu0 0.0
    %4196 = vmatprep.mubr.f32.mxu0 0.0
    %4197 = vmatmul.mubr.f32.gmra.mrb[0].mxu0 %v4128
    %v4198 = vpop.f32.mrb[0].mxu0
    %v4199 = vadd.f32 0.0, %v4198
    %v4200 = vpop.f32.mrb[0].mxu0
    %4201 = vdwg.mxu0
    %4202 = vrot.lane.b32.xlu0 %v389, 126
    %v4203 = vpop.permute.xlu0 %4202
    %4204 = vrot.lane.b32.xlu0 %v365, 122
    %v4205 = vpop.permute.xlu0 %4204
    %v4206 = vsel %vm392, %v4203, 0
    %v4208 = vsel %vm392, %v4205, 0
    %4210 = vmatprep.subr.mxu0 0.0
    %4211 = vmatpush1.xpose.msra.mxu0 %v4208
    %4212 = vmatprep.subr.mxu0 0.0
    %4213 = vmatpush1.xpose.msra.mxu0 0.0
    %4214 = vmatprep.subr.mxu0 0.0
    %4215 = vmatpush1.xpose.msra.mxu0 0.0
    %4216 = vmatprep.subr.mxu0 0.0
    %4217 = vmatpush1.xpose.msra.mxu0 0.0
    %4218 = vmatprep.subr.mxu0 0.0
    %4219 = vmatpush1.xpose.msra.mxu0 0.0
    %4220 = vmatprep.subr.mxu0 0.0
    %4221 = vmatpush1.xpose.msra.mxu0 0.0
    %4222 = vmatprep.subr.mxu0 0.0
    %4223 = vmatpush1.xpose.msra.mxu0 0.0
    %4224 = vmatprep.subr.mxu0 0.0
    %4225 = vmatpush1.xpose.msra.mxu0 0.0
    %4226 = vmatprep.subr.mxu0 0.0
    %4227 = vmatpush1.xpose.msra.mxu0 0.0
    %4228 = vmatprep.subr.mxu0 0.0
    %4229 = vmatpush1.xpose.msra.mxu0 0.0
    %4230 = vmatprep.subr.mxu0 0.0
    %4231 = vmatpush1.xpose.msra.mxu0 0.0
    %4232 = vmatprep.subr.mxu0 0.0
    %4233 = vmatpush1.xpose.msra.mxu0 0.0
    %4234 = vmatprep.subr.mxu0 0.0
    %4235 = vmatpush1.xpose.msra.mxu0 0.0
    %4236 = vmatprep.subr.mxu0 0.0
    %4237 = vmatpush1.xpose.msra.mxu0 0.0
    %4238 = vmatprep.subr.mxu0 0.0
    %4239 = vmatpush1.xpose.msra.mxu0 0.0
    %4240 = vmatprep.subr.mxu0 0.0
    %4241 = vmatpush1.xpose.msra.mxu0 0.0
    %4242 = vmatprep.subr.mxu0 0.0
    %4243 = vmatpush1.xpose.msra.mxu0 0.0
    %4244 = vmatprep.subr.mxu0 0.0
    %4245 = vmatpush1.xpose.msra.mxu0 0.0
    %4246 = vmatprep.subr.mxu0 0.0
    %4247 = vmatpush1.xpose.msra.mxu0 0.0
    %4248 = vmatprep.subr.mxu0 0.0
    %4249 = vmatpush1.xpose.msra.mxu0 0.0
    %4250 = vmatprep.subr.mxu0 0.0
    %4251 = vmatpush1.xpose.msra.mxu0 0.0
    %4252 = vmatprep.subr.mxu0 0.0
    %4253 = vmatpush1.xpose.msra.mxu0 0.0
    %4254 = vmatprep.subr.mxu0 0.0
    %4255 = vmatpush1.xpose.msra.mxu0 0.0
    %4256 = vmatprep.subr.mxu0 0.0
    %4257 = vmatpush1.xpose.msra.mxu0 0.0
    %4258 = vmatprep.subr.mxu0 0.0
    %4259 = vmatpush1.xpose.msra.mxu0 0.0
    %4260 = vmatprep.subr.mxu0 0.0
    %4261 = vmatpush1.xpose.msra.mxu0 0.0
    %4262 = vmatprep.subr.mxu0 0.0
    %4263 = vmatpush1.xpose.msra.mxu0 0.0
    %4264 = vmatprep.subr.mxu0 0.0
    %4265 = vmatpush1.xpose.msra.mxu0 0.0
    %4266 = vmatprep.subr.mxu0 0.0
    %4267 = vmatpush1.xpose.msra.mxu0 0.0
    %4268 = vmatprep.subr.mxu0 0.0
    %4269 = vmatpush1.xpose.msra.mxu0 0.0
    %4270 = vmatprep.subr.mxu0 0.0
    %4271 = vmatpush1.xpose.msra.mxu0 0.0
    %4272 = vmatprep.subr.mxu0 0.0
    %4273 = vmatpush1.xpose.msra.mxu0 0.0
    %4274 = vmatprep.mubr.f32.mxu0 0.0
    %4275 = vmatmul.mubr.f32.gmra.mrb[0].mxu0 %v4206
    %v4276 = vpop.f32.mrb[0].mxu0
    %v4277 = vadd.f32 0.0, %v4276
    %v4278 = vpop.f32.mrb[0].mxu0
    %4279 = vdwg.mxu0
    %v4280 = vsel %vm1623, %v3107, -inf
    %4281 = vmax.xlane.f32.xlu0 %v4280
    %v4282 = vpop.xlane.xlu0 %4281
    %v4283 = vsel %vm1623, %v3185, -inf
    %4284 = vmax.xlane.f32.xlu0 %v4283
    %v4285 = vpop.xlane.xlu0 %4284
    %v4286 = vsel %vm1623, %v3263, -inf
    %4287 = vmax.xlane.f32.xlu0 %v4286
    %v4288 = vpop.xlane.xlu0 %4287
    %v4289 = vsel %vm1623, %v3341, -inf
    %4290 = vmax.xlane.f32.xlu0 %v4289
    %v4291 = vpop.xlane.xlu0 %4290
    %v4292 = vsel %vm1623, %v3419, -inf
    %4293 = vmax.xlane.f32.xlu0 %v4292
    %v4294 = vpop.xlane.xlu0 %4293
    %v4295 = vsel %vm1623, %v3497, -inf
    %4296 = vmax.xlane.f32.xlu0 %v4295
    %v4297 = vpop.xlane.xlu0 %4296
    %v4298 = vsel %vm1623, %v3575, -inf
    %4299 = vmax.xlane.f32.xlu0 %v4298
    %v4300 = vpop.xlane.xlu0 %4299
    %v4301 = vsel %vm1623, %v3653, -inf
    %4302 = vmax.xlane.f32.xlu0 %v4301
    %v4303 = vpop.xlane.xlu0 %4302
    %v4304 = vsel %vm1623, %v3731, -inf
    %4305 = vmax.xlane.f32.xlu0 %v4304
    %v4306 = vpop.xlane.xlu0 %4305
    %v4307 = vsel %vm1623, %v3809, -inf
    %4308 = vmax.xlane.f32.xlu0 %v4307
    %v4309 = vpop.xlane.xlu0 %4308
    %v4310 = vsel %vm1623, %v3887, -inf
    %4311 = vmax.xlane.f32.xlu0 %v4310
    %v4312 = vpop.xlane.xlu0 %4311
    %v4313 = vsel %vm1623, %v3965, -inf
    %4314 = vmax.xlane.f32.xlu0 %v4313
    %v4315 = vpop.xlane.xlu0 %4314
    %v4316 = vsel %vm1623, %v4043, -inf
    %4317 = vmax.xlane.f32.xlu0 %v4316
    %v4318 = vpop.xlane.xlu0 %4317
    %v4319 = vsel %vm1623, %v4121, -inf
    %4320 = vmax.xlane.f32.xlu0 %v4319
    %v4321 = vpop.xlane.xlu0 %4320
    %v4322 = vsel %vm1623, %v4199, -inf
    %4323 = vmax.xlane.f32.xlu0 %v4322
    %v4324 = vpop.xlane.xlu0 %4323
    %v4325 = vsel %vm1623, %v4277, -inf
    %4326 = vmax.xlane.f32.xlu0 %v4325
    %v4327 = vpop.xlane.xlu0 %4326
    %v4328 = vsub.f32 %v3107, %v4282
    %v4329 = vsub.f32 %v3185, %v4285
    %v4330 = vsub.f32 %v3263, %v4288
    %v4331 = vsub.f32 %v3341, %v4291
    %v4332 = vsub.f32 %v3419, %v4294
    %v4333 = vsub.f32 %v3497, %v4297
    %v4334 = vsub.f32 %v3575, %v4300
    %v4335 = vsub.f32 %v3653, %v4303
    %v4336 = vsub.f32 %v3731, %v4306
    %v4337 = vsub.f32 %v3809, %v4309
    %v4338 = vsub.f32 %v3887, %v4312
    %v4339 = vsub.f32 %v3965, %v4315
    %v4340 = vsub.f32 %v4043, %v4318
    %v4341 = vsub.f32 %v4121, %v4321
    %v4342 = vsub.f32 %v4199, %v4324
    %v4343 = vsub.f32 %v4277, %v4327
    %v4344 = vmul.f32 %v4328, 1.442695
    %v4345 = vpow.pop %v4344
    %v4346 = vmul.f32 %v4329, 1.442695
    %v4347 = vpow.pop %v4346
    %v4348 = vmul.f32 %v4330, 1.442695
    %v4349 = vpow.pop %v4348
    %v4350 = vmul.f32 %v4331, 1.442695
    %v4351 = vpow.pop %v4350
    %v4352 = vmul.f32 %v4332, 1.442695
    %v4353 = vpow.pop %v4352
    %v4354 = vmul.f32 %v4333, 1.442695
    %v4355 = vpow.pop %v4354
    %v4356 = vmul.f32 %v4334, 1.442695
    %v4357 = vpow.pop %v4356
    %v4358 = vmul.f32 %v4335, 1.442695
    %v4359 = vpow.pop %v4358
    %v4360 = vmul.f32 %v4336, 1.442695
    %v4361 = vpow.pop %v4360
    %v4362 = vmul.f32 %v4337, 1.442695
    %v4363 = vpow.pop %v4362
    %v4364 = vmul.f32 %v4338, 1.442695
    %v4365 = vpow.pop %v4364
    %v4366 = vmul.f32 %v4339, 1.442695
    %v4367 = vpow.pop %v4366
    %v4368 = vmul.f32 %v4340, 1.442695
    %v4369 = vpow.pop %v4368
    %v4370 = vmul.f32 %v4341, 1.442695
    %v4371 = vpow.pop %v4370
    %v4372 = vmul.f32 %v4342, 1.442695
    %v4373 = vpow.pop %v4372
    %v4374 = vmul.f32 %v4343, 1.442695
    %v4375 = vpow.pop %v4374
    %v4376 = vsel %vm1623, %v4345, 0.0
    %4377 = vadd.xlane.f32.xlu0 %v4376
    %v4378 = vpop.xlane.xlu0 %4377
    %v4379 = vsel %vm1623, %v4347, 0.0
    %4380 = vadd.xlane.f32.xlu0 %v4379
    %v4381 = vpop.xlane.xlu0 %4380
    %v4382 = vsel %vm1623, %v4349, 0.0
    %4383 = vadd.xlane.f32.xlu0 %v4382
    %v4384 = vpop.xlane.xlu0 %4383
    %v4385 = vsel %vm1623, %v4351, 0.0
    %4386 = vadd.xlane.f32.xlu0 %v4385
    %v4387 = vpop.xlane.xlu0 %4386
    %v4388 = vsel %vm1623, %v4353, 0.0
    %4389 = vadd.xlane.f32.xlu0 %v4388
    %v4390 = vpop.xlane.xlu0 %4389
    %v4391 = vsel %vm1623, %v4355, 0.0
    %4392 = vadd.xlane.f32.xlu0 %v4391
    %v4393 = vpop.xlane.xlu0 %4392
    %v4394 = vsel %vm1623, %v4357, 0.0
    %4395 = vadd.xlane.f32.xlu0 %v4394
    %v4396 = vpop.xlane.xlu0 %4395
    %v4397 = vsel %vm1623, %v4359, 0.0
    %4398 = vadd.xlane.f32.xlu0 %v4397
    %v4399 = vpop.xlane.xlu0 %4398
    %v4400 = vsel %vm1623, %v4361, 0.0
    %4401 = vadd.xlane.f32.xlu0 %v4400
    %v4402 = vpop.xlane.xlu0 %4401
    %v4403 = vsel %vm1623, %v4363, 0.0
    %4404 = vadd.xlane.f32.xlu0 %v4403
    %v4405 = vpop.xlane.xlu0 %4404
    %v4406 = vsel %vm1623, %v4365, 0.0
    %4407 = vadd.xlane.f32.xlu0 %v4406
    %v4408 = vpop.xlane.xlu0 %4407
    %v4409 = vsel %vm1623, %v4367, 0.0
    %4410 = vadd.xlane.f32.xlu0 %v4409
    %v4411 = vpop.xlane.xlu0 %4410
    %v4412 = vsel %vm1623, %v4369, 0.0
    %4413 = vadd.xlane.f32.xlu0 %v4412
    %v4414 = vpop.xlane.xlu0 %4413
    %v4415 = vsel %vm1623, %v4371, 0.0
    %4416 = vadd.xlane.f32.xlu0 %v4415
    %v4417 = vpop.xlane.xlu0 %4416
    %v4418 = vsel %vm1623, %v4373, 0.0
    %4419 = vadd.xlane.f32.xlu0 %v4418
    %v4420 = vpop.xlane.xlu0 %4419
    %v4421 = vsel %vm1623, %v4375, 0.0
    %4422 = vadd.xlane.f32.xlu0 %v4421
    %v4423 = vpop.xlane.xlu0 %4422
    %v4424 = vrcp.pop %v4378
    %v4425 = vrcp.pop %v4381
    %v4426 = vrcp.pop %v4384
    %v4427 = vrcp.pop %v4387
    %v4428 = vrcp.pop %v4390
    %v4429 = vrcp.pop %v4393
    %v4430 = vrcp.pop %v4396
    %v4431 = vrcp.pop %v4399
    %v4432 = vrcp.pop %v4402
    %v4433 = vrcp.pop %v4405
    %v4434 = vrcp.pop %v4408
    %v4435 = vrcp.pop %v4411
    %v4436 = vrcp.pop %v4414
    %v4437 = vrcp.pop %v4417
    %v4438 = vrcp.pop %v4420
    %v4439 = vrcp.pop %v4423
    %v4440 = vmul.f32 %v4345, %v4424
    %v4441 = vmul.f32 %v4347, %v4425
    %v4442 = vmul.f32 %v4349, %v4426
    %v4443 = vmul.f32 %v4351, %v4427
    %v4444 = vmul.f32 %v4353, %v4428
    %v4445 = vmul.f32 %v4355, %v4429
    %v4446 = vmul.f32 %v4357, %v4430
    %v4447 = vmul.f32 %v4359, %v4431
    %v4448 = vmul.f32 %v4361, %v4432
    %v4449 = vmul.f32 %v4363, %v4433
    %v4450 = vmul.f32 %v4365, %v4434
    %v4451 = vmul.f32 %v4367, %v4435
    %v4452 = vmul.f32 %v4369, %v4436
    %v4453 = vmul.f32 %v4371, %v4437
    %v4454 = vmul.f32 %v4373, %v4438
    %v4455 = vmul.f32 %v4375, %v4439
    %4456 = vrot.lane.b32.xlu0 %v312, 118
    %v4457 = vpop.permute.xlu0 %4456
    %v4459 = vsel %vm202, %v4440, 0
    %v4461 = vsel %vm241, %v4457, 0
    %4463 = vmatprep.subr.mxu0 0.0
    %4464 = vmatpush1.msra.mxu0 %v4461
    %4465 = vmatprep.subr.mxu0 0.0
    %4466 = vmatpush1.msra.mxu0 0.0
    %4467 = vmatprep.subr.mxu0 0.0
    %4468 = vmatpush1.msra.mxu0 0.0
    %4469 = vmatprep.subr.mxu0 0.0
    %4470 = vmatpush1.msra.mxu0 0.0
    %4471 = vmatprep.subr.mxu0 0.0
    %4472 = vmatpush1.msra.mxu0 0.0
    %4473 = vmatprep.subr.mxu0 0.0
    %4474 = vmatpush1.msra.mxu0 0.0
    %4475 = vmatprep.subr.mxu0 0.0
    %4476 = vmatpush1.msra.mxu0 0.0
    %4477 = vmatprep.subr.mxu0 0.0
    %4478 = vmatpush1.msra.mxu0 0.0
    %4479 = vmatprep.subr.mxu0 0.0
    %4480 = vmatpush1.msra.mxu0 0.0
    %4481 = vmatprep.subr.mxu0 0.0
    %4482 = vmatpush1.msra.mxu0 0.0
    %4483 = vmatprep.subr.mxu0 0.0
    %4484 = vmatpush1.msra.mxu0 0.0
    %4485 = vmatprep.subr.mxu0 0.0
    %4486 = vmatpush1.msra.mxu0 0.0
    %4487 = vmatprep.subr.mxu0 0.0
    %4488 = vmatpush1.msra.mxu0 0.0
    %4489 = vmatprep.subr.mxu0 0.0
    %4490 = vmatpush1.msra.mxu0 0.0
    %4491 = vmatprep.subr.mxu0 0.0
    %4492 = vmatpush1.msra.mxu0 0.0
    %4493 = vmatprep.subr.mxu0 0.0
    %4494 = vmatpush1.msra.mxu0 0.0
    %4495 = vmatprep.subr.mxu0 0.0
    %4496 = vmatpush1.msra.mxu0 0.0
    %4497 = vmatprep.subr.mxu0 0.0
    %4498 = vmatpush1.msra.mxu0 0.0
    %4499 = vmatprep.subr.mxu0 0.0
    %4500 = vmatpush1.msra.mxu0 0.0
    %4501 = vmatprep.subr.mxu0 0.0
    %4502 = vmatpush1.msra.mxu0 0.0
    %4503 = vmatprep.subr.mxu0 0.0
    %4504 = vmatpush1.msra.mxu0 0.0
    %4505 = vmatprep.subr.mxu0 0.0
    %4506 = vmatpush1.msra.mxu0 0.0
    %4507 = vmatprep.subr.mxu0 0.0
    %4508 = vmatpush1.msra.mxu0 0.0
    %4509 = vmatprep.subr.mxu0 0.0
    %4510 = vmatpush1.msra.mxu0 0.0
    %4511 = vmatprep.subr.mxu0 0.0
    %4512 = vmatpush1.msra.mxu0 0.0
    %4513 = vmatprep.subr.mxu0 0.0
    %4514 = vmatpush1.msra.mxu0 0.0
    %4515 = vmatprep.subr.mxu0 0.0
    %4516 = vmatpush1.msra.mxu0 0.0
    %4517 = vmatprep.subr.mxu0 0.0
    %4518 = vmatpush1.msra.mxu0 0.0
    %4519 = vmatprep.subr.mxu0 0.0
    %4520 = vmatpush1.msra.mxu0 0.0
    %4521 = vmatprep.subr.mxu0 0.0
    %4522 = vmatpush1.msra.mxu0 0.0
    %4523 = vmatprep.subr.mxu0 0.0
    %4524 = vmatpush1.msra.mxu0 0.0
    %4525 = vmatprep.subr.mxu0 0.0
    %4526 = vmatpush1.msra.mxu0 0.0
    %4527 = vmatprep.mubr.f32.mxu0 0.0
    %4528 = vmatmul.mubr.f32.gmra.mrb[0].mxu0 %v4459
    %v4529 = vpop.f32.mrb[0].mxu0
    %v4530 = vadd.f32 0.0, %v4529
    %v4531 = vpop.f32.mrb[0].mxu0
    %4532 = vdwg.mxu0
    %4533 = vrot.lane.b32.xlu0 %v358, 118
    %v4534 = vpop.permute.xlu0 %4533
    %v4536 = vsel %vm202, %v4441, 0
    %v4538 = vsel %vm241, %v4534, 0
    %4540 = vmatprep.subr.mxu0 0.0
    %4541 = vmatpush1.msra.mxu0 %v4538
    %4542 = vmatprep.subr.mxu0 0.0
    %4543 = vmatpush1.msra.mxu0 0.0
    %4544 = vmatprep.subr.mxu0 0.0
    %4545 = vmatpush1.msra.mxu0 0.0
    %4546 = vmatprep.subr.mxu0 0.0
    %4547 = vmatpush1.msra.mxu0 0.0
    %4548 = vmatprep.subr.mxu0 0.0
    %4549 = vmatpush1.msra.mxu0 0.0
    %4550 = vmatprep.subr.mxu0 0.0
    %4551 = vmatpush1.msra.mxu0 0.0
    %4552 = vmatprep.subr.mxu0 0.0
    %4553 = vmatpush1.msra.mxu0 0.0
    %4554 = vmatprep.subr.mxu0 0.0
    %4555 = vmatpush1.msra.mxu0 0.0
    %4556 = vmatprep.subr.mxu0 0.0
    %4557 = vmatpush1.msra.mxu0 0.0
    %4558 = vmatprep.subr.mxu0 0.0
    %4559 = vmatpush1.msra.mxu0 0.0
    %4560 = vmatprep.subr.mxu0 0.0
    %4561 = vmatpush1.msra.mxu0 0.0
    %4562 = vmatprep.subr.mxu0 0.0
    %4563 = vmatpush1.msra.mxu0 0.0
    %4564 = vmatprep.subr.mxu0 0.0
    %4565 = vmatpush1.msra.mxu0 0.0
    %4566 = vmatprep.subr.mxu0 0.0
    %4567 = vmatpush1.msra.mxu0 0.0
    %4568 = vmatprep.subr.mxu0 0.0
    %4569 = vmatpush1.msra.mxu0 0.0
    %4570 = vmatprep.subr.mxu0 0.0
    %4571 = vmatpush1.msra.mxu0 0.0
    %4572 = vmatprep.subr.mxu0 0.0
    %4573 = vmatpush1.msra.mxu0 0.0
    %4574 = vmatprep.subr.mxu0 0.0
    %4575 = vmatpush1.msra.mxu0 0.0
    %4576 = vmatprep.subr.mxu0 0.0
    %4577 = vmatpush1.msra.mxu0 0.0
    %4578 = vmatprep.subr.mxu0 0.0
    %4579 = vmatpush1.msra.mxu0 0.0
    %4580 = vmatprep.subr.mxu0 0.0
    %4581 = vmatpush1.msra.mxu0 0.0
    %4582 = vmatprep.subr.mxu0 0.0
    %4583 = vmatpush1.msra.mxu0 0.0
    %4584 = vmatprep.subr.mxu0 0.0
    %4585 = vmatpush1.msra.mxu0 0.0
    %4586 = vmatprep.subr.mxu0 0.0
    %4587 = vmatpush1.msra.mxu0 0.0
    %4588 = vmatprep.subr.mxu0 0.0
    %4589 = vmatpush1.msra.mxu0 0.0
    %4590 = vmatprep.subr.mxu0 0.0
    %4591 = vmatpush1.msra.mxu0 0.0
    %4592 = vmatprep.subr.mxu0 0.0
    %4593 = vmatpush1.msra.mxu0 0.0
    %4594 = vmatprep.subr.mxu0 0.0
    %4595 = vmatpush1.msra.mxu0 0.0
    %4596 = vmatprep.subr.mxu0 0.0
    %4597 = vmatpush1.msra.mxu0 0.0
    %4598 = vmatprep.subr.mxu0 0.0
    %4599 = vmatpush1.msra.mxu0 0.0
    %4600 = vmatprep.subr.mxu0 0.0
    %4601 = vmatpush1.msra.mxu0 0.0
    %4602 = vmatprep.subr.mxu0 0.0
    %4603 = vmatpush1.msra.mxu0 0.0
    %4604 = vmatprep.mubr.f32.mxu0 0.0
    %4605 = vmatmul.mubr.f32.gmra.mrb[0].mxu0 %v4536
    %v4606 = vpop.f32.mrb[0].mxu0
    %v4607 = vadd.f32 0.0, %v4606
    %v4608 = vpop.f32.mrb[0].mxu0
    %4609 = vdwg.mxu0
    %4610 = vrot.lane.b32.xlu0 %v317, 118
    %v4611 = vpop.permute.xlu0 %4610
    %v4613 = vsel %vm202, %v4442, 0
    %v4615 = vsel %vm241, %v4611, 0
    %4617 = vmatprep.subr.mxu0 0.0
    %4618 = vmatpush1.msra.mxu0 %v4615
    %4619 = vmatprep.subr.mxu0 0.0
    %4620 = vmatpush1.msra.mxu0 0.0
    %4621 = vmatprep.subr.mxu0 0.0
    %4622 = vmatpush1.msra.mxu0 0.0
    %4623 = vmatprep.subr.mxu0 0.0
    %4624 = vmatpush1.msra.mxu0 0.0
    %4625 = vmatprep.subr.mxu0 0.0
    %4626 = vmatpush1.msra.mxu0 0.0
    %4627 = vmatprep.subr.mxu0 0.0
    %4628 = vmatpush1.msra.mxu0 0.0
    %4629 = vmatprep.subr.mxu0 0.0
    %4630 = vmatpush1.msra.mxu0 0.0
    %4631 = vmatprep.subr.mxu0 0.0
    %4632 = vmatpush1.msra.mxu0 0.0
    %4633 = vmatprep.subr.mxu0 0.0
    %4634 = vmatpush1.msra.mxu0 0.0
    %4635 = vmatprep.subr.mxu0 0.0
    %4636 = vmatpush1.msra.mxu0 0.0
    %4637 = vmatprep.subr.mxu0 0.0
    %4638 = vmatpush1.msra.mxu0 0.0
    %4639 = vmatprep.subr.mxu0 0.0
    %4640 = vmatpush1.msra.mxu0 0.0
    %4641 = vmatprep.subr.mxu0 0.0
    %4642 = vmatpush1.msra.mxu0 0.0
    %4643 = vmatprep.subr.mxu0 0.0
    %4644 = vmatpush1.msra.mxu0 0.0
    %4645 = vmatprep.subr.mxu0 0.0
    %4646 = vmatpush1.msra.mxu0 0.0
    %4647 = vmatprep.subr.mxu0 0.0
    %4648 = vmatpush1.msra.mxu0 0.0
    %4649 = vmatprep.subr.mxu0 0.0
    %4650 = vmatpush1.msra.mxu0 0.0
    %4651 = vmatprep.subr.mxu0 0.0
    %4652 = vmatpush1.msra.mxu0 0.0
    %4653 = vmatprep.subr.mxu0 0.0
    %4654 = vmatpush1.msra.mxu0 0.0
    %4655 = vmatprep.subr.mxu0 0.0
    %4656 = vmatpush1.msra.mxu0 0.0
    %4657 = vmatprep.subr.mxu0 0.0
    %4658 = vmatpush1.msra.mxu0 0.0
    %4659 = vmatprep.subr.mxu0 0.0
    %4660 = vmatpush1.msra.mxu0 0.0
    %4661 = vmatprep.subr.mxu0 0.0
    %4662 = vmatpush1.msra.mxu0 0.0
    %4663 = vmatprep.subr.mxu0 0.0
    %4664 = vmatpush1.msra.mxu0 0.0
    %4665 = vmatprep.subr.mxu0 0.0
    %4666 = vmatpush1.msra.mxu0 0.0
    %4667 = vmatprep.subr.mxu0 0.0
    %4668 = vmatpush1.msra.mxu0 0.0
    %4669 = vmatprep.subr.mxu0 0.0
    %4670 = vmatpush1.msra.mxu0 0.0
    %4671 = vmatprep.subr.mxu0 0.0
    %4672 = vmatpush1.msra.mxu0 0.0
    %4673 = vmatprep.subr.mxu0 0.0
    %4674 = vmatpush1.msra.mxu0 0.0
    %4675 = vmatprep.subr.mxu0 0.0
    %4676 = vmatpush1.msra.mxu0 0.0
    %4677 = vmatprep.subr.mxu0 0.0
    %4678 = vmatpush1.msra.mxu0 0.0
    %4679 = vmatprep.subr.mxu0 0.0
    %4680 = vmatpush1.msra.mxu0 0.0
    %4681 = vmatprep.mubr.f32.mxu0 0.0
    %4682 = vmatmul.mubr.f32.gmra.mrb[0].mxu0 %v4613
    %v4683 = vpop.f32.mrb[0].mxu0
    %v4684 = vadd.f32 0.0, %v4683
    %v4685 = vpop.f32.mrb[0].mxu0
    %4686 = vdwg.mxu0
    %4687 = vrot.lane.b32.xlu0 %v359, 118
    %v4688 = vpop.permute.xlu0 %4687
    %v4690 = vsel %vm202, %v4443, 0
    %v4692 = vsel %vm241, %v4688, 0
    %4694 = vmatprep.subr.mxu0 0.0
    %4695 = vmatpush1.msra.mxu0 %v4692
    %4696 = vmatprep.subr.mxu0 0.0
    %4697 = vmatpush1.msra.mxu0 0.0
    %4698 = vmatprep.subr.mxu0 0.0
    %4699 = vmatpush1.msra.mxu0 0.0
    %4700 = vmatprep.subr.mxu0 0.0
    %4701 = vmatpush1.msra.mxu0 0.0
    %4702 = vmatprep.subr.mxu0 0.0
    %4703 = vmatpush1.msra.mxu0 0.0
    %4704 = vmatprep.subr.mxu0 0.0
    %4705 = vmatpush1.msra.mxu0 0.0
    %4706 = vmatprep.subr.mxu0 0.0
    %4707 = vmatpush1.msra.mxu0 0.0
    %4708 = vmatprep.subr.mxu0 0.0
    %4709 = vmatpush1.msra.mxu0 0.0
    %4710 = vmatprep.subr.mxu0 0.0
    %4711 = vmatpush1.msra.mxu0 0.0
    %4712 = vmatprep.subr.mxu0 0.0
    %4713 = vmatpush1.msra.mxu0 0.0
    %4714 = vmatprep.subr.mxu0 0.0
    %4715 = vmatpush1.msra.mxu0 0.0
    %4716 = vmatprep.subr.mxu0 0.0
    %4717 = vmatpush1.msra.mxu0 0.0
    %4718 = vmatprep.subr.mxu0 0.0
    %4719 = vmatpush1.msra.mxu0 0.0
    %4720 = vmatprep.subr.mxu0 0.0
    %4721 = vmatpush1.msra.mxu0 0.0
    %4722 = vmatprep.subr.mxu0 0.0
    %4723 = vmatpush1.msra.mxu0 0.0
    %4724 = vmatprep.subr.mxu0 0.0
    %4725 = vmatpush1.msra.mxu0 0.0
    %4726 = vmatprep.subr.mxu0 0.0
    %4727 = vmatpush1.msra.mxu0 0.0
    %4728 = vmatprep.subr.mxu0 0.0
    %4729 = vmatpush1.msra.mxu0 0.0
    %4730 = vmatprep.subr.mxu0 0.0
    %4731 = vmatpush1.msra.mxu0 0.0
    %4732 = vmatprep.subr.mxu0 0.0
    %4733 = vmatpush1.msra.mxu0 0.0
    %4734 = vmatprep.subr.mxu0 0.0
    %4735 = vmatpush1.msra.mxu0 0.0
    %4736 = vmatprep.subr.mxu0 0.0
    %4737 = vmatpush1.msra.mxu0 0.0
    %4738 = vmatprep.subr.mxu0 0.0
    %4739 = vmatpush1.msra.mxu0 0.0
    %4740 = vmatprep.subr.mxu0 0.0
    %4741 = vmatpush1.msra.mxu0 0.0
    %4742 = vmatprep.subr.mxu0 0.0
    %4743 = vmatpush1.msra.mxu0 0.0
    %4744 = vmatprep.subr.mxu0 0.0
    %4745 = vmatpush1.msra.mxu0 0.0
    %4746 = vmatprep.subr.mxu0 0.0
    %4747 = vmatpush1.msra.mxu0 0.0
    %4748 = vmatprep.subr.mxu0 0.0
    %4749 = vmatpush1.msra.mxu0 0.0
    %4750 = vmatprep.subr.mxu0 0.0
    %4751 = vmatpush1.msra.mxu0 0.0
    %4752 = vmatprep.subr.mxu0 0.0
    %4753 = vmatpush1.msra.mxu0 0.0
    %4754 = vmatprep.subr.mxu0 0.0
    %4755 = vmatpush1.msra.mxu0 0.0
    %4756 = vmatprep.subr.mxu0 0.0
    %4757 = vmatpush1.msra.mxu0 0.0
    %4758 = vmatprep.mubr.f32.mxu0 0.0
    %4759 = vmatmul.mubr.f32.gmra.mrb[0].mxu0 %v4690
    %v4760 = vpop.f32.mrb[0].mxu0
    %v4761 = vadd.f32 0.0, %v4760
    %v4762 = vpop.f32.mrb[0].mxu0
    %4763 = vdwg.mxu0
    %4764 = vrot.lane.b32.xlu0 %v322, 118
    %v4765 = vpop.permute.xlu0 %4764
    %v4767 = vsel %vm202, %v4444, 0
    %v4769 = vsel %vm241, %v4765, 0
    %4771 = vmatprep.subr.mxu0 0.0
    %4772 = vmatpush1.msra.mxu0 %v4769
    %4773 = vmatprep.subr.mxu0 0.0
    %4774 = vmatpush1.msra.mxu0 0.0
    %4775 = vmatprep.subr.mxu0 0.0
    %4776 = vmatpush1.msra.mxu0 0.0
    %4777 = vmatprep.subr.mxu0 0.0
    %4778 = vmatpush1.msra.mxu0 0.0
    %4779 = vmatprep.subr.mxu0 0.0
    %4780 = vmatpush1.msra.mxu0 0.0
    %4781 = vmatprep.subr.mxu0 0.0
    %4782 = vmatpush1.msra.mxu0 0.0
    %4783 = vmatprep.subr.mxu0 0.0
    %4784 = vmatpush1.msra.mxu0 0.0
    %4785 = vmatprep.subr.mxu0 0.0
    %4786 = vmatpush1.msra.mxu0 0.0
    %4787 = vmatprep.subr.mxu0 0.0
    %4788 = vmatpush1.msra.mxu0 0.0
    %4789 = vmatprep.subr.mxu0 0.0
    %4790 = vmatpush1.msra.mxu0 0.0
    %4791 = vmatprep.subr.mxu0 0.0
    %4792 = vmatpush1.msra.mxu0 0.0
    %4793 = vmatprep.subr.mxu0 0.0
    %4794 = vmatpush1.msra.mxu0 0.0
    %4795 = vmatprep.subr.mxu0 0.0
    %4796 = vmatpush1.msra.mxu0 0.0
    %4797 = vmatprep.subr.mxu0 0.0
    %4798 = vmatpush1.msra.mxu0 0.0
    %4799 = vmatprep.subr.mxu0 0.0
    %4800 = vmatpush1.msra.mxu0 0.0
    %4801 = vmatprep.subr.mxu0 0.0
    %4802 = vmatpush1.msra.mxu0 0.0
    %4803 = vmatprep.subr.mxu0 0.0
    %4804 = vmatpush1.msra.mxu0 0.0
    %4805 = vmatprep.subr.mxu0 0.0
    %4806 = vmatpush1.msra.mxu0 0.0
    %4807 = vmatprep.subr.mxu0 0.0
    %4808 = vmatpush1.msra.mxu0 0.0
    %4809 = vmatprep.subr.mxu0 0.0
    %4810 = vmatpush1.msra.mxu0 0.0
    %4811 = vmatprep.subr.mxu0 0.0
    %4812 = vmatpush1.msra.mxu0 0.0
    %4813 = vmatprep.subr.mxu0 0.0
    %4814 = vmatpush1.msra.mxu0 0.0
    %4815 = vmatprep.subr.mxu0 0.0
    %4816 = vmatpush1.msra.mxu0 0.0
    %4817 = vmatprep.subr.mxu0 0.0
    %4818 = vmatpush1.msra.mxu0 0.0
    %4819 = vmatprep.subr.mxu0 0.0
    %4820 = vmatpush1.msra.mxu0 0.0
    %4821 = vmatprep.subr.mxu0 0.0
    %4822 = vmatpush1.msra.mxu0 0.0
    %4823 = vmatprep.subr.mxu0 0.0
    %4824 = vmatpush1.msra.mxu0 0.0
    %4825 = vmatprep.subr.mxu0 0.0
    %4826 = vmatpush1.msra.mxu0 0.0
    %4827 = vmatprep.subr.mxu0 0.0
    %4828 = vmatpush1.msra.mxu0 0.0
    %4829 = vmatprep.subr.mxu0 0.0
    %4830 = vmatpush1.msra.mxu0 0.0
    %4831 = vmatprep.subr.mxu0 0.0
    %4832 = vmatpush1.msra.mxu0 0.0
    %4833 = vmatprep.subr.mxu0 0.0
    %4834 = vmatpush1.msra.mxu0 0.0
    %4835 = vmatprep.mubr.f32.mxu0 0.0
    %4836 = vmatmul.mubr.f32.gmra.mrb[0].mxu0 %v4767
    %v4837 = vpop.f32.mrb[0].mxu0
    %v4838 = vadd.f32 0.0, %v4837
    %v4839 = vpop.f32.mrb[0].mxu0
    %4840 = vdwg.mxu0
    %4841 = vrot.lane.b32.xlu0 %v360, 118
    %v4842 = vpop.permute.xlu0 %4841
    %v4844 = vsel %vm202, %v4445, 0
    %v4846 = vsel %vm241, %v4842, 0
    %4848 = vmatprep.subr.mxu0 0.0
    %4849 = vmatpush1.msra.mxu0 %v4846
    %4850 = vmatprep.subr.mxu0 0.0
    %4851 = vmatpush1.msra.mxu0 0.0
    %4852 = vmatprep.subr.mxu0 0.0
    %4853 = vmatpush1.msra.mxu0 0.0
    %4854 = vmatprep.subr.mxu0 0.0
    %4855 = vmatpush1.msra.mxu0 0.0
    %4856 = vmatprep.subr.mxu0 0.0
    %4857 = vmatpush1.msra.mxu0 0.0
    %4858 = vmatprep.subr.mxu0 0.0
    %4859 = vmatpush1.msra.mxu0 0.0
    %4860 = vmatprep.subr.mxu0 0.0
    %4861 = vmatpush1.msra.mxu0 0.0
    %4862 = vmatprep.subr.mxu0 0.0
    %4863 = vmatpush1.msra.mxu0 0.0
    %4864 = vmatprep.subr.mxu0 0.0
    %4865 = vmatpush1.msra.mxu0 0.0
    %4866 = vmatprep.subr.mxu0 0.0
    %4867 = vmatpush1.msra.mxu0 0.0
    %4868 = vmatprep.subr.mxu0 0.0
    %4869 = vmatpush1.msra.mxu0 0.0
    %4870 = vmatprep.subr.mxu0 0.0
    %4871 = vmatpush1.msra.mxu0 0.0
    %4872 = vmatprep.subr.mxu0 0.0
    %4873 = vmatpush1.msra.mxu0 0.0
    %4874 = vmatprep.subr.mxu0 0.0
    %4875 = vmatpush1.msra.mxu0 0.0
    %4876 = vmatprep.subr.mxu0 0.0
    %4877 = vmatpush1.msra.mxu0 0.0
    %4878 = vmatprep.subr.mxu0 0.0
    %4879 = vmatpush1.msra.mxu0 0.0
    %4880 = vmatprep.subr.mxu0 0.0
    %4881 = vmatpush1.msra.mxu0 0.0
    %4882 = vmatprep.subr.mxu0 0.0
    %4883 = vmatpush1.msra.mxu0 0.0
    %4884 = vmatprep.subr.mxu0 0.0
    %4885 = vmatpush1.msra.mxu0 0.0
    %4886 = vmatprep.subr.mxu0 0.0
    %4887 = vmatpush1.msra.mxu0 0.0
    %4888 = vmatprep.subr.mxu0 0.0
    %4889 = vmatpush1.msra.mxu0 0.0
    %4890 = vmatprep.subr.mxu0 0.0
    %4891 = vmatpush1.msra.mxu0 0.0
    %4892 = vmatprep.subr.mxu0 0.0
    %4893 = vmatpush1.msra.mxu0 0.0
    %4894 = vmatprep.subr.mxu0 0.0
    %4895 = vmatpush1.msra.mxu0 0.0
    %4896 = vmatprep.subr.mxu0 0.0
    %4897 = vmatpush1.msra.mxu0 0.0
    %4898 = vmatprep.subr.mxu0 0.0
    %4899 = vmatpush1.msra.mxu0 0.0
    %4900 = vmatprep.subr.mxu0 0.0
    %4901 = vmatpush1.msra.mxu0 0.0
    %4902 = vmatprep.subr.mxu0 0.0
    %4903 = vmatpush1.msra.mxu0 0.0
    %4904 = vmatprep.subr.mxu0 0.0
    %4905 = vmatpush1.msra.mxu0 0.0
    %4906 = vmatprep.subr.mxu0 0.0
    %4907 = vmatpush1.msra.mxu0 0.0
    %4908 = vmatprep.subr.mxu0 0.0
    %4909 = vmatpush1.msra.mxu0 0.0
    %4910 = vmatprep.subr.mxu0 0.0
    %4911 = vmatpush1.msra.mxu0 0.0
    %4912 = vmatprep.mubr.f32.mxu0 0.0
    %4913 = vmatmul.mubr.f32.gmra.mrb[0].mxu0 %v4844
    %v4914 = vpop.f32.mrb[0].mxu0
    %v4915 = vadd.f32 0.0, %v4914
    %v4916 = vpop.f32.mrb[0].mxu0
    %4917 = vdwg.mxu0
    %4918 = vrot.lane.b32.xlu0 %v327, 118
    %v4919 = vpop.permute.xlu0 %4918
    %v4921 = vsel %vm202, %v4446, 0
    %v4923 = vsel %vm241, %v4919, 0
    %4925 = vmatprep.subr.mxu0 0.0
    %4926 = vmatpush1.msra.mxu0 %v4923
    %4927 = vmatprep.subr.mxu0 0.0
    %4928 = vmatpush1.msra.mxu0 0.0
    %4929 = vmatprep.subr.mxu0 0.0
    %4930 = vmatpush1.msra.mxu0 0.0
    %4931 = vmatprep.subr.mxu0 0.0
    %4932 = vmatpush1.msra.mxu0 0.0
    %4933 = vmatprep.subr.mxu0 0.0
    %4934 = vmatpush1.msra.mxu0 0.0
    %4935 = vmatprep.subr.mxu0 0.0
    %4936 = vmatpush1.msra.mxu0 0.0
    %4937 = vmatprep.subr.mxu0 0.0
    %4938 = vmatpush1.msra.mxu0 0.0
    %4939 = vmatprep.subr.mxu0 0.0
    %4940 = vmatpush1.msra.mxu0 0.0
    %4941 = vmatprep.subr.mxu0 0.0
    %4942 = vmatpush1.msra.mxu0 0.0
    %4943 = vmatprep.subr.mxu0 0.0
    %4944 = vmatpush1.msra.mxu0 0.0
    %4945 = vmatprep.subr.mxu0 0.0
    %4946 = vmatpush1.msra.mxu0 0.0
    %4947 = vmatprep.subr.mxu0 0.0
    %4948 = vmatpush1.msra.mxu0 0.0
    %4949 = vmatprep.subr.mxu0 0.0
    %4950 = vmatpush1.msra.mxu0 0.0
    %4951 = vmatprep.subr.mxu0 0.0
    %4952 = vmatpush1.msra.mxu0 0.0
    %4953 = vmatprep.subr.mxu0 0.0
    %4954 = vmatpush1.msra.mxu0 0.0
    %4955 = vmatprep.subr.mxu0 0.0
    %4956 = vmatpush1.msra.mxu0 0.0
    %4957 = vmatprep.subr.mxu0 0.0
    %4958 = vmatpush1.msra.mxu0 0.0
    %4959 = vmatprep.subr.mxu0 0.0
    %4960 = vmatpush1.msra.mxu0 0.0
    %4961 = vmatprep.subr.mxu0 0.0
    %4962 = vmatpush1.msra.mxu0 0.0
    %4963 = vmatprep.subr.mxu0 0.0
    %4964 = vmatpush1.msra.mxu0 0.0
    %4965 = vmatprep.subr.mxu0 0.0
    %4966 = vmatpush1.msra.mxu0 0.0
    %4967 = vmatprep.subr.mxu0 0.0
    %4968 = vmatpush1.msra.mxu0 0.0
    %4969 = vmatprep.subr.mxu0 0.0
    %4970 = vmatpush1.msra.mxu0 0.0
    %4971 = vmatprep.subr.mxu0 0.0
    %4972 = vmatpush1.msra.mxu0 0.0
    %4973 = vmatprep.subr.mxu0 0.0
    %4974 = vmatpush1.msra.mxu0 0.0
    %4975 = vmatprep.subr.mxu0 0.0
    %4976 = vmatpush1.msra.mxu0 0.0
    %4977 = vmatprep.subr.mxu0 0.0
    %4978 = vmatpush1.msra.mxu0 0.0
    %4979 = vmatprep.subr.mxu0 0.0
    %4980 = vmatpush1.msra.mxu0 0.0
    %4981 = vmatprep.subr.mxu0 0.0
    %4982 = vmatpush1.msra.mxu0 0.0
    %4983 = vmatprep.subr.mxu0 0.0
    %4984 = vmatpush1.msra.mxu0 0.0
    %4985 = vmatprep.subr.mxu0 0.0
    %4986 = vmatpush1.msra.mxu0 0.0
    %4987 = vmatprep.subr.mxu0 0.0
    %4988 = vmatpush1.msra.mxu0 0.0
    %4989 = vmatprep.mubr.f32.mxu0 0.0
    %4990 = vmatmul.mubr.f32.gmra.mrb[0].mxu0 %v4921
    %v4991 = vpop.f32.mrb[0].mxu0
    %v4992 = vadd.f32 0.0, %v4991
    %v4993 = vpop.f32.mrb[0].mxu0
    %4994 = vdwg.mxu0
    %4995 = vrot.lane.b32.xlu0 %v361, 118
    %v4996 = vpop.permute.xlu0 %4995
    %v4998 = vsel %vm202, %v4447, 0
    %v5000 = vsel %vm241, %v4996, 0
    %5002 = vmatprep.subr.mxu0 0.0
    %5003 = vmatpush1.msra.mxu0 %v5000
    %5004 = vmatprep.subr.mxu0 0.0
    %5005 = vmatpush1.msra.mxu0 0.0
    %5006 = vmatprep.subr.mxu0 0.0
    %5007 = vmatpush1.msra.mxu0 0.0
    %5008 = vmatprep.subr.mxu0 0.0
    %5009 = vmatpush1.msra.mxu0 0.0
    %5010 = vmatprep.subr.mxu0 0.0
    %5011 = vmatpush1.msra.mxu0 0.0
    %5012 = vmatprep.subr.mxu0 0.0
    %5013 = vmatpush1.msra.mxu0 0.0
    %5014 = vmatprep.subr.mxu0 0.0
    %5015 = vmatpush1.msra.mxu0 0.0
    %5016 = vmatprep.subr.mxu0 0.0
    %5017 = vmatpush1.msra.mxu0 0.0
    %5018 = vmatprep.subr.mxu0 0.0
    %5019 = vmatpush1.msra.mxu0 0.0
    %5020 = vmatprep.subr.mxu0 0.0
    %5021 = vmatpush1.msra.mxu0 0.0
    %5022 = vmatprep.subr.mxu0 0.0
    %5023 = vmatpush1.msra.mxu0 0.0
    %5024 = vmatprep.subr.mxu0 0.0
    %5025 = vmatpush1.msra.mxu0 0.0
    %5026 = vmatprep.subr.mxu0 0.0
    %5027 = vmatpush1.msra.mxu0 0.0
    %5028 = vmatprep.subr.mxu0 0.0
    %5029 = vmatpush1.msra.mxu0 0.0
    %5030 = vmatprep.subr.mxu0 0.0
    %5031 = vmatpush1.msra.mxu0 0.0
    %5032 = vmatprep.subr.mxu0 0.0
    %5033 = vmatpush1.msra.mxu0 0.0
    %5034 = vmatprep.subr.mxu0 0.0
    %5035 = vmatpush1.msra.mxu0 0.0
    %5036 = vmatprep.subr.mxu0 0.0
    %5037 = vmatpush1.msra.mxu0 0.0
    %5038 = vmatprep.subr.mxu0 0.0
    %5039 = vmatpush1.msra.mxu0 0.0
    %5040 = vmatprep.subr.mxu0 0.0
    %5041 = vmatpush1.msra.mxu0 0.0
    %5042 = vmatprep.subr.mxu0 0.0
    %5043 = vmatpush1.msra.mxu0 0.0
    %5044 = vmatprep.subr.mxu0 0.0
    %5045 = vmatpush1.msra.mxu0 0.0
    %5046 = vmatprep.subr.mxu0 0.0
    %5047 = vmatpush1.msra.mxu0 0.0
    %5048 = vmatprep.subr.mxu0 0.0
    %5049 = vmatpush1.msra.mxu0 0.0
    %5050 = vmatprep.subr.mxu0 0.0
    %5051 = vmatpush1.msra.mxu0 0.0
    %5052 = vmatprep.subr.mxu0 0.0
    %5053 = vmatpush1.msra.mxu0 0.0
    %5054 = vmatprep.subr.mxu0 0.0
    %5055 = vmatpush1.msra.mxu0 0.0
    %5056 = vmatprep.subr.mxu0 0.0
    %5057 = vmatpush1.msra.mxu0 0.0
    %5058 = vmatprep.subr.mxu0 0.0
    %5059 = vmatpush1.msra.mxu0 0.0
    %5060 = vmatprep.subr.mxu0 0.0
    %5061 = vmatpush1.msra.mxu0 0.0
    %5062 = vmatprep.subr.mxu0 0.0
    %5063 = vmatpush1.msra.mxu0 0.0
    %5064 = vmatprep.subr.mxu0 0.0
    %5065 = vmatpush1.msra.mxu0 0.0
    %5066 = vmatprep.mubr.f32.mxu0 0.0
    %5067 = vmatmul.mubr.f32.gmra.mrb[0].mxu0 %v4998
    %v5068 = vpop.f32.mrb[0].mxu0
    %v5069 = vadd.f32 0.0, %v5068
    %v5070 = vpop.f32.mrb[0].mxu0
    %5071 = vdwg.mxu0
    %5072 = vrot.lane.b32.xlu0 %v332, 118
    %v5073 = vpop.permute.xlu0 %5072
    %v5075 = vsel %vm202, %v4448, 0
    %v5077 = vsel %vm241, %v5073, 0
    %5079 = vmatprep.subr.mxu0 0.0
    %5080 = vmatpush1.msra.mxu0 %v5077
    %5081 = vmatprep.subr.mxu0 0.0
    %5082 = vmatpush1.msra.mxu0 0.0
    %5083 = vmatprep.subr.mxu0 0.0
    %5084 = vmatpush1.msra.mxu0 0.0
    %5085 = vmatprep.subr.mxu0 0.0
    %5086 = vmatpush1.msra.mxu0 0.0
    %5087 = vmatprep.subr.mxu0 0.0
    %5088 = vmatpush1.msra.mxu0 0.0
    %5089 = vmatprep.subr.mxu0 0.0
    %5090 = vmatpush1.msra.mxu0 0.0
    %5091 = vmatprep.subr.mxu0 0.0
    %5092 = vmatpush1.msra.mxu0 0.0
    %5093 = vmatprep.subr.mxu0 0.0
    %5094 = vmatpush1.msra.mxu0 0.0
    %5095 = vmatprep.subr.mxu0 0.0
    %5096 = vmatpush1.msra.mxu0 0.0
    %5097 = vmatprep.subr.mxu0 0.0
    %5098 = vmatpush1.msra.mxu0 0.0
    %5099 = vmatprep.subr.mxu0 0.0
    %5100 = vmatpush1.msra.mxu0 0.0
    %5101 = vmatprep.subr.mxu0 0.0
    %5102 = vmatpush1.msra.mxu0 0.0
    %5103 = vmatprep.subr.mxu0 0.0
    %5104 = vmatpush1.msra.mxu0 0.0
    %5105 = vmatprep.subr.mxu0 0.0
    %5106 = vmatpush1.msra.mxu0 0.0
    %5107 = vmatprep.subr.mxu0 0.0
    %5108 = vmatpush1.msra.mxu0 0.0
    %5109 = vmatprep.subr.mxu0 0.0
    %5110 = vmatpush1.msra.mxu0 0.0
    %5111 = vmatprep.subr.mxu0 0.0
    %5112 = vmatpush1.msra.mxu0 0.0
    %5113 = vmatprep.subr.mxu0 0.0
    %5114 = vmatpush1.msra.mxu0 0.0
    %5115 = vmatprep.subr.mxu0 0.0
    %5116 = vmatpush1.msra.mxu0 0.0
    %5117 = vmatprep.subr.mxu0 0.0
    %5118 = vmatpush1.msra.mxu0 0.0
    %5119 = vmatprep.subr.mxu0 0.0
    %5120 = vmatpush1.msra.mxu0 0.0
    %5121 = vmatprep.subr.mxu0 0.0
    %5122 = vmatpush1.msra.mxu0 0.0
    %5123 = vmatprep.subr.mxu0 0.0
    %5124 = vmatpush1.msra.mxu0 0.0
    %5125 = vmatprep.subr.mxu0 0.0
    %5126 = vmatpush1.msra.mxu0 0.0
    %5127 = vmatprep.subr.mxu0 0.0
    %5128 = vmatpush1.msra.mxu0 0.0
    %5129 = vmatprep.subr.mxu0 0.0
    %5130 = vmatpush1.msra.mxu0 0.0
    %5131 = vmatprep.subr.mxu0 0.0
    %5132 = vmatpush1.msra.mxu0 0.0
    %5133 = vmatprep.subr.mxu0 0.0
    %5134 = vmatpush1.msra.mxu0 0.0
    %5135 = vmatprep.subr.mxu0 0.0
    %5136 = vmatpush1.msra.mxu0 0.0
    %5137 = vmatprep.subr.mxu0 0.0
    %5138 = vmatpush1.msra.mxu0 0.0
    %5139 = vmatprep.subr.mxu0 0.0
    %5140 = vmatpush1.msra.mxu0 0.0
    %5141 = vmatprep.subr.mxu0 0.0
    %5142 = vmatpush1.msra.mxu0 0.0
    %5143 = vmatprep.mubr.f32.mxu0 0.0
    %5144 = vmatmul.mubr.f32.gmra.mrb[0].mxu0 %v5075
    %v5145 = vpop.f32.mrb[0].mxu0
    %v5146 = vadd.f32 0.0, %v5145
    %v5147 = vpop.f32.mrb[0].mxu0
    %5148 = vdwg.mxu0
    %5149 = vrot.lane.b32.xlu0 %v362, 118
    %v5150 = vpop.permute.xlu0 %5149
    %v5152 = vsel %vm202, %v4449, 0
    %v5154 = vsel %vm241, %v5150, 0
    %5156 = vmatprep.subr.mxu0 0.0
    %5157 = vmatpush1.msra.mxu0 %v5154
    %5158 = vmatprep.subr.mxu0 0.0
    %5159 = vmatpush1.msra.mxu0 0.0
    %5160 = vmatprep.subr.mxu0 0.0
    %5161 = vmatpush1.msra.mxu0 0.0
    %5162 = vmatprep.subr.mxu0 0.0
    %5163 = vmatpush1.msra.mxu0 0.0
    %5164 = vmatprep.subr.mxu0 0.0
    %5165 = vmatpush1.msra.mxu0 0.0
    %5166 = vmatprep.subr.mxu0 0.0
    %5167 = vmatpush1.msra.mxu0 0.0
    %5168 = vmatprep.subr.mxu0 0.0
    %5169 = vmatpush1.msra.mxu0 0.0
    %5170 = vmatprep.subr.mxu0 0.0
    %5171 = vmatpush1.msra.mxu0 0.0
    %5172 = vmatprep.subr.mxu0 0.0
    %5173 = vmatpush1.msra.mxu0 0.0
    %5174 = vmatprep.subr.mxu0 0.0
    %5175 = vmatpush1.msra.mxu0 0.0
    %5176 = vmatprep.subr.mxu0 0.0
    %5177 = vmatpush1.msra.mxu0 0.0
    %5178 = vmatprep.subr.mxu0 0.0
    %5179 = vmatpush1.msra.mxu0 0.0
    %5180 = vmatprep.subr.mxu0 0.0
    %5181 = vmatpush1.msra.mxu0 0.0
    %5182 = vmatprep.subr.mxu0 0.0
    %5183 = vmatpush1.msra.mxu0 0.0
    %5184 = vmatprep.subr.mxu0 0.0
    %5185 = vmatpush1.msra.mxu0 0.0
    %5186 = vmatprep.subr.mxu0 0.0
    %5187 = vmatpush1.msra.mxu0 0.0
    %5188 = vmatprep.subr.mxu0 0.0
    %5189 = vmatpush1.msra.mxu0 0.0
    %5190 = vmatprep.subr.mxu0 0.0
    %5191 = vmatpush1.msra.mxu0 0.0
    %5192 = vmatprep.subr.mxu0 0.0
    %5193 = vmatpush1.msra.mxu0 0.0
    %5194 = vmatprep.subr.mxu0 0.0
    %5195 = vmatpush1.msra.mxu0 0.0
    %5196 = vmatprep.subr.mxu0 0.0
    %5197 = vmatpush1.msra.mxu0 0.0
    %5198 = vmatprep.subr.mxu0 0.0
    %5199 = vmatpush1.msra.mxu0 0.0
    %5200 = vmatprep.subr.mxu0 0.0
    %5201 = vmatpush1.msra.mxu0 0.0
    %5202 = vmatprep.subr.mxu0 0.0
    %5203 = vmatpush1.msra.mxu0 0.0
    %5204 = vmatprep.subr.mxu0 0.0
    %5205 = vmatpush1.msra.mxu0 0.0
    %5206 = vmatprep.subr.mxu0 0.0
    %5207 = vmatpush1.msra.mxu0 0.0
    %5208 = vmatprep.subr.mxu0 0.0
    %5209 = vmatpush1.msra.mxu0 0.0
    %5210 = vmatprep.subr.mxu0 0.0
    %5211 = vmatpush1.msra.mxu0 0.0
    %5212 = vmatprep.subr.mxu0 0.0
    %5213 = vmatpush1.msra.mxu0 0.0
    %5214 = vmatprep.subr.mxu0 0.0
    %5215 = vmatpush1.msra.mxu0 0.0
    %5216 = vmatprep.subr.mxu0 0.0
    %5217 = vmatpush1.msra.mxu0 0.0
    %5218 = vmatprep.subr.mxu0 0.0
    %5219 = vmatpush1.msra.mxu0 0.0
    %5220 = vmatprep.mubr.f32.mxu0 0.0
    %5221 = vmatmul.mubr.f32.gmra.mrb[0].mxu0 %v5152
    %v5222 = vpop.f32.mrb[0].mxu0
    %v5223 = vadd.f32 0.0, %v5222
    %v5224 = vpop.f32.mrb[0].mxu0
    %5225 = vdwg.mxu0
    %5226 = vrot.lane.b32.xlu0 %v337, 118
    %v5227 = vpop.permute.xlu0 %5226
    %v5229 = vsel %vm202, %v4450, 0
    %v5231 = vsel %vm241, %v5227, 0
    %5233 = vmatprep.subr.mxu0 0.0
    %5234 = vmatpush1.msra.mxu0 %v5231
    %5235 = vmatprep.subr.mxu0 0.0
    %5236 = vmatpush1.msra.mxu0 0.0
    %5237 = vmatprep.subr.mxu0 0.0
    %5238 = vmatpush1.msra.mxu0 0.0
    %5239 = vmatprep.subr.mxu0 0.0
    %5240 = vmatpush1.msra.mxu0 0.0
    %5241 = vmatprep.subr.mxu0 0.0
    %5242 = vmatpush1.msra.mxu0 0.0
    %5243 = vmatprep.subr.mxu0 0.0
    %5244 = vmatpush1.msra.mxu0 0.0
    %5245 = vmatprep.subr.mxu0 0.0
    %5246 = vmatpush1.msra.mxu0 0.0
    %5247 = vmatprep.subr.mxu0 0.0
    %5248 = vmatpush1.msra.mxu0 0.0
    %5249 = vmatprep.subr.mxu0 0.0
    %5250 = vmatpush1.msra.mxu0 0.0
    %5251 = vmatprep.subr.mxu0 0.0
    %5252 = vmatpush1.msra.mxu0 0.0
    %5253 = vmatprep.subr.mxu0 0.0
    %5254 = vmatpush1.msra.mxu0 0.0
    %5255 = vmatprep.subr.mxu0 0.0
    %5256 = vmatpush1.msra.mxu0 0.0
    %5257 = vmatprep.subr.mxu0 0.0
    %5258 = vmatpush1.msra.mxu0 0.0
    %5259 = vmatprep.subr.mxu0 0.0
    %5260 = vmatpush1.msra.mxu0 0.0
    %5261 = vmatprep.subr.mxu0 0.0
    %5262 = vmatpush1.msra.mxu0 0.0
    %5263 = vmatprep.subr.mxu0 0.0
    %5264 = vmatpush1.msra.mxu0 0.0
    %5265 = vmatprep.subr.mxu0 0.0
    %5266 = vmatpush1.msra.mxu0 0.0
    %5267 = vmatprep.subr.mxu0 0.0
    %5268 = vmatpush1.msra.mxu0 0.0
    %5269 = vmatprep.subr.mxu0 0.0
    %5270 = vmatpush1.msra.mxu0 0.0
    %5271 = vmatprep.subr.mxu0 0.0
    %5272 = vmatpush1.msra.mxu0 0.0
    %5273 = vmatprep.subr.mxu0 0.0
    %5274 = vmatpush1.msra.mxu0 0.0
    %5275 = vmatprep.subr.mxu0 0.0
    %5276 = vmatpush1.msra.mxu0 0.0
    %5277 = vmatprep.subr.mxu0 0.0
    %5278 = vmatpush1.msra.mxu0 0.0
    %5279 = vmatprep.subr.mxu0 0.0
    %5280 = vmatpush1.msra.mxu0 0.0
    %5281 = vmatprep.subr.mxu0 0.0
    %5282 = vmatpush1.msra.mxu0 0.0
    %5283 = vmatprep.subr.mxu0 0.0
    %5284 = vmatpush1.msra.mxu0 0.0
    %5285 = vmatprep.subr.mxu0 0.0
    %5286 = vmatpush1.msra.mxu0 0.0
    %5287 = vmatprep.subr.mxu0 0.0
    %5288 = vmatpush1.msra.mxu0 0.0
    %5289 = vmatprep.subr.mxu0 0.0
    %5290 = vmatpush1.msra.mxu0 0.0
    %5291 = vmatprep.subr.mxu0 0.0
    %5292 = vmatpush1.msra.mxu0 0.0
    %5293 = vmatprep.subr.mxu0 0.0
    %5294 = vmatpush1.msra.mxu0 0.0
    %5295 = vmatprep.subr.mxu0 0.0
    %5296 = vmatpush1.msra.mxu0 0.0
    %5297 = vmatprep.mubr.f32.mxu0 0.0
    %5298 = vmatmul.mubr.f32.gmra.mrb[0].mxu0 %v5229
    %v5299 = vpop.f32.mrb[0].mxu0
    %v5300 = vadd.f32 0.0, %v5299
    %v5301 = vpop.f32.mrb[0].mxu0
    %5302 = vdwg.mxu0
    %5303 = vrot.lane.b32.xlu0 %v363, 118
    %v5304 = vpop.permute.xlu0 %5303
    %v5306 = vsel %vm202, %v4451, 0
    %v5308 = vsel %vm241, %v5304, 0
    %5310 = vmatprep.subr.mxu0 0.0
    %5311 = vmatpush1.msra.mxu0 %v5308
    %5312 = vmatprep.subr.mxu0 0.0
    %5313 = vmatpush1.msra.mxu0 0.0
    %5314 = vmatprep.subr.mxu0 0.0
    %5315 = vmatpush1.msra.mxu0 0.0
    %5316 = vmatprep.subr.mxu0 0.0
    %5317 = vmatpush1.msra.mxu0 0.0
    %5318 = vmatprep.subr.mxu0 0.0
    %5319 = vmatpush1.msra.mxu0 0.0
    %5320 = vmatprep.subr.mxu0 0.0
    %5321 = vmatpush1.msra.mxu0 0.0
    %5322 = vmatprep.subr.mxu0 0.0
    %5323 = vmatpush1.msra.mxu0 0.0
    %5324 = vmatprep.subr.mxu0 0.0
    %5325 = vmatpush1.msra.mxu0 0.0
    %5326 = vmatprep.subr.mxu0 0.0
    %5327 = vmatpush1.msra.mxu0 0.0
    %5328 = vmatprep.subr.mxu0 0.0
    %5329 = vmatpush1.msra.mxu0 0.0
    %5330 = vmatprep.subr.mxu0 0.0
    %5331 = vmatpush1.msra.mxu0 0.0
    %5332 = vmatprep.subr.mxu0 0.0
    %5333 = vmatpush1.msra.mxu0 0.0
    %5334 = vmatprep.subr.mxu0 0.0
    %5335 = vmatpush1.msra.mxu0 0.0
    %5336 = vmatprep.subr.mxu0 0.0
    %5337 = vmatpush1.msra.mxu0 0.0
    %5338 = vmatprep.subr.mxu0 0.0
    %5339 = vmatpush1.msra.mxu0 0.0
    %5340 = vmatprep.subr.mxu0 0.0
    %5341 = vmatpush1.msra.mxu0 0.0
    %5342 = vmatprep.subr.mxu0 0.0
    %5343 = vmatpush1.msra.mxu0 0.0
    %5344 = vmatprep.subr.mxu0 0.0
    %5345 = vmatpush1.msra.mxu0 0.0
    %5346 = vmatprep.subr.mxu0 0.0
    %5347 = vmatpush1.msra.mxu0 0.0
    %5348 = vmatprep.subr.mxu0 0.0
    %5349 = vmatpush1.msra.mxu0 0.0
    %5350 = vmatprep.subr.mxu0 0.0
    %5351 = vmatpush1.msra.mxu0 0.0
    %5352 = vmatprep.subr.mxu0 0.0
    %5353 = vmatpush1.msra.mxu0 0.0
    %5354 = vmatprep.subr.mxu0 0.0
    %5355 = vmatpush1.msra.mxu0 0.0
    %5356 = vmatprep.subr.mxu0 0.0
    %5357 = vmatpush1.msra.mxu0 0.0
    %5358 = vmatprep.subr.mxu0 0.0
    %5359 = vmatpush1.msra.mxu0 0.0
    %5360 = vmatprep.subr.mxu0 0.0
    %5361 = vmatpush1.msra.mxu0 0.0
    %5362 = vmatprep.subr.mxu0 0.0
    %5363 = vmatpush1.msra.mxu0 0.0
    %5364 = vmatprep.subr.mxu0 0.0
    %5365 = vmatpush1.msra.mxu0 0.0
    %5366 = vmatprep.subr.mxu0 0.0
    %5367 = vmatpush1.msra.mxu0 0.0
    %5368 = vmatprep.subr.mxu0 0.0
    %5369 = vmatpush1.msra.mxu0 0.0
    %5370 = vmatprep.subr.mxu0 0.0
    %5371 = vmatpush1.msra.mxu0 0.0
    %5372 = vmatprep.subr.mxu0 0.0
    %5373 = vmatpush1.msra.mxu0 0.0
    %5374 = vmatprep.mubr.f32.mxu0 0.0
    %5375 = vmatmul.mubr.f32.gmra.mrb[0].mxu0 %v5306
    %v5376 = vpop.f32.mrb[0].mxu0
    %v5377 = vadd.f32 0.0, %v5376
    %v5378 = vpop.f32.mrb[0].mxu0
    %5379 = vdwg.mxu0
    %5380 = vrot.lane.b32.xlu0 %v342, 118
    %v5381 = vpop.permute.xlu0 %5380
    %v5383 = vsel %vm202, %v4452, 0
    %v5385 = vsel %vm241, %v5381, 0
    %5387 = vmatprep.subr.mxu0 0.0
    %5388 = vmatpush1.msra.mxu0 %v5385
    %5389 = vmatprep.subr.mxu0 0.0
    %5390 = vmatpush1.msra.mxu0 0.0
    %5391 = vmatprep.subr.mxu0 0.0
    %5392 = vmatpush1.msra.mxu0 0.0
    %5393 = vmatprep.subr.mxu0 0.0
    %5394 = vmatpush1.msra.mxu0 0.0
    %5395 = vmatprep.subr.mxu0 0.0
    %5396 = vmatpush1.msra.mxu0 0.0
    %5397 = vmatprep.subr.mxu0 0.0
    %5398 = vmatpush1.msra.mxu0 0.0
    %5399 = vmatprep.subr.mxu0 0.0
    %5400 = vmatpush1.msra.mxu0 0.0
    %5401 = vmatprep.subr.mxu0 0.0
    %5402 = vmatpush1.msra.mxu0 0.0
    %5403 = vmatprep.subr.mxu0 0.0
    %5404 = vmatpush1.msra.mxu0 0.0
    %5405 = vmatprep.subr.mxu0 0.0
    %5406 = vmatpush1.msra.mxu0 0.0
    %5407 = vmatprep.subr.mxu0 0.0
    %5408 = vmatpush1.msra.mxu0 0.0
    %5409 = vmatprep.subr.mxu0 0.0
    %5410 = vmatpush1.msra.mxu0 0.0
    %5411 = vmatprep.subr.mxu0 0.0
    %5412 = vmatpush1.msra.mxu0 0.0
    %5413 = vmatprep.subr.mxu0 0.0
    %5414 = vmatpush1.msra.mxu0 0.0
    %5415 = vmatprep.subr.mxu0 0.0
    %5416 = vmatpush1.msra.mxu0 0.0
    %5417 = vmatprep.subr.mxu0 0.0
    %5418 = vmatpush1.msra.mxu0 0.0
    %5419 = vmatprep.subr.mxu0 0.0
    %5420 = vmatpush1.msra.mxu0 0.0
    %5421 = vmatprep.subr.mxu0 0.0
    %5422 = vmatpush1.msra.mxu0 0.0
    %5423 = vmatprep.subr.mxu0 0.0
    %5424 = vmatpush1.msra.mxu0 0.0
    %5425 = vmatprep.subr.mxu0 0.0
    %5426 = vmatpush1.msra.mxu0 0.0
    %5427 = vmatprep.subr.mxu0 0.0
    %5428 = vmatpush1.msra.mxu0 0.0
    %5429 = vmatprep.subr.mxu0 0.0
    %5430 = vmatpush1.msra.mxu0 0.0
    %5431 = vmatprep.subr.mxu0 0.0
    %5432 = vmatpush1.msra.mxu0 0.0
    %5433 = vmatprep.subr.mxu0 0.0
    %5434 = vmatpush1.msra.mxu0 0.0
    %5435 = vmatprep.subr.mxu0 0.0
    %5436 = vmatpush1.msra.mxu0 0.0
    %5437 = vmatprep.subr.mxu0 0.0
    %5438 = vmatpush1.msra.mxu0 0.0
    %5439 = vmatprep.subr.mxu0 0.0
    %5440 = vmatpush1.msra.mxu0 0.0
    %5441 = vmatprep.subr.mxu0 0.0
    %5442 = vmatpush1.msra.mxu0 0.0
    %5443 = vmatprep.subr.mxu0 0.0
    %5444 = vmatpush1.msra.mxu0 0.0
    %5445 = vmatprep.subr.mxu0 0.0
    %5446 = vmatpush1.msra.mxu0 0.0
    %5447 = vmatprep.subr.mxu0 0.0
    %5448 = vmatpush1.msra.mxu0 0.0
    %5449 = vmatprep.subr.mxu0 0.0
    %5450 = vmatpush1.msra.mxu0 0.0
    %5451 = vmatprep.mubr.f32.mxu0 0.0
    %5452 = vmatmul.mubr.f32.gmra.mrb[0].mxu0 %v5383
    %v5453 = vpop.f32.mrb[0].mxu0
    %v5454 = vadd.f32 0.0, %v5453
    %v5455 = vpop.f32.mrb[0].mxu0
    %5456 = vdwg.mxu0
    %5457 = vrot.lane.b32.xlu0 %v364, 118
    %v5458 = vpop.permute.xlu0 %5457
    %v5460 = vsel %vm202, %v4453, 0
    %v5462 = vsel %vm241, %v5458, 0
    %5464 = vmatprep.subr.mxu0 0.0
    %5465 = vmatpush1.msra.mxu0 %v5462
    %5466 = vmatprep.subr.mxu0 0.0
    %5467 = vmatpush1.msra.mxu0 0.0
    %5468 = vmatprep.subr.mxu0 0.0
    %5469 = vmatpush1.msra.mxu0 0.0
    %5470 = vmatprep.subr.mxu0 0.0
    %5471 = vmatpush1.msra.mxu0 0.0
    %5472 = vmatprep.subr.mxu0 0.0
    %5473 = vmatpush1.msra.mxu0 0.0
    %5474 = vmatprep.subr.mxu0 0.0
    %5475 = vmatpush1.msra.mxu0 0.0
    %5476 = vmatprep.subr.mxu0 0.0
    %5477 = vmatpush1.msra.mxu0 0.0
    %5478 = vmatprep.subr.mxu0 0.0
    %5479 = vmatpush1.msra.mxu0 0.0
    %5480 = vmatprep.subr.mxu0 0.0
    %5481 = vmatpush1.msra.mxu0 0.0
    %5482 = vmatprep.subr.mxu0 0.0
    %5483 = vmatpush1.msra.mxu0 0.0
    %5484 = vmatprep.subr.mxu0 0.0
    %5485 = vmatpush1.msra.mxu0 0.0
    %5486 = vmatprep.subr.mxu0 0.0
    %5487 = vmatpush1.msra.mxu0 0.0
    %5488 = vmatprep.subr.mxu0 0.0
    %5489 = vmatpush1.msra.mxu0 0.0
    %5490 = vmatprep.subr.mxu0 0.0
    %5491 = vmatpush1.msra.mxu0 0.0
    %5492 = vmatprep.subr.mxu0 0.0
    %5493 = vmatpush1.msra.mxu0 0.0
    %5494 = vmatprep.subr.mxu0 0.0
    %5495 = vmatpush1.msra.mxu0 0.0
    %5496 = vmatprep.subr.mxu0 0.0
    %5497 = vmatpush1.msra.mxu0 0.0
    %5498 = vmatprep.subr.mxu0 0.0
    %5499 = vmatpush1.msra.mxu0 0.0
    %5500 = vmatprep.subr.mxu0 0.0
    %5501 = vmatpush1.msra.mxu0 0.0
    %5502 = vmatprep.subr.mxu0 0.0
    %5503 = vmatpush1.msra.mxu0 0.0
    %5504 = vmatprep.subr.mxu0 0.0
    %5505 = vmatpush1.msra.mxu0 0.0
    %5506 = vmatprep.subr.mxu0 0.0
    %5507 = vmatpush1.msra.mxu0 0.0
    %5508 = vmatprep.subr.mxu0 0.0
    %5509 = vmatpush1.msra.mxu0 0.0
    %5510 = vmatprep.subr.mxu0 0.0
    %5511 = vmatpush1.msra.mxu0 0.0
    %5512 = vmatprep.subr.mxu0 0.0
    %5513 = vmatpush1.msra.mxu0 0.0
    %5514 = vmatprep.subr.mxu0 0.0
    %5515 = vmatpush1.msra.mxu0 0.0
    %5516 = vmatprep.subr.mxu0 0.0
    %5517 = vmatpush1.msra.mxu0 0.0
    %5518 = vmatprep.subr.mxu0 0.0
    %5519 = vmatpush1.msra.mxu0 0.0
    %5520 = vmatprep.subr.mxu0 0.0
    %5521 = vmatpush1.msra.mxu0 0.0
    %5522 = vmatprep.subr.mxu0 0.0
    %5523 = vmatpush1.msra.mxu0 0.0
    %5524 = vmatprep.subr.mxu0 0.0
    %5525 = vmatpush1.msra.mxu0 0.0
    %5526 = vmatprep.subr.mxu0 0.0
    %5527 = vmatpush1.msra.mxu0 0.0
    %5528 = vmatprep.mubr.f32.mxu0 0.0
    %5529 = vmatmul.mubr.f32.gmra.mrb[0].mxu0 %v5460
    %v5530 = vpop.f32.mrb[0].mxu0
    %v5531 = vadd.f32 0.0, %v5530
    %v5532 = vpop.f32.mrb[0].mxu0
    %5533 = vdwg.mxu0
    %5534 = vrot.lane.b32.xlu0 %v347, 118
    %v5535 = vpop.permute.xlu0 %5534
    %v5537 = vsel %vm202, %v4454, 0
    %v5539 = vsel %vm241, %v5535, 0
    %5541 = vmatprep.subr.mxu0 0.0
    %5542 = vmatpush1.msra.mxu0 %v5539
    %5543 = vmatprep.subr.mxu0 0.0
    %5544 = vmatpush1.msra.mxu0 0.0
    %5545 = vmatprep.subr.mxu0 0.0
    %5546 = vmatpush1.msra.mxu0 0.0
    %5547 = vmatprep.subr.mxu0 0.0
    %5548 = vmatpush1.msra.mxu0 0.0
    %5549 = vmatprep.subr.mxu0 0.0
    %5550 = vmatpush1.msra.mxu0 0.0
    %5551 = vmatprep.subr.mxu0 0.0
    %5552 = vmatpush1.msra.mxu0 0.0
    %5553 = vmatprep.subr.mxu0 0.0
    %5554 = vmatpush1.msra.mxu0 0.0
    %5555 = vmatprep.subr.mxu0 0.0
    %5556 = vmatpush1.msra.mxu0 0.0
    %5557 = vmatprep.subr.mxu0 0.0
    %5558 = vmatpush1.msra.mxu0 0.0
    %5559 = vmatprep.subr.mxu0 0.0
    %5560 = vmatpush1.msra.mxu0 0.0
    %5561 = vmatprep.subr.mxu0 0.0
    %5562 = vmatpush1.msra.mxu0 0.0
    %5563 = vmatprep.subr.mxu0 0.0
    %5564 = vmatpush1.msra.mxu0 0.0
    %5565 = vmatprep.subr.mxu0 0.0
    %5566 = vmatpush1.msra.mxu0 0.0
    %5567 = vmatprep.subr.mxu0 0.0
    %5568 = vmatpush1.msra.mxu0 0.0
    %5569 = vmatprep.subr.mxu0 0.0
    %5570 = vmatpush1.msra.mxu0 0.0
    %5571 = vmatprep.subr.mxu0 0.0
    %5572 = vmatpush1.msra.mxu0 0.0
    %5573 = vmatprep.subr.mxu0 0.0
    %5574 = vmatpush1.msra.mxu0 0.0
    %5575 = vmatprep.subr.mxu0 0.0
    %5576 = vmatpush1.msra.mxu0 0.0
    %5577 = vmatprep.subr.mxu0 0.0
    %5578 = vmatpush1.msra.mxu0 0.0
    %5579 = vmatprep.subr.mxu0 0.0
    %5580 = vmatpush1.msra.mxu0 0.0
    %5581 = vmatprep.subr.mxu0 0.0
    %5582 = vmatpush1.msra.mxu0 0.0
    %5583 = vmatprep.subr.mxu0 0.0
    %5584 = vmatpush1.msra.mxu0 0.0
    %5585 = vmatprep.subr.mxu0 0.0
    %5586 = vmatpush1.msra.mxu0 0.0
    %5587 = vmatprep.subr.mxu0 0.0
    %5588 = vmatpush1.msra.mxu0 0.0
    %5589 = vmatprep.subr.mxu0 0.0
    %5590 = vmatpush1.msra.mxu0 0.0
    %5591 = vmatprep.subr.mxu0 0.0
    %5592 = vmatpush1.msra.mxu0 0.0
    %5593 = vmatprep.subr.mxu0 0.0
    %5594 = vmatpush1.msra.mxu0 0.0
    %5595 = vmatprep.subr.mxu0 0.0
    %5596 = vmatpush1.msra.mxu0 0.0
    %5597 = vmatprep.subr.mxu0 0.0
    %5598 = vmatpush1.msra.mxu0 0.0
    %5599 = vmatprep.subr.mxu0 0.0
    %5600 = vmatpush1.msra.mxu0 0.0
    %5601 = vmatprep.subr.mxu0 0.0
    %5602 = vmatpush1.msra.mxu0 0.0
    %5603 = vmatprep.subr.mxu0 0.0
    %5604 = vmatpush1.msra.mxu0 0.0
    %5605 = vmatprep.mubr.f32.mxu0 0.0
    %5606 = vmatmul.mubr.f32.gmra.mrb[0].mxu0 %v5537
    %v5607 = vpop.f32.mrb[0].mxu0
    %v5608 = vadd.f32 0.0, %v5607
    %v5609 = vpop.f32.mrb[0].mxu0
    %5610 = vdwg.mxu0
    %5611 = vrot.lane.b32.xlu0 %v365, 118
    %v5612 = vpop.permute.xlu0 %5611
    %v5614 = vsel %vm202, %v4455, 0
    %v5616 = vsel %vm241, %v5612, 0
    %5618 = vmatprep.subr.mxu0 0.0
    %5619 = vmatpush1.msra.mxu0 %v5616
    %5620 = vmatprep.subr.mxu0 0.0
    %5621 = vmatpush1.msra.mxu0 0.0
    %5622 = vmatprep.subr.mxu0 0.0
    %5623 = vmatpush1.msra.mxu0 0.0
    %5624 = vmatprep.subr.mxu0 0.0
    %5625 = vmatpush1.msra.mxu0 0.0
    %5626 = vmatprep.subr.mxu0 0.0
    %5627 = vmatpush1.msra.mxu0 0.0
    %5628 = vmatprep.subr.mxu0 0.0
    %5629 = vmatpush1.msra.mxu0 0.0
    %5630 = vmatprep.subr.mxu0 0.0
    %5631 = vmatpush1.msra.mxu0 0.0
    %5632 = vmatprep.subr.mxu0 0.0
    %5633 = vmatpush1.msra.mxu0 0.0
    %5634 = vmatprep.subr.mxu0 0.0
    %5635 = vmatpush1.msra.mxu0 0.0
    %5636 = vmatprep.subr.mxu0 0.0
    %5637 = vmatpush1.msra.mxu0 0.0
    %5638 = vmatprep.subr.mxu0 0.0
    %5639 = vmatpush1.msra.mxu0 0.0
    %5640 = vmatprep.subr.mxu0 0.0
    %5641 = vmatpush1.msra.mxu0 0.0
    %5642 = vmatprep.subr.mxu0 0.0
    %5643 = vmatpush1.msra.mxu0 0.0
    %5644 = vmatprep.subr.mxu0 0.0
    %5645 = vmatpush1.msra.mxu0 0.0
    %5646 = vmatprep.subr.mxu0 0.0
    %5647 = vmatpush1.msra.mxu0 0.0
    %5648 = vmatprep.subr.mxu0 0.0
    %5649 = vmatpush1.msra.mxu0 0.0
    %5650 = vmatprep.subr.mxu0 0.0
    %5651 = vmatpush1.msra.mxu0 0.0
    %5652 = vmatprep.subr.mxu0 0.0
    %5653 = vmatpush1.msra.mxu0 0.0
    %5654 = vmatprep.subr.mxu0 0.0
    %5655 = vmatpush1.msra.mxu0 0.0
    %5656 = vmatprep.subr.mxu0 0.0
    %5657 = vmatpush1.msra.mxu0 0.0
    %5658 = vmatprep.subr.mxu0 0.0
    %5659 = vmatpush1.msra.mxu0 0.0
    %5660 = vmatprep.subr.mxu0 0.0
    %5661 = vmatpush1.msra.mxu0 0.0
    %5662 = vmatprep.subr.mxu0 0.0
    %5663 = vmatpush1.msra.mxu0 0.0
    %5664 = vmatprep.subr.mxu0 0.0
    %5665 = vmatpush1.msra.mxu0 0.0
    %5666 = vmatprep.subr.mxu0 0.0
    %5667 = vmatpush1.msra.mxu0 0.0
    %5668 = vmatprep.subr.mxu0 0.0
    %5669 = vmatpush1.msra.mxu0 0.0
    %5670 = vmatprep.subr.mxu0 0.0
    %5671 = vmatpush1.msra.mxu0 0.0
    %5672 = vmatprep.subr.mxu0 0.0
    %5673 = vmatpush1.msra.mxu0 0.0
    %5674 = vmatprep.subr.mxu0 0.0
    %5675 = vmatpush1.msra.mxu0 0.0
    %5676 = vmatprep.subr.mxu0 0.0
    %5677 = vmatpush1.msra.mxu0 0.0
    %5678 = vmatprep.subr.mxu0 0.0
    %5679 = vmatpush1.msra.mxu0 0.0
    %5680 = vmatprep.subr.mxu0 0.0
    %5681 = vmatpush1.msra.mxu0 0.0
    %5682 = vmatprep.mubr.f32.mxu0 0.0
    %5683 = vmatmul.mubr.f32.gmra.mrb[0].mxu0 %v5614
    %v5684 = vpop.f32.mrb[0].mxu0
    %v5685 = vadd.f32 0.0, %v5684
    %v5686 = vpop.f32.mrb[0].mxu0
    %5687 = vdwg.mxu0
    %5704 = vrot.lane.b32.xlu0 %v4530, 2
    %v5705 = vpop.permute.xlu0 %5704
    %5706 = vrot.lane.b32.xlu0 %v4607, 2
    %v5707 = vpop.permute.xlu0 %5706
    %5708 = vrot.lane.b32.xlu0 %v4684, 2
    %v5709 = vpop.permute.xlu0 %5708
    %5710 = vrot.lane.b32.xlu0 %v4761, 2
    %v5711 = vpop.permute.xlu0 %5710
    %5712 = vrot.lane.b32.xlu0 %v4838, 2
    %v5713 = vpop.permute.xlu0 %5712
    %5714 = vrot.lane.b32.xlu0 %v4915, 2
    %v5715 = vpop.permute.xlu0 %5714
    %5716 = vrot.lane.b32.xlu0 %v4992, 2
    %v5717 = vpop.permute.xlu0 %5716
    %5718 = vrot.lane.b32.xlu0 %v5069, 2
    %v5719 = vpop.permute.xlu0 %5718
    %5720 = vrot.lane.b32.xlu0 %v5146, 2
    %v5721 = vpop.permute.xlu0 %5720
    %5722 = vrot.lane.b32.xlu0 %v5223, 2
    %v5723 = vpop.permute.xlu0 %5722
    %5724 = vrot.lane.b32.xlu0 %v5300, 2
    %v5725 = vpop.permute.xlu0 %5724
    %5726 = vrot.lane.b32.xlu0 %v5377, 2
    %v5727 = vpop.permute.xlu0 %5726
    %5728 = vrot.lane.b32.xlu0 %v5454, 2
    %v5729 = vpop.permute.xlu0 %5728
    %5730 = vrot.lane.b32.xlu0 %v5531, 2
    %v5731 = vpop.permute.xlu0 %5730
    %5732 = vrot.lane.b32.xlu0 %v5608, 2
    %v5733 = vpop.permute.xlu0 %5732
    %5734 = vrot.lane.b32.xlu0 %v5685, 2
    %v5735 = vpop.permute.xlu0 %5734
    %v5752 = vsel %vm392, %v1874, %v5705
    %v5753 = vsel %vm392, %v1951, %v5707
    %v5754 = vsel %vm392, %v2028, %v5709
    %v5755 = vsel %vm392, %v2105, %v5711
    %v5756 = vsel %vm392, %v2182, %v5713
    %v5757 = vsel %vm392, %v2259, %v5715
    %v5758 = vsel %vm392, %v2336, %v5717
    %v5759 = vsel %vm392, %v2413, %v5719
    %v5760 = vsel %vm392, %v2490, %v5721
    %v5761 = vsel %vm392, %v2567, %v5723
    %v5762 = vsel %vm392, %v2644, %v5725
    %v5763 = vsel %vm392, %v2721, %v5727
    %v5764 = vsel %vm392, %v2798, %v5729
    %v5765 = vsel %vm392, %v2875, %v5731
    %v5766 = vsel %vm392, %v2952, %v5733
    %v5767 = vsel %vm392, %v3029, %v5735
    %v5784 = vcombine.low %v5752, %v5753
    %v5785 = vcombine.low %v5754, %v5755
    %v5786 = vcombine.low %v5756, %v5757
    %v5787 = vcombine.low %v5758, %v5759
    %v5788 = vcombine.low %v5760, %v5761
    %v5789 = vcombine.low %v5762, %v5763
    %v5790 = vcombine.low %v5764, %v5765
    %v5791 = vcombine.low %v5766, %v5767
    %5792 = vrot.lane.b32.xlu0 %v21, 116
    %v5793 = vpop.permute.xlu0 %5792
    %5794 = vrot.lane.b32.xlu0 %v215, 116
    %v5795 = vpop.permute.xlu0 %5794
    %v5797 = vsel %vm202, %v5784, 0
    %v5799 = vsel %vm202, %v5785, 0
    %v5801 = vsel %vm202, %v5786, 0
    %v5803 = vsel %vm202, %v5787, 0
    %v5805 = vsel %vm202, %v5788, 0
    %v5807 = vsel %vm202, %v5789, 0
    %v5809 = vsel %vm202, %v5790, 0
    %v5811 = vsel %vm202, %v5791, 0
    %v5813 = vsel %vm241, %v5793, 0
    %5815 = vmatprep.subr.mxu0 0.0
    %5816 = vmatpush1.msra.mxu0 %v5813
    %5817 = vmatprep.subr.mxu0 0.0
    %5818 = vmatpush1.msra.mxu0 0.0
    %5819 = vmatprep.subr.mxu0 0.0
    %5820 = vmatpush1.msra.mxu0 0.0
    %5821 = vmatprep.subr.mxu0 0.0
    %5822 = vmatpush1.msra.mxu0 0.0
    %5823 = vmatprep.subr.mxu0 0.0
    %5824 = vmatpush1.msra.mxu0 0.0
    %5825 = vmatprep.subr.mxu0 0.0
    %5826 = vmatpush1.msra.mxu0 0.0
    %5827 = vmatprep.subr.mxu0 0.0
    %5828 = vmatpush1.msra.mxu0 0.0
    %5829 = vmatprep.subr.mxu0 0.0
    %5830 = vmatpush1.msra.mxu0 0.0
    %5831 = vmatprep.subr.mxu0 0.0
    %5832 = vmatpush1.msra.mxu0 0.0
    %5833 = vmatprep.subr.mxu0 0.0
    %5834 = vmatpush1.msra.mxu0 0.0
    %5835 = vmatprep.subr.mxu0 0.0
    %5836 = vmatpush1.msra.mxu0 0.0
    %5837 = vmatprep.subr.mxu0 0.0
    %5838 = vmatpush1.msra.mxu0 0.0
    %5839 = vmatprep.subr.mxu0 0.0
    %5840 = vmatpush1.msra.mxu0 0.0
    %5841 = vmatprep.subr.mxu0 0.0
    %5842 = vmatpush1.msra.mxu0 0.0
    %5843 = vmatprep.subr.mxu0 0.0
    %5844 = vmatpush1.msra.mxu0 0.0
    %5845 = vmatprep.subr.mxu0 0.0
    %5846 = vmatpush1.msra.mxu0 0.0
    %5847 = vmatprep.subr.mxu0 0.0
    %5848 = vmatpush1.msra.mxu0 0.0
    %5849 = vmatprep.subr.mxu0 0.0
    %5850 = vmatpush1.msra.mxu0 0.0
    %5851 = vmatprep.subr.mxu0 0.0
    %5852 = vmatpush1.msra.mxu0 0.0
    %5853 = vmatprep.subr.mxu0 0.0
    %5854 = vmatpush1.msra.mxu0 0.0
    %5855 = vmatprep.subr.mxu0 0.0
    %5856 = vmatpush1.msra.mxu0 0.0
    %5857 = vmatprep.subr.mxu0 0.0
    %5858 = vmatpush1.msra.mxu0 0.0
    %5859 = vmatprep.subr.mxu0 0.0
    %5860 = vmatpush1.msra.mxu0 0.0
    %5861 = vmatprep.subr.mxu0 0.0
    %5862 = vmatpush1.msra.mxu0 0.0
    %5863 = vmatprep.subr.mxu0 0.0
    %5864 = vmatpush1.msra.mxu0 0.0
    %5865 = vmatprep.subr.mxu0 0.0
    %5866 = vmatpush1.msra.mxu0 0.0
    %5867 = vmatprep.subr.mxu0 0.0
    %5868 = vmatpush1.msra.mxu0 0.0
    %5869 = vmatprep.subr.mxu0 0.0
    %5870 = vmatpush1.msra.mxu0 0.0
    %5871 = vmatprep.subr.mxu0 0.0
    %5872 = vmatpush1.msra.mxu0 0.0
    %5873 = vmatprep.subr.mxu0 0.0
    %5874 = vmatpush1.msra.mxu0 0.0
    %5875 = vmatprep.subr.mxu0 0.0
    %5876 = vmatpush1.msra.mxu0 0.0
    %5877 = vmatprep.subr.mxu0 0.0
    %5878 = vmatpush1.msra.mxu0 0.0
    %5879 = vmatprep.mubr.f32.mxu0 0.0
    %5880 = vmatmul.mubr.f32.gmra.mrb[0].mxu0 %v5797
    %v5881 = vpop.f32.mrb[0].mxu0
    %v5882 = vadd.f32 %v5795, %v5881
    %v5883 = vpop.f32.mrb[0].mxu0
    %5884 = vmatprep.mubr.f32.mxu0 0.0
    %5885 = vmatmul.mubr.f32.gmra.mrb[0].mxu0 %v5799
    %v5886 = vpop.f32.mrb[0].mxu0
    %v5887 = vadd.f32 %v5795, %v5886
    %v5888 = vpop.f32.mrb[0].mxu0
    %5889 = vmatprep.mubr.f32.mxu0 0.0
    %5890 = vmatmul.mubr.f32.gmra.mrb[0].mxu0 %v5801
    %v5891 = vpop.f32.mrb[0].mxu0
    %v5892 = vadd.f32 %v5795, %v5891
    %v5893 = vpop.f32.mrb[0].mxu0
    %5894 = vmatprep.mubr.f32.mxu0 0.0
    %5895 = vmatmul.mubr.f32.gmra.mrb[0].mxu0 %v5803
    %v5896 = vpop.f32.mrb[0].mxu0
    %v5897 = vadd.f32 %v5795, %v5896
    %v5898 = vpop.f32.mrb[0].mxu0
    %5899 = vmatprep.mubr.f32.mxu0 0.0
    %5900 = vmatmul.mubr.f32.gmra.mrb[0].mxu0 %v5805
    %v5901 = vpop.f32.mrb[0].mxu0
    %v5902 = vadd.f32 %v5795, %v5901
    %v5903 = vpop.f32.mrb[0].mxu0
    %5904 = vmatprep.mubr.f32.mxu0 0.0
    %5905 = vmatmul.mubr.f32.gmra.mrb[0].mxu0 %v5807
    %v5906 = vpop.f32.mrb[0].mxu0
    %v5907 = vadd.f32 %v5795, %v5906
    %v5908 = vpop.f32.mrb[0].mxu0
    %5909 = vmatprep.mubr.f32.mxu0 0.0
    %5910 = vmatmul.mubr.f32.gmra.mrb[0].mxu0 %v5809
    %v5911 = vpop.f32.mrb[0].mxu0
    %v5912 = vadd.f32 %v5795, %v5911
    %v5913 = vpop.f32.mrb[0].mxu0
    %5914 = vmatprep.mubr.f32.mxu0 0.0
    %5915 = vmatmul.mubr.f32.gmra.mrb[0].mxu0 %v5811
    %v5916 = vpop.f32.mrb[0].mxu0
    %v5917 = vadd.f32 %v5795, %v5916
    %v5918 = vpop.f32.mrb[0].mxu0
    %5919 = vdwg.mxu0
    %v5928 = vcombine.high %v5882, %v5882
    %v5929 = vcombine.high %v5887, %v5887
    %v5930 = vcombine.high %v5892, %v5892
    %v5931 = vcombine.high %v5897, %v5897
    %v5932 = vcombine.high %v5902, %v5902
    %v5933 = vcombine.high %v5907, %v5907
    %v5934 = vcombine.high %v5912, %v5912
    %v5935 = vcombine.high %v5917, %v5917
    %v5936 = vlaneseq
    %v5937 = vshrl.u32 %v5936, 7
    %v5938 = vsub.s32 0, %v5937
    %v5939 = vrot.slane %v5882, %v5938
    %v5940 = vlaneseq
    %v5941 = vshrl.u32 %v5940, 7
    %v5942 = vsub.s32 0, %v5941
    %v5943 = vrot.slane %v5928, %v5942
    %v5944 = vlaneseq
    %v5945 = vshrl.u32 %v5944, 7
    %v5946 = vsub.s32 0, %v5945
    %v5947 = vrot.slane %v5887, %v5946
    %v5948 = vlaneseq
    %v5949 = vshrl.u32 %v5948, 7
    %v5950 = vsub.s32 0, %v5949
    %v5951 = vrot.slane %v5929, %v5950
    %v5952 = vlaneseq
    %v5953 = vshrl.u32 %v5952, 7
    %v5954 = vsub.s32 0, %v5953
    %v5955 = vrot.slane %v5892, %v5954
    %v5956 = vlaneseq
    %v5957 = vshrl.u32 %v5956, 7
    %v5958 = vsub.s32 0, %v5957
    %v5959 = vrot.slane %v5930, %v5958
    %v5960 = vlaneseq
    %v5961 = vshrl.u32 %v5960, 7
    %v5962 = vsub.s32 0, %v5961
    %v5963 = vrot.slane %v5897, %v5962
    %v5964 = vlaneseq
    %v5965 = vshrl.u32 %v5964, 7
    %v5966 = vsub.s32 0, %v5965
    %v5967 = vrot.slane %v5931, %v5966
    %v5968 = vlaneseq
    %v5969 = vshrl.u32 %v5968, 7
    %v5970 = vsub.s32 0, %v5969
    %v5971 = vrot.slane %v5902, %v5970
    %v5972 = vlaneseq
    %v5973 = vshrl.u32 %v5972, 7
    %v5974 = vsub.s32 0, %v5973
    %v5975 = vrot.slane %v5932, %v5974
    %v5976 = vlaneseq
    %v5977 = vshrl.u32 %v5976, 7
    %v5978 = vsub.s32 0, %v5977
    %v5979 = vrot.slane %v5907, %v5978
    %v5980 = vlaneseq
    %v5981 = vshrl.u32 %v5980, 7
    %v5982 = vsub.s32 0, %v5981
    %v5983 = vrot.slane %v5933, %v5982
    %v5984 = vlaneseq
    %v5985 = vshrl.u32 %v5984, 7
    %v5986 = vsub.s32 0, %v5985
    %v5987 = vrot.slane %v5912, %v5986
    %v5988 = vlaneseq
    %v5989 = vshrl.u32 %v5988, 7
    %v5990 = vsub.s32 0, %v5989
    %v5991 = vrot.slane %v5934, %v5990
    %v5992 = vlaneseq
    %v5993 = vshrl.u32 %v5992, 7
    %v5994 = vsub.s32 0, %v5993
    %v5995 = vrot.slane %v5917, %v5994
    %v5996 = vlaneseq
    %v5997 = vshrl.u32 %v5996, 7
    %v5998 = vsub.s32 0, %v5997
    %v5999 = vrot.slane %v5935, %v5998
    %v6000 = vsel %vm64, %v5943, %v5939
    %v6001 = vsel %vm67, %v5947, %v6000
    %v6002 = vsel %vm70, %v5951, %v6001
    %v6003 = vsel %vm73, %v5955, %v6002
    %v6004 = vsel %vm76, %v5959, %v6003
    %v6005 = vsel %vm79, %v5963, %v6004
    %v6006 = vsel %vm82, %v5967, %v6005
    %v6007 = vsel %vm64, %v5975, %v5971
    %v6008 = vsel %vm67, %v5979, %v6007
    %v6009 = vsel %vm70, %v5983, %v6008
    %v6010 = vsel %vm73, %v5987, %v6009
    %v6011 = vsel %vm76, %v5991, %v6010
    %v6012 = vsel %vm79, %v5995, %v6011
    %v6013 = vsel %vm82, %v5999, %v6012
    %v6016 = vlaneseq
    %v6017 = vshrl.u32 %v6016, 7
    %v6018 = vsub.s32 1, %v6017
    %v6019 = vrot.slane %v5882, %v6018
    %v6020 = vlaneseq
    %v6021 = vshrl.u32 %v6020, 7
    %v6022 = vsub.s32 1, %v6021
    %v6023 = vrot.slane %v5928, %v6022
    %v6024 = vlaneseq
    %v6025 = vshrl.u32 %v6024, 7
    %v6026 = vsub.s32 1, %v6025
    %v6027 = vrot.slane %v5887, %v6026
    %v6028 = vlaneseq
    %v6029 = vshrl.u32 %v6028, 7
    %v6030 = vsub.s32 1, %v6029
    %v6031 = vrot.slane %v5929, %v6030
    %v6032 = vlaneseq
    %v6033 = vshrl.u32 %v6032, 7
    %v6034 = vsub.s32 1, %v6033
    %v6035 = vrot.slane %v5892, %v6034
    %v6036 = vlaneseq
    %v6037 = vshrl.u32 %v6036, 7
    %v6038 = vsub.s32 1, %v6037
    %v6039 = vrot.slane %v5930, %v6038
    %v6040 = vlaneseq
    %v6041 = vshrl.u32 %v6040, 7
    %v6042 = vsub.s32 1, %v6041
    %v6043 = vrot.slane %v5897, %v6042
    %v6044 = vlaneseq
    %v6045 = vshrl.u32 %v6044, 7
    %v6046 = vsub.s32 1, %v6045
    %v6047 = vrot.slane %v5931, %v6046
    %v6048 = vlaneseq
    %v6049 = vshrl.u32 %v6048, 7
    %v6050 = vsub.s32 1, %v6049
    %v6051 = vrot.slane %v5902, %v6050
    %v6052 = vlaneseq
    %v6053 = vshrl.u32 %v6052, 7
    %v6054 = vsub.s32 1, %v6053
    %v6055 = vrot.slane %v5932, %v6054
    %v6056 = vlaneseq
    %v6057 = vshrl.u32 %v6056, 7
    %v6058 = vsub.s32 1, %v6057
    %v6059 = vrot.slane %v5907, %v6058
    %v6060 = vlaneseq
    %v6061 = vshrl.u32 %v6060, 7
    %v6062 = vsub.s32 1, %v6061
    %v6063 = vrot.slane %v5933, %v6062
    %v6064 = vlaneseq
    %v6065 = vshrl.u32 %v6064, 7
    %v6066 = vsub.s32 1, %v6065
    %v6067 = vrot.slane %v5912, %v6066
    %v6068 = vlaneseq
    %v6069 = vshrl.u32 %v6068, 7
    %v6070 = vsub.s32 1, %v6069
    %v6071 = vrot.slane %v5934, %v6070
    %v6072 = vlaneseq
    %v6073 = vshrl.u32 %v6072, 7
    %v6074 = vsub.s32 1, %v6073
    %v6075 = vrot.slane %v5917, %v6074
    %v6076 = vlaneseq
    %v6077 = vshrl.u32 %v6076, 7
    %v6078 = vsub.s32 1, %v6077
    %v6079 = vrot.slane %v5935, %v6078
    %v6080 = vsel %vm64, %v6023, %v6019
    %v6081 = vsel %vm67, %v6027, %v6080
    %v6082 = vsel %vm70, %v6031, %v6081
    %v6083 = vsel %vm73, %v6035, %v6082
    %v6084 = vsel %vm76, %v6039, %v6083
    %v6085 = vsel %vm79, %v6043, %v6084
    %v6086 = vsel %vm82, %v6047, %v6085
    %v6087 = vsel %vm64, %v6055, %v6051
    %v6088 = vsel %vm67, %v6059, %v6087
    %v6089 = vsel %vm70, %v6063, %v6088
    %v6090 = vsel %vm73, %v6067, %v6089
    %v6091 = vsel %vm76, %v6071, %v6090
    %v6092 = vsel %vm79, %v6075, %v6091
    %v6093 = vsel %vm82, %v6079, %v6092
    %6094 = vrot.lane.b32.xlu0 %v6086, 4
    %v6095 = vpop.permute.xlu0 %6094
    %6096 = vrot.lane.b32.xlu0 %v6093, 4
    %v6097 = vpop.permute.xlu0 %6096
    %v6100 = vlaneseq
    %v6101 = vshrl.u32 %v6100, 7
    %v6102 = vsub.s32 2, %v6101
    %v6103 = vrot.slane %v5882, %v6102
    %v6104 = vlaneseq
    %v6105 = vshrl.u32 %v6104, 7
    %v6106 = vsub.s32 2, %v6105
    %v6107 = vrot.slane %v5928, %v6106
    %v6108 = vlaneseq
    %v6109 = vshrl.u32 %v6108, 7
    %v6110 = vsub.s32 2, %v6109
    %v6111 = vrot.slane %v5887, %v6110
    %v6112 = vlaneseq
    %v6113 = vshrl.u32 %v6112, 7
    %v6114 = vsub.s32 2, %v6113
    %v6115 = vrot.slane %v5929, %v6114
    %v6116 = vlaneseq
    %v6117 = vshrl.u32 %v6116, 7
    %v6118 = vsub.s32 2, %v6117
    %v6119 = vrot.slane %v5892, %v6118
    %v6120 = vlaneseq
    %v6121 = vshrl.u32 %v6120, 7
    %v6122 = vsub.s32 2, %v6121
    %v6123 = vrot.slane %v5930, %v6122
    %v6124 = vlaneseq
    %v6125 = vshrl.u32 %v6124, 7
    %v6126 = vsub.s32 2, %v6125
    %v6127 = vrot.slane %v5897, %v6126
    %v6128 = vlaneseq
    %v6129 = vshrl.u32 %v6128, 7
    %v6130 = vsub.s32 2, %v6129
    %v6131 = vrot.slane %v5931, %v6130
    %v6132 = vlaneseq
    %v6133 = vshrl.u32 %v6132, 7
    %v6134 = vsub.s32 2, %v6133
    %v6135 = vrot.slane %v5902, %v6134
    %v6136 = vlaneseq
    %v6137 = vshrl.u32 %v6136, 7
    %v6138 = vsub.s32 2, %v6137
    %v6139 = vrot.slane %v5932, %v6138
    %v6140 = vlaneseq
    %v6141 = vshrl.u32 %v6140, 7
    %v6142 = vsub.s32 2, %v6141
    %v6143 = vrot.slane %v5907, %v6142
    %v6144 = vlaneseq
    %v6145 = vshrl.u32 %v6144, 7
    %v6146 = vsub.s32 2, %v6145
    %v6147 = vrot.slane %v5933, %v6146
    %v6148 = vlaneseq
    %v6149 = vshrl.u32 %v6148, 7
    %v6150 = vsub.s32 2, %v6149
    %v6151 = vrot.slane %v5912, %v6150
    %v6152 = vlaneseq
    %v6153 = vshrl.u32 %v6152, 7
    %v6154 = vsub.s32 2, %v6153
    %v6155 = vrot.slane %v5934, %v6154
    %v6156 = vlaneseq
    %v6157 = vshrl.u32 %v6156, 7
    %v6158 = vsub.s32 2, %v6157
    %v6159 = vrot.slane %v5917, %v6158
    %v6160 = vlaneseq
    %v6161 = vshrl.u32 %v6160, 7
    %v6162 = vsub.s32 2, %v6161
    %v6163 = vrot.slane %v5935, %v6162
    %v6164 = vsel %vm64, %v6107, %v6103
    %v6165 = vsel %vm67, %v6111, %v6164
    %v6166 = vsel %vm70, %v6115, %v6165
    %v6167 = vsel %vm73, %v6119, %v6166
    %v6168 = vsel %vm76, %v6123, %v6167
    %v6169 = vsel %vm79, %v6127, %v6168
    %v6170 = vsel %vm82, %v6131, %v6169
    %v6171 = vsel %vm64, %v6139, %v6135
    %v6172 = vsel %vm67, %v6143, %v6171
    %v6173 = vsel %vm70, %v6147, %v6172
    %v6174 = vsel %vm73, %v6151, %v6173
    %v6175 = vsel %vm76, %v6155, %v6174
    %v6176 = vsel %vm79, %v6159, %v6175
    %v6177 = vsel %vm82, %v6163, %v6176
    %6178 = vrot.lane.b32.xlu0 %v6170, 8
    %v6179 = vpop.permute.xlu0 %6178
    %6180 = vrot.lane.b32.xlu0 %v6177, 8
    %v6181 = vpop.permute.xlu0 %6180
    %v6184 = vlaneseq
    %v6185 = vshrl.u32 %v6184, 7
    %v6186 = vsub.s32 3, %v6185
    %v6187 = vrot.slane %v5882, %v6186
    %v6188 = vlaneseq
    %v6189 = vshrl.u32 %v6188, 7
    %v6190 = vsub.s32 3, %v6189
    %v6191 = vrot.slane %v5928, %v6190
    %v6192 = vlaneseq
    %v6193 = vshrl.u32 %v6192, 7
    %v6194 = vsub.s32 3, %v6193
    %v6195 = vrot.slane %v5887, %v6194
    %v6196 = vlaneseq
    %v6197 = vshrl.u32 %v6196, 7
    %v6198 = vsub.s32 3, %v6197
    %v6199 = vrot.slane %v5929, %v6198
    %v6200 = vlaneseq
    %v6201 = vshrl.u32 %v6200, 7
    %v6202 = vsub.s32 3, %v6201
    %v6203 = vrot.slane %v5892, %v6202
    %v6204 = vlaneseq
    %v6205 = vshrl.u32 %v6204, 7
    %v6206 = vsub.s32 3, %v6205
    %v6207 = vrot.slane %v5930, %v6206
    %v6208 = vlaneseq
    %v6209 = vshrl.u32 %v6208, 7
    %v6210 = vsub.s32 3, %v6209
    %v6211 = vrot.slane %v5897, %v6210
    %v6212 = vlaneseq
    %v6213 = vshrl.u32 %v6212, 7
    %v6214 = vsub.s32 3, %v6213
    %v6215 = vrot.slane %v5931, %v6214
    %v6216 = vlaneseq
    %v6217 = vshrl.u32 %v6216, 7
    %v6218 = vsub.s32 3, %v6217
    %v6219 = vrot.slane %v5902, %v6218
    %v6220 = vlaneseq
    %v6221 = vshrl.u32 %v6220, 7
    %v6222 = vsub.s32 3, %v6221
    %v6223 = vrot.slane %v5932, %v6222
    %v6224 = vlaneseq
    %v6225 = vshrl.u32 %v6224, 7
    %v6226 = vsub.s32 3, %v6225
    %v6227 = vrot.slane %v5907, %v6226
    %v6228 = vlaneseq
    %v6229 = vshrl.u32 %v6228, 7
    %v6230 = vsub.s32 3, %v6229
    %v6231 = vrot.slane %v5933, %v6230
    %v6232 = vlaneseq
    %v6233 = vshrl.u32 %v6232, 7
    %v6234 = vsub.s32 3, %v6233
    %v6235 = vrot.slane %v5912, %v6234
    %v6236 = vlaneseq
    %v6237 = vshrl.u32 %v6236, 7
    %v6238 = vsub.s32 3, %v6237
    %v6239 = vrot.slane %v5934, %v6238
    %v6240 = vlaneseq
    %v6241 = vshrl.u32 %v6240, 7
    %v6242 = vsub.s32 3, %v6241
    %v6243 = vrot.slane %v5917, %v6242
    %v6244 = vlaneseq
    %v6245 = vshrl.u32 %v6244, 7
    %v6246 = vsub.s32 3, %v6245
    %v6247 = vrot.slane %v5935, %v6246
    %v6248 = vsel %vm64, %v6191, %v6187
    %v6249 = vsel %vm67, %v6195, %v6248
    %v6250 = vsel %vm70, %v6199, %v6249
    %v6251 = vsel %vm73, %v6203, %v6250
    %v6252 = vsel %vm76, %v6207, %v6251
    %v6253 = vsel %vm79, %v6211, %v6252
    %v6254 = vsel %vm82, %v6215, %v6253
    %v6255 = vsel %vm64, %v6223, %v6219
    %v6256 = vsel %vm67, %v6227, %v6255
    %v6257 = vsel %vm70, %v6231, %v6256
    %v6258 = vsel %vm73, %v6235, %v6257
    %v6259 = vsel %vm76, %v6239, %v6258
    %v6260 = vsel %vm79, %v6243, %v6259
    %v6261 = vsel %vm82, %v6247, %v6260
    %6262 = vrot.lane.b32.xlu0 %v6254, 12
    %v6263 = vpop.permute.xlu0 %6262
    %6264 = vrot.lane.b32.xlu0 %v6261, 12
    %v6265 = vpop.permute.xlu0 %6264
    %v6268 = vsel %vm202, %v6006, %v6095
    %v6269 = vsel %vm202, %v6013, %v6097
    %v6270 = vsel %vm205, %v6268, %v6179
    %v6271 = vsel %vm205, %v6269, %v6181
    %v6272 = vsel %vm208, %v6270, %v6263
    %v6273 = vsel %vm208, %v6271, %v6265
    %v6274 = vlaneseq
    %v6275 = vshrl.u32 %v6274, 7
    %v6276 = vsub.s32 0, %v6275
    %v6277 = vrot.slane %v29, %v6276
    %vm6278 = vcmask 130048
    %v6280 = vsel %vm6278, %v6272, 0
    %v6283 = vsel %vm6278, %v6273, 0
    %6285 = vmatprep.subr.mxu0 0.0
    %6286 = vmatpush1.msra.mxu0 %v25
    %6287 = vmatprep.subr.mxu0 0.0
    %6288 = vmatpush1.msra.mxu0 %v26
    %6289 = vmatprep.subr.mxu0 0.0
    %6290 = vmatpush1.msra.mxu0 0.0
    %6291 = vmatprep.subr.mxu0 0.0
    %6292 = vmatpush1.msra.mxu0 0.0
    %6293 = vmatprep.subr.mxu0 0.0
    %6294 = vmatpush1.msra.mxu0 0.0
    %6295 = vmatprep.subr.mxu0 0.0
    %6296 = vmatpush1.msra.mxu0 0.0
    %6297 = vmatprep.subr.mxu0 0.0
    %6298 = vmatpush1.msra.mxu0 0.0
    %6299 = vmatprep.subr.mxu0 0.0
    %6300 = vmatpush1.msra.mxu0 0.0
    %6301 = vmatprep.subr.mxu0 0.0
    %6302 = vmatpush1.msra.mxu0 0.0
    %6303 = vmatprep.subr.mxu0 0.0
    %6304 = vmatpush1.msra.mxu0 0.0
    %6305 = vmatprep.subr.mxu0 0.0
    %6306 = vmatpush1.msra.mxu0 0.0
    %6307 = vmatprep.subr.mxu0 0.0
    %6308 = vmatpush1.msra.mxu0 0.0
    %6309 = vmatprep.subr.mxu0 0.0
    %6310 = vmatpush1.msra.mxu0 0.0
    %6311 = vmatprep.subr.mxu0 0.0
    %6312 = vmatpush1.msra.mxu0 0.0
    %6313 = vmatprep.subr.mxu0 0.0
    %6314 = vmatpush1.msra.mxu0 0.0
    %6315 = vmatprep.subr.mxu0 0.0
    %6316 = vmatpush1.msra.mxu0 0.0
    %6317 = vmatprep.subr.mxu0 0.0
    %6318 = vmatpush1.msra.mxu0 0.0
    %6319 = vmatprep.subr.mxu0 0.0
    %6320 = vmatpush1.msra.mxu0 0.0
    %6321 = vmatprep.subr.mxu0 0.0
    %6322 = vmatpush1.msra.mxu0 0.0
    %6323 = vmatprep.subr.mxu0 0.0
    %6324 = vmatpush1.msra.mxu0 0.0
    %6325 = vmatprep.subr.mxu0 0.0
    %6326 = vmatpush1.msra.mxu0 0.0
    %6327 = vmatprep.subr.mxu0 0.0
    %6328 = vmatpush1.msra.mxu0 0.0
    %6329 = vmatprep.subr.mxu0 0.0
    %6330 = vmatpush1.msra.mxu0 0.0
    %6331 = vmatprep.subr.mxu0 0.0
    %6332 = vmatpush1.msra.mxu0 0.0
    %6333 = vmatprep.subr.mxu0 0.0
    %6334 = vmatpush1.msra.mxu0 0.0
    %6335 = vmatprep.subr.mxu0 0.0
    %6336 = vmatpush1.msra.mxu0 0.0
    %6337 = vmatprep.subr.mxu0 0.0
    %6338 = vmatpush1.msra.mxu0 0.0
    %6339 = vmatprep.subr.mxu0 0.0
    %6340 = vmatpush1.msra.mxu0 0.0
    %6341 = vmatprep.subr.mxu0 0.0
    %6342 = vmatpush1.msra.mxu0 0.0
    %6343 = vmatprep.subr.mxu0 0.0
    %6344 = vmatpush1.msra.mxu0 0.0
    %6345 = vmatprep.subr.mxu0 0.0
    %6346 = vmatpush1.msra.mxu0 0.0
    %6347 = vmatprep.subr.mxu0 0.0
    %6348 = vmatpush1.msra.mxu0 0.0
    %6349 = vmatprep.mubr.f32.mxu0 0.0
    %6350 = vmatmul.mubr.f32.gmra.mrb[0].mxu0 %v6280
    %v6351 = vpop.f32.mrb[0].mxu0
    %v6352 = vadd.f32 %v6277, %v6351
    %v6353 = vpop.f32.mrb[0].mxu0
    %6354 = vmatprep.mubr.f32.mxu0 0.0
    %6355 = vmatmul.mubr.f32.gmra.mrb[0].mxu0 %v6283
    %v6356 = vpop.f32.mrb[0].mxu0
    %v6357 = vadd.f32 %v6277, %v6356
    %v6358 = vpop.f32.mrb[0].mxu0
    %6359 = vdwg.mxu0
    %v6360 = vmul.f32 %v6352, 0.5
    %v6361 = vmul.f32 %v6357, 0.5
    %v6362 = vmul.f32 %v6352, 0.70710677
    %v6363 = vmul.f32 %v6357, 0.70710677
    %v6364 = verf.f32.pop %v6362
    %v6365 = verf.f32.pop %v6363
    %v6366 = vadd.f32 %v6364, 1.0
    %v6367 = vadd.f32 %v6365, 1.0
    %v6368 = vmul.f32 %v6360, %v6366
    %v6369 = vmul.f32 %v6361, %v6367
    %v6370 = vadd.f32 %v6368, %v209
    %v6371 = vadd.f32 %v6369, %v210
    %v6372 = vsel %vm6278, %v6370, 0.0
    %6373 = vadd.xlane.f32.xlu0 %v6372
    %v6374 = vpop.xlane.xlu0 %6373
    %v6375 = vsel %vm6278, %v6371, 0.0
    %6376 = vadd.xlane.f32.xlu0 %v6375
    %v6377 = vpop.xlane.xlu0 %6376
    %v6378 = vrcp.pop 16.0
    %v6379 = vmul.f32 %v6374, %v6378
    %v6380 = vmul.f32 %v6377, %v6378
    %v6381 = vsub.f32 %v6370, %v6379
    %v6382 = vsub.f32 %v6371, %v6380
    %v6383 = vmul.f32 %v6381, %v6381
    %v6384 = vmul.f32 %v6382, %v6382
    %v6385 = vsel %vm6278, %v6383, 0.0
    %6386 = vadd.xlane.f32.xlu0 %v6385
    %v6387 = vpop.xlane.xlu0 %6386
    %v6388 = vsel %vm6278, %v6384, 0.0
    %6389 = vadd.xlane.f32.xlu0 %v6388
    %v6390 = vpop.xlane.xlu0 %6389
    %v6391 = vmul.f32 %v6387, %v6378
    %v6392 = vmul.f32 %v6390, %v6378
    %v6393 = vadd.f32 %v6391, 1e-05
    %v6394 = vadd.f32 %v6392, 1e-05
    %v6395 = vrsqrt.pop %v6393
    %v6396 = vrsqrt.pop %v6394
    %v6397 = vmul.f32 %v6381, %v6395
    %v6398 = vmul.f32 %v6382, %v6396
    %v6399 = vlaneseq
    %v6400 = vshrl.u32 %v6399, 7
    %v6401 = vsub.s32 1, %v6400
    %v6402 = vrot.slane %v29, %v6401
    %v6403 = vmul.f32 %v6397, %v6402
    %v6404 = vmul.f32 %v6398, %v6402
    %v6405 = vlaneseq
    %v6406 = vshrl.u32 %v6405, 7
    %v6407 = vsub.s32 2, %v6406
    %v6408 = vrot.slane %v29, %v6407
    %v6409 = vadd.f32 %v6403, %v6408
    %v6410 = vadd.f32 %v6404, %v6408
    %6413 = vrot.lane.b32.xlu0 %v6409, 124
    %v6414 = vpop.permute.xlu0 %6413
    %6415 = vrot.lane.b32.xlu0 %v6410, 124
    %v6416 = vpop.permute.xlu0 %6415
    %6417 = vrot.lane.b32.xlu0 %v6409, 120
    %v6418 = vpop.permute.xlu0 %6417
    %6419 = vrot.lane.b32.xlu0 %v6410, 120
    %v6420 = vpop.permute.xlu0 %6419
    %6421 = vrot.lane.b32.xlu0 %v6409, 116
    %v6422 = vpop.permute.xlu0 %6421
    %6423 = vrot.lane.b32.xlu0 %v6410, 116
    %v6424 = vpop.permute.xlu0 %6423
    %v6426 = vlaneseq
    %v6427 = vshrl.u32 %v6426, 7
    %v6428 = vsub.s32 0, %v6427
    %v6429 = vrot.slane %v24, %v6428
    %v6431 = vsel %vm202, %v6409, 0
    %v6433 = vsel %vm202, %v6414, 0
    %v6435 = vsel %vm202, %v6418, 0
    %v6437 = vsel %vm202, %v6422, 0
    %v6439 = vsel %vm202, %v6410, 0
    %v6441 = vsel %vm202, %v6416, 0
    %v6443 = vsel %vm202, %v6420, 0
    %v6445 = vsel %vm202, %v6424, 0
    %v6448 = vsel %vm241, %v22, 0
    %6450 = vmatprep.subr.mxu0 0.0
    %6451 = vmatpush1.msra.mxu0 %v6448
    %6452 = vmatprep.subr.mxu0 0.0
    %6453 = vmatpush1.msra.mxu0 0.0
    %6454 = vmatprep.subr.mxu0 0.0
    %6455 = vmatpush1.msra.mxu0 0.0
    %6456 = vmatprep.subr.mxu0 0.0
    %6457 = vmatpush1.msra.mxu0 0.0
    %6458 = vmatprep.subr.mxu0 0.0
    %6459 = vmatpush1.msra.mxu0 0.0
    %6460 = vmatprep.subr.mxu0 0.0
    %6461 = vmatpush1.msra.mxu0 0.0
    %6462 = vmatprep.subr.mxu0 0.0
    %6463 = vmatpush1.msra.mxu0 0.0
    %6464 = vmatprep.subr.mxu0 0.0
    %6465 = vmatpush1.msra.mxu0 0.0
    %6466 = vmatprep.subr.mxu0 0.0
    %6467 = vmatpush1.msra.mxu0 0.0
    %6468 = vmatprep.subr.mxu0 0.0
    %6469 = vmatpush1.msra.mxu0 0.0
    %6470 = vmatprep.subr.mxu0 0.0
    %6471 = vmatpush1.msra.mxu0 0.0
    %6472 = vmatprep.subr.mxu0 0.0
    %6473 = vmatpush1.msra.mxu0 0.0
    %6474 = vmatprep.subr.mxu0 0.0
    %6475 = vmatpush1.msra.mxu0 0.0
    %6476 = vmatprep.subr.mxu0 0.0
    %6477 = vmatpush1.msra.mxu0 0.0
    %6478 = vmatprep.subr.mxu0 0.0
    %6479 = vmatpush1.msra.mxu0 0.0
    %6480 = vmatprep.subr.mxu0 0.0
    %6481 = vmatpush1.msra.mxu0 0.0
    %6482 = vmatprep.subr.mxu0 0.0
    %6483 = vmatpush1.msra.mxu0 0.0
    %6484 = vmatprep.subr.mxu0 0.0
    %6485 = vmatpush1.msra.mxu0 0.0
    %6486 = vmatprep.subr.mxu0 0.0
    %6487 = vmatpush1.msra.mxu0 0.0
    %6488 = vmatprep.subr.mxu0 0.0
    %6489 = vmatpush1.msra.mxu0 0.0
    %6490 = vmatprep.subr.mxu0 0.0
    %6491 = vmatpush1.msra.mxu0 0.0
    %6492 = vmatprep.subr.mxu0 0.0
    %6493 = vmatpush1.msra.mxu0 0.0
    %6494 = vmatprep.subr.mxu0 0.0
    %6495 = vmatpush1.msra.mxu0 0.0
    %6496 = vmatprep.subr.mxu0 0.0
    %6497 = vmatpush1.msra.mxu0 0.0
    %6498 = vmatprep.subr.mxu0 0.0
    %6499 = vmatpush1.msra.mxu0 0.0
    %6500 = vmatprep.subr.mxu0 0.0
    %6501 = vmatpush1.msra.mxu0 0.0
    %6502 = vmatprep.subr.mxu0 0.0
    %6503 = vmatpush1.msra.mxu0 0.0
    %6504 = vmatprep.subr.mxu0 0.0
    %6505 = vmatpush1.msra.mxu0 0.0
    %6506 = vmatprep.subr.mxu0 0.0
    %6507 = vmatpush1.msra.mxu0 0.0
    %6508 = vmatprep.subr.mxu0 0.0
    %6509 = vmatpush1.msra.mxu0 0.0
    %6510 = vmatprep.subr.mxu0 0.0
    %6511 = vmatpush1.msra.mxu0 0.0
    %6512 = vmatprep.subr.mxu0 0.0
    %6513 = vmatpush1.msra.mxu0 0.0
    %6514 = vmatprep.mubr.f32.mxu0 0.0
    %6515 = vmatmul.mubr.f32.gmra.mrb[0].mxu0 %v6431
    %v6516 = vpop.f32.mrb[0].mxu0
    %v6517 = vadd.f32 %v6429, %v6516
    %v6518 = vpop.f32.mrb[0].mxu0
    %6519 = vmatprep.mubr.f32.mxu0 0.0
    %6520 = vmatmul.mubr.f32.gmra.mrb[0].mxu0 %v6433
    %v6521 = vpop.f32.mrb[0].mxu0
    %v6522 = vadd.f32 %v6429, %v6521
    %v6523 = vpop.f32.mrb[0].mxu0
    %6524 = vmatprep.mubr.f32.mxu0 0.0
    %6525 = vmatmul.mubr.f32.gmra.mrb[0].mxu0 %v6435
    %v6526 = vpop.f32.mrb[0].mxu0
    %v6527 = vadd.f32 %v6429, %v6526
    %v6528 = vpop.f32.mrb[0].mxu0
    %6529 = vmatprep.mubr.f32.mxu0 0.0
    %6530 = vmatmul.mubr.f32.gmra.mrb[0].mxu0 %v6437
    %v6531 = vpop.f32.mrb[0].mxu0
    %v6532 = vadd.f32 %v6429, %v6531
    %v6533 = vpop.f32.mrb[0].mxu0
    %6534 = vmatprep.mubr.f32.mxu0 0.0
    %6535 = vmatmul.mubr.f32.gmra.mrb[0].mxu0 %v6439
    %v6536 = vpop.f32.mrb[0].mxu0
    %v6537 = vadd.f32 %v6429, %v6536
    %v6538 = vpop.f32.mrb[0].mxu0
    %6539 = vmatprep.mubr.f32.mxu0 0.0
    %6540 = vmatmul.mubr.f32.gmra.mrb[0].mxu0 %v6441
    %v6541 = vpop.f32.mrb[0].mxu0
    %v6542 = vadd.f32 %v6429, %v6541
    %v6543 = vpop.f32.mrb[0].mxu0
    %6544 = vmatprep.mubr.f32.mxu0 0.0
    %6545 = vmatmul.mubr.f32.gmra.mrb[0].mxu0 %v6443
    %v6546 = vpop.f32.mrb[0].mxu0
    %v6547 = vadd.f32 %v6429, %v6546
    %v6548 = vpop.f32.mrb[0].mxu0
    %6549 = vmatprep.mubr.f32.mxu0 0.0
    %6550 = vmatmul.mubr.f32.gmra.mrb[0].mxu0 %v6445
    %v6551 = vpop.f32.mrb[0].mxu0
    %v6552 = vadd.f32 %v6429, %v6551
    %v6553 = vpop.f32.mrb[0].mxu0
    %6554 = vdwg.mxu0
    %v6555 = vmul.f32 %v6517, 0.70710677
    %v6556 = vmul.f32 %v6522, 0.70710677
    %v6557 = vmul.f32 %v6527, 0.70710677
    %v6558 = vmul.f32 %v6532, 0.70710677
    %v6559 = vmul.f32 %v6537, 0.70710677
    %v6560 = vmul.f32 %v6542, 0.70710677
    %v6561 = vmul.f32 %v6547, 0.70710677
    %v6562 = vmul.f32 %v6552, 0.70710677
    %6564 = vrot.lane.b32.xlu0 %v6517, 124
    %v6565 = vpop.permute.xlu0 %6564
    %v6567 = vsel %vm392, %v6555, 0
    %v6569 = vsel %vm392, %v6565, 0
    %6571 = vmatprep.subr.mxu0 0.0
    %6572 = vmatpush1.xpose.msra.mxu0 %v6569
    %6573 = vmatprep.subr.mxu0 0.0
    %6574 = vmatpush1.xpose.msra.mxu0 0.0
    %6575 = vmatprep.subr.mxu0 0.0
    %6576 = vmatpush1.xpose.msra.mxu0 0.0
    %6577 = vmatprep.subr.mxu0 0.0
    %6578 = vmatpush1.xpose.msra.mxu0 0.0
    %6579 = vmatprep.subr.mxu0 0.0
    %6580 = vmatpush1.xpose.msra.mxu0 0.0
    %6581 = vmatprep.subr.mxu0 0.0
    %6582 = vmatpush1.xpose.msra.mxu0 0.0
    %6583 = vmatprep.subr.mxu0 0.0
    %6584 = vmatpush1.xpose.msra.mxu0 0.0
    %6585 = vmatprep.subr.mxu0 0.0
    %6586 = vmatpush1.xpose.msra.mxu0 0.0
    %6587 = vmatprep.subr.mxu0 0.0
    %6588 = vmatpush1.xpose.msra.mxu0 0.0
    %6589 = vmatprep.subr.mxu0 0.0
    %6590 = vmatpush1.xpose.msra.mxu0 0.0
    %6591 = vmatprep.subr.mxu0 0.0
    %6592 = vmatpush1.xpose.msra.mxu0 0.0
    %6593 = vmatprep.subr.mxu0 0.0
    %6594 = vmatpush1.xpose.msra.mxu0 0.0
    %6595 = vmatprep.subr.mxu0 0.0
    %6596 = vmatpush1.xpose.msra.mxu0 0.0
    %6597 = vmatprep.subr.mxu0 0.0
    %6598 = vmatpush1.xpose.msra.mxu0 0.0
    %6599 = vmatprep.subr.mxu0 0.0
    %6600 = vmatpush1.xpose.msra.mxu0 0.0
    %6601 = vmatprep.subr.mxu0 0.0
    %6602 = vmatpush1.xpose.msra.mxu0 0.0
    %6603 = vmatprep.subr.mxu0 0.0
    %6604 = vmatpush1.xpose.msra.mxu0 0.0
    %6605 = vmatprep.subr.mxu0 0.0
    %6606 = vmatpush1.xpose.msra.mxu0 0.0
    %6607 = vmatprep.subr.mxu0 0.0
    %6608 = vmatpush1.xpose.msra.mxu0 0.0
    %6609 = vmatprep.subr.mxu0 0.0
    %6610 = vmatpush1.xpose.msra.mxu0 0.0
    %6611 = vmatprep.subr.mxu0 0.0
    %6612 = vmatpush1.xpose.msra.mxu0 0.0
    %6613 = vmatprep.subr.mxu0 0.0
    %6614 = vmatpush1.xpose.msra.mxu0 0.0
    %6615 = vmatprep.subr.mxu0 0.0
    %6616 = vmatpush1.xpose.msra.mxu0 0.0
    %6617 = vmatprep.subr.mxu0 0.0
    %6618 = vmatpush1.xpose.msra.mxu0 0.0
    %6619 = vmatprep.subr.mxu0 0.0
    %6620 = vmatpush1.xpose.msra.mxu0 0.0
    %6621 = vmatprep.subr.mxu0 0.0
    %6622 = vmatpush1.xpose.msra.mxu0 0.0
    %6623 = vmatprep.subr.mxu0 0.0
    %6624 = vmatpush1.xpose.msra.mxu0 0.0
    %6625 = vmatprep.subr.mxu0 0.0
    %6626 = vmatpush1.xpose.msra.mxu0 0.0
    %6627 = vmatprep.subr.mxu0 0.0
    %6628 = vmatpush1.xpose.msra.mxu0 0.0
    %6629 = vmatprep.subr.mxu0 0.0
    %6630 = vmatpush1.xpose.msra.mxu0 0.0
    %6631 = vmatprep.subr.mxu0 0.0
    %6632 = vmatpush1.xpose.msra.mxu0 0.0
    %6633 = vmatprep.subr.mxu0 0.0
    %6634 = vmatpush1.xpose.msra.mxu0 0.0
    %6635 = vmatprep.mubr.f32.mxu0 0.0
    %6636 = vmatmul.mubr.f32.gmra.mrb[0].mxu0 %v6567
    %v6637 = vpop.f32.mrb[0].mxu0
    %v6638 = vadd.f32 0.0, %v6637
    %v6639 = vpop.f32.mrb[0].mxu0
    %6640 = vdwg.mxu0
    %6642 = vrot.lane.b32.xlu0 %v6522, 124
    %v6643 = vpop.permute.xlu0 %6642
    %v6645 = vsel %vm392, %v6556, 0
    %v6647 = vsel %vm392, %v6643, 0
    %6649 = vmatprep.subr.mxu0 0.0
    %6650 = vmatpush1.xpose.msra.mxu0 %v6647
    %6651 = vmatprep.subr.mxu0 0.0
    %6652 = vmatpush1.xpose.msra.mxu0 0.0
    %6653 = vmatprep.subr.mxu0 0.0
    %6654 = vmatpush1.xpose.msra.mxu0 0.0
    %6655 = vmatprep.subr.mxu0 0.0
    %6656 = vmatpush1.xpose.msra.mxu0 0.0
    %6657 = vmatprep.subr.mxu0 0.0
    %6658 = vmatpush1.xpose.msra.mxu0 0.0
    %6659 = vmatprep.subr.mxu0 0.0
    %6660 = vmatpush1.xpose.msra.mxu0 0.0
    %6661 = vmatprep.subr.mxu0 0.0
    %6662 = vmatpush1.xpose.msra.mxu0 0.0
    %6663 = vmatprep.subr.mxu0 0.0
    %6664 = vmatpush1.xpose.msra.mxu0 0.0
    %6665 = vmatprep.subr.mxu0 0.0
    %6666 = vmatpush1.xpose.msra.mxu0 0.0
    %6667 = vmatprep.subr.mxu0 0.0
    %6668 = vmatpush1.xpose.msra.mxu0 0.0
    %6669 = vmatprep.subr.mxu0 0.0
    %6670 = vmatpush1.xpose.msra.mxu0 0.0
    %6671 = vmatprep.subr.mxu0 0.0
    %6672 = vmatpush1.xpose.msra.mxu0 0.0
    %6673 = vmatprep.subr.mxu0 0.0
    %6674 = vmatpush1.xpose.msra.mxu0 0.0
    %6675 = vmatprep.subr.mxu0 0.0
    %6676 = vmatpush1.xpose.msra.mxu0 0.0
    %6677 = vmatprep.subr.mxu0 0.0
    %6678 = vmatpush1.xpose.msra.mxu0 0.0
    %6679 = vmatprep.subr.mxu0 0.0
    %6680 = vmatpush1.xpose.msra.mxu0 0.0
    %6681 = vmatprep.subr.mxu0 0.0
    %6682 = vmatpush1.xpose.msra.mxu0 0.0
    %6683 = vmatprep.subr.mxu0 0.0
    %6684 = vmatpush1.xpose.msra.mxu0 0.0
    %6685 = vmatprep.subr.mxu0 0.0
    %6686 = vmatpush1.xpose.msra.mxu0 0.0
    %6687 = vmatprep.subr.mxu0 0.0
    %6688 = vmatpush1.xpose.msra.mxu0 0.0
    %6689 = vmatprep.subr.mxu0 0.0
    %6690 = vmatpush1.xpose.msra.mxu0 0.0
    %6691 = vmatprep.subr.mxu0 0.0
    %6692 = vmatpush1.xpose.msra.mxu0 0.0
    %6693 = vmatprep.subr.mxu0 0.0
    %6694 = vmatpush1.xpose.msra.mxu0 0.0
    %6695 = vmatprep.subr.mxu0 0.0
    %6696 = vmatpush1.xpose.msra.mxu0 0.0
    %6697 = vmatprep.subr.mxu0 0.0
    %6698 = vmatpush1.xpose.msra.mxu0 0.0
    %6699 = vmatprep.subr.mxu0 0.0
    %6700 = vmatpush1.xpose.msra.mxu0 0.0
    %6701 = vmatprep.subr.mxu0 0.0
    %6702 = vmatpush1.xpose.msra.mxu0 0.0
    %6703 = vmatprep.subr.mxu0 0.0
    %6704 = vmatpush1.xpose.msra.mxu0 0.0
    %6705 = vmatprep.subr.mxu0 0.0
    %6706 = vmatpush1.xpose.msra.mxu0 0.0
    %6707 = vmatprep.subr.mxu0 0.0
    %6708 = vmatpush1.xpose.msra.mxu0 0.0
    %6709 = vmatprep.subr.mxu0 0.0
    %6710 = vmatpush1.xpose.msra.mxu0 0.0
    %6711 = vmatprep.subr.mxu0 0.0
    %6712 = vmatpush1.xpose.msra.mxu0 0.0
    %6713 = vmatprep.mubr.f32.mxu0 0.0
    %6714 = vmatmul.mubr.f32.gmra.mrb[0].mxu0 %v6645
    %v6715 = vpop.f32.mrb[0].mxu0
    %v6716 = vadd.f32 0.0, %v6715
    %v6717 = vpop.f32.mrb[0].mxu0
    %6718 = vdwg.mxu0
    %6720 = vrot.lane.b32.xlu0 %v6527, 124
    %v6721 = vpop.permute.xlu0 %6720
    %v6723 = vsel %vm392, %v6557, 0
    %v6725 = vsel %vm392, %v6721, 0
    %6727 = vmatprep.subr.mxu0 0.0
    %6728 = vmatpush1.xpose.msra.mxu0 %v6725
    %6729 = vmatprep.subr.mxu0 0.0
    %6730 = vmatpush1.xpose.msra.mxu0 0.0
    %6731 = vmatprep.subr.mxu0 0.0
    %6732 = vmatpush1.xpose.msra.mxu0 0.0
    %6733 = vmatprep.subr.mxu0 0.0
    %6734 = vmatpush1.xpose.msra.mxu0 0.0
    %6735 = vmatprep.subr.mxu0 0.0
    %6736 = vmatpush1.xpose.msra.mxu0 0.0
    %6737 = vmatprep.subr.mxu0 0.0
    %6738 = vmatpush1.xpose.msra.mxu0 0.0
    %6739 = vmatprep.subr.mxu0 0.0
    %6740 = vmatpush1.xpose.msra.mxu0 0.0
    %6741 = vmatprep.subr.mxu0 0.0
    %6742 = vmatpush1.xpose.msra.mxu0 0.0
    %6743 = vmatprep.subr.mxu0 0.0
    %6744 = vmatpush1.xpose.msra.mxu0 0.0
    %6745 = vmatprep.subr.mxu0 0.0
    %6746 = vmatpush1.xpose.msra.mxu0 0.0
    %6747 = vmatprep.subr.mxu0 0.0
    %6748 = vmatpush1.xpose.msra.mxu0 0.0
    %6749 = vmatprep.subr.mxu0 0.0
    %6750 = vmatpush1.xpose.msra.mxu0 0.0
    %6751 = vmatprep.subr.mxu0 0.0
    %6752 = vmatpush1.xpose.msra.mxu0 0.0
    %6753 = vmatprep.subr.mxu0 0.0
    %6754 = vmatpush1.xpose.msra.mxu0 0.0
    %6755 = vmatprep.subr.mxu0 0.0
    %6756 = vmatpush1.xpose.msra.mxu0 0.0
    %6757 = vmatprep.subr.mxu0 0.0
    %6758 = vmatpush1.xpose.msra.mxu0 0.0
    %6759 = vmatprep.subr.mxu0 0.0
    %6760 = vmatpush1.xpose.msra.mxu0 0.0
    %6761 = vmatprep.subr.mxu0 0.0
    %6762 = vmatpush1.xpose.msra.mxu0 0.0
    %6763 = vmatprep.subr.mxu0 0.0
    %6764 = vmatpush1.xpose.msra.mxu0 0.0
    %6765 = vmatprep.subr.mxu0 0.0
    %6766 = vmatpush1.xpose.msra.mxu0 0.0
    %6767 = vmatprep.subr.mxu0 0.0
    %6768 = vmatpush1.xpose.msra.mxu0 0.0
    %6769 = vmatprep.subr.mxu0 0.0
    %6770 = vmatpush1.xpose.msra.mxu0 0.0
    %6771 = vmatprep.subr.mxu0 0.0
    %6772 = vmatpush1.xpose.msra.mxu0 0.0
    %6773 = vmatprep.subr.mxu0 0.0
    %6774 = vmatpush1.xpose.msra.mxu0 0.0
    %6775 = vmatprep.subr.mxu0 0.0
    %6776 = vmatpush1.xpose.msra.mxu0 0.0
    %6777 = vmatprep.subr.mxu0 0.0
    %6778 = vmatpush1.xpose.msra.mxu0 0.0
    %6779 = vmatprep.subr.mxu0 0.0
    %6780 = vmatpush1.xpose.msra.mxu0 0.0
    %6781 = vmatprep.subr.mxu0 0.0
    %6782 = vmatpush1.xpose.msra.mxu0 0.0
    %6783 = vmatprep.subr.mxu0 0.0
    %6784 = vmatpush1.xpose.msra.mxu0 0.0
    %6785 = vmatprep.subr.mxu0 0.0
    %6786 = vmatpush1.xpose.msra.mxu0 0.0
    %6787 = vmatprep.subr.mxu0 0.0
    %6788 = vmatpush1.xpose.msra.mxu0 0.0
    %6789 = vmatprep.subr.mxu0 0.0
    %6790 = vmatpush1.xpose.msra.mxu0 0.0
    %6791 = vmatprep.mubr.f32.mxu0 0.0
    %6792 = vmatmul.mubr.f32.gmra.mrb[0].mxu0 %v6723
    %v6793 = vpop.f32.mrb[0].mxu0
    %v6794 = vadd.f32 0.0, %v6793
    %v6795 = vpop.f32.mrb[0].mxu0
    %6796 = vdwg.mxu0
    %6798 = vrot.lane.b32.xlu0 %v6532, 124
    %v6799 = vpop.permute.xlu0 %6798
    %v6801 = vsel %vm392, %v6558, 0
    %v6803 = vsel %vm392, %v6799, 0
    %6805 = vmatprep.subr.mxu0 0.0
    %6806 = vmatpush1.xpose.msra.mxu0 %v6803
    %6807 = vmatprep.subr.mxu0 0.0
    %6808 = vmatpush1.xpose.msra.mxu0 0.0
    %6809 = vmatprep.subr.mxu0 0.0
    %6810 = vmatpush1.xpose.msra.mxu0 0.0
    %6811 = vmatprep.subr.mxu0 0.0
    %6812 = vmatpush1.xpose.msra.mxu0 0.0
    %6813 = vmatprep.subr.mxu0 0.0
    %6814 = vmatpush1.xpose.msra.mxu0 0.0
    %6815 = vmatprep.subr.mxu0 0.0
    %6816 = vmatpush1.xpose.msra.mxu0 0.0
    %6817 = vmatprep.subr.mxu0 0.0
    %6818 = vmatpush1.xpose.msra.mxu0 0.0
    %6819 = vmatprep.subr.mxu0 0.0
    %6820 = vmatpush1.xpose.msra.mxu0 0.0
    %6821 = vmatprep.subr.mxu0 0.0
    %6822 = vmatpush1.xpose.msra.mxu0 0.0
    %6823 = vmatprep.subr.mxu0 0.0
    %6824 = vmatpush1.xpose.msra.mxu0 0.0
    %6825 = vmatprep.subr.mxu0 0.0
    %6826 = vmatpush1.xpose.msra.mxu0 0.0
    %6827 = vmatprep.subr.mxu0 0.0
    %6828 = vmatpush1.xpose.msra.mxu0 0.0
    %6829 = vmatprep.subr.mxu0 0.0
    %6830 = vmatpush1.xpose.msra.mxu0 0.0
    %6831 = vmatprep.subr.mxu0 0.0
    %6832 = vmatpush1.xpose.msra.mxu0 0.0
    %6833 = vmatprep.subr.mxu0 0.0
    %6834 = vmatpush1.xpose.msra.mxu0 0.0
    %6835 = vmatprep.subr.mxu0 0.0
    %6836 = vmatpush1.xpose.msra.mxu0 0.0
    %6837 = vmatprep.subr.mxu0 0.0
    %6838 = vmatpush1.xpose.msra.mxu0 0.0
    %6839 = vmatprep.subr.mxu0 0.0
    %6840 = vmatpush1.xpose.msra.mxu0 0.0
    %6841 = vmatprep.subr.mxu0 0.0
    %6842 = vmatpush1.xpose.msra.mxu0 0.0
    %6843 = vmatprep.subr.mxu0 0.0
    %6844 = vmatpush1.xpose.msra.mxu0 0.0
    %6845 = vmatprep.subr.mxu0 0.0
    %6846 = vmatpush1.xpose.msra.mxu0 0.0
    %6847 = vmatprep.subr.mxu0 0.0
    %6848 = vmatpush1.xpose.msra.mxu0 0.0
    %6849 = vmatprep.subr.mxu0 0.0
    %6850 = vmatpush1.xpose.msra.mxu0 0.0
    %6851 = vmatprep.subr.mxu0 0.0
    %6852 = vmatpush1.xpose.msra.mxu0 0.0
    %6853 = vmatprep.subr.mxu0 0.0
    %6854 = vmatpush1.xpose.msra.mxu0 0.0
    %6855 = vmatprep.subr.mxu0 0.0
    %6856 = vmatpush1.xpose.msra.mxu0 0.0
    %6857 = vmatprep.subr.mxu0 0.0
    %6858 = vmatpush1.xpose.msra.mxu0 0.0
    %6859 = vmatprep.subr.mxu0 0.0
    %6860 = vmatpush1.xpose.msra.mxu0 0.0
    %6861 = vmatprep.subr.mxu0 0.0
    %6862 = vmatpush1.xpose.msra.mxu0 0.0
    %6863 = vmatprep.subr.mxu0 0.0
    %6864 = vmatpush1.xpose.msra.mxu0 0.0
    %6865 = vmatprep.subr.mxu0 0.0
    %6866 = vmatpush1.xpose.msra.mxu0 0.0
    %6867 = vmatprep.subr.mxu0 0.0
    %6868 = vmatpush1.xpose.msra.mxu0 0.0
    %6869 = vmatprep.mubr.f32.mxu0 0.0
    %6870 = vmatmul.mubr.f32.gmra.mrb[0].mxu0 %v6801
    %v6871 = vpop.f32.mrb[0].mxu0
    %v6872 = vadd.f32 0.0, %v6871
    %v6873 = vpop.f32.mrb[0].mxu0
    %6874 = vdwg.mxu0
    %6876 = vrot.lane.b32.xlu0 %v6537, 124
    %v6877 = vpop.permute.xlu0 %6876
    %v6879 = vsel %vm392, %v6559, 0
    %v6881 = vsel %vm392, %v6877, 0
    %6883 = vmatprep.subr.mxu0 0.0
    %6884 = vmatpush1.xpose.msra.mxu0 %v6881
    %6885 = vmatprep.subr.mxu0 0.0
    %6886 = vmatpush1.xpose.msra.mxu0 0.0
    %6887 = vmatprep.subr.mxu0 0.0
    %6888 = vmatpush1.xpose.msra.mxu0 0.0
    %6889 = vmatprep.subr.mxu0 0.0
    %6890 = vmatpush1.xpose.msra.mxu0 0.0
    %6891 = vmatprep.subr.mxu0 0.0
    %6892 = vmatpush1.xpose.msra.mxu0 0.0
    %6893 = vmatprep.subr.mxu0 0.0
    %6894 = vmatpush1.xpose.msra.mxu0 0.0
    %6895 = vmatprep.subr.mxu0 0.0
    %6896 = vmatpush1.xpose.msra.mxu0 0.0
    %6897 = vmatprep.subr.mxu0 0.0
    %6898 = vmatpush1.xpose.msra.mxu0 0.0
    %6899 = vmatprep.subr.mxu0 0.0
    %6900 = vmatpush1.xpose.msra.mxu0 0.0
    %6901 = vmatprep.subr.mxu0 0.0
    %6902 = vmatpush1.xpose.msra.mxu0 0.0
    %6903 = vmatprep.subr.mxu0 0.0
    %6904 = vmatpush1.xpose.msra.mxu0 0.0
    %6905 = vmatprep.subr.mxu0 0.0
    %6906 = vmatpush1.xpose.msra.mxu0 0.0
    %6907 = vmatprep.subr.mxu0 0.0
    %6908 = vmatpush1.xpose.msra.mxu0 0.0
    %6909 = vmatprep.subr.mxu0 0.0
    %6910 = vmatpush1.xpose.msra.mxu0 0.0
    %6911 = vmatprep.subr.mxu0 0.0
    %6912 = vmatpush1.xpose.msra.mxu0 0.0
    %6913 = vmatprep.subr.mxu0 0.0
    %6914 = vmatpush1.xpose.msra.mxu0 0.0
    %6915 = vmatprep.subr.mxu0 0.0
    %6916 = vmatpush1.xpose.msra.mxu0 0.0
    %6917 = vmatprep.subr.mxu0 0.0
    %6918 = vmatpush1.xpose.msra.mxu0 0.0
    %6919 = vmatprep.subr.mxu0 0.0
    %6920 = vmatpush1.xpose.msra.mxu0 0.0
    %6921 = vmatprep.subr.mxu0 0.0
    %6922 = vmatpush1.xpose.msra.mxu0 0.0
    %6923 = vmatprep.subr.mxu0 0.0
    %6924 = vmatpush1.xpose.msra.mxu0 0.0
    %6925 = vmatprep.subr.mxu0 0.0
    %6926 = vmatpush1.xpose.msra.mxu0 0.0
    %6927 = vmatprep.subr.mxu0 0.0
    %6928 = vmatpush1.xpose.msra.mxu0 0.0
    %6929 = vmatprep.subr.mxu0 0.0
    %6930 = vmatpush1.xpose.msra.mxu0 0.0
    %6931 = vmatprep.subr.mxu0 0.0
    %6932 = vmatpush1.xpose.msra.mxu0 0.0
    %6933 = vmatprep.subr.mxu0 0.0
    %6934 = vmatpush1.xpose.msra.mxu0 0.0
    %6935 = vmatprep.subr.mxu0 0.0
    %6936 = vmatpush1.xpose.msra.mxu0 0.0
    %6937 = vmatprep.subr.mxu0 0.0
    %6938 = vmatpush1.xpose.msra.mxu0 0.0
    %6939 = vmatprep.subr.mxu0 0.0
    %6940 = vmatpush1.xpose.msra.mxu0 0.0
    %6941 = vmatprep.subr.mxu0 0.0
    %6942 = vmatpush1.xpose.msra.mxu0 0.0
    %6943 = vmatprep.subr.mxu0 0.0
    %6944 = vmatpush1.xpose.msra.mxu0 0.0
    %6945 = vmatprep.subr.mxu0 0.0
    %6946 = vmatpush1.xpose.msra.mxu0 0.0
    %6947 = vmatprep.mubr.f32.mxu0 0.0
    %6948 = vmatmul.mubr.f32.gmra.mrb[0].mxu0 %v6879
    %v6949 = vpop.f32.mrb[0].mxu0
    %v6950 = vadd.f32 0.0, %v6949
    %v6951 = vpop.f32.mrb[0].mxu0
    %6952 = vdwg.mxu0
    %6954 = vrot.lane.b32.xlu0 %v6542, 124
    %v6955 = vpop.permute.xlu0 %6954
    %v6957 = vsel %vm392, %v6560, 0
    %v6959 = vsel %vm392, %v6955, 0
    %6961 = vmatprep.subr.mxu0 0.0
    %6962 = vmatpush1.xpose.msra.mxu0 %v6959
    %6963 = vmatprep.subr.mxu0 0.0
    %6964 = vmatpush1.xpose.msra.mxu0 0.0
    %6965 = vmatprep.subr.mxu0 0.0
    %6966 = vmatpush1.xpose.msra.mxu0 0.0
    %6967 = vmatprep.subr.mxu0 0.0
    %6968 = vmatpush1.xpose.msra.mxu0 0.0
    %6969 = vmatprep.subr.mxu0 0.0
    %6970 = vmatpush1.xpose.msra.mxu0 0.0
    %6971 = vmatprep.subr.mxu0 0.0
    %6972 = vmatpush1.xpose.msra.mxu0 0.0
    %6973 = vmatprep.subr.mxu0 0.0
    %6974 = vmatpush1.xpose.msra.mxu0 0.0
    %6975 = vmatprep.subr.mxu0 0.0
    %6976 = vmatpush1.xpose.msra.mxu0 0.0
    %6977 = vmatprep.subr.mxu0 0.0
    %6978 = vmatpush1.xpose.msra.mxu0 0.0
    %6979 = vmatprep.subr.mxu0 0.0
    %6980 = vmatpush1.xpose.msra.mxu0 0.0
    %6981 = vmatprep.subr.mxu0 0.0
    %6982 = vmatpush1.xpose.msra.mxu0 0.0
    %6983 = vmatprep.subr.mxu0 0.0
    %6984 = vmatpush1.xpose.msra.mxu0 0.0
    %6985 = vmatprep.subr.mxu0 0.0
    %6986 = vmatpush1.xpose.msra.mxu0 0.0
    %6987 = vmatprep.subr.mxu0 0.0
    %6988 = vmatpush1.xpose.msra.mxu0 0.0
    %6989 = vmatprep.subr.mxu0 0.0
    %6990 = vmatpush1.xpose.msra.mxu0 0.0
    %6991 = vmatprep.subr.mxu0 0.0
    %6992 = vmatpush1.xpose.msra.mxu0 0.0
    %6993 = vmatprep.subr.mxu0 0.0
    %6994 = vmatpush1.xpose.msra.mxu0 0.0
    %6995 = vmatprep.subr.mxu0 0.0
    %6996 = vmatpush1.xpose.msra.mxu0 0.0
    %6997 = vmatprep.subr.mxu0 0.0
    %6998 = vmatpush1.xpose.msra.mxu0 0.0
    %6999 = vmatprep.subr.mxu0 0.0
    %7000 = vmatpush1.xpose.msra.mxu0 0.0
    %7001 = vmatprep.subr.mxu0 0.0
    %7002 = vmatpush1.xpose.msra.mxu0 0.0
    %7003 = vmatprep.subr.mxu0 0.0
    %7004 = vmatpush1.xpose.msra.mxu0 0.0
    %7005 = vmatprep.subr.mxu0 0.0
    %7006 = vmatpush1.xpose.msra.mxu0 0.0
    %7007 = vmatprep.subr.mxu0 0.0
    %7008 = vmatpush1.xpose.msra.mxu0 0.0
    %7009 = vmatprep.subr.mxu0 0.0
    %7010 = vmatpush1.xpose.msra.mxu0 0.0
    %7011 = vmatprep.subr.mxu0 0.0
    %7012 = vmatpush1.xpose.msra.mxu0 0.0
    %7013 = vmatprep.subr.mxu0 0.0
    %7014 = vmatpush1.xpose.msra.mxu0 0.0
    %7015 = vmatprep.subr.mxu0 0.0
    %7016 = vmatpush1.xpose.msra.mxu0 0.0
    %7017 = vmatprep.subr.mxu0 0.0
    %7018 = vmatpush1.xpose.msra.mxu0 0.0
    %7019 = vmatprep.subr.mxu0 0.0
    %7020 = vmatpush1.xpose.msra.mxu0 0.0
    %7021 = vmatprep.subr.mxu0 0.0
    %7022 = vmatpush1.xpose.msra.mxu0 0.0
    %7023 = vmatprep.subr.mxu0 0.0
    %7024 = vmatpush1.xpose.msra.mxu0 0.0
    %7025 = vmatprep.mubr.f32.mxu0 0.0
    %7026 = vmatmul.mubr.f32.gmra.mrb[0].mxu0 %v6957
    %v7027 = vpop.f32.mrb[0].mxu0
    %v7028 = vadd.f32 0.0, %v7027
    %v7029 = vpop.f32.mrb[0].mxu0
    %7030 = vdwg.mxu0
    %7032 = vrot.lane.b32.xlu0 %v6547, 124
    %v7033 = vpop.permute.xlu0 %7032
    %v7035 = vsel %vm392, %v6561, 0
    %v7037 = vsel %vm392, %v7033, 0
    %7039 = vmatprep.subr.mxu0 0.0
    %7040 = vmatpush1.xpose.msra.mxu0 %v7037
    %7041 = vmatprep.subr.mxu0 0.0
    %7042 = vmatpush1.xpose.msra.mxu0 0.0
    %7043 = vmatprep.subr.mxu0 0.0
    %7044 = vmatpush1.xpose.msra.mxu0 0.0
    %7045 = vmatprep.subr.mxu0 0.0
    %7046 = vmatpush1.xpose.msra.mxu0 0.0
    %7047 = vmatprep.subr.mxu0 0.0
    %7048 = vmatpush1.xpose.msra.mxu0 0.0
    %7049 = vmatprep.subr.mxu0 0.0
    %7050 = vmatpush1.xpose.msra.mxu0 0.0
    %7051 = vmatprep.subr.mxu0 0.0
    %7052 = vmatpush1.xpose.msra.mxu0 0.0
    %7053 = vmatprep.subr.mxu0 0.0
    %7054 = vmatpush1.xpose.msra.mxu0 0.0
    %7055 = vmatprep.subr.mxu0 0.0
    %7056 = vmatpush1.xpose.msra.mxu0 0.0
    %7057 = vmatprep.subr.mxu0 0.0
    %7058 = vmatpush1.xpose.msra.mxu0 0.0
    %7059 = vmatprep.subr.mxu0 0.0
    %7060 = vmatpush1.xpose.msra.mxu0 0.0
    %7061 = vmatprep.subr.mxu0 0.0
    %7062 = vmatpush1.xpose.msra.mxu0 0.0
    %7063 = vmatprep.subr.mxu0 0.0
    %7064 = vmatpush1.xpose.msra.mxu0 0.0
    %7065 = vmatprep.subr.mxu0 0.0
    %7066 = vmatpush1.xpose.msra.mxu0 0.0
    %7067 = vmatprep.subr.mxu0 0.0
    %7068 = vmatpush1.xpose.msra.mxu0 0.0
    %7069 = vmatprep.subr.mxu0 0.0
    %7070 = vmatpush1.xpose.msra.mxu0 0.0
    %7071 = vmatprep.subr.mxu0 0.0
    %7072 = vmatpush1.xpose.msra.mxu0 0.0
    %7073 = vmatprep.subr.mxu0 0.0
    %7074 = vmatpush1.xpose.msra.mxu0 0.0
    %7075 = vmatprep.subr.mxu0 0.0
    %7076 = vmatpush1.xpose.msra.mxu0 0.0
    %7077 = vmatprep.subr.mxu0 0.0
    %7078 = vmatpush1.xpose.msra.mxu0 0.0
    %7079 = vmatprep.subr.mxu0 0.0
    %7080 = vmatpush1.xpose.msra.mxu0 0.0
    %7081 = vmatprep.subr.mxu0 0.0
    %7082 = vmatpush1.xpose.msra.mxu0 0.0
    %7083 = vmatprep.subr.mxu0 0.0
    %7084 = vmatpush1.xpose.msra.mxu0 0.0
    %7085 = vmatprep.subr.mxu0 0.0
    %7086 = vmatpush1.xpose.msra.mxu0 0.0
    %7087 = vmatprep.subr.mxu0 0.0
    %7088 = vmatpush1.xpose.msra.mxu0 0.0
    %7089 = vmatprep.subr.mxu0 0.0
    %7090 = vmatpush1.xpose.msra.mxu0 0.0
    %7091 = vmatprep.subr.mxu0 0.0
    %7092 = vmatpush1.xpose.msra.mxu0 0.0
    %7093 = vmatprep.subr.mxu0 0.0
    %7094 = vmatpush1.xpose.msra.mxu0 0.0
    %7095 = vmatprep.subr.mxu0 0.0
    %7096 = vmatpush1.xpose.msra.mxu0 0.0
    %7097 = vmatprep.subr.mxu0 0.0
    %7098 = vmatpush1.xpose.msra.mxu0 0.0
    %7099 = vmatprep.subr.mxu0 0.0
    %7100 = vmatpush1.xpose.msra.mxu0 0.0
    %7101 = vmatprep.subr.mxu0 0.0
    %7102 = vmatpush1.xpose.msra.mxu0 0.0
    %7103 = vmatprep.mubr.f32.mxu0 0.0
    %7104 = vmatmul.mubr.f32.gmra.mrb[0].mxu0 %v7035
    %v7105 = vpop.f32.mrb[0].mxu0
    %v7106 = vadd.f32 0.0, %v7105
    %v7107 = vpop.f32.mrb[0].mxu0
    %7108 = vdwg.mxu0
    %7110 = vrot.lane.b32.xlu0 %v6552, 124
    %v7111 = vpop.permute.xlu0 %7110
    %v7113 = vsel %vm392, %v6562, 0
    %v7115 = vsel %vm392, %v7111, 0
    %7117 = vmatprep.subr.mxu0 0.0
    %7118 = vmatpush1.xpose.msra.mxu0 %v7115
    %7119 = vmatprep.subr.mxu0 0.0
    %7120 = vmatpush1.xpose.msra.mxu0 0.0
    %7121 = vmatprep.subr.mxu0 0.0
    %7122 = vmatpush1.xpose.msra.mxu0 0.0
    %7123 = vmatprep.subr.mxu0 0.0
    %7124 = vmatpush1.xpose.msra.mxu0 0.0
    %7125 = vmatprep.subr.mxu0 0.0
    %7126 = vmatpush1.xpose.msra.mxu0 0.0
    %7127 = vmatprep.subr.mxu0 0.0
    %7128 = vmatpush1.xpose.msra.mxu0 0.0
    %7129 = vmatprep.subr.mxu0 0.0
    %7130 = vmatpush1.xpose.msra.mxu0 0.0
    %7131 = vmatprep.subr.mxu0 0.0
    %7132 = vmatpush1.xpose.msra.mxu0 0.0
    %7133 = vmatprep.subr.mxu0 0.0
    %7134 = vmatpush1.xpose.msra.mxu0 0.0
    %7135 = vmatprep.subr.mxu0 0.0
    %7136 = vmatpush1.xpose.msra.mxu0 0.0
    %7137 = vmatprep.subr.mxu0 0.0
    %7138 = vmatpush1.xpose.msra.mxu0 0.0
    %7139 = vmatprep.subr.mxu0 0.0
    %7140 = vmatpush1.xpose.msra.mxu0 0.0
    %7141 = vmatprep.subr.mxu0 0.0
    %7142 = vmatpush1.xpose.msra.mxu0 0.0
    %7143 = vmatprep.subr.mxu0 0.0
    %7144 = vmatpush1.xpose.msra.mxu0 0.0
    %7145 = vmatprep.subr.mxu0 0.0
    %7146 = vmatpush1.xpose.msra.mxu0 0.0
    %7147 = vmatprep.subr.mxu0 0.0
    %7148 = vmatpush1.xpose.msra.mxu0 0.0
    %7149 = vmatprep.subr.mxu0 0.0
    %7150 = vmatpush1.xpose.msra.mxu0 0.0
    %7151 = vmatprep.subr.mxu0 0.0
    %7152 = vmatpush1.xpose.msra.mxu0 0.0
    %7153 = vmatprep.subr.mxu0 0.0
    %7154 = vmatpush1.xpose.msra.mxu0 0.0
    %7155 = vmatprep.subr.mxu0 0.0
    %7156 = vmatpush1.xpose.msra.mxu0 0.0
    %7157 = vmatprep.subr.mxu0 0.0
    %7158 = vmatpush1.xpose.msra.mxu0 0.0
    %7159 = vmatprep.subr.mxu0 0.0
    %7160 = vmatpush1.xpose.msra.mxu0 0.0
    %7161 = vmatprep.subr.mxu0 0.0
    %7162 = vmatpush1.xpose.msra.mxu0 0.0
    %7163 = vmatprep.subr.mxu0 0.0
    %7164 = vmatpush1.xpose.msra.mxu0 0.0
    %7165 = vmatprep.subr.mxu0 0.0
    %7166 = vmatpush1.xpose.msra.mxu0 0.0
    %7167 = vmatprep.subr.mxu0 0.0
    %7168 = vmatpush1.xpose.msra.mxu0 0.0
    %7169 = vmatprep.subr.mxu0 0.0
    %7170 = vmatpush1.xpose.msra.mxu0 0.0
    %7171 = vmatprep.subr.mxu0 0.0
    %7172 = vmatpush1.xpose.msra.mxu0 0.0
    %7173 = vmatprep.subr.mxu0 0.0
    %7174 = vmatpush1.xpose.msra.mxu0 0.0
    %7175 = vmatprep.subr.mxu0 0.0
    %7176 = vmatpush1.xpose.msra.mxu0 0.0
    %7177 = vmatprep.subr.mxu0 0.0
    %7178 = vmatpush1.xpose.msra.mxu0 0.0
    %7179 = vmatprep.subr.mxu0 0.0
    %7180 = vmatpush1.xpose.msra.mxu0 0.0
    %7181 = vmatprep.mubr.f32.mxu0 0.0
    %7182 = vmatmul.mubr.f32.gmra.mrb[0].mxu0 %v7113
    %v7183 = vpop.f32.mrb[0].mxu0
    %v7184 = vadd.f32 0.0, %v7183
    %v7185 = vpop.f32.mrb[0].mxu0
    %7186 = vdwg.mxu0
    %v7187 = vsel %vm205, %v6638, -inf
    %7188 = vmax.xlane.f32.xlu0 %v7187
    %v7189 = vpop.xlane.xlu0 %7188
    %v7190 = vsel %vm205, %v6716, -inf
    %7191 = vmax.xlane.f32.xlu0 %v7190
    %v7192 = vpop.xlane.xlu0 %7191
    %v7193 = vsel %vm205, %v6794, -inf
    %7194 = vmax.xlane.f32.xlu0 %v7193
    %v7195 = vpop.xlane.xlu0 %7194
    %v7196 = vsel %vm205, %v6872, -inf
    %7197 = vmax.xlane.f32.xlu0 %v7196
    %v7198 = vpop.xlane.xlu0 %7197
    %v7199 = vsel %vm205, %v6950, -inf
    %7200 = vmax.xlane.f32.xlu0 %v7199
    %v7201 = vpop.xlane.xlu0 %7200
    %v7202 = vsel %vm205, %v7028, -inf
    %7203 = vmax.xlane.f32.xlu0 %v7202
    %v7204 = vpop.xlane.xlu0 %7203
    %v7205 = vsel %vm205, %v7106, -inf
    %7206 = vmax.xlane.f32.xlu0 %v7205
    %v7207 = vpop.xlane.xlu0 %7206
    %v7208 = vsel %vm205, %v7184, -inf
    %7209 = vmax.xlane.f32.xlu0 %v7208
    %v7210 = vpop.xlane.xlu0 %7209
    %v7211 = vsub.f32 %v6638, %v7189
    %v7212 = vsub.f32 %v6716, %v7192
    %v7213 = vsub.f32 %v6794, %v7195
    %v7214 = vsub.f32 %v6872, %v7198
    %v7215 = vsub.f32 %v6950, %v7201
    %v7216 = vsub.f32 %v7028, %v7204
    %v7217 = vsub.f32 %v7106, %v7207
    %v7218 = vsub.f32 %v7184, %v7210
    %v7219 = vmul.f32 %v7211, 1.442695
    %v7220 = vpow.pop %v7219
    %v7221 = vmul.f32 %v7212, 1.442695
    %v7222 = vpow.pop %v7221
    %v7223 = vmul.f32 %v7213, 1.442695
    %v7224 = vpow.pop %v7223
    %v7225 = vmul.f32 %v7214, 1.442695
    %v7226 = vpow.pop %v7225
    %v7227 = vmul.f32 %v7215, 1.442695
    %v7228 = vpow.pop %v7227
    %v7229 = vmul.f32 %v7216, 1.442695
    %v7230 = vpow.pop %v7229
    %v7231 = vmul.f32 %v7217, 1.442695
    %v7232 = vpow.pop %v7231
    %v7233 = vmul.f32 %v7218, 1.442695
    %v7234 = vpow.pop %v7233
    %v7235 = vsel %vm205, %v7220, 0.0
    %7236 = vadd.xlane.f32.xlu0 %v7235
    %v7237 = vpop.xlane.xlu0 %7236
    %v7238 = vsel %vm205, %v7222, 0.0
    %7239 = vadd.xlane.f32.xlu0 %v7238
    %v7240 = vpop.xlane.xlu0 %7239
    %v7241 = vsel %vm205, %v7224, 0.0
    %7242 = vadd.xlane.f32.xlu0 %v7241
    %v7243 = vpop.xlane.xlu0 %7242
    %v7244 = vsel %vm205, %v7226, 0.0
    %7245 = vadd.xlane.f32.xlu0 %v7244
    %v7246 = vpop.xlane.xlu0 %7245
    %v7247 = vsel %vm205, %v7228, 0.0
    %7248 = vadd.xlane.f32.xlu0 %v7247
    %v7249 = vpop.xlane.xlu0 %7248
    %v7250 = vsel %vm205, %v7230, 0.0
    %7251 = vadd.xlane.f32.xlu0 %v7250
    %v7252 = vpop.xlane.xlu0 %7251
    %v7253 = vsel %vm205, %v7232, 0.0
    %7254 = vadd.xlane.f32.xlu0 %v7253
    %v7255 = vpop.xlane.xlu0 %7254
    %v7256 = vsel %vm205, %v7234, 0.0
    %7257 = vadd.xlane.f32.xlu0 %v7256
    %v7258 = vpop.xlane.xlu0 %7257
    %v7259 = vrcp.pop %v7237
    %v7260 = vrcp.pop %v7240
    %v7261 = vrcp.pop %v7243
    %v7262 = vrcp.pop %v7246
    %v7263 = vrcp.pop %v7249
    %v7264 = vrcp.pop %v7252
    %v7265 = vrcp.pop %v7255
    %v7266 = vrcp.pop %v7258
    %v7267 = vmul.f32 %v7220, %v7259
    %v7268 = vmul.f32 %v7222, %v7260
    %v7269 = vmul.f32 %v7224, %v7261
    %v7270 = vmul.f32 %v7226, %v7262
    %v7271 = vmul.f32 %v7228, %v7263
    %v7272 = vmul.f32 %v7230, %v7264
    %v7273 = vmul.f32 %v7232, %v7265
    %v7274 = vmul.f32 %v7234, %v7266
    %7275 = vrot.lane.b32.xlu0 %v6517, 120
    %v7276 = vpop.permute.xlu0 %7275
    %v7279 = vsel %vm205, %v7267, 0
    %7281 = vmatprep.subr.mxu0 0.0
    %7282 = vmatpush1.msra.mxu0 %v7276
    %7283 = vmatprep.subr.mxu0 0.0
    %7284 = vmatpush1.msra.mxu0 0.0
    %7285 = vmatprep.subr.mxu0 0.0
    %7286 = vmatpush1.msra.mxu0 0.0
    %7287 = vmatprep.subr.mxu0 0.0
    %7288 = vmatpush1.msra.mxu0 0.0
    %7289 = vmatprep.subr.mxu0 0.0
    %7290 = vmatpush1.msra.mxu0 0.0
    %7291 = vmatprep.subr.mxu0 0.0
    %7292 = vmatpush1.msra.mxu0 0.0
    %7293 = vmatprep.subr.mxu0 0.0
    %7294 = vmatpush1.msra.mxu0 0.0
    %7295 = vmatprep.subr.mxu0 0.0
    %7296 = vmatpush1.msra.mxu0 0.0
    %7297 = vmatprep.subr.mxu0 0.0
    %7298 = vmatpush1.msra.mxu0 0.0
    %7299 = vmatprep.subr.mxu0 0.0
    %7300 = vmatpush1.msra.mxu0 0.0
    %7301 = vmatprep.subr.mxu0 0.0
    %7302 = vmatpush1.msra.mxu0 0.0
    %7303 = vmatprep.subr.mxu0 0.0
    %7304 = vmatpush1.msra.mxu0 0.0
    %7305 = vmatprep.subr.mxu0 0.0
    %7306 = vmatpush1.msra.mxu0 0.0
    %7307 = vmatprep.subr.mxu0 0.0
    %7308 = vmatpush1.msra.mxu0 0.0
    %7309 = vmatprep.subr.mxu0 0.0
    %7310 = vmatpush1.msra.mxu0 0.0
    %7311 = vmatprep.subr.mxu0 0.0
    %7312 = vmatpush1.msra.mxu0 0.0
    %7313 = vmatprep.subr.mxu0 0.0
    %7314 = vmatpush1.msra.mxu0 0.0
    %7315 = vmatprep.subr.mxu0 0.0
    %7316 = vmatpush1.msra.mxu0 0.0
    %7317 = vmatprep.subr.mxu0 0.0
    %7318 = vmatpush1.msra.mxu0 0.0
    %7319 = vmatprep.subr.mxu0 0.0
    %7320 = vmatpush1.msra.mxu0 0.0
    %7321 = vmatprep.subr.mxu0 0.0
    %7322 = vmatpush1.msra.mxu0 0.0
    %7323 = vmatprep.subr.mxu0 0.0
    %7324 = vmatpush1.msra.mxu0 0.0
    %7325 = vmatprep.subr.mxu0 0.0
    %7326 = vmatpush1.msra.mxu0 0.0
    %7327 = vmatprep.subr.mxu0 0.0
    %7328 = vmatpush1.msra.mxu0 0.0
    %7329 = vmatprep.subr.mxu0 0.0
    %7330 = vmatpush1.msra.mxu0 0.0
    %7331 = vmatprep.subr.mxu0 0.0
    %7332 = vmatpush1.msra.mxu0 0.0
    %7333 = vmatprep.subr.mxu0 0.0
    %7334 = vmatpush1.msra.mxu0 0.0
    %7335 = vmatprep.subr.mxu0 0.0
    %7336 = vmatpush1.msra.mxu0 0.0
    %7337 = vmatprep.subr.mxu0 0.0
    %7338 = vmatpush1.msra.mxu0 0.0
    %7339 = vmatprep.subr.mxu0 0.0
    %7340 = vmatpush1.msra.mxu0 0.0
    %7341 = vmatprep.subr.mxu0 0.0
    %7342 = vmatpush1.msra.mxu0 0.0
    %7343 = vmatprep.subr.mxu0 0.0
    %7344 = vmatpush1.msra.mxu0 0.0
    %7345 = vmatprep.mubr.f32.mxu0 0.0
    %7346 = vmatmul.mubr.f32.gmra.mrb[0].mxu0 %v7279
    %v7347 = vpop.f32.mrb[0].mxu0
    %v7348 = vadd.f32 0.0, %v7347
    %v7349 = vpop.f32.mrb[0].mxu0
    %7350 = vdwg.mxu0
    %7351 = vrot.lane.b32.xlu0 %v6522, 120
    %v7352 = vpop.permute.xlu0 %7351
    %v7355 = vsel %vm205, %v7268, 0
    %7357 = vmatprep.subr.mxu0 0.0
    %7358 = vmatpush1.msra.mxu0 %v7352
    %7359 = vmatprep.subr.mxu0 0.0
    %7360 = vmatpush1.msra.mxu0 0.0
    %7361 = vmatprep.subr.mxu0 0.0
    %7362 = vmatpush1.msra.mxu0 0.0
    %7363 = vmatprep.subr.mxu0 0.0
    %7364 = vmatpush1.msra.mxu0 0.0
    %7365 = vmatprep.subr.mxu0 0.0
    %7366 = vmatpush1.msra.mxu0 0.0
    %7367 = vmatprep.subr.mxu0 0.0
    %7368 = vmatpush1.msra.mxu0 0.0
    %7369 = vmatprep.subr.mxu0 0.0
    %7370 = vmatpush1.msra.mxu0 0.0
    %7371 = vmatprep.subr.mxu0 0.0
    %7372 = vmatpush1.msra.mxu0 0.0
    %7373 = vmatprep.subr.mxu0 0.0
    %7374 = vmatpush1.msra.mxu0 0.0
    %7375 = vmatprep.subr.mxu0 0.0
    %7376 = vmatpush1.msra.mxu0 0.0
    %7377 = vmatprep.subr.mxu0 0.0
    %7378 = vmatpush1.msra.mxu0 0.0
    %7379 = vmatprep.subr.mxu0 0.0
    %7380 = vmatpush1.msra.mxu0 0.0
    %7381 = vmatprep.subr.mxu0 0.0
    %7382 = vmatpush1.msra.mxu0 0.0
    %7383 = vmatprep.subr.mxu0 0.0
    %7384 = vmatpush1.msra.mxu0 0.0
    %7385 = vmatprep.subr.mxu0 0.0
    %7386 = vmatpush1.msra.mxu0 0.0
    %7387 = vmatprep.subr.mxu0 0.0
    %7388 = vmatpush1.msra.mxu0 0.0
    %7389 = vmatprep.subr.mxu0 0.0
    %7390 = vmatpush1.msra.mxu0 0.0
    %7391 = vmatprep.subr.mxu0 0.0
    %7392 = vmatpush1.msra.mxu0 0.0
    %7393 = vmatprep.subr.mxu0 0.0
    %7394 = vmatpush1.msra.mxu0 0.0
    %7395 = vmatprep.subr.mxu0 0.0
    %7396 = vmatpush1.msra.mxu0 0.0
    %7397 = vmatprep.subr.mxu0 0.0
    %7398 = vmatpush1.msra.mxu0 0.0
    %7399 = vmatprep.subr.mxu0 0.0
    %7400 = vmatpush1.msra.mxu0 0.0
    %7401 = vmatprep.subr.mxu0 0.0
    %7402 = vmatpush1.msra.mxu0 0.0
    %7403 = vmatprep.subr.mxu0 0.0
    %7404 = vmatpush1.msra.mxu0 0.0
    %7405 = vmatprep.subr.mxu0 0.0
    %7406 = vmatpush1.msra.mxu0 0.0
    %7407 = vmatprep.subr.mxu0 0.0
    %7408 = vmatpush1.msra.mxu0 0.0
    %7409 = vmatprep.subr.mxu0 0.0
    %7410 = vmatpush1.msra.mxu0 0.0
    %7411 = vmatprep.subr.mxu0 0.0
    %7412 = vmatpush1.msra.mxu0 0.0
    %7413 = vmatprep.subr.mxu0 0.0
    %7414 = vmatpush1.msra.mxu0 0.0
    %7415 = vmatprep.subr.mxu0 0.0
    %7416 = vmatpush1.msra.mxu0 0.0
    %7417 = vmatprep.subr.mxu0 0.0
    %7418 = vmatpush1.msra.mxu0 0.0
    %7419 = vmatprep.subr.mxu0 0.0
    %7420 = vmatpush1.msra.mxu0 0.0
    %7421 = vmatprep.mubr.f32.mxu0 0.0
    %7422 = vmatmul.mubr.f32.gmra.mrb[0].mxu0 %v7355
    %v7423 = vpop.f32.mrb[0].mxu0
    %v7424 = vadd.f32 0.0, %v7423
    %v7425 = vpop.f32.mrb[0].mxu0
    %7426 = vdwg.mxu0
    %7427 = vrot.lane.b32.xlu0 %v6527, 120
    %v7428 = vpop.permute.xlu0 %7427
    %v7431 = vsel %vm205, %v7269, 0
    %7433 = vmatprep.subr.mxu0 0.0
    %7434 = vmatpush1.msra.mxu0 %v7428
    %7435 = vmatprep.subr.mxu0 0.0
    %7436 = vmatpush1.msra.mxu0 0.0
    %7437 = vmatprep.subr.mxu0 0.0
    %7438 = vmatpush1.msra.mxu0 0.0
    %7439 = vmatprep.subr.mxu0 0.0
    %7440 = vmatpush1.msra.mxu0 0.0
    %7441 = vmatprep.subr.mxu0 0.0
    %7442 = vmatpush1.msra.mxu0 0.0
    %7443 = vmatprep.subr.mxu0 0.0
    %7444 = vmatpush1.msra.mxu0 0.0
    %7445 = vmatprep.subr.mxu0 0.0
    %7446 = vmatpush1.msra.mxu0 0.0
    %7447 = vmatprep.subr.mxu0 0.0
    %7448 = vmatpush1.msra.mxu0 0.0
    %7449 = vmatprep.subr.mxu0 0.0
    %7450 = vmatpush1.msra.mxu0 0.0
    %7451 = vmatprep.subr.mxu0 0.0
    %7452 = vmatpush1.msra.mxu0 0.0
    %7453 = vmatprep.subr.mxu0 0.0
    %7454 = vmatpush1.msra.mxu0 0.0
    %7455 = vmatprep.subr.mxu0 0.0
    %7456 = vmatpush1.msra.mxu0 0.0
    %7457 = vmatprep.subr.mxu0 0.0
    %7458 = vmatpush1.msra.mxu0 0.0
    %7459 = vmatprep.subr.mxu0 0.0
    %7460 = vmatpush1.msra.mxu0 0.0
    %7461 = vmatprep.subr.mxu0 0.0
    %7462 = vmatpush1.msra.mxu0 0.0
    %7463 = vmatprep.subr.mxu0 0.0
    %7464 = vmatpush1.msra.mxu0 0.0
    %7465 = vmatprep.subr.mxu0 0.0
    %7466 = vmatpush1.msra.mxu0 0.0
    %7467 = vmatprep.subr.mxu0 0.0
    %7468 = vmatpush1.msra.mxu0 0.0
    %7469 = vmatprep.subr.mxu0 0.0
    %7470 = vmatpush1.msra.mxu0 0.0
    %7471 = vmatprep.subr.mxu0 0.0
    %7472 = vmatpush1.msra.mxu0 0.0
    %7473 = vmatprep.subr.mxu0 0.0
    %7474 = vmatpush1.msra.mxu0 0.0
    %7475 = vmatprep.subr.mxu0 0.0
    %7476 = vmatpush1.msra.mxu0 0.0
    %7477 = vmatprep.subr.mxu0 0.0
    %7478 = vmatpush1.msra.mxu0 0.0
    %7479 = vmatprep.subr.mxu0 0.0
    %7480 = vmatpush1.msra.mxu0 0.0
    %7481 = vmatprep.subr.mxu0 0.0
    %7482 = vmatpush1.msra.mxu0 0.0
    %7483 = vmatprep.subr.mxu0 0.0
    %7484 = vmatpush1.msra.mxu0 0.0
    %7485 = vmatprep.subr.mxu0 0.0
    %7486 = vmatpush1.msra.mxu0 0.0
    %7487 = vmatprep.subr.mxu0 0.0
    %7488 = vmatpush1.msra.mxu0 0.0
    %7489 = vmatprep.subr.mxu0 0.0
    %7490 = vmatpush1.msra.mxu0 0.0
    %7491 = vmatprep.subr.mxu0 0.0
    %7492 = vmatpush1.msra.mxu0 0.0
    %7493 = vmatprep.subr.mxu0 0.0
    %7494 = vmatpush1.msra.mxu0 0.0
    %7495 = vmatprep.subr.mxu0 0.0
    %7496 = vmatpush1.msra.mxu0 0.0
    %7497 = vmatprep.mubr.f32.mxu0 0.0
    %7498 = vmatmul.mubr.f32.gmra.mrb[0].mxu0 %v7431
    %v7499 = vpop.f32.mrb[0].mxu0
    %v7500 = vadd.f32 0.0, %v7499
    %v7501 = vpop.f32.mrb[0].mxu0
    %7502 = vdwg.mxu0
    %7503 = vrot.lane.b32.xlu0 %v6532, 120
    %v7504 = vpop.permute.xlu0 %7503
    %v7507 = vsel %vm205, %v7270, 0
    %7509 = vmatprep.subr.mxu0 0.0
    %7510 = vmatpush1.msra.mxu0 %v7504
    %7511 = vmatprep.subr.mxu0 0.0
    %7512 = vmatpush1.msra.mxu0 0.0
    %7513 = vmatprep.subr.mxu0 0.0
    %7514 = vmatpush1.msra.mxu0 0.0
    %7515 = vmatprep.subr.mxu0 0.0
    %7516 = vmatpush1.msra.mxu0 0.0
    %7517 = vmatprep.subr.mxu0 0.0
    %7518 = vmatpush1.msra.mxu0 0.0
    %7519 = vmatprep.subr.mxu0 0.0
    %7520 = vmatpush1.msra.mxu0 0.0
    %7521 = vmatprep.subr.mxu0 0.0
    %7522 = vmatpush1.msra.mxu0 0.0
    %7523 = vmatprep.subr.mxu0 0.0
    %7524 = vmatpush1.msra.mxu0 0.0
    %7525 = vmatprep.subr.mxu0 0.0
    %7526 = vmatpush1.msra.mxu0 0.0
    %7527 = vmatprep.subr.mxu0 0.0
    %7528 = vmatpush1.msra.mxu0 0.0
    %7529 = vmatprep.subr.mxu0 0.0
    %7530 = vmatpush1.msra.mxu0 0.0
    %7531 = vmatprep.subr.mxu0 0.0
    %7532 = vmatpush1.msra.mxu0 0.0
    %7533 = vmatprep.subr.mxu0 0.0
    %7534 = vmatpush1.msra.mxu0 0.0
    %7535 = vmatprep.subr.mxu0 0.0
    %7536 = vmatpush1.msra.mxu0 0.0
    %7537 = vmatprep.subr.mxu0 0.0
    %7538 = vmatpush1.msra.mxu0 0.0
    %7539 = vmatprep.subr.mxu0 0.0
    %7540 = vmatpush1.msra.mxu0 0.0
    %7541 = vmatprep.subr.mxu0 0.0
    %7542 = vmatpush1.msra.mxu0 0.0
    %7543 = vmatprep.subr.mxu0 0.0
    %7544 = vmatpush1.msra.mxu0 0.0
    %7545 = vmatprep.subr.mxu0 0.0
    %7546 = vmatpush1.msra.mxu0 0.0
    %7547 = vmatprep.subr.mxu0 0.0
    %7548 = vmatpush1.msra.mxu0 0.0
    %7549 = vmatprep.subr.mxu0 0.0
    %7550 = vmatpush1.msra.mxu0 0.0
    %7551 = vmatprep.subr.mxu0 0.0
    %7552 = vmatpush1.msra.mxu0 0.0
    %7553 = vmatprep.subr.mxu0 0.0
    %7554 = vmatpush1.msra.mxu0 0.0
    %7555 = vmatprep.subr.mxu0 0.0
    %7556 = vmatpush1.msra.mxu0 0.0
    %7557 = vmatprep.subr.mxu0 0.0
    %7558 = vmatpush1.msra.mxu0 0.0
    %7559 = vmatprep.subr.mxu0 0.0
    %7560 = vmatpush1.msra.mxu0 0.0
    %7561 = vmatprep.subr.mxu0 0.0
    %7562 = vmatpush1.msra.mxu0 0.0
    %7563 = vmatprep.subr.mxu0 0.0
    %7564 = vmatpush1.msra.mxu0 0.0
    %7565 = vmatprep.subr.mxu0 0.0
    %7566 = vmatpush1.msra.mxu0 0.0
    %7567 = vmatprep.subr.mxu0 0.0
    %7568 = vmatpush1.msra.mxu0 0.0
    %7569 = vmatprep.subr.mxu0 0.0
    %7570 = vmatpush1.msra.mxu0 0.0
    %7571 = vmatprep.subr.mxu0 0.0
    %7572 = vmatpush1.msra.mxu0 0.0
    %7573 = vmatprep.mubr.f32.mxu0 0.0
    %7574 = vmatmul.mubr.f32.gmra.mrb[0].mxu0 %v7507
    %v7575 = vpop.f32.mrb[0].mxu0
    %v7576 = vadd.f32 0.0, %v7575
    %v7577 = vpop.f32.mrb[0].mxu0
    %7578 = vdwg.mxu0
    %7579 = vrot.lane.b32.xlu0 %v6537, 120
    %v7580 = vpop.permute.xlu0 %7579
    %v7583 = vsel %vm205, %v7271, 0
    %7585 = vmatprep.subr.mxu0 0.0
    %7586 = vmatpush1.msra.mxu0 %v7580
    %7587 = vmatprep.subr.mxu0 0.0
    %7588 = vmatpush1.msra.mxu0 0.0
    %7589 = vmatprep.subr.mxu0 0.0
    %7590 = vmatpush1.msra.mxu0 0.0
    %7591 = vmatprep.subr.mxu0 0.0
    %7592 = vmatpush1.msra.mxu0 0.0
    %7593 = vmatprep.subr.mxu0 0.0
    %7594 = vmatpush1.msra.mxu0 0.0
    %7595 = vmatprep.subr.mxu0 0.0
    %7596 = vmatpush1.msra.mxu0 0.0
    %7597 = vmatprep.subr.mxu0 0.0
    %7598 = vmatpush1.msra.mxu0 0.0
    %7599 = vmatprep.subr.mxu0 0.0
    %7600 = vmatpush1.msra.mxu0 0.0
    %7601 = vmatprep.subr.mxu0 0.0
    %7602 = vmatpush1.msra.mxu0 0.0
    %7603 = vmatprep.subr.mxu0 0.0
    %7604 = vmatpush1.msra.mxu0 0.0
    %7605 = vmatprep.subr.mxu0 0.0
    %7606 = vmatpush1.msra.mxu0 0.0
    %7607 = vmatprep.subr.mxu0 0.0
    %7608 = vmatpush1.msra.mxu0 0.0
    %7609 = vmatprep.subr.mxu0 0.0
    %7610 = vmatpush1.msra.mxu0 0.0
    %7611 = vmatprep.subr.mxu0 0.0
    %7612 = vmatpush1.msra.mxu0 0.0
    %7613 = vmatprep.subr.mxu0 0.0
    %7614 = vmatpush1.msra.mxu0 0.0
    %7615 = vmatprep.subr.mxu0 0.0
    %7616 = vmatpush1.msra.mxu0 0.0
    %7617 = vmatprep.subr.mxu0 0.0
    %7618 = vmatpush1.msra.mxu0 0.0
    %7619 = vmatprep.subr.mxu0 0.0
    %7620 = vmatpush1.msra.mxu0 0.0
    %7621 = vmatprep.subr.mxu0 0.0
    %7622 = vmatpush1.msra.mxu0 0.0
    %7623 = vmatprep.subr.mxu0 0.0
    %7624 = vmatpush1.msra.mxu0 0.0
    %7625 = vmatprep.subr.mxu0 0.0
    %7626 = vmatpush1.msra.mxu0 0.0
    %7627 = vmatprep.subr.mxu0 0.0
    %7628 = vmatpush1.msra.mxu0 0.0
    %7629 = vmatprep.subr.mxu0 0.0
    %7630 = vmatpush1.msra.mxu0 0.0
    %7631 = vmatprep.subr.mxu0 0.0
    %7632 = vmatpush1.msra.mxu0 0.0
    %7633 = vmatprep.subr.mxu0 0.0
    %7634 = vmatpush1.msra.mxu0 0.0
    %7635 = vmatprep.subr.mxu0 0.0
    %7636 = vmatpush1.msra.mxu0 0.0
    %7637 = vmatprep.subr.mxu0 0.0
    %7638 = vmatpush1.msra.mxu0 0.0
    %7639 = vmatprep.subr.mxu0 0.0
    %7640 = vmatpush1.msra.mxu0 0.0
    %7641 = vmatprep.subr.mxu0 0.0
    %7642 = vmatpush1.msra.mxu0 0.0
    %7643 = vmatprep.subr.mxu0 0.0
    %7644 = vmatpush1.msra.mxu0 0.0
    %7645 = vmatprep.subr.mxu0 0.0
    %7646 = vmatpush1.msra.mxu0 0.0
    %7647 = vmatprep.subr.mxu0 0.0
    %7648 = vmatpush1.msra.mxu0 0.0
    %7649 = vmatprep.mubr.f32.mxu0 0.0
    %7650 = vmatmul.mubr.f32.gmra.mrb[0].mxu0 %v7583
    %v7651 = vpop.f32.mrb[0].mxu0
    %v7652 = vadd.f32 0.0, %v7651
    %v7653 = vpop.f32.mrb[0].mxu0
    %7654 = vdwg.mxu0
    %7655 = vrot.lane.b32.xlu0 %v6542, 120
    %v7656 = vpop.permute.xlu0 %7655
    %v7659 = vsel %vm205, %v7272, 0
    %7661 = vmatprep.subr.mxu0 0.0
    %7662 = vmatpush1.msra.mxu0 %v7656
    %7663 = vmatprep.subr.mxu0 0.0
    %7664 = vmatpush1.msra.mxu0 0.0
    %7665 = vmatprep.subr.mxu0 0.0
    %7666 = vmatpush1.msra.mxu0 0.0
    %7667 = vmatprep.subr.mxu0 0.0
    %7668 = vmatpush1.msra.mxu0 0.0
    %7669 = vmatprep.subr.mxu0 0.0
    %7670 = vmatpush1.msra.mxu0 0.0
    %7671 = vmatprep.subr.mxu0 0.0
    %7672 = vmatpush1.msra.mxu0 0.0
    %7673 = vmatprep.subr.mxu0 0.0
    %7674 = vmatpush1.msra.mxu0 0.0
    %7675 = vmatprep.subr.mxu0 0.0
    %7676 = vmatpush1.msra.mxu0 0.0
    %7677 = vmatprep.subr.mxu0 0.0
    %7678 = vmatpush1.msra.mxu0 0.0
    %7679 = vmatprep.subr.mxu0 0.0
    %7680 = vmatpush1.msra.mxu0 0.0
    %7681 = vmatprep.subr.mxu0 0.0
    %7682 = vmatpush1.msra.mxu0 0.0
    %7683 = vmatprep.subr.mxu0 0.0
    %7684 = vmatpush1.msra.mxu0 0.0
    %7685 = vmatprep.subr.mxu0 0.0
    %7686 = vmatpush1.msra.mxu0 0.0
    %7687 = vmatprep.subr.mxu0 0.0
    %7688 = vmatpush1.msra.mxu0 0.0
    %7689 = vmatprep.subr.mxu0 0.0
    %7690 = vmatpush1.msra.mxu0 0.0
    %7691 = vmatprep.subr.mxu0 0.0
    %7692 = vmatpush1.msra.mxu0 0.0
    %7693 = vmatprep.subr.mxu0 0.0
    %7694 = vmatpush1.msra.mxu0 0.0
    %7695 = vmatprep.subr.mxu0 0.0
    %7696 = vmatpush1.msra.mxu0 0.0
    %7697 = vmatprep.subr.mxu0 0.0
    %7698 = vmatpush1.msra.mxu0 0.0
    %7699 = vmatprep.subr.mxu0 0.0
    %7700 = vmatpush1.msra.mxu0 0.0
    %7701 = vmatprep.subr.mxu0 0.0
    %7702 = vmatpush1.msra.mxu0 0.0
    %7703 = vmatprep.subr.mxu0 0.0
    %7704 = vmatpush1.msra.mxu0 0.0
    %7705 = vmatprep.subr.mxu0 0.0
    %7706 = vmatpush1.msra.mxu0 0.0
    %7707 = vmatprep.subr.mxu0 0.0
    %7708 = vmatpush1.msra.mxu0 0.0
    %7709 = vmatprep.subr.mxu0 0.0
    %7710 = vmatpush1.msra.mxu0 0.0
    %7711 = vmatprep.subr.mxu0 0.0
    %7712 = vmatpush1.msra.mxu0 0.0
    %7713 = vmatprep.subr.mxu0 0.0
    %7714 = vmatpush1.msra.mxu0 0.0
    %7715 = vmatprep.subr.mxu0 0.0
    %7716 = vmatpush1.msra.mxu0 0.0
    %7717 = vmatprep.subr.mxu0 0.0
    %7718 = vmatpush1.msra.mxu0 0.0
    %7719 = vmatprep.subr.mxu0 0.0
    %7720 = vmatpush1.msra.mxu0 0.0
    %7721 = vmatprep.subr.mxu0 0.0
    %7722 = vmatpush1.msra.mxu0 0.0
    %7723 = vmatprep.subr.mxu0 0.0
    %7724 = vmatpush1.msra.mxu0 0.0
    %7725 = vmatprep.mubr.f32.mxu0 0.0
    %7726 = vmatmul.mubr.f32.gmra.mrb[0].mxu0 %v7659
    %v7727 = vpop.f32.mrb[0].mxu0
    %v7728 = vadd.f32 0.0, %v7727
    %v7729 = vpop.f32.mrb[0].mxu0
    %7730 = vdwg.mxu0
    %7731 = vrot.lane.b32.xlu0 %v6547, 120
    %v7732 = vpop.permute.xlu0 %7731
    %v7735 = vsel %vm205, %v7273, 0
    %7737 = vmatprep.subr.mxu0 0.0
    %7738 = vmatpush1.msra.mxu0 %v7732
    %7739 = vmatprep.subr.mxu0 0.0
    %7740 = vmatpush1.msra.mxu0 0.0
    %7741 = vmatprep.subr.mxu0 0.0
    %7742 = vmatpush1.msra.mxu0 0.0
    %7743 = vmatprep.subr.mxu0 0.0
    %7744 = vmatpush1.msra.mxu0 0.0
    %7745 = vmatprep.subr.mxu0 0.0
    %7746 = vmatpush1.msra.mxu0 0.0
    %7747 = vmatprep.subr.mxu0 0.0
    %7748 = vmatpush1.msra.mxu0 0.0
    %7749 = vmatprep.subr.mxu0 0.0
    %7750 = vmatpush1.msra.mxu0 0.0
    %7751 = vmatprep.subr.mxu0 0.0
    %7752 = vmatpush1.msra.mxu0 0.0
    %7753 = vmatprep.subr.mxu0 0.0
    %7754 = vmatpush1.msra.mxu0 0.0
    %7755 = vmatprep.subr.mxu0 0.0
    %7756 = vmatpush1.msra.mxu0 0.0
    %7757 = vmatprep.subr.mxu0 0.0
    %7758 = vmatpush1.msra.mxu0 0.0
    %7759 = vmatprep.subr.mxu0 0.0
    %7760 = vmatpush1.msra.mxu0 0.0
    %7761 = vmatprep.subr.mxu0 0.0
    %7762 = vmatpush1.msra.mxu0 0.0
    %7763 = vmatprep.subr.mxu0 0.0
    %7764 = vmatpush1.msra.mxu0 0.0
    %7765 = vmatprep.subr.mxu0 0.0
    %7766 = vmatpush1.msra.mxu0 0.0
    %7767 = vmatprep.subr.mxu0 0.0
    %7768 = vmatpush1.msra.mxu0 0.0
    %7769 = vmatprep.subr.mxu0 0.0
    %7770 = vmatpush1.msra.mxu0 0.0
    %7771 = vmatprep.subr.mxu0 0.0
    %7772 = vmatpush1.msra.mxu0 0.0
    %7773 = vmatprep.subr.mxu0 0.0
    %7774 = vmatpush1.msra.mxu0 0.0
    %7775 = vmatprep.subr.mxu0 0.0
    %7776 = vmatpush1.msra.mxu0 0.0
    %7777 = vmatprep.subr.mxu0 0.0
    %7778 = vmatpush1.msra.mxu0 0.0
    %7779 = vmatprep.subr.mxu0 0.0
    %7780 = vmatpush1.msra.mxu0 0.0
    %7781 = vmatprep.subr.mxu0 0.0
    %7782 = vmatpush1.msra.mxu0 0.0
    %7783 = vmatprep.subr.mxu0 0.0
    %7784 = vmatpush1.msra.mxu0 0.0
    %7785 = vmatprep.subr.mxu0 0.0
    %7786 = vmatpush1.msra.mxu0 0.0
    %7787 = vmatprep.subr.mxu0 0.0
    %7788 = vmatpush1.msra.mxu0 0.0
    %7789 = vmatprep.subr.mxu0 0.0
    %7790 = vmatpush1.msra.mxu0 0.0
    %7791 = vmatprep.subr.mxu0 0.0
    %7792 = vmatpush1.msra.mxu0 0.0
    %7793 = vmatprep.subr.mxu0 0.0
    %7794 = vmatpush1.msra.mxu0 0.0
    %7795 = vmatprep.subr.mxu0 0.0
    %7796 = vmatpush1.msra.mxu0 0.0
    %7797 = vmatprep.subr.mxu0 0.0
    %7798 = vmatpush1.msra.mxu0 0.0
    %7799 = vmatprep.subr.mxu0 0.0
    %7800 = vmatpush1.msra.mxu0 0.0
    %7801 = vmatprep.mubr.f32.mxu0 0.0
    %7802 = vmatmul.mubr.f32.gmra.mrb[0].mxu0 %v7735
    %v7803 = vpop.f32.mrb[0].mxu0
    %v7804 = vadd.f32 0.0, %v7803
    %v7805 = vpop.f32.mrb[0].mxu0
    %7806 = vdwg.mxu0
    %7807 = vrot.lane.b32.xlu0 %v6552, 120
    %v7808 = vpop.permute.xlu0 %7807
    %v7811 = vsel %vm205, %v7274, 0
    %7813 = vmatprep.subr.mxu0 0.0
    %7814 = vmatpush1.msra.mxu0 %v7808
    %7815 = vmatprep.subr.mxu0 0.0
    %7816 = vmatpush1.msra.mxu0 0.0
    %7817 = vmatprep.subr.mxu0 0.0
    %7818 = vmatpush1.msra.mxu0 0.0
    %7819 = vmatprep.subr.mxu0 0.0
    %7820 = vmatpush1.msra.mxu0 0.0
    %7821 = vmatprep.subr.mxu0 0.0
    %7822 = vmatpush1.msra.mxu0 0.0
    %7823 = vmatprep.subr.mxu0 0.0
    %7824 = vmatpush1.msra.mxu0 0.0
    %7825 = vmatprep.subr.mxu0 0.0
    %7826 = vmatpush1.msra.mxu0 0.0
    %7827 = vmatprep.subr.mxu0 0.0
    %7828 = vmatpush1.msra.mxu0 0.0
    %7829 = vmatprep.subr.mxu0 0.0
    %7830 = vmatpush1.msra.mxu0 0.0
    %7831 = vmatprep.subr.mxu0 0.0
    %7832 = vmatpush1.msra.mxu0 0.0
    %7833 = vmatprep.subr.mxu0 0.0
    %7834 = vmatpush1.msra.mxu0 0.0
    %7835 = vmatprep.subr.mxu0 0.0
    %7836 = vmatpush1.msra.mxu0 0.0
    %7837 = vmatprep.subr.mxu0 0.0
    %7838 = vmatpush1.msra.mxu0 0.0
    %7839 = vmatprep.subr.mxu0 0.0
    %7840 = vmatpush1.msra.mxu0 0.0
    %7841 = vmatprep.subr.mxu0 0.0
    %7842 = vmatpush1.msra.mxu0 0.0
    %7843 = vmatprep.subr.mxu0 0.0
    %7844 = vmatpush1.msra.mxu0 0.0
    %7845 = vmatprep.subr.mxu0 0.0
    %7846 = vmatpush1.msra.mxu0 0.0
    %7847 = vmatprep.subr.mxu0 0.0
    %7848 = vmatpush1.msra.mxu0 0.0
    %7849 = vmatprep.subr.mxu0 0.0
    %7850 = vmatpush1.msra.mxu0 0.0
    %7851 = vmatprep.subr.mxu0 0.0
    %7852 = vmatpush1.msra.mxu0 0.0
    %7853 = vmatprep.subr.mxu0 0.0
    %7854 = vmatpush1.msra.mxu0 0.0
    %7855 = vmatprep.subr.mxu0 0.0
    %7856 = vmatpush1.msra.mxu0 0.0
    %7857 = vmatprep.subr.mxu0 0.0
    %7858 = vmatpush1.msra.mxu0 0.0
    %7859 = vmatprep.subr.mxu0 0.0
    %7860 = vmatpush1.msra.mxu0 0.0
    %7861 = vmatprep.subr.mxu0 0.0
    %7862 = vmatpush1.msra.mxu0 0.0
    %7863 = vmatprep.subr.mxu0 0.0
    %7864 = vmatpush1.msra.mxu0 0.0
    %7865 = vmatprep.subr.mxu0 0.0
    %7866 = vmatpush1.msra.mxu0 0.0
    %7867 = vmatprep.subr.mxu0 0.0
    %7868 = vmatpush1.msra.mxu0 0.0
    %7869 = vmatprep.subr.mxu0 0.0
    %7870 = vmatpush1.msra.mxu0 0.0
    %7871 = vmatprep.subr.mxu0 0.0
    %7872 = vmatpush1.msra.mxu0 0.0
    %7873 = vmatprep.subr.mxu0 0.0
    %7874 = vmatpush1.msra.mxu0 0.0
    %7875 = vmatprep.subr.mxu0 0.0
    %7876 = vmatpush1.msra.mxu0 0.0
    %7877 = vmatprep.mubr.f32.mxu0 0.0
    %7878 = vmatmul.mubr.f32.gmra.mrb[0].mxu0 %v7811
    %v7879 = vpop.f32.mrb[0].mxu0
    %v7880 = vadd.f32 0.0, %v7879
    %v7881 = vpop.f32.mrb[0].mxu0
    %7882 = vdwg.mxu0
    %7883 = vrot.lane.b32.xlu0 %v6555, 126
    %v7884 = vpop.permute.xlu0 %7883
    %7885 = vrot.lane.b32.xlu0 %v6517, 122
    %v7886 = vpop.permute.xlu0 %7885
    %v7887 = vsel %vm392, %v7884, 0
    %v7889 = vsel %vm392, %v7886, 0
    %7891 = vmatprep.subr.mxu0 0.0
    %7892 = vmatpush1.xpose.msra.mxu0 %v7889
    %7893 = vmatprep.subr.mxu0 0.0
    %7894 = vmatpush1.xpose.msra.mxu0 0.0
    %7895 = vmatprep.subr.mxu0 0.0
    %7896 = vmatpush1.xpose.msra.mxu0 0.0
    %7897 = vmatprep.subr.mxu0 0.0
    %7898 = vmatpush1.xpose.msra.mxu0 0.0
    %7899 = vmatprep.subr.mxu0 0.0
    %7900 = vmatpush1.xpose.msra.mxu0 0.0
    %7901 = vmatprep.subr.mxu0 0.0
    %7902 = vmatpush1.xpose.msra.mxu0 0.0
    %7903 = vmatprep.subr.mxu0 0.0
    %7904 = vmatpush1.xpose.msra.mxu0 0.0
    %7905 = vmatprep.subr.mxu0 0.0
    %7906 = vmatpush1.xpose.msra.mxu0 0.0
    %7907 = vmatprep.subr.mxu0 0.0
    %7908 = vmatpush1.xpose.msra.mxu0 0.0
    %7909 = vmatprep.subr.mxu0 0.0
    %7910 = vmatpush1.xpose.msra.mxu0 0.0
    %7911 = vmatprep.subr.mxu0 0.0
    %7912 = vmatpush1.xpose.msra.mxu0 0.0
    %7913 = vmatprep.subr.mxu0 0.0
    %7914 = vmatpush1.xpose.msra.mxu0 0.0
    %7915 = vmatprep.subr.mxu0 0.0
    %7916 = vmatpush1.xpose.msra.mxu0 0.0
    %7917 = vmatprep.subr.mxu0 0.0
    %7918 = vmatpush1.xpose.msra.mxu0 0.0
    %7919 = vmatprep.subr.mxu0 0.0
    %7920 = vmatpush1.xpose.msra.mxu0 0.0
    %7921 = vmatprep.subr.mxu0 0.0
    %7922 = vmatpush1.xpose.msra.mxu0 0.0
    %7923 = vmatprep.subr.mxu0 0.0
    %7924 = vmatpush1.xpose.msra.mxu0 0.0
    %7925 = vmatprep.subr.mxu0 0.0
    %7926 = vmatpush1.xpose.msra.mxu0 0.0
    %7927 = vmatprep.subr.mxu0 0.0
    %7928 = vmatpush1.xpose.msra.mxu0 0.0
    %7929 = vmatprep.subr.mxu0 0.0
    %7930 = vmatpush1.xpose.msra.mxu0 0.0
    %7931 = vmatprep.subr.mxu0 0.0
    %7932 = vmatpush1.xpose.msra.mxu0 0.0
    %7933 = vmatprep.subr.mxu0 0.0
    %7934 = vmatpush1.xpose.msra.mxu0 0.0
    %7935 = vmatprep.subr.mxu0 0.0
    %7936 = vmatpush1.xpose.msra.mxu0 0.0
    %7937 = vmatprep.subr.mxu0 0.0
    %7938 = vmatpush1.xpose.msra.mxu0 0.0
    %7939 = vmatprep.subr.mxu0 0.0
    %7940 = vmatpush1.xpose.msra.mxu0 0.0
    %7941 = vmatprep.subr.mxu0 0.0
    %7942 = vmatpush1.xpose.msra.mxu0 0.0
    %7943 = vmatprep.subr.mxu0 0.0
    %7944 = vmatpush1.xpose.msra.mxu0 0.0
    %7945 = vmatprep.subr.mxu0 0.0
    %7946 = vmatpush1.xpose.msra.mxu0 0.0
    %7947 = vmatprep.subr.mxu0 0.0
    %7948 = vmatpush1.xpose.msra.mxu0 0.0
    %7949 = vmatprep.subr.mxu0 0.0
    %7950 = vmatpush1.xpose.msra.mxu0 0.0
    %7951 = vmatprep.subr.mxu0 0.0
    %7952 = vmatpush1.xpose.msra.mxu0 0.0
    %7953 = vmatprep.subr.mxu0 0.0
    %7954 = vmatpush1.xpose.msra.mxu0 0.0
    %7955 = vmatprep.mubr.f32.mxu0 0.0
    %7956 = vmatmul.mubr.f32.gmra.mrb[0].mxu0 %v7887
    %v7957 = vpop.f32.mrb[0].mxu0
    %v7958 = vadd.f32 0.0, %v7957
    %v7959 = vpop.f32.mrb[0].mxu0
    %7960 = vdwg.mxu0
    %7961 = vrot.lane.b32.xlu0 %v6556, 126
    %v7962 = vpop.permute.xlu0 %7961
    %7963 = vrot.lane.b32.xlu0 %v6522, 122
    %v7964 = vpop.permute.xlu0 %7963
    %v7965 = vsel %vm392, %v7962, 0
    %v7967 = vsel %vm392, %v7964, 0
    %7969 = vmatprep.subr.mxu0 0.0
    %7970 = vmatpush1.xpose.msra.mxu0 %v7967
    %7971 = vmatprep.subr.mxu0 0.0
    %7972 = vmatpush1.xpose.msra.mxu0 0.0
    %7973 = vmatprep.subr.mxu0 0.0
    %7974 = vmatpush1.xpose.msra.mxu0 0.0
    %7975 = vmatprep.subr.mxu0 0.0
    %7976 = vmatpush1.xpose.msra.mxu0 0.0
    %7977 = vmatprep.subr.mxu0 0.0
    %7978 = vmatpush1.xpose.msra.mxu0 0.0
    %7979 = vmatprep.subr.mxu0 0.0
    %7980 = vmatpush1.xpose.msra.mxu0 0.0
    %7981 = vmatprep.subr.mxu0 0.0
    %7982 = vmatpush1.xpose.msra.mxu0 0.0
    %7983 = vmatprep.subr.mxu0 0.0
    %7984 = vmatpush1.xpose.msra.mxu0 0.0
    %7985 = vmatprep.subr.mxu0 0.0
    %7986 = vmatpush1.xpose.msra.mxu0 0.0
    %7987 = vmatprep.subr.mxu0 0.0
    %7988 = vmatpush1.xpose.msra.mxu0 0.0
    %7989 = vmatprep.subr.mxu0 0.0
    %7990 = vmatpush1.xpose.msra.mxu0 0.0
    %7991 = vmatprep.subr.mxu0 0.0
    %7992 = vmatpush1.xpose.msra.mxu0 0.0
    %7993 = vmatprep.subr.mxu0 0.0
    %7994 = vmatpush1.xpose.msra.mxu0 0.0
    %7995 = vmatprep.subr.mxu0 0.0
    %7996 = vmatpush1.xpose.msra.mxu0 0.0
    %7997 = vmatprep.subr.mxu0 0.0
    %7998 = vmatpush1.xpose.msra.mxu0 0.0
    %7999 = vmatprep.subr.mxu0 0.0
    %8000 = vmatpush1.xpose.msra.mxu0 0.0
    %8001 = vmatprep.subr.mxu0 0.0
    %8002 = vmatpush1.xpose.msra.mxu0 0.0
    %8003 = vmatprep.subr.mxu0 0.0
    %8004 = vmatpush1.xpose.msra.mxu0 0.0
    %8005 = vmatprep.subr.mxu0 0.0
    %8006 = vmatpush1.xpose.msra.mxu0 0.0
    %8007 = vmatprep.subr.mxu0 0.0
    %8008 = vmatpush1.xpose.msra.mxu0 0.0
    %8009 = vmatprep.subr.mxu0 0.0
    %8010 = vmatpush1.xpose.msra.mxu0 0.0
    %8011 = vmatprep.subr.mxu0 0.0
    %8012 = vmatpush1.xpose.msra.mxu0 0.0
    %8013 = vmatprep.subr.mxu0 0.0
    %8014 = vmatpush1.xpose.msra.mxu0 0.0
    %8015 = vmatprep.subr.mxu0 0.0
    %8016 = vmatpush1.xpose.msra.mxu0 0.0
    %8017 = vmatprep.subr.mxu0 0.0
    %8018 = vmatpush1.xpose.msra.mxu0 0.0
    %8019 = vmatprep.subr.mxu0 0.0
    %8020 = vmatpush1.xpose.msra.mxu0 0.0
    %8021 = vmatprep.subr.mxu0 0.0
    %8022 = vmatpush1.xpose.msra.mxu0 0.0
    %8023 = vmatprep.subr.mxu0 0.0
    %8024 = vmatpush1.xpose.msra.mxu0 0.0
    %8025 = vmatprep.subr.mxu0 0.0
    %8026 = vmatpush1.xpose.msra.mxu0 0.0
    %8027 = vmatprep.subr.mxu0 0.0
    %8028 = vmatpush1.xpose.msra.mxu0 0.0
    %8029 = vmatprep.subr.mxu0 0.0
    %8030 = vmatpush1.xpose.msra.mxu0 0.0
    %8031 = vmatprep.subr.mxu0 0.0
    %8032 = vmatpush1.xpose.msra.mxu0 0.0
    %8033 = vmatprep.mubr.f32.mxu0 0.0
    %8034 = vmatmul.mubr.f32.gmra.mrb[0].mxu0 %v7965
    %v8035 = vpop.f32.mrb[0].mxu0
    %v8036 = vadd.f32 0.0, %v8035
    %v8037 = vpop.f32.mrb[0].mxu0
    %8038 = vdwg.mxu0
    %8039 = vrot.lane.b32.xlu0 %v6557, 126
    %v8040 = vpop.permute.xlu0 %8039
    %8041 = vrot.lane.b32.xlu0 %v6527, 122
    %v8042 = vpop.permute.xlu0 %8041
    %v8043 = vsel %vm392, %v8040, 0
    %v8045 = vsel %vm392, %v8042, 0
    %8047 = vmatprep.subr.mxu0 0.0
    %8048 = vmatpush1.xpose.msra.mxu0 %v8045
    %8049 = vmatprep.subr.mxu0 0.0
    %8050 = vmatpush1.xpose.msra.mxu0 0.0
    %8051 = vmatprep.subr.mxu0 0.0
    %8052 = vmatpush1.xpose.msra.mxu0 0.0
    %8053 = vmatprep.subr.mxu0 0.0
    %8054 = vmatpush1.xpose.msra.mxu0 0.0
    %8055 = vmatprep.subr.mxu0 0.0
    %8056 = vmatpush1.xpose.msra.mxu0 0.0
    %8057 = vmatprep.subr.mxu0 0.0
    %8058 = vmatpush1.xpose.msra.mxu0 0.0
    %8059 = vmatprep.subr.mxu0 0.0
    %8060 = vmatpush1.xpose.msra.mxu0 0.0
    %8061 = vmatprep.subr.mxu0 0.0
    %8062 = vmatpush1.xpose.msra.mxu0 0.0
    %8063 = vmatprep.subr.mxu0 0.0
    %8064 = vmatpush1.xpose.msra.mxu0 0.0
    %8065 = vmatprep.subr.mxu0 0.0
    %8066 = vmatpush1.xpose.msra.mxu0 0.0
    %8067 = vmatprep.subr.mxu0 0.0
    %8068 = vmatpush1.xpose.msra.mxu0 0.0
    %8069 = vmatprep.subr.mxu0 0.0
    %8070 = vmatpush1.xpose.msra.mxu0 0.0
    %8071 = vmatprep.subr.mxu0 0.0
    %8072 = vmatpush1.xpose.msra.mxu0 0.0
    %8073 = vmatprep.subr.mxu0 0.0
    %8074 = vmatpush1.xpose.msra.mxu0 0.0
    %8075 = vmatprep.subr.mxu0 0.0
    %8076 = vmatpush1.xpose.msra.mxu0 0.0
    %8077 = vmatprep.subr.mxu0 0.0
    %8078 = vmatpush1.xpose.msra.mxu0 0.0
    %8079 = vmatprep.subr.mxu0 0.0
    %8080 = vmatpush1.xpose.msra.mxu0 0.0
    %8081 = vmatprep.subr.mxu0 0.0
    %8082 = vmatpush1.xpose.msra.mxu0 0.0
    %8083 = vmatprep.subr.mxu0 0.0
    %8084 = vmatpush1.xpose.msra.mxu0 0.0
    %8085 = vmatprep.subr.mxu0 0.0
    %8086 = vmatpush1.xpose.msra.mxu0 0.0
    %8087 = vmatprep.subr.mxu0 0.0
    %8088 = vmatpush1.xpose.msra.mxu0 0.0
    %8089 = vmatprep.subr.mxu0 0.0
    %8090 = vmatpush1.xpose.msra.mxu0 0.0
    %8091 = vmatprep.subr.mxu0 0.0
    %8092 = vmatpush1.xpose.msra.mxu0 0.0
    %8093 = vmatprep.subr.mxu0 0.0
    %8094 = vmatpush1.xpose.msra.mxu0 0.0
    %8095 = vmatprep.subr.mxu0 0.0
    %8096 = vmatpush1.xpose.msra.mxu0 0.0
    %8097 = vmatprep.subr.mxu0 0.0
    %8098 = vmatpush1.xpose.msra.mxu0 0.0
    %8099 = vmatprep.subr.mxu0 0.0
    %8100 = vmatpush1.xpose.msra.mxu0 0.0
    %8101 = vmatprep.subr.mxu0 0.0
    %8102 = vmatpush1.xpose.msra.mxu0 0.0
    %8103 = vmatprep.subr.mxu0 0.0
    %8104 = vmatpush1.xpose.msra.mxu0 0.0
    %8105 = vmatprep.subr.mxu0 0.0
    %8106 = vmatpush1.xpose.msra.mxu0 0.0
    %8107 = vmatprep.subr.mxu0 0.0
    %8108 = vmatpush1.xpose.msra.mxu0 0.0
    %8109 = vmatprep.subr.mxu0 0.0
    %8110 = vmatpush1.xpose.msra.mxu0 0.0
    %8111 = vmatprep.mubr.f32.mxu0 0.0
    %8112 = vmatmul.mubr.f32.gmra.mrb[0].mxu0 %v8043
    %v8113 = vpop.f32.mrb[0].mxu0
    %v8114 = vadd.f32 0.0, %v8113
    %v8115 = vpop.f32.mrb[0].mxu0
    %8116 = vdwg.mxu0
    %8117 = vrot.lane.b32.xlu0 %v6558, 126
    %v8118 = vpop.permute.xlu0 %8117
    %8119 = vrot.lane.b32.xlu0 %v6532, 122
    %v8120 = vpop.permute.xlu0 %8119
    %v8121 = vsel %vm392, %v8118, 0
    %v8123 = vsel %vm392, %v8120, 0
    %8125 = vmatprep.subr.mxu0 0.0
    %8126 = vmatpush1.xpose.msra.mxu0 %v8123
    %8127 = vmatprep.subr.mxu0 0.0
    %8128 = vmatpush1.xpose.msra.mxu0 0.0
    %8129 = vmatprep.subr.mxu0 0.0
    %8130 = vmatpush1.xpose.msra.mxu0 0.0
    %8131 = vmatprep.subr.mxu0 0.0
    %8132 = vmatpush1.xpose.msra.mxu0 0.0
    %8133 = vmatprep.subr.mxu0 0.0
    %8134 = vmatpush1.xpose.msra.mxu0 0.0
    %8135 = vmatprep.subr.mxu0 0.0
    %8136 = vmatpush1.xpose.msra.mxu0 0.0
    %8137 = vmatprep.subr.mxu0 0.0
    %8138 = vmatpush1.xpose.msra.mxu0 0.0
    %8139 = vmatprep.subr.mxu0 0.0
    %8140 = vmatpush1.xpose.msra.mxu0 0.0
    %8141 = vmatprep.subr.mxu0 0.0
    %8142 = vmatpush1.xpose.msra.mxu0 0.0
    %8143 = vmatprep.subr.mxu0 0.0
    %8144 = vmatpush1.xpose.msra.mxu0 0.0
    %8145 = vmatprep.subr.mxu0 0.0
    %8146 = vmatpush1.xpose.msra.mxu0 0.0
    %8147 = vmatprep.subr.mxu0 0.0
    %8148 = vmatpush1.xpose.msra.mxu0 0.0
    %8149 = vmatprep.subr.mxu0 0.0
    %8150 = vmatpush1.xpose.msra.mxu0 0.0
    %8151 = vmatprep.subr.mxu0 0.0
    %8152 = vmatpush1.xpose.msra.mxu0 0.0
    %8153 = vmatprep.subr.mxu0 0.0
    %8154 = vmatpush1.xpose.msra.mxu0 0.0
    %8155 = vmatprep.subr.mxu0 0.0
    %8156 = vmatpush1.xpose.msra.mxu0 0.0
    %8157 = vmatprep.subr.mxu0 0.0
    %8158 = vmatpush1.xpose.msra.mxu0 0.0
    %8159 = vmatprep.subr.mxu0 0.0
    %8160 = vmatpush1.xpose.msra.mxu0 0.0
    %8161 = vmatprep.subr.mxu0 0.0
    %8162 = vmatpush1.xpose.msra.mxu0 0.0
    %8163 = vmatprep.subr.mxu0 0.0
    %8164 = vmatpush1.xpose.msra.mxu0 0.0
    %8165 = vmatprep.subr.mxu0 0.0
    %8166 = vmatpush1.xpose.msra.mxu0 0.0
    %8167 = vmatprep.subr.mxu0 0.0
    %8168 = vmatpush1.xpose.msra.mxu0 0.0
    %8169 = vmatprep.subr.mxu0 0.0
    %8170 = vmatpush1.xpose.msra.mxu0 0.0
    %8171 = vmatprep.subr.mxu0 0.0
    %8172 = vmatpush1.xpose.msra.mxu0 0.0
    %8173 = vmatprep.subr.mxu0 0.0
    %8174 = vmatpush1.xpose.msra.mxu0 0.0
    %8175 = vmatprep.subr.mxu0 0.0
    %8176 = vmatpush1.xpose.msra.mxu0 0.0
    %8177 = vmatprep.subr.mxu0 0.0
    %8178 = vmatpush1.xpose.msra.mxu0 0.0
    %8179 = vmatprep.subr.mxu0 0.0
    %8180 = vmatpush1.xpose.msra.mxu0 0.0
    %8181 = vmatprep.subr.mxu0 0.0
    %8182 = vmatpush1.xpose.msra.mxu0 0.0
    %8183 = vmatprep.subr.mxu0 0.0
    %8184 = vmatpush1.xpose.msra.mxu0 0.0
    %8185 = vmatprep.subr.mxu0 0.0
    %8186 = vmatpush1.xpose.msra.mxu0 0.0
    %8187 = vmatprep.subr.mxu0 0.0
    %8188 = vmatpush1.xpose.msra.mxu0 0.0
    %8189 = vmatprep.mubr.f32.mxu0 0.0
    %8190 = vmatmul.mubr.f32.gmra.mrb[0].mxu0 %v8121
    %v8191 = vpop.f32.mrb[0].mxu0
    %v8192 = vadd.f32 0.0, %v8191
    %v8193 = vpop.f32.mrb[0].mxu0
    %8194 = vdwg.mxu0
    %8195 = vrot.lane.b32.xlu0 %v6559, 126
    %v8196 = vpop.permute.xlu0 %8195
    %8197 = vrot.lane.b32.xlu0 %v6537, 122
    %v8198 = vpop.permute.xlu0 %8197
    %v8199 = vsel %vm392, %v8196, 0
    %v8201 = vsel %vm392, %v8198, 0
    %8203 = vmatprep.subr.mxu0 0.0
    %8204 = vmatpush1.xpose.msra.mxu0 %v8201
    %8205 = vmatprep.subr.mxu0 0.0
    %8206 = vmatpush1.xpose.msra.mxu0 0.0
    %8207 = vmatprep.subr.mxu0 0.0
    %8208 = vmatpush1.xpose.msra.mxu0 0.0
    %8209 = vmatprep.subr.mxu0 0.0
    %8210 = vmatpush1.xpose.msra.mxu0 0.0
    %8211 = vmatprep.subr.mxu0 0.0
    %8212 = vmatpush1.xpose.msra.mxu0 0.0
    %8213 = vmatprep.subr.mxu0 0.0
    %8214 = vmatpush1.xpose.msra.mxu0 0.0
    %8215 = vmatprep.subr.mxu0 0.0
    %8216 = vmatpush1.xpose.msra.mxu0 0.0
    %8217 = vmatprep.subr.mxu0 0.0
    %8218 = vmatpush1.xpose.msra.mxu0 0.0
    %8219 = vmatprep.subr.mxu0 0.0
    %8220 = vmatpush1.xpose.msra.mxu0 0.0
    %8221 = vmatprep.subr.mxu0 0.0
    %8222 = vmatpush1.xpose.msra.mxu0 0.0
    %8223 = vmatprep.subr.mxu0 0.0
    %8224 = vmatpush1.xpose.msra.mxu0 0.0
    %8225 = vmatprep.subr.mxu0 0.0
    %8226 = vmatpush1.xpose.msra.mxu0 0.0
    %8227 = vmatprep.subr.mxu0 0.0
    %8228 = vmatpush1.xpose.msra.mxu0 0.0
    %8229 = vmatprep.subr.mxu0 0.0
    %8230 = vmatpush1.xpose.msra.mxu0 0.0
    %8231 = vmatprep.subr.mxu0 0.0
    %8232 = vmatpush1.xpose.msra.mxu0 0.0
    %8233 = vmatprep.subr.mxu0 0.0
    %8234 = vmatpush1.xpose.msra.mxu0 0.0
    %8235 = vmatprep.subr.mxu0 0.0
    %8236 = vmatpush1.xpose.msra.mxu0 0.0
    %8237 = vmatprep.subr.mxu0 0.0
    %8238 = vmatpush1.xpose.msra.mxu0 0.0
    %8239 = vmatprep.subr.mxu0 0.0
    %8240 = vmatpush1.xpose.msra.mxu0 0.0
    %8241 = vmatprep.subr.mxu0 0.0
    %8242 = vmatpush1.xpose.msra.mxu0 0.0
    %8243 = vmatprep.subr.mxu0 0.0
    %8244 = vmatpush1.xpose.msra.mxu0 0.0
    %8245 = vmatprep.subr.mxu0 0.0
    %8246 = vmatpush1.xpose.msra.mxu0 0.0
    %8247 = vmatprep.subr.mxu0 0.0
    %8248 = vmatpush1.xpose.msra.mxu0 0.0
    %8249 = vmatprep.subr.mxu0 0.0
    %8250 = vmatpush1.xpose.msra.mxu0 0.0
    %8251 = vmatprep.subr.mxu0 0.0
    %8252 = vmatpush1.xpose.msra.mxu0 0.0
    %8253 = vmatprep.subr.mxu0 0.0
    %8254 = vmatpush1.xpose.msra.mxu0 0.0
    %8255 = vmatprep.subr.mxu0 0.0
    %8256 = vmatpush1.xpose.msra.mxu0 0.0
    %8257 = vmatprep.subr.mxu0 0.0
    %8258 = vmatpush1.xpose.msra.mxu0 0.0
    %8259 = vmatprep.subr.mxu0 0.0
    %8260 = vmatpush1.xpose.msra.mxu0 0.0
    %8261 = vmatprep.subr.mxu0 0.0
    %8262 = vmatpush1.xpose.msra.mxu0 0.0
    %8263 = vmatprep.subr.mxu0 0.0
    %8264 = vmatpush1.xpose.msra.mxu0 0.0
    %8265 = vmatprep.subr.mxu0 0.0
    %8266 = vmatpush1.xpose.msra.mxu0 0.0
    %8267 = vmatprep.mubr.f32.mxu0 0.0
    %8268 = vmatmul.mubr.f32.gmra.mrb[0].mxu0 %v8199
    %v8269 = vpop.f32.mrb[0].mxu0
    %v8270 = vadd.f32 0.0, %v8269
    %v8271 = vpop.f32.mrb[0].mxu0
    %8272 = vdwg.mxu0
    %8273 = vrot.lane.b32.xlu0 %v6560, 126
    %v8274 = vpop.permute.xlu0 %8273
    %8275 = vrot.lane.b32.xlu0 %v6542, 122
    %v8276 = vpop.permute.xlu0 %8275
    %v8277 = vsel %vm392, %v8274, 0
    %v8279 = vsel %vm392, %v8276, 0
    %8281 = vmatprep.subr.mxu0 0.0
    %8282 = vmatpush1.xpose.msra.mxu0 %v8279
    %8283 = vmatprep.subr.mxu0 0.0
    %8284 = vmatpush1.xpose.msra.mxu0 0.0
    %8285 = vmatprep.subr.mxu0 0.0
    %8286 = vmatpush1.xpose.msra.mxu0 0.0
    %8287 = vmatprep.subr.mxu0 0.0
    %8288 = vmatpush1.xpose.msra.mxu0 0.0
    %8289 = vmatprep.subr.mxu0 0.0
    %8290 = vmatpush1.xpose.msra.mxu0 0.0
    %8291 = vmatprep.subr.mxu0 0.0
    %8292 = vmatpush1.xpose.msra.mxu0 0.0
    %8293 = vmatprep.subr.mxu0 0.0
    %8294 = vmatpush1.xpose.msra.mxu0 0.0
    %8295 = vmatprep.subr.mxu0 0.0
    %8296 = vmatpush1.xpose.msra.mxu0 0.0
    %8297 = vmatprep.subr.mxu0 0.0
    %8298 = vmatpush1.xpose.msra.mxu0 0.0
    %8299 = vmatprep.subr.mxu0 0.0
    %8300 = vmatpush1.xpose.msra.mxu0 0.0
    %8301 = vmatprep.subr.mxu0 0.0
    %8302 = vmatpush1.xpose.msra.mxu0 0.0
    %8303 = vmatprep.subr.mxu0 0.0
    %8304 = vmatpush1.xpose.msra.mxu0 0.0
    %8305 = vmatprep.subr.mxu0 0.0
    %8306 = vmatpush1.xpose.msra.mxu0 0.0
    %8307 = vmatprep.subr.mxu0 0.0
    %8308 = vmatpush1.xpose.msra.mxu0 0.0
    %8309 = vmatprep.subr.mxu0 0.0
    %8310 = vmatpush1.xpose.msra.mxu0 0.0
    %8311 = vmatprep.subr.mxu0 0.0
    %8312 = vmatpush1.xpose.msra.mxu0 0.0
    %8313 = vmatprep.subr.mxu0 0.0
    %8314 = vmatpush1.xpose.msra.mxu0 0.0
    %8315 = vmatprep.subr.mxu0 0.0
    %8316 = vmatpush1.xpose.msra.mxu0 0.0
    %8317 = vmatprep.subr.mxu0 0.0
    %8318 = vmatpush1.xpose.msra.mxu0 0.0
    %8319 = vmatprep.subr.mxu0 0.0
    %8320 = vmatpush1.xpose.msra.mxu0 0.0
    %8321 = vmatprep.subr.mxu0 0.0
    %8322 = vmatpush1.xpose.msra.mxu0 0.0
    %8323 = vmatprep.subr.mxu0 0.0
    %8324 = vmatpush1.xpose.msra.mxu0 0.0
    %8325 = vmatprep.subr.mxu0 0.0
    %8326 = vmatpush1.xpose.msra.mxu0 0.0
    %8327 = vmatprep.subr.mxu0 0.0
    %8328 = vmatpush1.xpose.msra.mxu0 0.0
    %8329 = vmatprep.subr.mxu0 0.0
    %8330 = vmatpush1.xpose.msra.mxu0 0.0
    %8331 = vmatprep.subr.mxu0 0.0
    %8332 = vmatpush1.xpose.msra.mxu0 0.0
    %8333 = vmatprep.subr.mxu0 0.0
    %8334 = vmatpush1.xpose.msra.mxu0 0.0
    %8335 = vmatprep.subr.mxu0 0.0
    %8336 = vmatpush1.xpose.msra.mxu0 0.0
    %8337 = vmatprep.subr.mxu0 0.0
    %8338 = vmatpush1.xpose.msra.mxu0 0.0
    %8339 = vmatprep.subr.mxu0 0.0
    %8340 = vmatpush1.xpose.msra.mxu0 0.0
    %8341 = vmatprep.subr.mxu0 0.0
    %8342 = vmatpush1.xpose.msra.mxu0 0.0
    %8343 = vmatprep.subr.mxu0 0.0
    %8344 = vmatpush1.xpose.msra.mxu0 0.0
    %8345 = vmatprep.mubr.f32.mxu0 0.0
    %8346 = vmatmul.mubr.f32.gmra.mrb[0].mxu0 %v8277
    %v8347 = vpop.f32.mrb[0].mxu0
    %v8348 = vadd.f32 0.0, %v8347
    %v8349 = vpop.f32.mrb[0].mxu0
    %8350 = vdwg.mxu0
    %8351 = vrot.lane.b32.xlu0 %v6561, 126
    %v8352 = vpop.permute.xlu0 %8351
    %8353 = vrot.lane.b32.xlu0 %v6547, 122
    %v8354 = vpop.permute.xlu0 %8353
    %v8355 = vsel %vm392, %v8352, 0
    %v8357 = vsel %vm392, %v8354, 0
    %8359 = vmatprep.subr.mxu0 0.0
    %8360 = vmatpush1.xpose.msra.mxu0 %v8357
    %8361 = vmatprep.subr.mxu0 0.0
    %8362 = vmatpush1.xpose.msra.mxu0 0.0
    %8363 = vmatprep.subr.mxu0 0.0
    %8364 = vmatpush1.xpose.msra.mxu0 0.0
    %8365 = vmatprep.subr.mxu0 0.0
    %8366 = vmatpush1.xpose.msra.mxu0 0.0
    %8367 = vmatprep.subr.mxu0 0.0
    %8368 = vmatpush1.xpose.msra.mxu0 0.0
    %8369 = vmatprep.subr.mxu0 0.0
    %8370 = vmatpush1.xpose.msra.mxu0 0.0
    %8371 = vmatprep.subr.mxu0 0.0
    %8372 = vmatpush1.xpose.msra.mxu0 0.0
    %8373 = vmatprep.subr.mxu0 0.0
    %8374 = vmatpush1.xpose.msra.mxu0 0.0
    %8375 = vmatprep.subr.mxu0 0.0
    %8376 = vmatpush1.xpose.msra.mxu0 0.0
    %8377 = vmatprep.subr.mxu0 0.0
    %8378 = vmatpush1.xpose.msra.mxu0 0.0
    %8379 = vmatprep.subr.mxu0 0.0
    %8380 = vmatpush1.xpose.msra.mxu0 0.0
    %8381 = vmatprep.subr.mxu0 0.0
    %8382 = vmatpush1.xpose.msra.mxu0 0.0
    %8383 = vmatprep.subr.mxu0 0.0
    %8384 = vmatpush1.xpose.msra.mxu0 0.0
    %8385 = vmatprep.subr.mxu0 0.0
    %8386 = vmatpush1.xpose.msra.mxu0 0.0
    %8387 = vmatprep.subr.mxu0 0.0
    %8388 = vmatpush1.xpose.msra.mxu0 0.0
    %8389 = vmatprep.subr.mxu0 0.0
    %8390 = vmatpush1.xpose.msra.mxu0 0.0
    %8391 = vmatprep.subr.mxu0 0.0
    %8392 = vmatpush1.xpose.msra.mxu0 0.0
    %8393 = vmatprep.subr.mxu0 0.0
    %8394 = vmatpush1.xpose.msra.mxu0 0.0
    %8395 = vmatprep.subr.mxu0 0.0
    %8396 = vmatpush1.xpose.msra.mxu0 0.0
    %8397 = vmatprep.subr.mxu0 0.0
    %8398 = vmatpush1.xpose.msra.mxu0 0.0
    %8399 = vmatprep.subr.mxu0 0.0
    %8400 = vmatpush1.xpose.msra.mxu0 0.0
    %8401 = vmatprep.subr.mxu0 0.0
    %8402 = vmatpush1.xpose.msra.mxu0 0.0
    %8403 = vmatprep.subr.mxu0 0.0
    %8404 = vmatpush1.xpose.msra.mxu0 0.0
    %8405 = vmatprep.subr.mxu0 0.0
    %8406 = vmatpush1.xpose.msra.mxu0 0.0
    %8407 = vmatprep.subr.mxu0 0.0
    %8408 = vmatpush1.xpose.msra.mxu0 0.0
    %8409 = vmatprep.subr.mxu0 0.0
    %8410 = vmatpush1.xpose.msra.mxu0 0.0
    %8411 = vmatprep.subr.mxu0 0.0
    %8412 = vmatpush1.xpose.msra.mxu0 0.0
    %8413 = vmatprep.subr.mxu0 0.0
    %8414 = vmatpush1.xpose.msra.mxu0 0.0
    %8415 = vmatprep.subr.mxu0 0.0
    %8416 = vmatpush1.xpose.msra.mxu0 0.0
    %8417 = vmatprep.subr.mxu0 0.0
    %8418 = vmatpush1.xpose.msra.mxu0 0.0
    %8419 = vmatprep.subr.mxu0 0.0
    %8420 = vmatpush1.xpose.msra.mxu0 0.0
    %8421 = vmatprep.subr.mxu0 0.0
    %8422 = vmatpush1.xpose.msra.mxu0 0.0
    %8423 = vmatprep.mubr.f32.mxu0 0.0
    %8424 = vmatmul.mubr.f32.gmra.mrb[0].mxu0 %v8355
    %v8425 = vpop.f32.mrb[0].mxu0
    %v8426 = vadd.f32 0.0, %v8425
    %v8427 = vpop.f32.mrb[0].mxu0
    %8428 = vdwg.mxu0
    %8429 = vrot.lane.b32.xlu0 %v6562, 126
    %v8430 = vpop.permute.xlu0 %8429
    %8431 = vrot.lane.b32.xlu0 %v6552, 122
    %v8432 = vpop.permute.xlu0 %8431
    %v8433 = vsel %vm392, %v8430, 0
    %v8435 = vsel %vm392, %v8432, 0
    %8437 = vmatprep.subr.mxu0 0.0
    %8438 = vmatpush1.xpose.msra.mxu0 %v8435
    %8439 = vmatprep.subr.mxu0 0.0
    %8440 = vmatpush1.xpose.msra.mxu0 0.0
    %8441 = vmatprep.subr.mxu0 0.0
    %8442 = vmatpush1.xpose.msra.mxu0 0.0
    %8443 = vmatprep.subr.mxu0 0.0
    %8444 = vmatpush1.xpose.msra.mxu0 0.0
    %8445 = vmatprep.subr.mxu0 0.0
    %8446 = vmatpush1.xpose.msra.mxu0 0.0
    %8447 = vmatprep.subr.mxu0 0.0
    %8448 = vmatpush1.xpose.msra.mxu0 0.0
    %8449 = vmatprep.subr.mxu0 0.0
    %8450 = vmatpush1.xpose.msra.mxu0 0.0
    %8451 = vmatprep.subr.mxu0 0.0
    %8452 = vmatpush1.xpose.msra.mxu0 0.0
    %8453 = vmatprep.subr.mxu0 0.0
    %8454 = vmatpush1.xpose.msra.mxu0 0.0
    %8455 = vmatprep.subr.mxu0 0.0
    %8456 = vmatpush1.xpose.msra.mxu0 0.0
    %8457 = vmatprep.subr.mxu0 0.0
    %8458 = vmatpush1.xpose.msra.mxu0 0.0
    %8459 = vmatprep.subr.mxu0 0.0
    %8460 = vmatpush1.xpose.msra.mxu0 0.0
    %8461 = vmatprep.subr.mxu0 0.0
    %8462 = vmatpush1.xpose.msra.mxu0 0.0
    %8463 = vmatprep.subr.mxu0 0.0
    %8464 = vmatpush1.xpose.msra.mxu0 0.0
    %8465 = vmatprep.subr.mxu0 0.0
    %8466 = vmatpush1.xpose.msra.mxu0 0.0
    %8467 = vmatprep.subr.mxu0 0.0
    %8468 = vmatpush1.xpose.msra.mxu0 0.0
    %8469 = vmatprep.subr.mxu0 0.0
    %8470 = vmatpush1.xpose.msra.mxu0 0.0
    %8471 = vmatprep.subr.mxu0 0.0
    %8472 = vmatpush1.xpose.msra.mxu0 0.0
    %8473 = vmatprep.subr.mxu0 0.0
    %8474 = vmatpush1.xpose.msra.mxu0 0.0
    %8475 = vmatprep.subr.mxu0 0.0
    %8476 = vmatpush1.xpose.msra.mxu0 0.0
    %8477 = vmatprep.subr.mxu0 0.0
    %8478 = vmatpush1.xpose.msra.mxu0 0.0
    %8479 = vmatprep.subr.mxu0 0.0
    %8480 = vmatpush1.xpose.msra.mxu0 0.0
    %8481 = vmatprep.subr.mxu0 0.0
    %8482 = vmatpush1.xpose.msra.mxu0 0.0
    %8483 = vmatprep.subr.mxu0 0.0
    %8484 = vmatpush1.xpose.msra.mxu0 0.0
    %8485 = vmatprep.subr.mxu0 0.0
    %8486 = vmatpush1.xpose.msra.mxu0 0.0
    %8487 = vmatprep.subr.mxu0 0.0
    %8488 = vmatpush1.xpose.msra.mxu0 0.0
    %8489 = vmatprep.subr.mxu0 0.0
    %8490 = vmatpush1.xpose.msra.mxu0 0.0
    %8491 = vmatprep.subr.mxu0 0.0
    %8492 = vmatpush1.xpose.msra.mxu0 0.0
    %8493 = vmatprep.subr.mxu0 0.0
    %8494 = vmatpush1.xpose.msra.mxu0 0.0
    %8495 = vmatprep.subr.mxu0 0.0
    %8496 = vmatpush1.xpose.msra.mxu0 0.0
    %8497 = vmatprep.subr.mxu0 0.0
    %8498 = vmatpush1.xpose.msra.mxu0 0.0
    %8499 = vmatprep.subr.mxu0 0.0
    %8500 = vmatpush1.xpose.msra.mxu0 0.0
    %8501 = vmatprep.mubr.f32.mxu0 0.0
    %8502 = vmatmul.mubr.f32.gmra.mrb[0].mxu0 %v8433
    %v8503 = vpop.f32.mrb[0].mxu0
    %v8504 = vadd.f32 0.0, %v8503
    %v8505 = vpop.f32.mrb[0].mxu0
    %8506 = vdwg.mxu0
    %v8507 = vsel %vm205, %v7958, -inf
    %8508 = vmax.xlane.f32.xlu0 %v8507
    %v8509 = vpop.xlane.xlu0 %8508
    %v8510 = vsel %vm205, %v8036, -inf
    %8511 = vmax.xlane.f32.xlu0 %v8510
    %v8512 = vpop.xlane.xlu0 %8511
    %v8513 = vsel %vm205, %v8114, -inf
    %8514 = vmax.xlane.f32.xlu0 %v8513
    %v8515 = vpop.xlane.xlu0 %8514
    %v8516 = vsel %vm205, %v8192, -inf
    %8517 = vmax.xlane.f32.xlu0 %v8516
    %v8518 = vpop.xlane.xlu0 %8517
    %v8519 = vsel %vm205, %v8270, -inf
    %8520 = vmax.xlane.f32.xlu0 %v8519
    %v8521 = vpop.xlane.xlu0 %8520
    %v8522 = vsel %vm205, %v8348, -inf
    %8523 = vmax.xlane.f32.xlu0 %v8522
    %v8524 = vpop.xlane.xlu0 %8523
    %v8525 = vsel %vm205, %v8426, -inf
    %8526 = vmax.xlane.f32.xlu0 %v8525
    %v8527 = vpop.xlane.xlu0 %8526
    %v8528 = vsel %vm205, %v8504, -inf
    %8529 = vmax.xlane.f32.xlu0 %v8528
    %v8530 = vpop.xlane.xlu0 %8529
    %v8531 = vsub.f32 %v7958, %v8509
    %v8532 = vsub.f32 %v8036, %v8512
    %v8533 = vsub.f32 %v8114, %v8515
    %v8534 = vsub.f32 %v8192, %v8518
    %v8535 = vsub.f32 %v8270, %v8521
    %v8536 = vsub.f32 %v8348, %v8524
    %v8537 = vsub.f32 %v8426, %v8527
    %v8538 = vsub.f32 %v8504, %v8530
    %v8539 = vmul.f32 %v8531, 1.442695
    %v8540 = vpow.pop %v8539
    %v8541 = vmul.f32 %v8532, 1.442695
    %v8542 = vpow.pop %v8541
    %v8543 = vmul.f32 %v8533, 1.442695
    %v8544 = vpow.pop %v8543
    %v8545 = vmul.f32 %v8534, 1.442695
    %v8546 = vpow.pop %v8545
    %v8547 = vmul.f32 %v8535, 1.442695
    %v8548 = vpow.pop %v8547
    %v8549 = vmul.f32 %v8536, 1.442695
    %v8550 = vpow.pop %v8549
    %v8551 = vmul.f32 %v8537, 1.442695
    %v8552 = vpow.pop %v8551
    %v8553 = vmul.f32 %v8538, 1.442695
    %v8554 = vpow.pop %v8553
    %v8555 = vsel %vm205, %v8540, 0.0
    %8556 = vadd.xlane.f32.xlu0 %v8555
    %v8557 = vpop.xlane.xlu0 %8556
    %v8558 = vsel %vm205, %v8542, 0.0
    %8559 = vadd.xlane.f32.xlu0 %v8558
    %v8560 = vpop.xlane.xlu0 %8559
    %v8561 = vsel %vm205, %v8544, 0.0
    %8562 = vadd.xlane.f32.xlu0 %v8561
    %v8563 = vpop.xlane.xlu0 %8562
    %v8564 = vsel %vm205, %v8546, 0.0
    %8565 = vadd.xlane.f32.xlu0 %v8564
    %v8566 = vpop.xlane.xlu0 %8565
    %v8567 = vsel %vm205, %v8548, 0.0
    %8568 = vadd.xlane.f32.xlu0 %v8567
    %v8569 = vpop.xlane.xlu0 %8568
    %v8570 = vsel %vm205, %v8550, 0.0
    %8571 = vadd.xlane.f32.xlu0 %v8570
    %v8572 = vpop.xlane.xlu0 %8571
    %v8573 = vsel %vm205, %v8552, 0.0
    %8574 = vadd.xlane.f32.xlu0 %v8573
    %v8575 = vpop.xlane.xlu0 %8574
    %v8576 = vsel %vm205, %v8554, 0.0
    %8577 = vadd.xlane.f32.xlu0 %v8576
    %v8578 = vpop.xlane.xlu0 %8577
    %v8579 = vrcp.pop %v8557
    %v8580 = vrcp.pop %v8560
    %v8581 = vrcp.pop %v8563
    %v8582 = vrcp.pop %v8566
    %v8583 = vrcp.pop %v8569
    %v8584 = vrcp.pop %v8572
    %v8585 = vrcp.pop %v8575
    %v8586 = vrcp.pop %v8578
    %v8587 = vmul.f32 %v8540, %v8579
    %v8588 = vmul.f32 %v8542, %v8580
    %v8589 = vmul.f32 %v8544, %v8581
    %v8590 = vmul.f32 %v8546, %v8582
    %v8591 = vmul.f32 %v8548, %v8583
    %v8592 = vmul.f32 %v8550, %v8584
    %v8593 = vmul.f32 %v8552, %v8585
    %v8594 = vmul.f32 %v8554, %v8586
    %8595 = vrot.lane.b32.xlu0 %v6517, 118
    %v8596 = vpop.permute.xlu0 %8595
    %v8599 = vsel %vm205, %v8587, 0
    %8601 = vmatprep.subr.mxu0 0.0
    %8602 = vmatpush1.msra.mxu0 %v8596
    %8603 = vmatprep.subr.mxu0 0.0
    %8604 = vmatpush1.msra.mxu0 0.0
    %8605 = vmatprep.subr.mxu0 0.0
    %8606 = vmatpush1.msra.mxu0 0.0
    %8607 = vmatprep.subr.mxu0 0.0
    %8608 = vmatpush1.msra.mxu0 0.0
    %8609 = vmatprep.subr.mxu0 0.0
    %8610 = vmatpush1.msra.mxu0 0.0
    %8611 = vmatprep.subr.mxu0 0.0
    %8612 = vmatpush1.msra.mxu0 0.0
    %8613 = vmatprep.subr.mxu0 0.0
    %8614 = vmatpush1.msra.mxu0 0.0
    %8615 = vmatprep.subr.mxu0 0.0
    %8616 = vmatpush1.msra.mxu0 0.0
    %8617 = vmatprep.subr.mxu0 0.0
    %8618 = vmatpush1.msra.mxu0 0.0
    %8619 = vmatprep.subr.mxu0 0.0
    %8620 = vmatpush1.msra.mxu0 0.0
    %8621 = vmatprep.subr.mxu0 0.0
    %8622 = vmatpush1.msra.mxu0 0.0
    %8623 = vmatprep.subr.mxu0 0.0
    %8624 = vmatpush1.msra.mxu0 0.0
    %8625 = vmatprep.subr.mxu0 0.0
    %8626 = vmatpush1.msra.mxu0 0.0
    %8627 = vmatprep.subr.mxu0 0.0
    %8628 = vmatpush1.msra.mxu0 0.0
    %8629 = vmatprep.subr.mxu0 0.0
    %8630 = vmatpush1.msra.mxu0 0.0
    %8631 = vmatprep.subr.mxu0 0.0
    %8632 = vmatpush1.msra.mxu0 0.0
    %8633 = vmatprep.subr.mxu0 0.0
    %8634 = vmatpush1.msra.mxu0 0.0
    %8635 = vmatprep.subr.mxu0 0.0
    %8636 = vmatpush1.msra.mxu0 0.0
    %8637 = vmatprep.subr.mxu0 0.0
    %8638 = vmatpush1.msra.mxu0 0.0
    %8639 = vmatprep.subr.mxu0 0.0
    %8640 = vmatpush1.msra.mxu0 0.0
    %8641 = vmatprep.subr.mxu0 0.0
    %8642 = vmatpush1.msra.mxu0 0.0
    %8643 = vmatprep.subr.mxu0 0.0
    %8644 = vmatpush1.msra.mxu0 0.0
    %8645 = vmatprep.subr.mxu0 0.0
    %8646 = vmatpush1.msra.mxu0 0.0
    %8647 = vmatprep.subr.mxu0 0.0
    %8648 = vmatpush1.msra.mxu0 0.0
    %8649 = vmatprep.subr.mxu0 0.0
    %8650 = vmatpush1.msra.mxu0 0.0
    %8651 = vmatprep.subr.mxu0 0.0
    %8652 = vmatpush1.msra.mxu0 0.0
    %8653 = vmatprep.subr.mxu0 0.0
    %8654 = vmatpush1.msra.mxu0 0.0
    %8655 = vmatprep.subr.mxu0 0.0
    %8656 = vmatpush1.msra.mxu0 0.0
    %8657 = vmatprep.subr.mxu0 0.0
    %8658 = vmatpush1.msra.mxu0 0.0
    %8659 = vmatprep.subr.mxu0 0.0
    %8660 = vmatpush1.msra.mxu0 0.0
    %8661 = vmatprep.subr.mxu0 0.0
    %8662 = vmatpush1.msra.mxu0 0.0
    %8663 = vmatprep.subr.mxu0 0.0
    %8664 = vmatpush1.msra.mxu0 0.0
    %8665 = vmatprep.mubr.f32.mxu0 0.0
    %8666 = vmatmul.mubr.f32.gmra.mrb[0].mxu0 %v8599
    %v8667 = vpop.f32.mrb[0].mxu0
    %v8668 = vadd.f32 0.0, %v8667
    %v8669 = vpop.f32.mrb[0].mxu0
    %8670 = vdwg.mxu0
    %8671 = vrot.lane.b32.xlu0 %v6522, 118
    %v8672 = vpop.permute.xlu0 %8671
    %v8675 = vsel %vm205, %v8588, 0
    %8677 = vmatprep.subr.mxu0 0.0
    %8678 = vmatpush1.msra.mxu0 %v8672
    %8679 = vmatprep.subr.mxu0 0.0
    %8680 = vmatpush1.msra.mxu0 0.0
    %8681 = vmatprep.subr.mxu0 0.0
    %8682 = vmatpush1.msra.mxu0 0.0
    %8683 = vmatprep.subr.mxu0 0.0
    %8684 = vmatpush1.msra.mxu0 0.0
    %8685 = vmatprep.subr.mxu0 0.0
    %8686 = vmatpush1.msra.mxu0 0.0
    %8687 = vmatprep.subr.mxu0 0.0
    %8688 = vmatpush1.msra.mxu0 0.0
    %8689 = vmatprep.subr.mxu0 0.0
    %8690 = vmatpush1.msra.mxu0 0.0
    %8691 = vmatprep.subr.mxu0 0.0
    %8692 = vmatpush1.msra.mxu0 0.0
    %8693 = vmatprep.subr.mxu0 0.0
    %8694 = vmatpush1.msra.mxu0 0.0
    %8695 = vmatprep.subr.mxu0 0.0
    %8696 = vmatpush1.msra.mxu0 0.0
    %8697 = vmatprep.subr.mxu0 0.0
    %8698 = vmatpush1.msra.mxu0 0.0
    %8699 = vmatprep.subr.mxu0 0.0
    %8700 = vmatpush1.msra.mxu0 0.0
    %8701 = vmatprep.subr.mxu0 0.0
    %8702 = vmatpush1.msra.mxu0 0.0
    %8703 = vmatprep.subr.mxu0 0.0
    %8704 = vmatpush1.msra.mxu0 0.0
    %8705 = vmatprep.subr.mxu0 0.0
    %8706 = vmatpush1.msra.mxu0 0.0
    %8707 = vmatprep.subr.mxu0 0.0
    %8708 = vmatpush1.msra.mxu0 0.0
    %8709 = vmatprep.subr.mxu0 0.0
    %8710 = vmatpush1.msra.mxu0 0.0
    %8711 = vmatprep.subr.mxu0 0.0
    %8712 = vmatpush1.msra.mxu0 0.0
    %8713 = vmatprep.subr.mxu0 0.0
    %8714 = vmatpush1.msra.mxu0 0.0
    %8715 = vmatprep.subr.mxu0 0.0
    %8716 = vmatpush1.msra.mxu0 0.0
    %8717 = vmatprep.subr.mxu0 0.0
    %8718 = vmatpush1.msra.mxu0 0.0
    %8719 = vmatprep.subr.mxu0 0.0
    %8720 = vmatpush1.msra.mxu0 0.0
    %8721 = vmatprep.subr.mxu0 0.0
    %8722 = vmatpush1.msra.mxu0 0.0
    %8723 = vmatprep.subr.mxu0 0.0
    %8724 = vmatpush1.msra.mxu0 0.0
    %8725 = vmatprep.subr.mxu0 0.0
    %8726 = vmatpush1.msra.mxu0 0.0
    %8727 = vmatprep.subr.mxu0 0.0
    %8728 = vmatpush1.msra.mxu0 0.0
    %8729 = vmatprep.subr.mxu0 0.0
    %8730 = vmatpush1.msra.mxu0 0.0
    %8731 = vmatprep.subr.mxu0 0.0
    %8732 = vmatpush1.msra.mxu0 0.0
    %8733 = vmatprep.subr.mxu0 0.0
    %8734 = vmatpush1.msra.mxu0 0.0
    %8735 = vmatprep.subr.mxu0 0.0
    %8736 = vmatpush1.msra.mxu0 0.0
    %8737 = vmatprep.subr.mxu0 0.0
    %8738 = vmatpush1.msra.mxu0 0.0
    %8739 = vmatprep.subr.mxu0 0.0
    %8740 = vmatpush1.msra.mxu0 0.0
    %8741 = vmatprep.mubr.f32.mxu0 0.0
    %8742 = vmatmul.mubr.f32.gmra.mrb[0].mxu0 %v8675
    %v8743 = vpop.f32.mrb[0].mxu0
    %v8744 = vadd.f32 0.0, %v8743
    %v8745 = vpop.f32.mrb[0].mxu0
    %8746 = vdwg.mxu0
    %8747 = vrot.lane.b32.xlu0 %v6527, 118
    %v8748 = vpop.permute.xlu0 %8747
    %v8751 = vsel %vm205, %v8589, 0
    %8753 = vmatprep.subr.mxu0 0.0
    %8754 = vmatpush1.msra.mxu0 %v8748
    %8755 = vmatprep.subr.mxu0 0.0
    %8756 = vmatpush1.msra.mxu0 0.0
    %8757 = vmatprep.subr.mxu0 0.0
    %8758 = vmatpush1.msra.mxu0 0.0
    %8759 = vmatprep.subr.mxu0 0.0
    %8760 = vmatpush1.msra.mxu0 0.0
    %8761 = vmatprep.subr.mxu0 0.0
    %8762 = vmatpush1.msra.mxu0 0.0
    %8763 = vmatprep.subr.mxu0 0.0
    %8764 = vmatpush1.msra.mxu0 0.0
    %8765 = vmatprep.subr.mxu0 0.0
    %8766 = vmatpush1.msra.mxu0 0.0
    %8767 = vmatprep.subr.mxu0 0.0
    %8768 = vmatpush1.msra.mxu0 0.0
    %8769 = vmatprep.subr.mxu0 0.0
    %8770 = vmatpush1.msra.mxu0 0.0
    %8771 = vmatprep.subr.mxu0 0.0
    %8772 = vmatpush1.msra.mxu0 0.0
    %8773 = vmatprep.subr.mxu0 0.0
    %8774 = vmatpush1.msra.mxu0 0.0
    %8775 = vmatprep.subr.mxu0 0.0
    %8776 = vmatpush1.msra.mxu0 0.0
    %8777 = vmatprep.subr.mxu0 0.0
    %8778 = vmatpush1.msra.mxu0 0.0
    %8779 = vmatprep.subr.mxu0 0.0
    %8780 = vmatpush1.msra.mxu0 0.0
    %8781 = vmatprep.subr.mxu0 0.0
    %8782 = vmatpush1.msra.mxu0 0.0
    %8783 = vmatprep.subr.mxu0 0.0
    %8784 = vmatpush1.msra.mxu0 0.0
    %8785 = vmatprep.subr.mxu0 0.0
    %8786 = vmatpush1.msra.mxu0 0.0
    %8787 = vmatprep.subr.mxu0 0.0
    %8788 = vmatpush1.msra.mxu0 0.0
    %8789 = vmatprep.subr.mxu0 0.0
    %8790 = vmatpush1.msra.mxu0 0.0
    %8791 = vmatprep.subr.mxu0 0.0
    %8792 = vmatpush1.msra.mxu0 0.0
    %8793 = vmatprep.subr.mxu0 0.0
    %8794 = vmatpush1.msra.mxu0 0.0
    %8795 = vmatprep.subr.mxu0 0.0
    %8796 = vmatpush1.msra.mxu0 0.0
    %8797 = vmatprep.subr.mxu0 0.0
    %8798 = vmatpush1.msra.mxu0 0.0
    %8799 = vmatprep.subr.mxu0 0.0
    %8800 = vmatpush1.msra.mxu0 0.0
    %8801 = vmatprep.subr.mxu0 0.0
    %8802 = vmatpush1.msra.mxu0 0.0
    %8803 = vmatprep.subr.mxu0 0.0
    %8804 = vmatpush1.msra.mxu0 0.0
    %8805 = vmatprep.subr.mxu0 0.0
    %8806 = vmatpush1.msra.mxu0 0.0
    %8807 = vmatprep.subr.mxu0 0.0
    %8808 = vmatpush1.msra.mxu0 0.0
    %8809 = vmatprep.subr.mxu0 0.0
    %8810 = vmatpush1.msra.mxu0 0.0
    %8811 = vmatprep.subr.mxu0 0.0
    %8812 = vmatpush1.msra.mxu0 0.0
    %8813 = vmatprep.subr.mxu0 0.0
    %8814 = vmatpush1.msra.mxu0 0.0
    %8815 = vmatprep.subr.mxu0 0.0
    %8816 = vmatpush1.msra.mxu0 0.0
    %8817 = vmatprep.mubr.f32.mxu0 0.0
    %8818 = vmatmul.mubr.f32.gmra.mrb[0].mxu0 %v8751
    %v8819 = vpop.f32.mrb[0].mxu0
    %v8820 = vadd.f32 0.0, %v8819
    %v8821 = vpop.f32.mrb[0].mxu0
    %8822 = vdwg.mxu0
    %8823 = vrot.lane.b32.xlu0 %v6532, 118
    %v8824 = vpop.permute.xlu0 %8823
    %v8827 = vsel %vm205, %v8590, 0
    %8829 = vmatprep.subr.mxu0 0.0
    %8830 = vmatpush1.msra.mxu0 %v8824
    %8831 = vmatprep.subr.mxu0 0.0
    %8832 = vmatpush1.msra.mxu0 0.0
    %8833 = vmatprep.subr.mxu0 0.0
    %8834 = vmatpush1.msra.mxu0 0.0
    %8835 = vmatprep.subr.mxu0 0.0
    %8836 = vmatpush1.msra.mxu0 0.0
    %8837 = vmatprep.subr.mxu0 0.0
    %8838 = vmatpush1.msra.mxu0 0.0
    %8839 = vmatprep.subr.mxu0 0.0
    %8840 = vmatpush1.msra.mxu0 0.0
    %8841 = vmatprep.subr.mxu0 0.0
    %8842 = vmatpush1.msra.mxu0 0.0
    %8843 = vmatprep.subr.mxu0 0.0
    %8844 = vmatpush1.msra.mxu0 0.0
    %8845 = vmatprep.subr.mxu0 0.0
    %8846 = vmatpush1.msra.mxu0 0.0
    %8847 = vmatprep.subr.mxu0 0.0
    %8848 = vmatpush1.msra.mxu0 0.0
    %8849 = vmatprep.subr.mxu0 0.0
    %8850 = vmatpush1.msra.mxu0 0.0
    %8851 = vmatprep.subr.mxu0 0.0
    %8852 = vmatpush1.msra.mxu0 0.0
    %8853 = vmatprep.subr.mxu0 0.0
    %8854 = vmatpush1.msra.mxu0 0.0
    %8855 = vmatprep.subr.mxu0 0.0
    %8856 = vmatpush1.msra.mxu0 0.0
    %8857 = vmatprep.subr.mxu0 0.0
    %8858 = vmatpush1.msra.mxu0 0.0
    %8859 = vmatprep.subr.mxu0 0.0
    %8860 = vmatpush1.msra.mxu0 0.0
    %8861 = vmatprep.subr.mxu0 0.0
    %8862 = vmatpush1.msra.mxu0 0.0
    %8863 = vmatprep.subr.mxu0 0.0
    %8864 = vmatpush1.msra.mxu0 0.0
    %8865 = vmatprep.subr.mxu0 0.0
    %8866 = vmatpush1.msra.mxu0 0.0
    %8867 = vmatprep.subr.mxu0 0.0
    %8868 = vmatpush1.msra.mxu0 0.0
    %8869 = vmatprep.subr.mxu0 0.0
    %8870 = vmatpush1.msra.mxu0 0.0
    %8871 = vmatprep.subr.mxu0 0.0
    %8872 = vmatpush1.msra.mxu0 0.0
    %8873 = vmatprep.subr.mxu0 0.0
    %8874 = vmatpush1.msra.mxu0 0.0
    %8875 = vmatprep.subr.mxu0 0.0
    %8876 = vmatpush1.msra.mxu0 0.0
    %8877 = vmatprep.subr.mxu0 0.0
    %8878 = vmatpush1.msra.mxu0 0.0
    %8879 = vmatprep.subr.mxu0 0.0
    %8880 = vmatpush1.msra.mxu0 0.0
    %8881 = vmatprep.subr.mxu0 0.0
    %8882 = vmatpush1.msra.mxu0 0.0
    %8883 = vmatprep.subr.mxu0 0.0
    %8884 = vmatpush1.msra.mxu0 0.0
    %8885 = vmatprep.subr.mxu0 0.0
    %8886 = vmatpush1.msra.mxu0 0.0
    %8887 = vmatprep.subr.mxu0 0.0
    %8888 = vmatpush1.msra.mxu0 0.0
    %8889 = vmatprep.subr.mxu0 0.0
    %8890 = vmatpush1.msra.mxu0 0.0
    %8891 = vmatprep.subr.mxu0 0.0
    %8892 = vmatpush1.msra.mxu0 0.0
    %8893 = vmatprep.mubr.f32.mxu0 0.0
    %8894 = vmatmul.mubr.f32.gmra.mrb[0].mxu0 %v8827
    %v8895 = vpop.f32.mrb[0].mxu0
    %v8896 = vadd.f32 0.0, %v8895
    %v8897 = vpop.f32.mrb[0].mxu0
    %8898 = vdwg.mxu0
    %8899 = vrot.lane.b32.xlu0 %v6537, 118
    %v8900 = vpop.permute.xlu0 %8899
    %v8903 = vsel %vm205, %v8591, 0
    %8905 = vmatprep.subr.mxu0 0.0
    %8906 = vmatpush1.msra.mxu0 %v8900
    %8907 = vmatprep.subr.mxu0 0.0
    %8908 = vmatpush1.msra.mxu0 0.0
    %8909 = vmatprep.subr.mxu0 0.0
    %8910 = vmatpush1.msra.mxu0 0.0
    %8911 = vmatprep.subr.mxu0 0.0
    %8912 = vmatpush1.msra.mxu0 0.0
    %8913 = vmatprep.subr.mxu0 0.0
    %8914 = vmatpush1.msra.mxu0 0.0
    %8915 = vmatprep.subr.mxu0 0.0
    %8916 = vmatpush1.msra.mxu0 0.0
    %8917 = vmatprep.subr.mxu0 0.0
    %8918 = vmatpush1.msra.mxu0 0.0
    %8919 = vmatprep.subr.mxu0 0.0
    %8920 = vmatpush1.msra.mxu0 0.0
    %8921 = vmatprep.subr.mxu0 0.0
    %8922 = vmatpush1.msra.mxu0 0.0
    %8923 = vmatprep.subr.mxu0 0.0
    %8924 = vmatpush1.msra.mxu0 0.0
    %8925 = vmatprep.subr.mxu0 0.0
    %8926 = vmatpush1.msra.mxu0 0.0
    %8927 = vmatprep.subr.mxu0 0.0
    %8928 = vmatpush1.msra.mxu0 0.0
    %8929 = vmatprep.subr.mxu0 0.0
    %8930 = vmatpush1.msra.mxu0 0.0
    %8931 = vmatprep.subr.mxu0 0.0
    %8932 = vmatpush1.msra.mxu0 0.0
    %8933 = vmatprep.subr.mxu0 0.0
    %8934 = vmatpush1.msra.mxu0 0.0
    %8935 = vmatprep.subr.mxu0 0.0
    %8936 = vmatpush1.msra.mxu0 0.0
    %8937 = vmatprep.subr.mxu0 0.0
    %8938 = vmatpush1.msra.mxu0 0.0
    %8939 = vmatprep.subr.mxu0 0.0
    %8940 = vmatpush1.msra.mxu0 0.0
    %8941 = vmatprep.subr.mxu0 0.0
    %8942 = vmatpush1.msra.mxu0 0.0
    %8943 = vmatprep.subr.mxu0 0.0
    %8944 = vmatpush1.msra.mxu0 0.0
    %8945 = vmatprep.subr.mxu0 0.0
    %8946 = vmatpush1.msra.mxu0 0.0
    %8947 = vmatprep.subr.mxu0 0.0
    %8948 = vmatpush1.msra.mxu0 0.0
    %8949 = vmatprep.subr.mxu0 0.0
    %8950 = vmatpush1.msra.mxu0 0.0
    %8951 = vmatprep.subr.mxu0 0.0
    %8952 = vmatpush1.msra.mxu0 0.0
    %8953 = vmatprep.subr.mxu0 0.0
    %8954 = vmatpush1.msra.mxu0 0.0
    %8955 = vmatprep.subr.mxu0 0.0
    %8956 = vmatpush1.msra.mxu0 0.0
    %8957 = vmatprep.subr.mxu0 0.0
    %8958 = vmatpush1.msra.mxu0 0.0
    %8959 = vmatprep.subr.mxu0 0.0
    %8960 = vmatpush1.msra.mxu0 0.0
    %8961 = vmatprep.subr.mxu0 0.0
    %8962 = vmatpush1.msra.mxu0 0.0
    %8963 = vmatprep.subr.mxu0 0.0
    %8964 = vmatpush1.msra.mxu0 0.0
    %8965 = vmatprep.subr.mxu0 0.0
    %8966 = vmatpush1.msra.mxu0 0.0
    %8967 = vmatprep.subr.mxu0 0.0
    %8968 = vmatpush1.msra.mxu0 0.0
    %8969 = vmatprep.mubr.f32.mxu0 0.0
    %8970 = vmatmul.mubr.f32.gmra.mrb[0].mxu0 %v8903
    %v8971 = vpop.f32.mrb[0].mxu0
    %v8972 = vadd.f32 0.0, %v8971
    %v8973 = vpop.f32.mrb[0].mxu0
    %8974 = vdwg.mxu0
    %8975 = vrot.lane.b32.xlu0 %v6542, 118
    %v8976 = vpop.permute.xlu0 %8975
    %v8979 = vsel %vm205, %v8592, 0
    %8981 = vmatprep.subr.mxu0 0.0
    %8982 = vmatpush1.msra.mxu0 %v8976
    %8983 = vmatprep.subr.mxu0 0.0
    %8984 = vmatpush1.msra.mxu0 0.0
    %8985 = vmatprep.subr.mxu0 0.0
    %8986 = vmatpush1.msra.mxu0 0.0
    %8987 = vmatprep.subr.mxu0 0.0
    %8988 = vmatpush1.msra.mxu0 0.0
    %8989 = vmatprep.subr.mxu0 0.0
    %8990 = vmatpush1.msra.mxu0 0.0
    %8991 = vmatprep.subr.mxu0 0.0
    %8992 = vmatpush1.msra.mxu0 0.0
    %8993 = vmatprep.subr.mxu0 0.0
    %8994 = vmatpush1.msra.mxu0 0.0
    %8995 = vmatprep.subr.mxu0 0.0
    %8996 = vmatpush1.msra.mxu0 0.0
    %8997 = vmatprep.subr.mxu0 0.0
    %8998 = vmatpush1.msra.mxu0 0.0
    %8999 = vmatprep.subr.mxu0 0.0
    %9000 = vmatpush1.msra.mxu0 0.0
    %9001 = vmatprep.subr.mxu0 0.0
    %9002 = vmatpush1.msra.mxu0 0.0
    %9003 = vmatprep.subr.mxu0 0.0
    %9004 = vmatpush1.msra.mxu0 0.0
    %9005 = vmatprep.subr.mxu0 0.0
    %9006 = vmatpush1.msra.mxu0 0.0
    %9007 = vmatprep.subr.mxu0 0.0
    %9008 = vmatpush1.msra.mxu0 0.0
    %9009 = vmatprep.subr.mxu0 0.0
    %9010 = vmatpush1.msra.mxu0 0.0
    %9011 = vmatprep.subr.mxu0 0.0
    %9012 = vmatpush1.msra.mxu0 0.0
    %9013 = vmatprep.subr.mxu0 0.0
    %9014 = vmatpush1.msra.mxu0 0.0
    %9015 = vmatprep.subr.mxu0 0.0
    %9016 = vmatpush1.msra.mxu0 0.0
    %9017 = vmatprep.subr.mxu0 0.0
    %9018 = vmatpush1.msra.mxu0 0.0
    %9019 = vmatprep.subr.mxu0 0.0
    %9020 = vmatpush1.msra.mxu0 0.0
    %9021 = vmatprep.subr.mxu0 0.0
    %9022 = vmatpush1.msra.mxu0 0.0
    %9023 = vmatprep.subr.mxu0 0.0
    %9024 = vmatpush1.msra.mxu0 0.0
    %9025 = vmatprep.subr.mxu0 0.0
    %9026 = vmatpush1.msra.mxu0 0.0
    %9027 = vmatprep.subr.mxu0 0.0
    %9028 = vmatpush1.msra.mxu0 0.0
    %9029 = vmatprep.subr.mxu0 0.0
    %9030 = vmatpush1.msra.mxu0 0.0
    %9031 = vmatprep.subr.mxu0 0.0
    %9032 = vmatpush1.msra.mxu0 0.0
    %9033 = vmatprep.subr.mxu0 0.0
    %9034 = vmatpush1.msra.mxu0 0.0
    %9035 = vmatprep.subr.mxu0 0.0
    %9036 = vmatpush1.msra.mxu0 0.0
    %9037 = vmatprep.subr.mxu0 0.0
    %9038 = vmatpush1.msra.mxu0 0.0
    %9039 = vmatprep.subr.mxu0 0.0
    %9040 = vmatpush1.msra.mxu0 0.0
    %9041 = vmatprep.subr.mxu0 0.0
    %9042 = vmatpush1.msra.mxu0 0.0
    %9043 = vmatprep.subr.mxu0 0.0
    %9044 = vmatpush1.msra.mxu0 0.0
    %9045 = vmatprep.mubr.f32.mxu0 0.0
    %9046 = vmatmul.mubr.f32.gmra.mrb[0].mxu0 %v8979
    %v9047 = vpop.f32.mrb[0].mxu0
    %v9048 = vadd.f32 0.0, %v9047
    %v9049 = vpop.f32.mrb[0].mxu0
    %9050 = vdwg.mxu0
    %9051 = vrot.lane.b32.xlu0 %v6547, 118
    %v9052 = vpop.permute.xlu0 %9051
    %v9055 = vsel %vm205, %v8593, 0
    %9057 = vmatprep.subr.mxu0 0.0
    %9058 = vmatpush1.msra.mxu0 %v9052
    %9059 = vmatprep.subr.mxu0 0.0
    %9060 = vmatpush1.msra.mxu0 0.0
    %9061 = vmatprep.subr.mxu0 0.0
    %9062 = vmatpush1.msra.mxu0 0.0
    %9063 = vmatprep.subr.mxu0 0.0
    %9064 = vmatpush1.msra.mxu0 0.0
    %9065 = vmatprep.subr.mxu0 0.0
    %9066 = vmatpush1.msra.mxu0 0.0
    %9067 = vmatprep.subr.mxu0 0.0
    %9068 = vmatpush1.msra.mxu0 0.0
    %9069 = vmatprep.subr.mxu0 0.0
    %9070 = vmatpush1.msra.mxu0 0.0
    %9071 = vmatprep.subr.mxu0 0.0
    %9072 = vmatpush1.msra.mxu0 0.0
    %9073 = vmatprep.subr.mxu0 0.0
    %9074 = vmatpush1.msra.mxu0 0.0
    %9075 = vmatprep.subr.mxu0 0.0
    %9076 = vmatpush1.msra.mxu0 0.0
    %9077 = vmatprep.subr.mxu0 0.0
    %9078 = vmatpush1.msra.mxu0 0.0
    %9079 = vmatprep.subr.mxu0 0.0
    %9080 = vmatpush1.msra.mxu0 0.0
    %9081 = vmatprep.subr.mxu0 0.0
    %9082 = vmatpush1.msra.mxu0 0.0
    %9083 = vmatprep.subr.mxu0 0.0
    %9084 = vmatpush1.msra.mxu0 0.0
    %9085 = vmatprep.subr.mxu0 0.0
    %9086 = vmatpush1.msra.mxu0 0.0
    %9087 = vmatprep.subr.mxu0 0.0
    %9088 = vmatpush1.msra.mxu0 0.0
    %9089 = vmatprep.subr.mxu0 0.0
    %9090 = vmatpush1.msra.mxu0 0.0
    %9091 = vmatprep.subr.mxu0 0.0
    %9092 = vmatpush1.msra.mxu0 0.0
    %9093 = vmatprep.subr.mxu0 0.0
    %9094 = vmatpush1.msra.mxu0 0.0
    %9095 = vmatprep.subr.mxu0 0.0
    %9096 = vmatpush1.msra.mxu0 0.0
    %9097 = vmatprep.subr.mxu0 0.0
    %9098 = vmatpush1.msra.mxu0 0.0
    %9099 = vmatprep.subr.mxu0 0.0
    %9100 = vmatpush1.msra.mxu0 0.0
    %9101 = vmatprep.subr.mxu0 0.0
    %9102 = vmatpush1.msra.mxu0 0.0
    %9103 = vmatprep.subr.mxu0 0.0
    %9104 = vmatpush1.msra.mxu0 0.0
    %9105 = vmatprep.subr.mxu0 0.0
    %9106 = vmatpush1.msra.mxu0 0.0
    %9107 = vmatprep.subr.mxu0 0.0
    %9108 = vmatpush1.msra.mxu0 0.0
    %9109 = vmatprep.subr.mxu0 0.0
    %9110 = vmatpush1.msra.mxu0 0.0
    %9111 = vmatprep.subr.mxu0 0.0
    %9112 = vmatpush1.msra.mxu0 0.0
    %9113 = vmatprep.subr.mxu0 0.0
    %9114 = vmatpush1.msra.mxu0 0.0
    %9115 = vmatprep.subr.mxu0 0.0
    %9116 = vmatpush1.msra.mxu0 0.0
    %9117 = vmatprep.subr.mxu0 0.0
    %9118 = vmatpush1.msra.mxu0 0.0
    %9119 = vmatprep.subr.mxu0 0.0
    %9120 = vmatpush1.msra.mxu0 0.0
    %9121 = vmatprep.mubr.f32.mxu0 0.0
    %9122 = vmatmul.mubr.f32.gmra.mrb[0].mxu0 %v9055
    %v9123 = vpop.f32.mrb[0].mxu0
    %v9124 = vadd.f32 0.0, %v9123
    %v9125 = vpop.f32.mrb[0].mxu0
    %9126 = vdwg.mxu0
    %9127 = vrot.lane.b32.xlu0 %v6552, 118
    %v9128 = vpop.permute.xlu0 %9127
    %v9131 = vsel %vm205, %v8594, 0
    %9133 = vmatprep.subr.mxu0 0.0
    %9134 = vmatpush1.msra.mxu0 %v9128
    %9135 = vmatprep.subr.mxu0 0.0
    %9136 = vmatpush1.msra.mxu0 0.0
    %9137 = vmatprep.subr.mxu0 0.0
    %9138 = vmatpush1.msra.mxu0 0.0
    %9139 = vmatprep.subr.mxu0 0.0
    %9140 = vmatpush1.msra.mxu0 0.0
    %9141 = vmatprep.subr.mxu0 0.0
    %9142 = vmatpush1.msra.mxu0 0.0
    %9143 = vmatprep.subr.mxu0 0.0
    %9144 = vmatpush1.msra.mxu0 0.0
    %9145 = vmatprep.subr.mxu0 0.0
    %9146 = vmatpush1.msra.mxu0 0.0
    %9147 = vmatprep.subr.mxu0 0.0
    %9148 = vmatpush1.msra.mxu0 0.0
    %9149 = vmatprep.subr.mxu0 0.0
    %9150 = vmatpush1.msra.mxu0 0.0
    %9151 = vmatprep.subr.mxu0 0.0
    %9152 = vmatpush1.msra.mxu0 0.0
    %9153 = vmatprep.subr.mxu0 0.0
    %9154 = vmatpush1.msra.mxu0 0.0
    %9155 = vmatprep.subr.mxu0 0.0
    %9156 = vmatpush1.msra.mxu0 0.0
    %9157 = vmatprep.subr.mxu0 0.0
    %9158 = vmatpush1.msra.mxu0 0.0
    %9159 = vmatprep.subr.mxu0 0.0
    %9160 = vmatpush1.msra.mxu0 0.0
    %9161 = vmatprep.subr.mxu0 0.0
    %9162 = vmatpush1.msra.mxu0 0.0
    %9163 = vmatprep.subr.mxu0 0.0
    %9164 = vmatpush1.msra.mxu0 0.0
    %9165 = vmatprep.subr.mxu0 0.0
    %9166 = vmatpush1.msra.mxu0 0.0
    %9167 = vmatprep.subr.mxu0 0.0
    %9168 = vmatpush1.msra.mxu0 0.0
    %9169 = vmatprep.subr.mxu0 0.0
    %9170 = vmatpush1.msra.mxu0 0.0
    %9171 = vmatprep.subr.mxu0 0.0
    %9172 = vmatpush1.msra.mxu0 0.0
    %9173 = vmatprep.subr.mxu0 0.0
    %9174 = vmatpush1.msra.mxu0 0.0
    %9175 = vmatprep.subr.mxu0 0.0
    %9176 = vmatpush1.msra.mxu0 0.0
    %9177 = vmatprep.subr.mxu0 0.0
    %9178 = vmatpush1.msra.mxu0 0.0
    %9179 = vmatprep.subr.mxu0 0.0
    %9180 = vmatpush1.msra.mxu0 0.0
    %9181 = vmatprep.subr.mxu0 0.0
    %9182 = vmatpush1.msra.mxu0 0.0
    %9183 = vmatprep.subr.mxu0 0.0
    %9184 = vmatpush1.msra.mxu0 0.0
    %9185 = vmatprep.subr.mxu0 0.0
    %9186 = vmatpush1.msra.mxu0 0.0
    %9187 = vmatprep.subr.mxu0 0.0
    %9188 = vmatpush1.msra.mxu0 0.0
    %9189 = vmatprep.subr.mxu0 0.0
    %9190 = vmatpush1.msra.mxu0 0.0
    %9191 = vmatprep.subr.mxu0 0.0
    %9192 = vmatpush1.msra.mxu0 0.0
    %9193 = vmatprep.subr.mxu0 0.0
    %9194 = vmatpush1.msra.mxu0 0.0
    %9195 = vmatprep.subr.mxu0 0.0
    %9196 = vmatpush1.msra.mxu0 0.0
    %9197 = vmatprep.mubr.f32.mxu0 0.0
    %9198 = vmatmul.mubr.f32.gmra.mrb[0].mxu0 %v9131
    %v9199 = vpop.f32.mrb[0].mxu0
    %v9200 = vadd.f32 0.0, %v9199
    %v9201 = vpop.f32.mrb[0].mxu0
    %9202 = vdwg.mxu0
    %9211 = vrot.lane.b32.xlu0 %v8668, 2
    %v9212 = vpop.permute.xlu0 %9211
    %9213 = vrot.lane.b32.xlu0 %v8744, 2
    %v9214 = vpop.permute.xlu0 %9213
    %9215 = vrot.lane.b32.xlu0 %v8820, 2
    %v9216 = vpop.permute.xlu0 %9215
    %9217 = vrot.lane.b32.xlu0 %v8896, 2
    %v9218 = vpop.permute.xlu0 %9217
    %9219 = vrot.lane.b32.xlu0 %v8972, 2
    %v9220 = vpop.permute.xlu0 %9219
    %9221 = vrot.lane.b32.xlu0 %v9048, 2
    %v9222 = vpop.permute.xlu0 %9221
    %9223 = vrot.lane.b32.xlu0 %v9124, 2
    %v9224 = vpop.permute.xlu0 %9223
    %9225 = vrot.lane.b32.xlu0 %v9200, 2
    %v9226 = vpop.permute.xlu0 %9225
    %v9235 = vsel %vm392, %v7348, %v9212
    %v9236 = vsel %vm392, %v7424, %v9214
    %v9237 = vsel %vm392, %v7500, %v9216
    %v9238 = vsel %vm392, %v7576, %v9218
    %v9239 = vsel %vm392, %v7652, %v9220
    %v9240 = vsel %vm392, %v7728, %v9222
    %v9241 = vsel %vm392, %v7804, %v9224
    %v9242 = vsel %vm392, %v7880, %v9226
    %9243 = vrot.lane.b32.xlu0 %v22, 116
    %v9244 = vpop.permute.xlu0 %9243
    %9245 = vrot.lane.b32.xlu0 %v6429, 116
    %v9246 = vpop.permute.xlu0 %9245
    %v9249 = vsel %vm202, %v9235, 0
    %v9252 = vsel %vm202, %v9236, 0
    %v9255 = vsel %vm202, %v9237, 0
    %v9258 = vsel %vm202, %v9238, 0
    %v9261 = vsel %vm202, %v9239, 0
    %v9264 = vsel %vm202, %v9240, 0
    %v9267 = vsel %vm202, %v9241, 0
    %v9270 = vsel %vm202, %v9242, 0
    %v9272 = vsel %vm241, %v9244, 0
    %9274 = vmatprep.subr.mxu0 0.0
    %9275 = vmatpush1.msra.mxu0 %v9272
    %9276 = vmatprep.subr.mxu0 0.0
    %9277 = vmatpush1.msra.mxu0 0.0
    %9278 = vmatprep.subr.mxu0 0.0
    %9279 = vmatpush1.msra.mxu0 0.0
    %9280 = vmatprep.subr.mxu0 0.0
    %9281 = vmatpush1.msra.mxu0 0.0
    %9282 = vmatprep.subr.mxu0 0.0
    %9283 = vmatpush1.msra.mxu0 0.0
    %9284 = vmatprep.subr.mxu0 0.0
    %9285 = vmatpush1.msra.mxu0 0.0
    %9286 = vmatprep.subr.mxu0 0.0
    %9287 = vmatpush1.msra.mxu0 0.0
    %9288 = vmatprep.subr.mxu0 0.0
    %9289 = vmatpush1.msra.mxu0 0.0
    %9290 = vmatprep.subr.mxu0 0.0
    %9291 = vmatpush1.msra.mxu0 0.0
    %9292 = vmatprep.subr.mxu0 0.0
    %9293 = vmatpush1.msra.mxu0 0.0
    %9294 = vmatprep.subr.mxu0 0.0
    %9295 = vmatpush1.msra.mxu0 0.0
    %9296 = vmatprep.subr.mxu0 0.0
    %9297 = vmatpush1.msra.mxu0 0.0
    %9298 = vmatprep.subr.mxu0 0.0
    %9299 = vmatpush1.msra.mxu0 0.0
    %9300 = vmatprep.subr.mxu0 0.0
    %9301 = vmatpush1.msra.mxu0 0.0
    %9302 = vmatprep.subr.mxu0 0.0
    %9303 = vmatpush1.msra.mxu0 0.0
    %9304 = vmatprep.subr.mxu0 0.0
    %9305 = vmatpush1.msra.mxu0 0.0
    %9306 = vmatprep.subr.mxu0 0.0
    %9307 = vmatpush1.msra.mxu0 0.0
    %9308 = vmatprep.subr.mxu0 0.0
    %9309 = vmatpush1.msra.mxu0 0.0
    %9310 = vmatprep.subr.mxu0 0.0
    %9311 = vmatpush1.msra.mxu0 0.0
    %9312 = vmatprep.subr.mxu0 0.0
    %9313 = vmatpush1.msra.mxu0 0.0
    %9314 = vmatprep.subr.mxu0 0.0
    %9315 = vmatpush1.msra.mxu0 0.0
    %9316 = vmatprep.subr.mxu0 0.0
    %9317 = vmatpush1.msra.mxu0 0.0
    %9318 = vmatprep.subr.mxu0 0.0
    %9319 = vmatpush1.msra.mxu0 0.0
    %9320 = vmatprep.subr.mxu0 0.0
    %9321 = vmatpush1.msra.mxu0 0.0
    %9322 = vmatprep.subr.mxu0 0.0
    %9323 = vmatpush1.msra.mxu0 0.0
    %9324 = vmatprep.subr.mxu0 0.0
    %9325 = vmatpush1.msra.mxu0 0.0
    %9326 = vmatprep.subr.mxu0 0.0
    %9327 = vmatpush1.msra.mxu0 0.0
    %9328 = vmatprep.subr.mxu0 0.0
    %9329 = vmatpush1.msra.mxu0 0.0
    %9330 = vmatprep.subr.mxu0 0.0
    %9331 = vmatpush1.msra.mxu0 0.0
    %9332 = vmatprep.subr.mxu0 0.0
    %9333 = vmatpush1.msra.mxu0 0.0
    %9334 = vmatprep.subr.mxu0 0.0
    %9335 = vmatpush1.msra.mxu0 0.0
    %9336 = vmatprep.subr.mxu0 0.0
    %9337 = vmatpush1.msra.mxu0 0.0
    %9338 = vmatprep.mubr.f32.mxu0 0.0
    %9339 = vmatmul.mubr.f32.gmra.mrb[0].mxu0 %v9249
    %v9340 = vpop.f32.mrb[0].mxu0
    %v9341 = vadd.f32 %v9246, %v9340
    %v9342 = vpop.f32.mrb[0].mxu0
    %9343 = vmatprep.mubr.f32.mxu0 0.0
    %9344 = vmatmul.mubr.f32.gmra.mrb[0].mxu0 %v9252
    %v9345 = vpop.f32.mrb[0].mxu0
    %v9346 = vadd.f32 %v9246, %v9345
    %v9347 = vpop.f32.mrb[0].mxu0
    %9348 = vmatprep.mubr.f32.mxu0 0.0
    %9349 = vmatmul.mubr.f32.gmra.mrb[0].mxu0 %v9255
    %v9350 = vpop.f32.mrb[0].mxu0
    %v9351 = vadd.f32 %v9246, %v9350
    %v9352 = vpop.f32.mrb[0].mxu0
    %9353 = vmatprep.mubr.f32.mxu0 0.0
    %9354 = vmatmul.mubr.f32.gmra.mrb[0].mxu0 %v9258
    %v9355 = vpop.f32.mrb[0].mxu0
    %v9356 = vadd.f32 %v9246, %v9355
    %v9357 = vpop.f32.mrb[0].mxu0
    %9358 = vmatprep.mubr.f32.mxu0 0.0
    %9359 = vmatmul.mubr.f32.gmra.mrb[0].mxu0 %v9261
    %v9360 = vpop.f32.mrb[0].mxu0
    %v9361 = vadd.f32 %v9246, %v9360
    %v9362 = vpop.f32.mrb[0].mxu0
    %9363 = vmatprep.mubr.f32.mxu0 0.0
    %9364 = vmatmul.mubr.f32.gmra.mrb[0].mxu0 %v9264
    %v9365 = vpop.f32.mrb[0].mxu0
    %v9366 = vadd.f32 %v9246, %v9365
    %v9367 = vpop.f32.mrb[0].mxu0
    %9368 = vmatprep.mubr.f32.mxu0 0.0
    %9369 = vmatmul.mubr.f32.gmra.mrb[0].mxu0 %v9267
    %v9370 = vpop.f32.mrb[0].mxu0
    %v9371 = vadd.f32 %v9246, %v9370
    %v9372 = vpop.f32.mrb[0].mxu0
    %9373 = vmatprep.mubr.f32.mxu0 0.0
    %9374 = vmatmul.mubr.f32.gmra.mrb[0].mxu0 %v9270
    %v9375 = vpop.f32.mrb[0].mxu0
    %v9376 = vadd.f32 %v9246, %v9375
    %v9377 = vpop.f32.mrb[0].mxu0
    %9378 = vdwg.mxu0
    %9381 = vrot.lane.b32.xlu0 %v9346, 4
    %v9382 = vpop.permute.xlu0 %9381
    %9383 = vrot.lane.b32.xlu0 %v9366, 4
    %v9384 = vpop.permute.xlu0 %9383
    %9389 = vrot.lane.b32.xlu0 %v9351, 8
    %v9390 = vpop.permute.xlu0 %9389
    %9391 = vrot.lane.b32.xlu0 %v9371, 8
    %v9392 = vpop.permute.xlu0 %9391
    %9397 = vrot.lane.b32.xlu0 %v9356, 12
    %v9398 = vpop.permute.xlu0 %9397
    %9399 = vrot.lane.b32.xlu0 %v9376, 12
    %v9400 = vpop.permute.xlu0 %9399
    %v9403 = vsel %vm202, %v9341, %v9382
    %v9404 = vsel %vm202, %v9361, %v9384
    %v9405 = vsel %vm205, %v9403, %v9390
    %v9406 = vsel %vm205, %v9404, %v9392
    %v9407 = vsel %vm208, %v9405, %v9398
    %v9408 = vsel %vm208, %v9406, %v9400
    %v9409 = vlaneseq
    %v9410 = vshrl.u32 %v9409, 7
    %v9411 = vsub.s32 0, %v9410
    %v9412 = vrot.slane %v30, %v9411
    %v9414 = vsel %vm6278, %v9407, 0
    %v9417 = vsel %vm6278, %v9408, 0
    %9419 = vmatprep.subr.mxu0 0.0
    %9420 = vmatpush1.msra.mxu0 %v27
    %9421 = vmatprep.subr.mxu0 0.0
    %9422 = vmatpush1.msra.mxu0 %v28
    %9423 = vmatprep.subr.mxu0 0.0
    %9424 = vmatpush1.msra.mxu0 0.0
    %9425 = vmatprep.subr.mxu0 0.0
    %9426 = vmatpush1.msra.mxu0 0.0
    %9427 = vmatprep.subr.mxu0 0.0
    %9428 = vmatpush1.msra.mxu0 0.0
    %9429 = vmatprep.subr.mxu0 0.0
    %9430 = vmatpush1.msra.mxu0 0.0
    %9431 = vmatprep.subr.mxu0 0.0
    %9432 = vmatpush1.msra.mxu0 0.0
    %9433 = vmatprep.subr.mxu0 0.0
    %9434 = vmatpush1.msra.mxu0 0.0
    %9435 = vmatprep.subr.mxu0 0.0
    %9436 = vmatpush1.msra.mxu0 0.0
    %9437 = vmatprep.subr.mxu0 0.0
    %9438 = vmatpush1.msra.mxu0 0.0
    %9439 = vmatprep.subr.mxu0 0.0
    %9440 = vmatpush1.msra.mxu0 0.0
    %9441 = vmatprep.subr.mxu0 0.0
    %9442 = vmatpush1.msra.mxu0 0.0
    %9443 = vmatprep.subr.mxu0 0.0
    %9444 = vmatpush1.msra.mxu0 0.0
    %9445 = vmatprep.subr.mxu0 0.0
    %9446 = vmatpush1.msra.mxu0 0.0
    %9447 = vmatprep.subr.mxu0 0.0
    %9448 = vmatpush1.msra.mxu0 0.0
    %9449 = vmatprep.subr.mxu0 0.0
    %9450 = vmatpush1.msra.mxu0 0.0
    %9451 = vmatprep.subr.mxu0 0.0
    %9452 = vmatpush1.msra.mxu0 0.0
    %9453 = vmatprep.subr.mxu0 0.0
    %9454 = vmatpush1.msra.mxu0 0.0
    %9455 = vmatprep.subr.mxu0 0.0
    %9456 = vmatpush1.msra.mxu0 0.0
    %9457 = vmatprep.subr.mxu0 0.0
    %9458 = vmatpush1.msra.mxu0 0.0
    %9459 = vmatprep.subr.mxu0 0.0
    %9460 = vmatpush1.msra.mxu0 0.0
    %9461 = vmatprep.subr.mxu0 0.0
    %9462 = vmatpush1.msra.mxu0 0.0
    %9463 = vmatprep.subr.mxu0 0.0
    %9464 = vmatpush1.msra.mxu0 0.0
    %9465 = vmatprep.subr.mxu0 0.0
    %9466 = vmatpush1.msra.mxu0 0.0
    %9467 = vmatprep.subr.mxu0 0.0
    %9468 = vmatpush1.msra.mxu0 0.0
    %9469 = vmatprep.subr.mxu0 0.0
    %9470 = vmatpush1.msra.mxu0 0.0
    %9471 = vmatprep.subr.mxu0 0.0
    %9472 = vmatpush1.msra.mxu0 0.0
    %9473 = vmatprep.subr.mxu0 0.0
    %9474 = vmatpush1.msra.mxu0 0.0
    %9475 = vmatprep.subr.mxu0 0.0
    %9476 = vmatpush1.msra.mxu0 0.0
    %9477 = vmatprep.subr.mxu0 0.0
    %9478 = vmatpush1.msra.mxu0 0.0
    %9479 = vmatprep.subr.mxu0 0.0
    %9480 = vmatpush1.msra.mxu0 0.0
    %9481 = vmatprep.subr.mxu0 0.0
    %9482 = vmatpush1.msra.mxu0 0.0
    %9483 = vmatprep.mubr.f32.mxu0 0.0
    %9484 = vmatmul.mubr.f32.gmra.mrb[0].mxu0 %v9414
    %v9485 = vpop.f32.mrb[0].mxu0
    %v9486 = vadd.f32 %v9412, %v9485
    %v9487 = vpop.f32.mrb[0].mxu0
    %9488 = vmatprep.mubr.f32.mxu0 0.0
    %9489 = vmatmul.mubr.f32.gmra.mrb[0].mxu0 %v9417
    %v9490 = vpop.f32.mrb[0].mxu0
    %v9491 = vadd.f32 %v9412, %v9490
    %v9492 = vpop.f32.mrb[0].mxu0
    %9493 = vdwg.mxu0
    %v9494 = vmul.f32 %v9486, 0.5
    %v9495 = vmul.f32 %v9491, 0.5
    %v9496 = vmul.f32 %v9486, 0.70710677
    %v9497 = vmul.f32 %v9491, 0.70710677
    %v9498 = verf.f32.pop %v9496
    %v9499 = verf.f32.pop %v9497
    %v9500 = vadd.f32 %v9498, 1.0
    %v9501 = vadd.f32 %v9499, 1.0
    %v9502 = vmul.f32 %v9494, %v9500
    %v9503 = vmul.f32 %v9495, %v9501
    %v9504 = vadd.f32 %v9502, %v6409
    %v9505 = vadd.f32 %v9503, %v6410
    %v9506 = vsel %vm6278, %v9504, 0.0
    %9507 = vadd.xlane.f32.xlu0 %v9506
    %v9508 = vpop.xlane.xlu0 %9507
    %v9509 = vsel %vm6278, %v9505, 0.0
    %9510 = vadd.xlane.f32.xlu0 %v9509
    %v9511 = vpop.xlane.xlu0 %9510
    %v9512 = vmul.f32 %v9508, %v6378
    %v9513 = vmul.f32 %v9511, %v6378
    %v9514 = vsub.f32 %v9504, %v9512
    %v9515 = vsub.f32 %v9505, %v9513
    %v9516 = vmul.f32 %v9514, %v9514
    %v9517 = vmul.f32 %v9515, %v9515
    %v9518 = vsel %vm6278, %v9516, 0.0
    %9519 = vadd.xlane.f32.xlu0 %v9518
    %v9520 = vpop.xlane.xlu0 %9519
    %v9521 = vsel %vm6278, %v9517, 0.0
    %9522 = vadd.xlane.f32.xlu0 %v9521
    %v9523 = vpop.xlane.xlu0 %9522
    %v9524 = vmul.f32 %v9520, %v6378
    %v9525 = vmul.f32 %v9523, %v6378
    %v9526 = vadd.f32 %v9524, 1e-05
    %v9527 = vadd.f32 %v9525, 1e-05
    %v9528 = vrsqrt.pop %v9526
    %v9529 = vrsqrt.pop %v9527
    %v9530 = vmul.f32 %v9514, %v9528
    %v9531 = vmul.f32 %v9515, %v9529
    %v9532 = vlaneseq
    %v9533 = vshrl.u32 %v9532, 7
    %v9534 = vsub.s32 1, %v9533
    %v9535 = vrot.slane %v30, %v9534
    %v9536 = vmul.f32 %v9530, %v9535
    %v9537 = vmul.f32 %v9531, %v9535
    %v9538 = vlaneseq
    %v9539 = vshrl.u32 %v9538, 7
    %v9540 = vsub.s32 2, %v9539
    %v9541 = vrot.slane %v30, %v9540
    %v9542 = vadd.f32 %v9536, %v9541
    %v9543 = vadd.f32 %v9537, %v9541
    %9544 = vst.msk [vmem:[#allocation2] sm:$0xff] %vm6278, %v9542
    %9545 = vst.msk [vmem:[#allocation2 + $0x8] sm:$0xff] %vm6278, %v9543
    // Predicated region
    $region22: #{tpu_custom_call.1} parent=1 // pred_check
      _
    $region23: #{tpu_custom_call.1} parent=1 // pred_check_branch
      %9547 = sbr.rel (0) target = $region25
    $region24: #{tpu_custom_call.1} parent=1 // pred_region
      %s9549 = ssub.s32 256, 256
      %9550 = vsyncadd [#allocation3], %s9549
      %s9551 = sshll.u32 [#allocation2], 4
      %s9552 = int_to_ptr.vmem [resolvable:$true] %s9551
      %9557 = dma.vmem_to_hbm [thread:$0]  %s9552, 256, %s5, [#allocation3], 128, 128, 8
    $region25: #{tpu_custom_call.1} parent=1 // pred_fallthru
      _
    // Predicated region
    $region26: #{tpu_custom_call.1} parent=1 // pred_check
      _
    $region27: #{tpu_custom_call.1} parent=1 // pred_check_branch
      %9559 = sbr.rel (0) target = $region29
    $region28: #{tpu_custom_call.1} parent=1 // pred_region
      %9560 = dma.done [#allocation3], 256
    $region29: #{tpu_custom_call.1} parent=1 // pred_fallthru
      _
    %9561 = vsyncpa [#allocation3], 1

</llo_original>
